<compile_context>
chip_gen: v7x
topology: tpu7x:2x2x1
jax: 0.10.0
libtpu: 0.0.40
codegen_flags: <defaults>
</compile_context>

<pallas_src>
import functools

import jax
import jax.numpy as jnp
from jax import lax
from jax.experimental import pallas as pl
from jax.experimental.pallas import tpu as pltpu

EPS = 1e-5


# ----------------------------- pass A ---------------------------------------
def _conv1_stats_kernel(x_ref, w1_ref, wd_ref, y1_ref, stats_ref, xpad_ref):
    """conv1 (3x3, per-tap matmuls) + bn1 / bn_d sufficient statistics.

    x_ref    : (1, H, W, Cin)  input image tile (NHWC)
    w1_ref   : (9, Cin, Cout)  conv1 weights, tap-major (dh*3 + dw)
    wd_ref   : (Cin, Cout)     1x1 downsample weights
    y1_ref   : (1, H*W, Cout)  raw conv1 output for this tile
    stats_ref: (4, Cout)       [sum1, sumsq1, sum_d, sumsq_d] accumulator
    xpad_ref : VMEM (H+2, W+2, Cin) zero-haloed scratch
    """
    _, H, W, Cin = x_ref.shape
    Cout = y1_ref.shape[-1]
    HW = H * W

    @pl.when(pl.program_id(0) == 0)
    def _init():
        xpad_ref[...] = jnp.zeros_like(xpad_ref)      # halo ring stays zero
        stats_ref[...] = jnp.zeros_like(stats_ref)

    x = x_ref[0]
    xpad_ref[1:H + 1, 1:W + 1, :] = x                 # interior only

    mxu = w1_ref.dtype
    acc = jnp.zeros((HW, Cout), jnp.float32)
    for dh in range(3):                               # per-tap accumulating matmuls
        for dw in range(3):
            patch = xpad_ref[dh:dh + H, dw:dw + W, :].reshape(HW, Cin)
            acc += jnp.dot(patch.astype(mxu), w1_ref[dh * 3 + dw],
                           preferred_element_type=jnp.float32)

    # 1x1 downsample (stats only here; value is recomputed cheaply in pass C).
    idn = jnp.dot(x.reshape(HW, Cin).astype(mxu), wd_ref[...],
                  preferred_element_type=jnp.float32)

    y1_ref[0] = acc
    stats_ref[...] += jnp.concatenate(
        [jnp.sum(acc, axis=0, keepdims=True),
         jnp.sum(acc * acc, axis=0, keepdims=True),
         jnp.sum(idn, axis=0, keepdims=True),
         jnp.sum(idn * idn, axis=0, keepdims=True)], axis=0)


# ----------------------------- pass B ---------------------------------------
def _conv2_stats_kernel(y1_ref, a1_ref, c1_ref, w2_ref, z2_ref, stats_ref,
                        hpad_ref):
    """bn1 affine + relu + conv2 (3x3 per-tap matmuls) + bn2 statistics."""
    _, HW, Cout = y1_ref.shape
    Hp2, Wp2, _ = hpad_ref.shape
    H, W = Hp2 - 2, Wp2 - 2

    @pl.when(pl.program_id(0) == 0)
    def _init():
        hpad_ref[...] = jnp.zeros_like(hpad_ref)
        stats_ref[...] = jnp.zeros_like(stats_ref)

    h = jnp.maximum(y1_ref[0] * a1_ref[...] + c1_ref[...], 0.0)
    hpad_ref[1:H + 1, 1:W + 1, :] = h.reshape(H, W, Cout)

    mxu = w2_ref.dtype
    acc = jnp.zeros((HW, Cout), jnp.float32)
    for dh in range(3):
        for dw in range(3):
            patch = hpad_ref[dh:dh + H, dw:dw + W, :].reshape(HW, Cout)
            acc += jnp.dot(patch.astype(mxu), w2_ref[dh * 3 + dw],
                           preferred_element_type=jnp.float32)

    z2_ref[0] = acc
    stats_ref[...] += jnp.concatenate(
        [jnp.sum(acc, axis=0, keepdims=True),
         jnp.sum(acc * acc, axis=0, keepdims=True)], axis=0)


# ----------------------------- pass C ---------------------------------------
def _finalize_kernel(z2_ref, x_ref, wd_ref, a2_ref, c2_ref, ad_ref, cd_ref,
                     out_ref):
    """bn2 / bn_d affine, recomputed 1x1 downsample, residual add, relu."""
    mxu = wd_ref.dtype
    idn = jnp.dot(x_ref[0].astype(mxu), wd_ref[...],
                  preferred_element_type=jnp.float32)
    out = jnp.maximum(z2_ref[0] * a2_ref[...] + c2_ref[...]
                      + idn * ad_ref[...] + cd_ref[...], 0.0)
    out_ref[0] = out


# ----------------------------- wrapper ---------------------------------------
def _bn_affine_from_stats(s, sq, g, b, count):
    # Training-mode BN folded to y*a + c;  var = E[x^2] - E[x]^2 (f32, clamped).
    mean = s / count
    var = jnp.maximum(sq / count - mean * mean, 0.0)
    a = g * lax.rsqrt(var + EPS)
    return a, b - mean * a


@functools.partial(jax.jit, static_argnames=("mxu_dtype",))
def basic_block(x_nchw, params, *, mxu_dtype=jnp.float32):
    """x_nchw: (N, Cin, H, W) float32. Returns (N, Cout, H, W)."""
    x = jnp.transpose(x_nchw, (0, 2, 3, 1)).astype(jnp.float32)   # -> NHWC
    N, H, W, Cin = x.shape
    Cout = params["w1"].shape[-1]
    HW = H * W
    R = N * HW

    w1 = params["w1"].reshape(9, Cin, Cout).astype(mxu_dtype)
    w2 = params["w2"].reshape(9, Cout, Cout).astype(mxu_dtype)
    wd = params["wd"].astype(mxu_dtype)

    def row(v):
        return v.reshape(1, Cout).astype(jnp.float32)

    vec_spec = pl.BlockSpec((1, Cout), lambda n: (0, 0))
    # Per-step working set is tiny here; 32 MiB is safe on v5e/v6e/v7x.
    # At real ResNet shapes pick the largest H-row tile that fits (bigger on
    # v6e's 128 MiB VMEM, roughly half on v7x's 64 MiB).
    cparams_acc = pltpu.CompilerParams(
        dimension_semantics=("arbitrary",),            # carries stats accumulator
        vmem_limit_bytes=32 * 1024 * 1024)
    cparams_par = pltpu.CompilerParams(
        dimension_semantics=("parallel",),             # megacore-shardable
        vmem_limit_bytes=32 * 1024 * 1024)

    # ---- pass A: conv1 + bn1/bn_d statistics --------------------------------
    y1, stats1 = pl.pallas_call(
        _conv1_stats_kernel,
        grid=(N,),
        in_specs=[
            pl.BlockSpec((1, H, W, Cin), lambda n: (n, 0, 0, 0)),
            pl.BlockSpec((9, Cin, Cout), lambda n: (0, 0, 0)),
            pl.BlockSpec((Cin, Cout), lambda n: (0, 0)),
        ],
        out_specs=[
            pl.BlockSpec((1, HW, Cout), lambda n: (n, 0, 0)),
            pl.BlockSpec((4, Cout), lambda n: (0, 0)),
        ],
        out_shape=[
            jax.ShapeDtypeStruct((N, HW, Cout), jnp.float32),
            jax.ShapeDtypeStruct((4, Cout), jnp.float32),
        ],
        scratch_shapes=[pltpu.VMEM((H + 2, W + 2, Cin), jnp.float32)],
        compiler_params=cparams_acc,
        cost_estimate=pl.CostEstimate(
            flops=2 * R * Cin * Cout * 10,
            transcendentals=0,
            bytes_accessed=4 * (R * Cin + R * Cout + 10 * Cin * Cout + 4 * Cout)),
    )(x, w1, wd)

    a1, c1 = _bn_affine_from_stats(stats1[0:1], stats1[1:2],
                                   row(params["g1"]), row(params["b1"]), R)
    ad, cd = _bn_affine_from_stats(stats1[2:3], stats1[3:4],
                                   row(params["gd"]), row(params["bd"]), R)

    # ---- pass B: bn1 affine + relu + conv2 + bn2 statistics ------------------
    z2, stats2 = pl.pallas_call(
        _conv2_stats_kernel,
        grid=(N,),
        in_specs=[
            pl.BlockSpec((1, HW, Cout), lambda n: (n, 0, 0)),
            vec_spec, vec_spec,
            pl.BlockSpec((9, Cout, Cout), lambda n: (0, 0, 0)),
        ],
        out_specs=[
            pl.BlockSpec((1, HW, Cout), lambda n: (n, 0, 0)),
            pl.BlockSpec((2, Cout), lambda n: (0, 0)),
        ],
        out_shape=[
            jax.ShapeDtypeStruct((N, HW, Cout), jnp.float32),
            jax.ShapeDtypeStruct((2, Cout), jnp.float32),
        ],
        scratch_shapes=[pltpu.VMEM((H + 2, W + 2, Cout), jnp.float32)],
        compiler_params=cparams_acc,
        cost_estimate=pl.CostEstimate(
            flops=2 * R * Cout * Cout * 9,
            transcendentals=0,
            bytes_accessed=4 * (2 * R * Cout + 9 * Cout * Cout + 2 * Cout)),
    )(y1, a1, c1, w2)

    a2, c2 = _bn_affine_from_stats(stats2[0:1], stats2[1:2],
                                   row(params["g2"]), row(params["b2"]), R)

    # ---- pass C: bn2/bn_d affine + downsample recompute + add + relu ---------
    x_flat = x.reshape(N, HW, Cin)                     # metadata-only reshape
    out_flat = pl.pallas_call(
        _finalize_kernel,
        grid=(N,),
        in_specs=[
            pl.BlockSpec((1, HW, Cout), lambda n: (n, 0, 0)),
            pl.BlockSpec((1, HW, Cin), lambda n: (n, 0, 0)),
            pl.BlockSpec((Cin, Cout), lambda n: (0, 0)),
            vec_spec, vec_spec, vec_spec, vec_spec,
        ],
        out_specs=pl.BlockSpec((1, HW, Cout), lambda n: (n, 0, 0)),
        out_shape=jax.ShapeDtypeStruct((N, HW, Cout), jnp.float32),
        compiler_params=cparams_par,
        cost_estimate=pl.CostEstimate(
            flops=2 * R * Cin * Cout + 6 * R * Cout,
            transcendentals=0,
            bytes_accessed=4 * (2 * R * Cout + R * Cin + Cin * Cout + 4 * Cout)),
    )(z2, x_flat, wd, a2, c2, ad, cd)

    out = out_flat.reshape(N, H, W, Cout)
    return jnp.transpose(out, (0, 3, 1, 2))            # -> NCHW


# ----------------------------- reference & test ------------------------------
def reference(x_nchw, params):
    """Pure-JAX reference of BasicBlock._old_resnet (training-mode BN)."""
    x = jnp.transpose(x_nchw, (0, 2, 3, 1)).astype(jnp.float32)

    def conv3x3(y, w):
        return jax.lax.conv_general_dilated(
            y, w, window_strides=(1, 1), padding="SAME",
            dimension_numbers=("NHWC", "HWIO", "NHWC"))

    def bn(y, g, b):
        m = jnp.mean(y, axis=(0, 1, 2), keepdims=True)
        v = jnp.mean((y - m) ** 2, axis=(0, 1, 2), keepdims=True)
        return (y - m) * jax.lax.rsqrt(v + EPS) * g + b

    out = jnp.maximum(bn(conv3x3(x, params["w1"]), params["g1"], params["b1"]), 0.0)
    out = bn(conv3x3(out, params["w2"]), params["g2"], params["b2"])
    idn = bn(jnp.einsum("nhwc,cd->nhwd", x, params["wd"]),
             params["gd"], params["bd"])
    out = jnp.maximum(out + idn, 0.0)
    return jnp.transpose(out, (0, 3, 1, 2))


def init_params(key, inplanes, planes):
    ks = jax.random.split(key, 8)
    scale1 = (2.0 / (9 * inplanes)) ** 0.5
    scale2 = (2.0 / (9 * planes)) ** 0.5
    scaled = (2.0 / inplanes) ** 0.5
    return {
        "w1": jax.random.normal(ks[0], (3, 3, inplanes, planes), jnp.float32) * scale1,
        "g1": 1.0 + 0.1 * jax.random.normal(ks[1], (planes,), jnp.float32),
        "b1": 0.1 * jax.random.normal(ks[2], (planes,), jnp.float32),
        "w2": jax.random.normal(ks[3], (3, 3, planes, planes), jnp.float32) * scale2,
        "g2": 1.0 + 0.1 * jax.random.normal(ks[4], (planes,), jnp.float32),
        "b2": 0.1 * jax.random.normal(ks[5], (planes,), jnp.float32),
        "wd": jax.random.normal(ks[6], (inplanes, planes), jnp.float32) * scaled,
        "gd": jnp.ones((planes,), jnp.float32),
        "bd": jnp.zeros((planes,), jnp.float32),
    }


if __name__ == "__main__":
    key = jax.random.PRNGKey(0)
    kx, kp = jax.random.split(key)

    N, inplanes, planes, H, W = 2, 4, 8, 16, 16   # inplanes != planes -> downsample path
    x = jax.random.normal(kx, (N, inplanes, H, W), jnp.float32)
    params = init_params(kp, inplanes, planes)

    out = jax.block_until_ready(basic_block(x, params))
    ref = jax.block_until_ready(reference(x, params))

    assert out.shape == (N, planes, H, W), out.shape
    err = float(jnp.max(jnp.abs(out - ref)))
    assert jnp.allclose(out, ref, atol=2e-3, rtol=2e-3), err

    print("KERNEL_OK")
</pallas_src>

<mosaic_0001>
module attributes {stable_mosaic.version = 11 : i64} {
  func.func @_conv1_stats_kernel(%arg0: i32, %arg1: memref<1x16x16x4xf32, #tpu.memory_space<vmem>>, %arg2: memref<9x4x8xf32, #tpu.memory_space<vmem>>, %arg3: memref<4x8xf32, #tpu.memory_space<vmem>>, %arg4: memref<1x256x8xf32, #tpu.memory_space<vmem>>, %arg5: memref<4x8xf32, #tpu.memory_space<vmem>>, %arg6: memref<18x18x4xf32, #tpu.memory_space<vmem>>) attributes {dimension_semantics = [#tpu.dimension_semantics<arbitrary>], iteration_bounds = array<i64: 2>, scalar_prefetch = 0 : i64, scratch_operands = 1 : i64, tpu.core_type = #tpu.core_type<tc>, window_params = [{transform_indices = @transform_0, window_bounds = array<i64: 1, 16, 16, 4>}, {pipeline_mode = #tpu.pipeline_mode<synchronous>, transform_indices = @transform_1, window_bounds = array<i64: 9, 4, 8>}, {pipeline_mode = #tpu.pipeline_mode<synchronous>, transform_indices = @transform_2, window_bounds = array<i64: 4, 8>}, {transform_indices = @transform_3, window_bounds = array<i64: 1, 256, 8>}, {pipeline_mode = #tpu.pipeline_mode<synchronous>, transform_indices = @transform_4, window_bounds = array<i64: 4, 8>}]} {
    %c0_i32 = arith.constant 0 : i32
    %0 = arith.cmpi eq, %arg0, %c0_i32 : i32
    %1 = arith.extui %0 : i1 to i32
    %c0_i32_0 = arith.constant 0 : i32
    %2 = arith.cmpi ne, %1, %c0_i32_0 : i32
    scf.if %2 {
      %cst_76 = arith.constant 0.000000e+00 : f32
      %81 = vector.broadcast %cst_76 : f32 to vector<18x18x4xf32>
      %c0_77 = arith.constant 0 : index
      %c0_78 = arith.constant 0 : index
      %c0_79 = arith.constant 0 : index
      %82 = vector.load %arg6[%c0_77, %c0_78, %c0_79] : memref<18x18x4xf32, #tpu.memory_space<vmem>>, vector<18x18x4xf32>
      tpu.vector_store %arg6[%c0_77, %c0_78, %c0_79], %81 {strides = array<i32>} : memref<18x18x4xf32, #tpu.memory_space<vmem>>, vector<18x18x4xf32>,
      %cst_80 = arith.constant 0.000000e+00 : f32
      %83 = vector.broadcast %cst_80 : f32 to vector<4x8xf32>
      %c0_81 = arith.constant 0 : index
      %c0_82 = arith.constant 0 : index
      %84 = vector.load %arg5[%c0_81, %c0_82] : memref<4x8xf32, #tpu.memory_space<vmem>>, vector<4x8xf32>
      tpu.vector_store %arg5[%c0_81, %c0_82], %83 {strides = array<i32>} : memref<4x8xf32, #tpu.memory_space<vmem>>, vector<4x8xf32>,
    } else {
    }
    %c0 = arith.constant 0 : index
    %c0_1 = arith.constant 0 : index
    %c0_2 = arith.constant 0 : index
    %c0_3 = arith.constant 0 : index
    %3 = vector.load %arg1[%c0, %c0_1, %c0_2, %c0_3] : memref<1x16x16x4xf32, #tpu.memory_space<vmem>>, vector<1x16x16x4xf32>
    %4 = vector.shape_cast %3 : vector<1x16x16x4xf32> to vector<16x16x4xf32>
    %c1 = arith.constant 1 : index
    %c1_4 = arith.constant 1 : index
    %c0_5 = arith.constant 0 : index
    %5 = vector.load %arg6[%c1, %c1_4, %c0_5] : memref<18x18x4xf32, #tpu.memory_space<vmem>>, vector<16x16x4xf32>
    tpu.vector_store %arg6[%c1, %c1_4, %c0_5], %4 {strides = array<i32>} : memref<18x18x4xf32, #tpu.memory_space<vmem>>, vector<16x16x4xf32>,
    %cst = arith.constant 0.000000e+00 : f32
    %6 = vector.broadcast %cst : f32 to vector<256x8xf32>
    %c0_6 = arith.constant 0 : index
    %c0_7 = arith.constant 0 : index
    %c0_8 = arith.constant 0 : index
    %7 = vector.load %arg6[%c0_6, %c0_7, %c0_8] : memref<18x18x4xf32, #tpu.memory_space<vmem>>, vector<16x16x4xf32>
    %8 = vector.shape_cast %7 : vector<16x16x4xf32> to vector<256x4xf32>
    %c0_9 = arith.constant 0 : index
    %c0_10 = arith.constant 0 : index
    %c0_11 = arith.constant 0 : index
    %9 = vector.load %arg2[%c0_9, %c0_10, %c0_11] : memref<9x4x8xf32, #tpu.memory_space<vmem>>, vector<1x4x8xf32>
    %10 = vector.shape_cast %9 : vector<1x4x8xf32> to vector<4x8xf32>
    %cst_12 = arith.constant dense<0.000000e+00> : vector<256x8xf32>
    %11 = tpu.matmul %8, %10, %cst_12 {dimension_numbers = #tpu.dot_dimension_numbers<[1], [0], [0], [1], [0, 0, 1, 1], [], []>} : vector<256x4xf32>, vector<4x8xf32>, vector<256x8xf32> -> vector<256x8xf32>
    %12 = arith.addf %6, %11 : vector<256x8xf32>
    %c0_13 = arith.constant 0 : index
    %c1_14 = arith.constant 1 : index
    %c0_15 = arith.constant 0 : index
    %13 = vector.load %arg6[%c0_13, %c1_14, %c0_15] : memref<18x18x4xf32, #tpu.memory_space<vmem>>, vector<16x16x4xf32>
    %14 = vector.shape_cast %13 : vector<16x16x4xf32> to vector<256x4xf32>
    %c1_16 = arith.constant 1 : index
    %c0_17 = arith.constant 0 : index
    %c0_18 = arith.constant 0 : index
    %15 = vector.load %arg2[%c1_16, %c0_17, %c0_18] : memref<9x4x8xf32, #tpu.memory_space<vmem>>, vector<1x4x8xf32>
    %16 = vector.shape_cast %15 : vector<1x4x8xf32> to vector<4x8xf32>
    %cst_19 = arith.constant dense<0.000000e+00> : vector<256x8xf32>
    %17 = tpu.matmul %14, %16, %cst_19 {dimension_numbers = #tpu.dot_dimension_numbers<[1], [0], [0], [1], [0, 0, 1, 1], [], []>} : vector<256x4xf32>, vector<4x8xf32>, vector<256x8xf32> -> vector<256x8xf32>
    %18 = arith.addf %12, %17 : vector<256x8xf32>
    %c0_20 = arith.constant 0 : index
    %c2 = arith.constant 2 : index
    %c0_21 = arith.constant 0 : index
    %19 = vector.load %arg6[%c0_20, %c2, %c0_21] : memref<18x18x4xf32, #tpu.memory_space<vmem>>, vector<16x16x4xf32>
    %20 = vector.shape_cast %19 : vector<16x16x4xf32> to vector<256x4xf32>
    %c2_22 = arith.constant 2 : index
    %c0_23 = arith.constant 0 : index
    %c0_24 = arith.constant 0 : index
    %21 = vector.load %arg2[%c2_22, %c0_23, %c0_24] : memref<9x4x8xf32, #tpu.memory_space<vmem>>, vector<1x4x8xf32>
    %22 = vector.shape_cast %21 : vector<1x4x8xf32> to vector<4x8xf32>
    %cst_25 = arith.constant dense<0.000000e+00> : vector<256x8xf32>
    %23 = tpu.matmul %20, %22, %cst_25 {dimension_numbers = #tpu.dot_dimension_numbers<[1], [0], [0], [1], [0, 0, 1, 1], [], []>} : vector<256x4xf32>, vector<4x8xf32>, vector<256x8xf32> -> vector<256x8xf32>
    %24 = arith.addf %18, %23 : vector<256x8xf32>
    %c1_26 = arith.constant 1 : index
    %c0_27 = arith.constant 0 : index
    %c0_28 = arith.constant 0 : index
    %25 = vector.load %arg6[%c1_26, %c0_27, %c0_28] : memref<18x18x4xf32, #tpu.memory_space<vmem>>, vector<16x16x4xf32>
    %26 = vector.shape_cast %25 : vector<16x16x4xf32> to vector<256x4xf32>
    %c3 = arith.constant 3 : index
    %c0_29 = arith.constant 0 : index
    %c0_30 = arith.constant 0 : index
    %27 = vector.load %arg2[%c3, %c0_29, %c0_30] : memref<9x4x8xf32, #tpu.memory_space<vmem>>, vector<1x4x8xf32>
    %28 = vector.shape_cast %27 : vector<1x4x8xf32> to vector<4x8xf32>
    %cst_31 = arith.constant dense<0.000000e+00> : vector<256x8xf32>
    %29 = tpu.matmul %26, %28, %cst_31 {dimension_numbers = #tpu.dot_dimension_numbers<[1], [0], [0], [1], [0, 0, 1, 1], [], []>} : vector<256x4xf32>, vector<4x8xf32>, vector<256x8xf32> -> vector<256x8xf32>
    %30 = arith.addf %24, %29 : vector<256x8xf32>
    %c1_32 = arith.constant 1 : index
    %c1_33 = arith.constant 1 : index
    %c0_34 = arith.constant 0 : index
    %31 = vector.load %arg6[%c1_32, %c1_33, %c0_34] : memref<18x18x4xf32, #tpu.memory_space<vmem>>, vector<16x16x4xf32>
    %32 = vector.shape_cast %31 : vector<16x16x4xf32> to vector<256x4xf32>
    %c4 = arith.constant 4 : index
    %c0_35 = arith.constant 0 : index
    %c0_36 = arith.constant 0 : index
    %33 = vector.load %arg2[%c4, %c0_35, %c0_36] : memref<9x4x8xf32, #tpu.memory_space<vmem>>, vector<1x4x8xf32>
    %34 = vector.shape_cast %33 : vector<1x4x8xf32> to vector<4x8xf32>
    %cst_37 = arith.constant dense<0.000000e+00> : vector<256x8xf32>
    %35 = tpu.matmul %32, %34, %cst_37 {dimension_numbers = #tpu.dot_dimension_numbers<[1], [0], [0], [1], [0, 0, 1, 1], [], []>} : vector<256x4xf32>, vector<4x8xf32>, vector<256x8xf32> -> vector<256x8xf32>
    %36 = arith.addf %30, %35 : vector<256x8xf32>
    %c1_38 = arith.constant 1 : index
    %c2_39 = arith.constant 2 : index
    %c0_40 = arith.constant 0 : index
    %37 = vector.load %arg6[%c1_38, %c2_39, %c0_40] : memref<18x18x4xf32, #tpu.memory_space<vmem>>, vector<16x16x4xf32>
    %38 = vector.shape_cast %37 : vector<16x16x4xf32> to vector<256x4xf32>
    %c5 = arith.constant 5 : index
    %c0_41 = arith.constant 0 : index
    %c0_42 = arith.constant 0 : index
    %39 = vector.load %arg2[%c5, %c0_41, %c0_42] : memref<9x4x8xf32, #tpu.memory_space<vmem>>, vector<1x4x8xf32>
    %40 = vector.shape_cast %39 : vector<1x4x8xf32> to vector<4x8xf32>
    %cst_43 = arith.constant dense<0.000000e+00> : vector<256x8xf32>
    %41 = tpu.matmul %38, %40, %cst_43 {dimension_numbers = #tpu.dot_dimension_numbers<[1], [0], [0], [1], [0, 0, 1, 1], [], []>} : vector<256x4xf32>, vector<4x8xf32>, vector<256x8xf32> -> vector<256x8xf32>
    %42 = arith.addf %36, %41 : vector<256x8xf32>
    %c2_44 = arith.constant 2 : index
    %c0_45 = arith.constant 0 : index
    %c0_46 = arith.constant 0 : index
    %43 = vector.load %arg6[%c2_44, %c0_45, %c0_46] : memref<18x18x4xf32, #tpu.memory_space<vmem>>, vector<16x16x4xf32>
    %44 = vector.shape_cast %43 : vector<16x16x4xf32> to vector<256x4xf32>
    %c6 = arith.constant 6 : index
    %c0_47 = arith.constant 0 : index
    %c0_48 = arith.constant 0 : index
    %45 = vector.load %arg2[%c6, %c0_47, %c0_48] : memref<9x4x8xf32, #tpu.memory_space<vmem>>, vector<1x4x8xf32>
    %46 = vector.shape_cast %45 : vector<1x4x8xf32> to vector<4x8xf32>
    %cst_49 = arith.constant dense<0.000000e+00> : vector<256x8xf32>
    %47 = tpu.matmul %44, %46, %cst_49 {dimension_numbers = #tpu.dot_dimension_numbers<[1], [0], [0], [1], [0, 0, 1, 1], [], []>} : vector<256x4xf32>, vector<4x8xf32>, vector<256x8xf32> -> vector<256x8xf32>
    %48 = arith.addf %42, %47 : vector<256x8xf32>
    %c2_50 = arith.constant 2 : index
    %c1_51 = arith.constant 1 : index
    %c0_52 = arith.constant 0 : index
    %49 = vector.load %arg6[%c2_50, %c1_51, %c0_52] : memref<18x18x4xf32, #tpu.memory_space<vmem>>, vector<16x16x4xf32>
    %50 = vector.shape_cast %49 : vector<16x16x4xf32> to vector<256x4xf32>
    %c7 = arith.constant 7 : index
    %c0_53 = arith.constant 0 : index
    %c0_54 = arith.constant 0 : index
    %51 = vector.load %arg2[%c7, %c0_53, %c0_54] : memref<9x4x8xf32, #tpu.memory_space<vmem>>, vector<1x4x8xf32>
    %52 = vector.shape_cast %51 : vector<1x4x8xf32> to vector<4x8xf32>
    %cst_55 = arith.constant dense<0.000000e+00> : vector<256x8xf32>
    %53 = tpu.matmul %50, %52, %cst_55 {dimension_numbers = #tpu.dot_dimension_numbers<[1], [0], [0], [1], [0, 0, 1, 1], [], []>} : vector<256x4xf32>, vector<4x8xf32>, vector<256x8xf32> -> vector<256x8xf32>
    %54 = arith.addf %48, %53 : vector<256x8xf32>
    %c2_56 = arith.constant 2 : index
    %c2_57 = arith.constant 2 : index
    %c0_58 = arith.constant 0 : index
    %55 = vector.load %arg6[%c2_56, %c2_57, %c0_58] : memref<18x18x4xf32, #tpu.memory_space<vmem>>, vector<16x16x4xf32>
    %56 = vector.shape_cast %55 : vector<16x16x4xf32> to vector<256x4xf32>
    %c8 = arith.constant 8 : index
    %c0_59 = arith.constant 0 : index
    %c0_60 = arith.constant 0 : index
    %57 = vector.load %arg2[%c8, %c0_59, %c0_60] : memref<9x4x8xf32, #tpu.memory_space<vmem>>, vector<1x4x8xf32>
    %58 = vector.shape_cast %57 : vector<1x4x8xf32> to vector<4x8xf32>
    %cst_61 = arith.constant dense<0.000000e+00> : vector<256x8xf32>
    %59 = tpu.matmul %56, %58, %cst_61 {dimension_numbers = #tpu.dot_dimension_numbers<[1], [0], [0], [1], [0, 0, 1, 1], [], []>} : vector<256x4xf32>, vector<4x8xf32>, vector<256x8xf32> -> vector<256x8xf32>
    %60 = arith.addf %54, %59 : vector<256x8xf32>
    %61 = vector.shape_cast %4 : vector<16x16x4xf32> to vector<256x4xf32>
    %c0_62 = arith.constant 0 : index
    %c0_63 = arith.constant 0 : index
    %62 = vector.load %arg3[%c0_62, %c0_63] : memref<4x8xf32, #tpu.memory_space<vmem>>, vector<4x8xf32>
    %cst_64 = arith.constant dense<0.000000e+00> : vector<256x8xf32>
    %63 = tpu.matmul %61, %62, %cst_64 {dimension_numbers = #tpu.dot_dimension_numbers<[1], [0], [0], [1], [0, 0, 1, 1], [], []>} : vector<256x4xf32>, vector<4x8xf32>, vector<256x8xf32> -> vector<256x8xf32>
    %c0_65 = arith.constant 0 : index
    %c0_66 = arith.constant 0 : index
    %c0_67 = arith.constant 0 : index
    %64 = vector.load %arg4[%c0_65, %c0_66, %c0_67] : memref<1x256x8xf32, #tpu.memory_space<vmem>>, vector<1x256x8xf32>
    %65 = vector.shape_cast %64 : vector<1x256x8xf32> to vector<256x8xf32>
    %66 = vector.shape_cast %60 : vector<256x8xf32> to vector<1x256x8xf32>
    tpu.vector_store %arg4[%c0_65, %c0_66, %c0_67], %66 {strides = array<i32>} : memref<1x256x8xf32, #tpu.memory_space<vmem>>, vector<1x256x8xf32>,
    %c0_68 = arith.constant 0 : index
    %c0_69 = arith.constant 0 : index
    %67 = vector.load %arg5[%c0_68, %c0_69] : memref<4x8xf32, #tpu.memory_space<vmem>>, vector<4x8xf32>
    %cst_70 = arith.constant dense<0.000000e+00> : vector<8xf32>
    %68 = vector.multi_reduction <add>, %60, %cst_70 [0] : vector<256x8xf32> to vector<8xf32>
    %69 = vector.shape_cast %68 : vector<8xf32> to vector<1x8xf32>
    %70 = arith.mulf %60, %60 : vector<256x8xf32>
    %cst_71 = arith.constant dense<0.000000e+00> : vector<8xf32>
    %71 = vector.multi_reduction <add>, %70, %cst_71 [0] : vector<256x8xf32> to vector<8xf32>
    %72 = vector.shape_cast %71 : vector<8xf32> to vector<1x8xf32>
    %cst_72 = arith.constant dense<0.000000e+00> : vector<8xf32>
    %73 = vector.multi_reduction <add>, %63, %cst_72 [0] : vector<256x8xf32> to vector<8xf32>
    %74 = vector.shape_cast %73 : vector<8xf32> to vector<1x8xf32>
    %75 = arith.mulf %63, %63 : vector<256x8xf32>
    %cst_73 = arith.constant dense<0.000000e+00> : vector<8xf32>
    %76 = vector.multi_reduction <add>, %75, %cst_73 [0] : vector<256x8xf32> to vector<8xf32>
    %77 = vector.shape_cast %76 : vector<8xf32> to vector<1x8xf32>
    %78 = tpu.concatenate %69, %72, %74, %77 in 0 : vector<1x8xf32>, vector<1x8xf32>, vector<1x8xf32>, vector<1x8xf32> -> vector<4x8xf32>
    %79 = arith.addf %67, %78 : vector<4x8xf32>
    %c0_74 = arith.constant 0 : index
    %c0_75 = arith.constant 0 : index
    %80 = vector.load %arg5[%c0_74, %c0_75] : memref<4x8xf32, #tpu.memory_space<vmem>>, vector<4x8xf32>
    tpu.vector_store %arg5[%c0_74, %c0_75], %79 {strides = array<i32>} : memref<4x8xf32, #tpu.memory_space<vmem>>, vector<4x8xf32>,
    return
  }
  func.func @transform_0(%arg0: i32) -> (i32, i32, i32, i32) {
    %c0_i32 = arith.constant 0 : i32
    %c0_i32_0 = arith.constant 0 : i32
    %c0_i32_1 = arith.constant 0 : i32
    %c0_i32_2 = arith.constant 0 : i32
    return %arg0, %c0_i32, %c0_i32_0, %c0_i32_1 : i32, i32, i32, i32
  }
  func.func @transform_1(%arg0: i32) -> (i32, i32, i32) {
    %c0_i32 = arith.constant 0 : i32
    %c0_i32_0 = arith.constant 0 : i32
    %c0_i32_1 = arith.constant 0 : i32
    %c0_i32_2 = arith.constant 0 : i32
    return %c0_i32, %c0_i32_0, %c0_i32_1 : i32, i32, i32
  }
  func.func @transform_2(%arg0: i32) -> (i32, i32) {
    %c0_i32 = arith.constant 0 : i32
    %c0_i32_0 = arith.constant 0 : i32
    %c0_i32_1 = arith.constant 0 : i32
    return %c0_i32, %c0_i32_0 : i32, i32
  }
  func.func @transform_3(%arg0: i32) -> (i32, i32, i32) {
    %c0_i32 = arith.constant 0 : i32
    %c0_i32_0 = arith.constant 0 : i32
    %c0_i32_1 = arith.constant 0 : i32
    return %arg0, %c0_i32, %c0_i32_0 : i32, i32, i32
  }
  func.func @transform_4(%arg0: i32) -> (i32, i32) {
    %c0_i32 = arith.constant 0 : i32
    %c0_i32_0 = arith.constant 0 : i32
    %c0_i32_1 = arith.constant 0 : i32
    return %c0_i32, %c0_i32_0 : i32, i32
  }
}

module attributes {stable_mosaic.version = 11 : i64} {
  func.func @_conv2_stats_kernel(%arg0: i32, %arg1: memref<1x256x8xf32, #tpu.memory_space<vmem>>, %arg2: memref<1x8xf32, #tpu.memory_space<vmem>>, %arg3: memref<1x8xf32, #tpu.memory_space<vmem>>, %arg4: memref<9x8x8xf32, #tpu.memory_space<vmem>>, %arg5: memref<1x256x8xf32, #tpu.memory_space<vmem>>, %arg6: memref<2x8xf32, #tpu.memory_space<vmem>>, %arg7: memref<18x18x8xf32, #tpu.memory_space<vmem>>) attributes {dimension_semantics = [#tpu.dimension_semantics<arbitrary>], iteration_bounds = array<i64: 2>, scalar_prefetch = 0 : i64, scratch_operands = 1 : i64, tpu.core_type = #tpu.core_type<tc>, window_params = [{transform_indices = @transform_0, window_bounds = array<i64: 1, 256, 8>}, {pipeline_mode = #tpu.pipeline_mode<synchronous>, transform_indices = @transform_1, window_bounds = array<i64: 1, 8>}, {pipeline_mode = #tpu.pipeline_mode<synchronous>, transform_indices = @transform_2, window_bounds = array<i64: 1, 8>}, {pipeline_mode = #tpu.pipeline_mode<synchronous>, transform_indices = @transform_3, window_bounds = array<i64: 9, 8, 8>}, {transform_indices = @transform_4, window_bounds = array<i64: 1, 256, 8>}, {pipeline_mode = #tpu.pipeline_mode<synchronous>, transform_indices = @transform_5, window_bounds = array<i64: 2, 8>}]} {
    %c0_i32 = arith.constant 0 : i32
    %0 = arith.cmpi eq, %arg0, %c0_i32 : i32
    %1 = arith.extui %0 : i1 to i32
    %c0_i32_0 = arith.constant 0 : i32
    %2 = arith.cmpi ne, %1, %c0_i32_0 : i32
    scf.if %2 {
      %cst_75 = arith.constant 0.000000e+00 : f32
      %82 = vector.broadcast %cst_75 : f32 to vector<18x18x8xf32>
      %c0_76 = arith.constant 0 : index
      %c0_77 = arith.constant 0 : index
      %c0_78 = arith.constant 0 : index
      %83 = vector.load %arg7[%c0_76, %c0_77, %c0_78] : memref<18x18x8xf32, #tpu.memory_space<vmem>>, vector<18x18x8xf32>
      tpu.vector_store %arg7[%c0_76, %c0_77, %c0_78], %82 {strides = array<i32>} : memref<18x18x8xf32, #tpu.memory_space<vmem>>, vector<18x18x8xf32>,
      %cst_79 = arith.constant 0.000000e+00 : f32
      %84 = vector.broadcast %cst_79 : f32 to vector<2x8xf32>
      %c0_80 = arith.constant 0 : index
      %c0_81 = arith.constant 0 : index
      %85 = vector.load %arg6[%c0_80, %c0_81] : memref<2x8xf32, #tpu.memory_space<vmem>>, vector<2x8xf32>
      tpu.vector_store %arg6[%c0_80, %c0_81], %84 {strides = array<i32>} : memref<2x8xf32, #tpu.memory_space<vmem>>, vector<2x8xf32>,
    } else {
    }
    %c0 = arith.constant 0 : index
    %c0_1 = arith.constant 0 : index
    %c0_2 = arith.constant 0 : index
    %3 = vector.load %arg1[%c0, %c0_1, %c0_2] : memref<1x256x8xf32, #tpu.memory_space<vmem>>, vector<1x256x8xf32>
    %4 = vector.shape_cast %3 : vector<1x256x8xf32> to vector<256x8xf32>
    %c0_3 = arith.constant 0 : index
    %c0_4 = arith.constant 0 : index
    %5 = vector.load %arg2[%c0_3, %c0_4] : memref<1x8xf32, #tpu.memory_space<vmem>>, vector<1x8xf32>
    %6 = vector.broadcast %5 : vector<1x8xf32> to vector<256x8xf32>
    %7 = arith.mulf %4, %6 : vector<256x8xf32>
    %c0_5 = arith.constant 0 : index
    %c0_6 = arith.constant 0 : index
    %8 = vector.load %arg3[%c0_5, %c0_6] : memref<1x8xf32, #tpu.memory_space<vmem>>, vector<1x8xf32>
    %9 = vector.broadcast %8 : vector<1x8xf32> to vector<256x8xf32>
    %10 = arith.addf %7, %9 : vector<256x8xf32>
    %cst = arith.constant 0.000000e+00 : f32
    %11 = vector.broadcast %cst : f32 to vector<256x8xf32>
    %12 = arith.maximumf %10, %11 : vector<256x8xf32>
    %13 = vector.shape_cast %12 : vector<256x8xf32> to vector<16x16x8xf32>
    %c1 = arith.constant 1 : index
    %c1_7 = arith.constant 1 : index
    %c0_8 = arith.constant 0 : index
    %14 = vector.load %arg7[%c1, %c1_7, %c0_8] : memref<18x18x8xf32, #tpu.memory_space<vmem>>, vector<16x16x8xf32>
    tpu.vector_store %arg7[%c1, %c1_7, %c0_8], %13 {strides = array<i32>} : memref<18x18x8xf32, #tpu.memory_space<vmem>>, vector<16x16x8xf32>,
    %cst_9 = arith.constant 0.000000e+00 : f32
    %15 = vector.broadcast %cst_9 : f32 to vector<256x8xf32>
    %c0_10 = arith.constant 0 : index
    %c0_11 = arith.constant 0 : index
    %c0_12 = arith.constant 0 : index
    %16 = vector.load %arg7[%c0_10, %c0_11, %c0_12] : memref<18x18x8xf32, #tpu.memory_space<vmem>>, vector<16x16x8xf32>
    %17 = vector.shape_cast %16 : vector<16x16x8xf32> to vector<256x8xf32>
    %c0_13 = arith.constant 0 : index
    %c0_14 = arith.constant 0 : index
    %c0_15 = arith.constant 0 : index
    %18 = vector.load %arg4[%c0_13, %c0_14, %c0_15] : memref<9x8x8xf32, #tpu.memory_space<vmem>>, vector<1x8x8xf32>
    %19 = vector.shape_cast %18 : vector<1x8x8xf32> to vector<8x8xf32>
    %cst_16 = arith.constant dense<0.000000e+00> : vector<256x8xf32>
    %20 = tpu.matmul %17, %19, %cst_16 {dimension_numbers = #tpu.dot_dimension_numbers<[1], [0], [0], [1], [0, 0, 1, 1], [], []>} : vector<256x8xf32>, vector<8x8xf32>, vector<256x8xf32> -> vector<256x8xf32>
    %21 = arith.addf %15, %20 : vector<256x8xf32>
    %c0_17 = arith.constant 0 : index
    %c1_18 = arith.constant 1 : index
    %c0_19 = arith.constant 0 : index
    %22 = vector.load %arg7[%c0_17, %c1_18, %c0_19] : memref<18x18x8xf32, #tpu.memory_space<vmem>>, vector<16x16x8xf32>
    %23 = vector.shape_cast %22 : vector<16x16x8xf32> to vector<256x8xf32>
    %c1_20 = arith.constant 1 : index
    %c0_21 = arith.constant 0 : index
    %c0_22 = arith.constant 0 : index
    %24 = vector.load %arg4[%c1_20, %c0_21, %c0_22] : memref<9x8x8xf32, #tpu.memory_space<vmem>>, vector<1x8x8xf32>
    %25 = vector.shape_cast %24 : vector<1x8x8xf32> to vector<8x8xf32>
    %cst_23 = arith.constant dense<0.000000e+00> : vector<256x8xf32>
    %26 = tpu.matmul %23, %25, %cst_23 {dimension_numbers = #tpu.dot_dimension_numbers<[1], [0], [0], [1], [0, 0, 1, 1], [], []>} : vector<256x8xf32>, vector<8x8xf32>, vector<256x8xf32> -> vector<256x8xf32>
    %27 = arith.addf %21, %26 : vector<256x8xf32>
    %c0_24 = arith.constant 0 : index
    %c2 = arith.constant 2 : index
    %c0_25 = arith.constant 0 : index
    %28 = vector.load %arg7[%c0_24, %c2, %c0_25] : memref<18x18x8xf32, #tpu.memory_space<vmem>>, vector<16x16x8xf32>
    %29 = vector.shape_cast %28 : vector<16x16x8xf32> to vector<256x8xf32>
    %c2_26 = arith.constant 2 : index
    %c0_27 = arith.constant 0 : index
    %c0_28 = arith.constant 0 : index
    %30 = vector.load %arg4[%c2_26, %c0_27, %c0_28] : memref<9x8x8xf32, #tpu.memory_space<vmem>>, vector<1x8x8xf32>
    %31 = vector.shape_cast %30 : vector<1x8x8xf32> to vector<8x8xf32>
    %cst_29 = arith.constant dense<0.000000e+00> : vector<256x8xf32>
    %32 = tpu.matmul %29, %31, %cst_29 {dimension_numbers = #tpu.dot_dimension_numbers<[1], [0], [0], [1], [0, 0, 1, 1], [], []>} : vector<256x8xf32>, vector<8x8xf32>, vector<256x8xf32> -> vector<256x8xf32>
    %33 = arith.addf %27, %32 : vector<256x8xf32>
    %c1_30 = arith.constant 1 : index
    %c0_31 = arith.constant 0 : index
    %c0_32 = arith.constant 0 : index
    %34 = vector.load %arg7[%c1_30, %c0_31, %c0_32] : memref<18x18x8xf32, #tpu.memory_space<vmem>>, vector<16x16x8xf32>
    %35 = vector.shape_cast %34 : vector<16x16x8xf32> to vector<256x8xf32>
    %c3 = arith.constant 3 : index
    %c0_33 = arith.constant 0 : index
    %c0_34 = arith.constant 0 : index
    %36 = vector.load %arg4[%c3, %c0_33, %c0_34] : memref<9x8x8xf32, #tpu.memory_space<vmem>>, vector<1x8x8xf32>
    %37 = vector.shape_cast %36 : vector<1x8x8xf32> to vector<8x8xf32>
    %cst_35 = arith.constant dense<0.000000e+00> : vector<256x8xf32>
    %38 = tpu.matmul %35, %37, %cst_35 {dimension_numbers = #tpu.dot_dimension_numbers<[1], [0], [0], [1], [0, 0, 1, 1], [], []>} : vector<256x8xf32>, vector<8x8xf32>, vector<256x8xf32> -> vector<256x8xf32>
    %39 = arith.addf %33, %38 : vector<256x8xf32>
    %c1_36 = arith.constant 1 : index
    %c1_37 = arith.constant 1 : index
    %c0_38 = arith.constant 0 : index
    %40 = vector.load %arg7[%c1_36, %c1_37, %c0_38] : memref<18x18x8xf32, #tpu.memory_space<vmem>>, vector<16x16x8xf32>
    %41 = vector.shape_cast %40 : vector<16x16x8xf32> to vector<256x8xf32>
    %c4 = arith.constant 4 : index
    %c0_39 = arith.constant 0 : index
    %c0_40 = arith.constant 0 : index
    %42 = vector.load %arg4[%c4, %c0_39, %c0_40] : memref<9x8x8xf32, #tpu.memory_space<vmem>>, vector<1x8x8xf32>
    %43 = vector.shape_cast %42 : vector<1x8x8xf32> to vector<8x8xf32>
    %cst_41 = arith.constant dense<0.000000e+00> : vector<256x8xf32>
    %44 = tpu.matmul %41, %43, %cst_41 {dimension_numbers = #tpu.dot_dimension_numbers<[1], [0], [0], [1], [0, 0, 1, 1], [], []>} : vector<256x8xf32>, vector<8x8xf32>, vector<256x8xf32> -> vector<256x8xf32>
    %45 = arith.addf %39, %44 : vector<256x8xf32>
    %c1_42 = arith.constant 1 : index
    %c2_43 = arith.constant 2 : index
    %c0_44 = arith.constant 0 : index
    %46 = vector.load %arg7[%c1_42, %c2_43, %c0_44] : memref<18x18x8xf32, #tpu.memory_space<vmem>>, vector<16x16x8xf32>
    %47 = vector.shape_cast %46 : vector<16x16x8xf32> to vector<256x8xf32>
    %c5 = arith.constant 5 : index
    %c0_45 = arith.constant 0 : index
    %c0_46 = arith.constant 0 : index
    %48 = vector.load %arg4[%c5, %c0_45, %c0_46] : memref<9x8x8xf32, #tpu.memory_space<vmem>>, vector<1x8x8xf32>
    %49 = vector.shape_cast %48 : vector<1x8x8xf32> to vector<8x8xf32>
    %cst_47 = arith.constant dense<0.000000e+00> : vector<256x8xf32>
    %50 = tpu.matmul %47, %49, %cst_47 {dimension_numbers = #tpu.dot_dimension_numbers<[1], [0], [0], [1], [0, 0, 1, 1], [], []>} : vector<256x8xf32>, vector<8x8xf32>, vector<256x8xf32> -> vector<256x8xf32>
    %51 = arith.addf %45, %50 : vector<256x8xf32>
    %c2_48 = arith.constant 2 : index
    %c0_49 = arith.constant 0 : index
    %c0_50 = arith.constant 0 : index
    %52 = vector.load %arg7[%c2_48, %c0_49, %c0_50] : memref<18x18x8xf32, #tpu.memory_space<vmem>>, vector<16x16x8xf32>
    %53 = vector.shape_cast %52 : vector<16x16x8xf32> to vector<256x8xf32>
    %c6 = arith.constant 6 : index
    %c0_51 = arith.constant 0 : index
    %c0_52 = arith.constant 0 : index
    %54 = vector.load %arg4[%c6, %c0_51, %c0_52] : memref<9x8x8xf32, #tpu.memory_space<vmem>>, vector<1x8x8xf32>
    %55 = vector.shape_cast %54 : vector<1x8x8xf32> to vector<8x8xf32>
    %cst_53 = arith.constant dense<0.000000e+00> : vector<256x8xf32>
    %56 = tpu.matmul %53, %55, %cst_53 {dimension_numbers = #tpu.dot_dimension_numbers<[1], [0], [0], [1], [0, 0, 1, 1], [], []>} : vector<256x8xf32>, vector<8x8xf32>, vector<256x8xf32> -> vector<256x8xf32>
    %57 = arith.addf %51, %56 : vector<256x8xf32>
    %c2_54 = arith.constant 2 : index
    %c1_55 = arith.constant 1 : index
    %c0_56 = arith.constant 0 : index
    %58 = vector.load %arg7[%c2_54, %c1_55, %c0_56] : memref<18x18x8xf32, #tpu.memory_space<vmem>>, vector<16x16x8xf32>
    %59 = vector.shape_cast %58 : vector<16x16x8xf32> to vector<256x8xf32>
    %c7 = arith.constant 7 : index
    %c0_57 = arith.constant 0 : index
    %c0_58 = arith.constant 0 : index
    %60 = vector.load %arg4[%c7, %c0_57, %c0_58] : memref<9x8x8xf32, #tpu.memory_space<vmem>>, vector<1x8x8xf32>
    %61 = vector.shape_cast %60 : vector<1x8x8xf32> to vector<8x8xf32>
    %cst_59 = arith.constant dense<0.000000e+00> : vector<256x8xf32>
    %62 = tpu.matmul %59, %61, %cst_59 {dimension_numbers = #tpu.dot_dimension_numbers<[1], [0], [0], [1], [0, 0, 1, 1], [], []>} : vector<256x8xf32>, vector<8x8xf32>, vector<256x8xf32> -> vector<256x8xf32>
    %63 = arith.addf %57, %62 : vector<256x8xf32>
    %c2_60 = arith.constant 2 : index
    %c2_61 = arith.constant 2 : index
    %c0_62 = arith.constant 0 : index
    %64 = vector.load %arg7[%c2_60, %c2_61, %c0_62] : memref<18x18x8xf32, #tpu.memory_space<vmem>>, vector<16x16x8xf32>
    %65 = vector.shape_cast %64 : vector<16x16x8xf32> to vector<256x8xf32>
    %c8 = arith.constant 8 : index
    %c0_63 = arith.constant 0 : index
    %c0_64 = arith.constant 0 : index
    %66 = vector.load %arg4[%c8, %c0_63, %c0_64] : memref<9x8x8xf32, #tpu.memory_space<vmem>>, vector<1x8x8xf32>
    %67 = vector.shape_cast %66 : vector<1x8x8xf32> to vector<8x8xf32>
    %cst_65 = arith.constant dense<0.000000e+00> : vector<256x8xf32>
    %68 = tpu.matmul %65, %67, %cst_65 {dimension_numbers = #tpu.dot_dimension_numbers<[1], [0], [0], [1], [0, 0, 1, 1], [], []>} : vector<256x8xf32>, vector<8x8xf32>, vector<256x8xf32> -> vector<256x8xf32>
    %69 = arith.addf %63, %68 : vector<256x8xf32>
    %c0_66 = arith.constant 0 : index
    %c0_67 = arith.constant 0 : index
    %c0_68 = arith.constant 0 : index
    %70 = vector.load %arg5[%c0_66, %c0_67, %c0_68] : memref<1x256x8xf32, #tpu.memory_space<vmem>>, vector<1x256x8xf32>
    %71 = vector.shape_cast %70 : vector<1x256x8xf32> to vector<256x8xf32>
    %72 = vector.shape_cast %69 : vector<256x8xf32> to vector<1x256x8xf32>
    tpu.vector_store %arg5[%c0_66, %c0_67, %c0_68], %72 {strides = array<i32>} : memref<1x256x8xf32, #tpu.memory_space<vmem>>, vector<1x256x8xf32>,
    %c0_69 = arith.constant 0 : index
    %c0_70 = arith.constant 0 : index
    %73 = vector.load %arg6[%c0_69, %c0_70] : memref<2x8xf32, #tpu.memory_space<vmem>>, vector<2x8xf32>
    %cst_71 = arith.constant dense<0.000000e+00> : vector<8xf32>
    %74 = vector.multi_reduction <add>, %69, %cst_71 [0] : vector<256x8xf32> to vector<8xf32>
    %75 = vector.shape_cast %74 : vector<8xf32> to vector<1x8xf32>
    %76 = arith.mulf %69, %69 : vector<256x8xf32>
    %cst_72 = arith.constant dense<0.000000e+00> : vector<8xf32>
    %77 = vector.multi_reduction <add>, %76, %cst_72 [0] : vector<256x8xf32> to vector<8xf32>
    %78 = vector.shape_cast %77 : vector<8xf32> to vector<1x8xf32>
    %79 = tpu.concatenate %75, %78 in 0 : vector<1x8xf32>, vector<1x8xf32> -> vector<2x8xf32>
    %80 = arith.addf %73, %79 : vector<2x8xf32>
    %c0_73 = arith.constant 0 : index
    %c0_74 = arith.constant 0 : index
    %81 = vector.load %arg6[%c0_73, %c0_74] : memref<2x8xf32, #tpu.memory_space<vmem>>, vector<2x8xf32>
    tpu.vector_store %arg6[%c0_73, %c0_74], %80 {strides = array<i32>} : memref<2x8xf32, #tpu.memory_space<vmem>>, vector<2x8xf32>,
    return
  }
  func.func @transform_0(%arg0: i32) -> (i32, i32, i32) {
    %c0_i32 = arith.constant 0 : i32
    %c0_i32_0 = arith.constant 0 : i32
    %c0_i32_1 = arith.constant 0 : i32
    return %arg0, %c0_i32, %c0_i32_0 : i32, i32, i32
  }
  func.func @transform_1(%arg0: i32) -> (i32, i32) {
    %c0_i32 = arith.constant 0 : i32
    %c0_i32_0 = arith.constant 0 : i32
    %c0_i32_1 = arith.constant 0 : i32
    return %c0_i32, %c0_i32_0 : i32, i32
  }
  func.func @transform_2(%arg0: i32) -> (i32, i32) {
    %c0_i32 = arith.constant 0 : i32
    %c0_i32_0 = arith.constant 0 : i32
    %c0_i32_1 = arith.constant 0 : i32
    return %c0_i32, %c0_i32_0 : i32, i32
  }
  func.func @transform_3(%arg0: i32) -> (i32, i32, i32) {
    %c0_i32 = arith.constant 0 : i32
    %c0_i32_0 = arith.constant 0 : i32
    %c0_i32_1 = arith.constant 0 : i32
    %c0_i32_2 = arith.constant 0 : i32
    return %c0_i32, %c0_i32_0, %c0_i32_1 : i32, i32, i32
  }
  func.func @transform_4(%arg0: i32) -> (i32, i32, i32) {
    %c0_i32 = arith.constant 0 : i32
    %c0_i32_0 = arith.constant 0 : i32
    %c0_i32_1 = arith.constant 0 : i32
    return %arg0, %c0_i32, %c0_i32_0 : i32, i32, i32
  }
  func.func @transform_5(%arg0: i32) -> (i32, i32) {
    %c0_i32 = arith.constant 0 : i32
    %c0_i32_0 = arith.constant 0 : i32
    %c0_i32_1 = arith.constant 0 : i32
    return %c0_i32, %c0_i32_0 : i32, i32
  }
}

module attributes {stable_mosaic.version = 11 : i64} {
  func.func @_finalize_kernel(%arg0: i32, %arg1: memref<1x256x8xf32, #tpu.memory_space<vmem>>, %arg2: memref<1x256x4xf32, #tpu.memory_space<vmem>>, %arg3: memref<4x8xf32, #tpu.memory_space<vmem>>, %arg4: memref<1x8xf32, #tpu.memory_space<vmem>>, %arg5: memref<1x8xf32, #tpu.memory_space<vmem>>, %arg6: memref<1x8xf32, #tpu.memory_space<vmem>>, %arg7: memref<1x8xf32, #tpu.memory_space<vmem>>, %arg8: memref<1x256x8xf32, #tpu.memory_space<vmem>>) attributes {dimension_semantics = [#tpu.dimension_semantics<parallel>], iteration_bounds = array<i64: 2>, scalar_prefetch = 0 : i64, scratch_operands = 0 : i64, tpu.core_type = #tpu.core_type<tc>, window_params = [{transform_indices = @transform_0, window_bounds = array<i64: 1, 256, 8>}, {transform_indices = @transform_1, window_bounds = array<i64: 1, 256, 4>}, {pipeline_mode = #tpu.pipeline_mode<synchronous>, transform_indices = @transform_2, window_bounds = array<i64: 4, 8>}, {pipeline_mode = #tpu.pipeline_mode<synchronous>, transform_indices = @transform_3, window_bounds = array<i64: 1, 8>}, {pipeline_mode = #tpu.pipeline_mode<synchronous>, transform_indices = @transform_4, window_bounds = array<i64: 1, 8>}, {pipeline_mode = #tpu.pipeline_mode<synchronous>, transform_indices = @transform_5, window_bounds = array<i64: 1, 8>}, {pipeline_mode = #tpu.pipeline_mode<synchronous>, transform_indices = @transform_6, window_bounds = array<i64: 1, 8>}, {transform_indices = @transform_7, window_bounds = array<i64: 1, 256, 8>}]} {
    %c0 = arith.constant 0 : index
    %c0_0 = arith.constant 0 : index
    %c0_1 = arith.constant 0 : index
    %0 = vector.load %arg2[%c0, %c0_0, %c0_1] : memref<1x256x4xf32, #tpu.memory_space<vmem>>, vector<1x256x4xf32>
    %1 = vector.shape_cast %0 : vector<1x256x4xf32> to vector<256x4xf32>
    %c0_2 = arith.constant 0 : index
    %c0_3 = arith.constant 0 : index
    %2 = vector.load %arg3[%c0_2, %c0_3] : memref<4x8xf32, #tpu.memory_space<vmem>>, vector<4x8xf32>
    %cst = arith.constant dense<0.000000e+00> : vector<256x8xf32>
    %3 = tpu.matmul %1, %2, %cst {dimension_numbers = #tpu.dot_dimension_numbers<[1], [0], [0], [1], [0, 0, 1, 1], [], []>} : vector<256x4xf32>, vector<4x8xf32>, vector<256x8xf32> -> vector<256x8xf32>
    %c0_4 = arith.constant 0 : index
    %c0_5 = arith.constant 0 : index
    %c0_6 = arith.constant 0 : index
    %4 = vector.load %arg1[%c0_4, %c0_5, %c0_6] : memref<1x256x8xf32, #tpu.memory_space<vmem>>, vector<1x256x8xf32>
    %5 = vector.shape_cast %4 : vector<1x256x8xf32> to vector<256x8xf32>
    %c0_7 = arith.constant 0 : index
    %c0_8 = arith.constant 0 : index
    %6 = vector.load %arg4[%c0_7, %c0_8] : memref<1x8xf32, #tpu.memory_space<vmem>>, vector<1x8xf32>
    %7 = vector.broadcast %6 : vector<1x8xf32> to vector<256x8xf32>
    %8 = arith.mulf %5, %7 : vector<256x8xf32>
    %c0_9 = arith.constant 0 : index
    %c0_10 = arith.constant 0 : index
    %9 = vector.load %arg5[%c0_9, %c0_10] : memref<1x8xf32, #tpu.memory_space<vmem>>, vector<1x8xf32>
    %10 = vector.broadcast %9 : vector<1x8xf32> to vector<256x8xf32>
    %11 = arith.addf %8, %10 : vector<256x8xf32>
    %c0_11 = arith.constant 0 : index
    %c0_12 = arith.constant 0 : index
    %12 = vector.load %arg6[%c0_11, %c0_12] : memref<1x8xf32, #tpu.memory_space<vmem>>, vector<1x8xf32>
    %13 = vector.broadcast %12 : vector<1x8xf32> to vector<256x8xf32>
    %14 = arith.mulf %3, %13 : vector<256x8xf32>
    %15 = arith.addf %11, %14 : vector<256x8xf32>
    %c0_13 = arith.constant 0 : index
    %c0_14 = arith.constant 0 : index
    %16 = vector.load %arg7[%c0_13, %c0_14] : memref<1x8xf32, #tpu.memory_space<vmem>>, vector<1x8xf32>
    %17 = vector.broadcast %16 : vector<1x8xf32> to vector<256x8xf32>
    %18 = arith.addf %15, %17 : vector<256x8xf32>
    %cst_15 = arith.constant 0.000000e+00 : f32
    %19 = vector.broadcast %cst_15 : f32 to vector<256x8xf32>
    %20 = arith.maximumf %18, %19 : vector<256x8xf32>
    %c0_16 = arith.constant 0 : index
    %c0_17 = arith.constant 0 : index
    %c0_18 = arith.constant 0 : index
    %21 = vector.load %arg8[%c0_16, %c0_17, %c0_18] : memref<1x256x8xf32, #tpu.memory_space<vmem>>, vector<1x256x8xf32>
    %22 = vector.shape_cast %21 : vector<1x256x8xf32> to vector<256x8xf32>
    %23 = vector.shape_cast %20 : vector<256x8xf32> to vector<1x256x8xf32>
    tpu.vector_store %arg8[%c0_16, %c0_17, %c0_18], %23 {strides = array<i32>} : memref<1x256x8xf32, #tpu.memory_space<vmem>>, vector<1x256x8xf32>,
    return
  }
  func.func @transform_0(%arg0: i32) -> (i32, i32, i32) {
    %c0_i32 = arith.constant 0 : i32
    %c0_i32_0 = arith.constant 0 : i32
    %c0_i32_1 = arith.constant 0 : i32
    return %arg0, %c0_i32, %c0_i32_0 : i32, i32, i32
  }
  func.func @transform_1(%arg0: i32) -> (i32, i32, i32) {
    %c0_i32 = arith.constant 0 : i32
    %c0_i32_0 = arith.constant 0 : i32
    %c0_i32_1 = arith.constant 0 : i32
    return %arg0, %c0_i32, %c0_i32_0 : i32, i32, i32
  }
  func.func @transform_2(%arg0: i32) -> (i32, i32) {
    %c0_i32 = arith.constant 0 : i32
    %c0_i32_0 = arith.constant 0 : i32
    %c0_i32_1 = arith.constant 0 : i32
    return %c0_i32, %c0_i32_0 : i32, i32
  }
  func.func @transform_3(%arg0: i32) -> (i32, i32) {
    %c0_i32 = arith.constant 0 : i32
    %c0_i32_0 = arith.constant 0 : i32
    %c0_i32_1 = arith.constant 0 : i32
    return %c0_i32, %c0_i32_0 : i32, i32
  }
  func.func @transform_4(%arg0: i32) -> (i32, i32) {
    %c0_i32 = arith.constant 0 : i32
    %c0_i32_0 = arith.constant 0 : i32
    %c0_i32_1 = arith.constant 0 : i32
    return %c0_i32, %c0_i32_0 : i32, i32
  }
  func.func @transform_5(%arg0: i32) -> (i32, i32) {
    %c0_i32 = arith.constant 0 : i32
    %c0_i32_0 = arith.constant 0 : i32
    %c0_i32_1 = arith.constant 0 : i32
    return %c0_i32, %c0_i32_0 : i32, i32
  }
  func.func @transform_6(%arg0: i32) -> (i32, i32) {
    %c0_i32 = arith.constant 0 : i32
    %c0_i32_0 = arith.constant 0 : i32
    %c0_i32_1 = arith.constant 0 : i32
    return %c0_i32, %c0_i32_0 : i32, i32
  }
  func.func @transform_7(%arg0: i32) -> (i32, i32, i32) {
    %c0_i32 = arith.constant 0 : i32
    %c0_i32_0 = arith.constant 0 : i32
    %c0_i32_1 = arith.constant 0 : i32
    return %arg0, %c0_i32, %c0_i32_0 : i32, i32, i32
  }
}

</mosaic_0001>

<llo_original>
// kernel: basic_block.5
$region0: #{basic_block.5}
  #allocation0 [shape = 'u32[]', space=smem, size = 0x4, offset = 0x4, fixed_abs, tag = 'smem constant byte address 0x4 - core index']
  #allocation1 [shape = 'u32[144,128]{1,0:T(1,128)}', space=vmem, size = 0x12000, scoped, tag = 'internal scratch']
  %s0 = inlined_call_operand.vmem [shape: f32[2,256,8], index: 0, kind: input, shape index: {}]
  %s1 = inlined_call_operand.vmem [shape: f32[2,256,4], index: 1, kind: input, shape index: {}]
  %s2 = inlined_call_operand.vmem [shape: f32[4,8], index: 2, kind: input, shape index: {}]
  %s3 = inlined_call_operand.vmem [shape: f32[1,8], index: 3, kind: input, shape index: {}]
  %s4 = inlined_call_operand.vmem [shape: f32[1,8], index: 4, kind: input, shape index: {}]
  %s5 = inlined_call_operand.vmem [shape: f32[1,8], index: 5, kind: input, shape index: {}]
  %s6 = inlined_call_operand.vmem [shape: f32[1,8], index: 6, kind: input, shape index: {}]
  %s7 = inlined_call_operand.vmem [shape: f32[2,256,8], index: 7, kind: output, shape index: {}]
  %s8 = sld [smem:[#allocation0]]
  $region61: #{basic_block.5} parent=0
    _
  %s10 = ssub.s32 1, %s8
  %s11 = scalar_select 0, %s10, %s8
  loop: start=0, step=1, limit=4
  $region2: #{basic_block.5} parent=0 // loop_pre_header
    _
  $region3: #{basic_block.5} parent=0 // loop_header
    %s13 = sphi 0, %s17
    %p14 = scmp.ge.s32.totalorder %s13, 4
    %s23 = sphi 0, %s25
    %s26 = sphi 0, %s23
    %s27 = sphi 0, %s26
    %s43 = sphi 0, %s27
    %s49 = sphi 0, %s51
    %s52 = sphi 0, %s49
    %s53 = sphi 0, %s52
    %s69 = sphi 0, %s53
    %s73 = sphi 0, %s73
    %s75 = sphi 0, %s73
    %s76 = sphi 0, %s75
    %s90 = sphi 0, %s76
    %s94 = sphi 0, %s94
    %s96 = sphi 0, %s94
    %s97 = sphi 0, %s96
    %s111 = sphi 0, %s97
    %s115 = sphi 0, %s115
    %s117 = sphi 0, %s115
    %s118 = sphi 0, %s117
    %s132 = sphi 0, %s118
    %s136 = sphi 0, %s136
    %s138 = sphi 0, %s136
    %s139 = sphi 0, %s138
    %s153 = sphi 0, %s139
    %s157 = sphi 0, %s157
    %s159 = sphi 0, %s157
    %s160 = sphi 0, %s159
    %s174 = sphi 0, %s160
    %s180 = sphi 0, %s182
    %s183 = sphi 0, %s180
    %s184 = sphi 0, %s183
    %s200 = sphi 0, %s184
  $region4: #{basic_block.5} parent=0 // loop_header_branch
    %16 = sbr.rel (%p14) target = $region8
  $region5: #{basic_block.5} parent=0 // loop_body
    %s18 = ssub.s32 %s13, 1
    %s19 = ssub.s32 %s13, 2
    %s20 = sadd.s32 %s13, 1
    %s21 = ssub.s32 %s13, %s20
    %p22 = scmp.eq.s32.totalorder %s21, 0
    %s24 = sadd.s32 %s23, 1
    %s25 = scalar_select %p22, %s23, %s24
    %p28 = pneg %p22
    %p29 = scmp.eq.s32.totalorder %s13, 1
    %p30 = por %p28, %p29
    %p31 = scmp.ne.s32.totalorder %s23, %s26
    %p32 = scmp.eq.s32.totalorder %s13, 0
    %p33 = por %p31, %p32
    %p34 = scmp.ne.s32.totalorder %s23, %s26
    %p35 = scmp.eq.s32.totalorder %s18, 1
    %p36 = por %p34, %p35
    %p37 = scmp.ne.s32.totalorder %s26, %s27
    %p38 = scmp.eq.s32.totalorder %s18, 0
    %p39 = por %p37, %p38
    %p40 = scmp.ne.s32.totalorder %s26, %s27
    %p41 = scmp.eq.s32.totalorder %s19, 1
    %p42 = por %p40, %p41
    %p44 = scmp.ne.s32.totalorder %s27, %s43
    %p45 = scmp.eq.s32.totalorder %s19, 0
    %p46 = por %p44, %p45
    %s47 = ssub.s32 %s13, %s20
    %p48 = scmp.eq.s32.totalorder %s47, 0
    %s50 = sadd.s32 %s49, 1
    %s51 = scalar_select %p48, %s49, %s50
    %p54 = pneg %p48
    %p55 = scmp.eq.s32.totalorder %s13, 1
    %p56 = por %p54, %p55
    %p57 = scmp.ne.s32.totalorder %s49, %s52
    %p58 = scmp.eq.s32.totalorder %s13, 0
    %p59 = por %p57, %p58
    %p60 = scmp.ne.s32.totalorder %s49, %s52
    %p61 = scmp.eq.s32.totalorder %s18, 1
    %p62 = por %p60, %p61
    %p63 = scmp.ne.s32.totalorder %s52, %s53
    %p64 = scmp.eq.s32.totalorder %s18, 0
    %p65 = por %p63, %p64
    %p66 = scmp.ne.s32.totalorder %s52, %s53
    %p67 = scmp.eq.s32.totalorder %s19, 1
    %p68 = por %p66, %p67
    %p70 = scmp.ne.s32.totalorder %s53, %s69
    %p71 = scmp.eq.s32.totalorder %s19, 0
    %p72 = por %p70, %p71
    %s74 = sadd.s32 %s73, 1
    %p77 = scmp.eq.s32.totalorder %s13, 1
    %p78 = scmp.ne.s32.totalorder %s73, %s75
    %p79 = scmp.eq.s32.totalorder %s13, 0
    %p80 = por %p78, %p79
    %p81 = scmp.ne.s32.totalorder %s73, %s75
    %p82 = scmp.eq.s32.totalorder %s18, 1
    %p83 = por %p81, %p82
    %p84 = scmp.ne.s32.totalorder %s75, %s76
    %p85 = scmp.eq.s32.totalorder %s18, 0
    %p86 = por %p84, %p85
    %p87 = scmp.ne.s32.totalorder %s75, %s76
    %p88 = scmp.eq.s32.totalorder %s19, 1
    %p89 = por %p87, %p88
    %p91 = scmp.ne.s32.totalorder %s76, %s90
    %p92 = scmp.eq.s32.totalorder %s19, 0
    %p93 = por %p91, %p92
    %s95 = sadd.s32 %s94, 1
    %p98 = scmp.eq.s32.totalorder %s13, 1
    %p99 = scmp.ne.s32.totalorder %s94, %s96
    %p100 = scmp.eq.s32.totalorder %s13, 0
    %p101 = por %p99, %p100
    %p102 = scmp.ne.s32.totalorder %s94, %s96
    %p103 = scmp.eq.s32.totalorder %s18, 1
    %p104 = por %p102, %p103
    %p105 = scmp.ne.s32.totalorder %s96, %s97
    %p106 = scmp.eq.s32.totalorder %s18, 0
    %p107 = por %p105, %p106
    %p108 = scmp.ne.s32.totalorder %s96, %s97
    %p109 = scmp.eq.s32.totalorder %s19, 1
    %p110 = por %p108, %p109
    %p112 = scmp.ne.s32.totalorder %s97, %s111
    %p113 = scmp.eq.s32.totalorder %s19, 0
    %p114 = por %p112, %p113
    %s116 = sadd.s32 %s115, 1
    %p119 = scmp.eq.s32.totalorder %s13, 1
    %p120 = scmp.ne.s32.totalorder %s115, %s117
    %p121 = scmp.eq.s32.totalorder %s13, 0
    %p122 = por %p120, %p121
    %p123 = scmp.ne.s32.totalorder %s115, %s117
    %p124 = scmp.eq.s32.totalorder %s18, 1
    %p125 = por %p123, %p124
    %p126 = scmp.ne.s32.totalorder %s117, %s118
    %p127 = scmp.eq.s32.totalorder %s18, 0
    %p128 = por %p126, %p127
    %p129 = scmp.ne.s32.totalorder %s117, %s118
    %p130 = scmp.eq.s32.totalorder %s19, 1
    %p131 = por %p129, %p130
    %p133 = scmp.ne.s32.totalorder %s118, %s132
    %p134 = scmp.eq.s32.totalorder %s19, 0
    %p135 = por %p133, %p134
    %s137 = sadd.s32 %s136, 1
    %p140 = scmp.eq.s32.totalorder %s13, 1
    %p141 = scmp.ne.s32.totalorder %s136, %s138
    %p142 = scmp.eq.s32.totalorder %s13, 0
    %p143 = por %p141, %p142
    %p144 = scmp.ne.s32.totalorder %s136, %s138
    %p145 = scmp.eq.s32.totalorder %s18, 1
    %p146 = por %p144, %p145
    %p147 = scmp.ne.s32.totalorder %s138, %s139
    %p148 = scmp.eq.s32.totalorder %s18, 0
    %p149 = por %p147, %p148
    %p150 = scmp.ne.s32.totalorder %s138, %s139
    %p151 = scmp.eq.s32.totalorder %s19, 1
    %p152 = por %p150, %p151
    %p154 = scmp.ne.s32.totalorder %s139, %s153
    %p155 = scmp.eq.s32.totalorder %s19, 0
    %p156 = por %p154, %p155
    %s158 = sadd.s32 %s157, 1
    %p161 = scmp.eq.s32.totalorder %s13, 1
    %p162 = scmp.ne.s32.totalorder %s157, %s159
    %p163 = scmp.eq.s32.totalorder %s13, 0
    %p164 = por %p162, %p163
    %p165 = scmp.ne.s32.totalorder %s157, %s159
    %p166 = scmp.eq.s32.totalorder %s18, 1
    %p167 = por %p165, %p166
    %p168 = scmp.ne.s32.totalorder %s159, %s160
    %p169 = scmp.eq.s32.totalorder %s18, 0
    %p170 = por %p168, %p169
    %p171 = scmp.ne.s32.totalorder %s159, %s160
    %p172 = scmp.eq.s32.totalorder %s19, 1
    %p173 = por %p171, %p172
    %p175 = scmp.ne.s32.totalorder %s160, %s174
    %p176 = scmp.eq.s32.totalorder %s19, 0
    %p177 = por %p175, %p176
    %s178 = ssub.s32 %s13, %s20
    %p179 = scmp.eq.s32.totalorder %s178, 0
    %s181 = sadd.s32 %s180, 1
    %s182 = scalar_select %p179, %s180, %s181
    %p185 = pneg %p179
    %p186 = scmp.eq.s32.totalorder %s13, 1
    %p187 = por %p185, %p186
    %p188 = scmp.ne.s32.totalorder %s180, %s183
    %p189 = scmp.eq.s32.totalorder %s13, 0
    %p190 = por %p188, %p189
    %p191 = scmp.ne.s32.totalorder %s180, %s183
    %p192 = scmp.eq.s32.totalorder %s18, 1
    %p193 = por %p191, %p192
    %p194 = scmp.ne.s32.totalorder %s183, %s184
    %p195 = scmp.eq.s32.totalorder %s18, 0
    %p196 = por %p194, %p195
    %p197 = scmp.ne.s32.totalorder %s183, %s184
    %p198 = scmp.eq.s32.totalorder %s19, 1
    %p199 = por %p197, %p198
    %p201 = scmp.ne.s32.totalorder %s184, %s200
    %p202 = scmp.eq.s32.totalorder %s19, 0
    %p203 = por %p201, %p202
    %p204 = scmp.le.s32.totalorder 1, %s13
    %p205 = scmp.lt.s32.totalorder %s13, 3
    %p206 = pnand %p204, %p205
    %p207 = pneg %p206
    // Predicated region
    $region9: #{basic_block.5} parent=5 // pred_check
      _
    $region10: #{basic_block.5} parent=5 // pred_check_branch
      %209 = sbr.rel (%p206) target = $region12
    $region11: #{basic_block.5} parent=5 // pred_region
      %s210 = ssub.s32 %s13, 1
      // Predicated region
      $region13: #{basic_block.5} parent=11 // pred_check
        %p211 = pneg %p86
      $region14: #{basic_block.5} parent=11 // pred_check_branch
        %213 = sbr.rel (%p211) target = $region16
      $region15: #{basic_block.5} parent=11 // pred_region
        _
      $region16: #{basic_block.5} parent=11 // pred_fallthru
        _
      // Predicated region
      $region17: #{basic_block.5} parent=11 // pred_check
        %p214 = pneg %p107
      $region18: #{basic_block.5} parent=11 // pred_check_branch
        %216 = sbr.rel (%p214) target = $region20
      $region19: #{basic_block.5} parent=11 // pred_region
        _
      $region20: #{basic_block.5} parent=11 // pred_fallthru
        _
      // Predicated region
      $region21: #{basic_block.5} parent=11 // pred_check
        %p217 = pneg %p128
      $region22: #{basic_block.5} parent=11 // pred_check_branch
        %219 = sbr.rel (%p217) target = $region24
      $region23: #{basic_block.5} parent=11 // pred_region
        _
      $region24: #{basic_block.5} parent=11 // pred_fallthru
        _
      // Predicated region
      $region25: #{basic_block.5} parent=11 // pred_check
        %p220 = pneg %p149
      $region26: #{basic_block.5} parent=11 // pred_check_branch
        %222 = sbr.rel (%p220) target = $region28
      $region27: #{basic_block.5} parent=11 // pred_region
        _
      $region28: #{basic_block.5} parent=11 // pred_fallthru
        _
      // Predicated region
      $region29: #{basic_block.5} parent=11 // pred_check
        %p223 = pneg %p170
      $region30: #{basic_block.5} parent=11 // pred_check_branch
        %225 = sbr.rel (%p223) target = $region32
      $region31: #{basic_block.5} parent=11 // pred_region
        _
      $region32: #{basic_block.5} parent=11 // pred_fallthru
        _
    $region12: #{basic_block.5} parent=5 // pred_fallthru
      _
    %p226 = scmp.lt.s32.totalorder %s13, 2
    // Predicated region
    $region33: #{basic_block.5} parent=5 // pred_check
      %p227 = pneg %p226
    $region34: #{basic_block.5} parent=5 // pred_check_branch
      %229 = sbr.rel (%p227) target = $region36
    $region35: #{basic_block.5} parent=5 // pred_region
      // Predicated region
      $region37: #{basic_block.5} parent=35 // pred_check
        %p230 = pneg %p33
      $region38: #{basic_block.5} parent=35 // pred_check_branch
        %232 = sbr.rel (%p230) target = $region40
      $region39: #{basic_block.5} parent=35 // pred_region
        %p233 = scmp.lt.s32.totalorder %s13, 1
        %s234 = scalar_select %p233, %s13, 1
        %s235 = smul.addr %s234, 32
        %s236 = smul.addr %s235, 8
        %s237 = scalar_lea.vmem %s0, %s236
      $region40: #{basic_block.5} parent=35 // pred_fallthru
        _
      // Predicated region
      $region41: #{basic_block.5} parent=35 // pred_check
        %p238 = pneg %p59
      $region42: #{basic_block.5} parent=35 // pred_check_branch
        %240 = sbr.rel (%p238) target = $region44
      $region43: #{basic_block.5} parent=35 // pred_region
        %p241 = scmp.lt.s32.totalorder %s13, 1
        %s242 = scalar_select %p241, %s13, 1
        %s243 = smul.addr %s242, 32
        %s244 = smul.addr %s243, 8
        %s245 = scalar_lea.vmem %s1, %s244
      $region44: #{basic_block.5} parent=35 // pred_fallthru
        _
    $region36: #{basic_block.5} parent=5 // pred_fallthru
      _
    %p246 = scmp.le.s32.totalorder 1, %s13
    %p247 = scmp.lt.s32.totalorder %s13, 3
    %p248 = pnand %p246, %p247
    %p249 = pneg %p248
    // Predicated region
    $region45: #{basic_block.5} parent=5 // pred_check
      _
    $region46: #{basic_block.5} parent=5 // pred_check_branch
      %251 = sbr.rel (%p248) target = $region48
    $region47: #{basic_block.5} parent=5 // pred_region
      %s252 = ssub.s32 %s13, 1
      %p253 = scmp.lt.s32.totalorder %s18, 1
      %s254 = scalar_select %p253, %s18, 1
      %s255 = smul.addr %s254, 32
      %s256 = smul.addr %s255, 8
      %s257 = scalar_lea.vmem %s0, %s256
      %p258 = pneg %p39
      %p259 = pneg %p36
      %p260 = scmp.lt.s32.totalorder %s18, 1
      %s261 = scalar_select %p260, %s18, 1
      %s262 = smul.addr %s261, 32
      %s263 = smul.addr %s262, 8
      %s264 = scalar_lea.vmem %s1, %s263
      %p265 = pneg %p65
      %p266 = pneg %p62
      %p267 = pneg %p86
      %p268 = pneg %p83
      %p269 = pneg %p107
      %p270 = pneg %p104
      %p271 = pneg %p128
      %p272 = pneg %p125
      %p273 = pneg %p149
      %p274 = pneg %p146
      %p275 = pneg %p170
      %p276 = pneg %p167
      %p277 = pneg %p196
      %p278 = pneg %p193
      %p279 = scmp.lt.s32.totalorder %s18, 1
      %s280 = scalar_select %p279, %s18, 1
      %s281 = smul.addr %s280, 32
      %s282 = smul.addr %s281, 8
      %s283 = scalar_lea.vmem %s7, %s282
      %p284 = scmp.lt.s32.totalorder %s18, 1
      %s285 = scalar_select %p284, %s18, 1
      %s286 = smul.addr %s285, 32
      %s287 = smul.addr %s286, 8
      %s288 = scalar_lea.vmem %s0, %s287
      %p289 = scmp.lt.s32.totalorder %s18, 1
      %s290 = scalar_select %p289, %s18, 1
      %s291 = smul.addr %s290, 32
      %s292 = smul.addr %s291, 8
      %s293 = scalar_lea.vmem %s1, %s292
      %p294 = scmp.lt.s32.totalorder %s18, 1
      %s295 = scalar_select %p294, %s18, 1
      %s296 = smul.addr %s295, 32
      %s297 = smul.addr %s296, 8
      %s298 = scalar_lea.vmem %s7, %s297
      %v299 = vld [vmem:[%s293] sm:$0xff]
      %v300 = vld [vmem:[%s293 + $0x8] sm:$0xff]
      %v301 = vld [vmem:[%s293 + $0x10] sm:$0xff]
      %v302 = vld [vmem:[%s293 + $0x18] sm:$0xff]
      %v303 = vld [vmem:[%s293 + $0x20] sm:$0xff]
      %v304 = vld [vmem:[%s293 + $0x28] sm:$0xff]
      %v305 = vld [vmem:[%s293 + $0x30] sm:$0xff]
      %v306 = vld [vmem:[%s293 + $0x38] sm:$0xff]
      %v307 = vld [vmem:[%s293 + $0x40] sm:$0xff]
      %v308 = vld [vmem:[%s293 + $0x48] sm:$0xff]
      %v309 = vld [vmem:[%s293 + $0x50] sm:$0xff]
      %v310 = vld [vmem:[%s293 + $0x58] sm:$0xff]
      %v311 = vld [vmem:[%s293 + $0x60] sm:$0xff]
      %v312 = vld [vmem:[%s293 + $0x68] sm:$0xff]
      %v313 = vld [vmem:[%s293 + $0x70] sm:$0xff]
      %v314 = vld [vmem:[%s293 + $0x78] sm:$0xff]
      %v315 = vld [vmem:[%s293 + $0x80] sm:$0xff]
      %v316 = vld [vmem:[%s293 + $0x88] sm:$0xff]
      %v317 = vld [vmem:[%s293 + $0x90] sm:$0xff]
      %v318 = vld [vmem:[%s293 + $0x98] sm:$0xff]
      %v319 = vld [vmem:[%s293 + $0xa0] sm:$0xff]
      %v320 = vld [vmem:[%s293 + $0xa8] sm:$0xff]
      %v321 = vld [vmem:[%s293 + $0xb0] sm:$0xff]
      %v322 = vld [vmem:[%s293 + $0xb8] sm:$0xff]
      %v323 = vld [vmem:[%s293 + $0xc0] sm:$0xff]
      %v324 = vld [vmem:[%s293 + $0xc8] sm:$0xff]
      %v325 = vld [vmem:[%s293 + $0xd0] sm:$0xff]
      %v326 = vld [vmem:[%s293 + $0xd8] sm:$0xff]
      %v327 = vld [vmem:[%s293 + $0xe0] sm:$0xff]
      %v328 = vld [vmem:[%s293 + $0xe8] sm:$0xff]
      %v329 = vld [vmem:[%s293 + $0xf0] sm:$0xff]
      %v330 = vld [vmem:[%s293 + $0xf8] sm:$0xff]
      %v331 = vld [vmem:[%s2] sm:$0xf]
      %vm332 = vcmask 31744
      %v334 = vsel %vm332, %v299, 0
      %v337 = vsel %vm332, %v300, 0
      %v340 = vsel %vm332, %v301, 0
      %v343 = vsel %vm332, %v302, 0
      %v346 = vsel %vm332, %v303, 0
      %v349 = vsel %vm332, %v304, 0
      %v352 = vsel %vm332, %v305, 0
      %v355 = vsel %vm332, %v306, 0
      %v358 = vsel %vm332, %v307, 0
      %v361 = vsel %vm332, %v308, 0
      %v364 = vsel %vm332, %v309, 0
      %v367 = vsel %vm332, %v310, 0
      %v370 = vsel %vm332, %v311, 0
      %v373 = vsel %vm332, %v312, 0
      %v376 = vsel %vm332, %v313, 0
      %v379 = vsel %vm332, %v314, 0
      %v382 = vsel %vm332, %v315, 0
      %v385 = vsel %vm332, %v316, 0
      %v388 = vsel %vm332, %v317, 0
      %v391 = vsel %vm332, %v318, 0
      %v394 = vsel %vm332, %v319, 0
      %v397 = vsel %vm332, %v320, 0
      %v400 = vsel %vm332, %v321, 0
      %v403 = vsel %vm332, %v322, 0
      %v406 = vsel %vm332, %v323, 0
      %v409 = vsel %vm332, %v324, 0
      %v412 = vsel %vm332, %v325, 0
      %v415 = vsel %vm332, %v326, 0
      %v418 = vsel %vm332, %v327, 0
      %v421 = vsel %vm332, %v328, 0
      %v424 = vsel %vm332, %v329, 0
      %v427 = vsel %vm332, %v330, 0
      %vm429 = vcmask 1043456
      %v431 = vsel %vm429, %v331, 0
      %433 = vmatprep.subr.mxu0 0.0
      %434 = vmatpush1.msra.mxu0 %v431
      %435 = vmatprep.subr.mxu0 0.0
      %436 = vmatpush1.msra.mxu0 0.0
      %437 = vmatprep.subr.mxu0 0.0
      %438 = vmatpush1.msra.mxu0 0.0
      %439 = vmatprep.subr.mxu0 0.0
      %440 = vmatpush1.msra.mxu0 0.0
      %441 = vmatprep.subr.mxu0 0.0
      %442 = vmatpush1.msra.mxu0 0.0
      %443 = vmatprep.subr.mxu0 0.0
      %444 = vmatpush1.msra.mxu0 0.0
      %445 = vmatprep.subr.mxu0 0.0
      %446 = vmatpush1.msra.mxu0 0.0
      %447 = vmatprep.subr.mxu0 0.0
      %448 = vmatpush1.msra.mxu0 0.0
      %449 = vmatprep.subr.mxu0 0.0
      %450 = vmatpush1.msra.mxu0 0.0
      %451 = vmatprep.subr.mxu0 0.0
      %452 = vmatpush1.msra.mxu0 0.0
      %453 = vmatprep.subr.mxu0 0.0
      %454 = vmatpush1.msra.mxu0 0.0
      %455 = vmatprep.subr.mxu0 0.0
      %456 = vmatpush1.msra.mxu0 0.0
      %457 = vmatprep.subr.mxu0 0.0
      %458 = vmatpush1.msra.mxu0 0.0
      %459 = vmatprep.subr.mxu0 0.0
      %460 = vmatpush1.msra.mxu0 0.0
      %461 = vmatprep.subr.mxu0 0.0
      %462 = vmatpush1.msra.mxu0 0.0
      %463 = vmatprep.subr.mxu0 0.0
      %464 = vmatpush1.msra.mxu0 0.0
      %465 = vmatprep.subr.mxu0 0.0
      %466 = vmatpush1.msra.mxu0 0.0
      %467 = vmatprep.subr.mxu0 0.0
      %468 = vmatpush1.msra.mxu0 0.0
      %469 = vmatprep.subr.mxu0 0.0
      %470 = vmatpush1.msra.mxu0 0.0
      %471 = vmatprep.subr.mxu0 0.0
      %472 = vmatpush1.msra.mxu0 0.0
      %473 = vmatprep.subr.mxu0 0.0
      %474 = vmatpush1.msra.mxu0 0.0
      %475 = vmatprep.subr.mxu0 0.0
      %476 = vmatpush1.msra.mxu0 0.0
      %477 = vmatprep.subr.mxu0 0.0
      %478 = vmatpush1.msra.mxu0 0.0
      %479 = vmatprep.subr.mxu0 0.0
      %480 = vmatpush1.msra.mxu0 0.0
      %481 = vmatprep.subr.mxu0 0.0
      %482 = vmatpush1.msra.mxu0 0.0
      %483 = vmatprep.subr.mxu0 0.0
      %484 = vmatpush1.msra.mxu0 0.0
      %485 = vmatprep.subr.mxu0 0.0
      %486 = vmatpush1.msra.mxu0 0.0
      %487 = vmatprep.subr.mxu0 0.0
      %488 = vmatpush1.msra.mxu0 0.0
      %489 = vmatprep.subr.mxu0 0.0
      %490 = vmatpush1.msra.mxu0 0.0
      %491 = vmatprep.subr.mxu0 0.0
      %492 = vmatpush1.msra.mxu0 0.0
      %493 = vmatprep.subr.mxu0 0.0
      %494 = vmatpush1.msra.mxu0 0.0
      %495 = vmatprep.subr.mxu0 0.0
      %496 = vmatpush1.msra.mxu0 0.0
      %497 = vmatprep.mubr.f32.mxu0 0.0
      %498 = vmatmul.mubr.f32.gmra.mrb[0].mxu0 %v334
      %v499 = vpop.f32.mrb[0].mxu0
      %v500 = vadd.f32 0.0, %v499
      %v501 = vpop.f32.mrb[0].mxu0
      %502 = vmatprep.mubr.f32.mxu0 0.0
      %503 = vmatmul.mubr.f32.gmra.mrb[0].mxu0 %v337
      %v504 = vpop.f32.mrb[0].mxu0
      %v505 = vadd.f32 0.0, %v504
      %v506 = vpop.f32.mrb[0].mxu0
      %507 = vmatprep.mubr.f32.mxu0 0.0
      %508 = vmatmul.mubr.f32.gmra.mrb[0].mxu0 %v340
      %v509 = vpop.f32.mrb[0].mxu0
      %v510 = vadd.f32 0.0, %v509
      %v511 = vpop.f32.mrb[0].mxu0
      %512 = vmatprep.mubr.f32.mxu0 0.0
      %513 = vmatmul.mubr.f32.gmra.mrb[0].mxu0 %v343
      %v514 = vpop.f32.mrb[0].mxu0
      %v515 = vadd.f32 0.0, %v514
      %v516 = vpop.f32.mrb[0].mxu0
      %517 = vmatprep.mubr.f32.mxu0 0.0
      %518 = vmatmul.mubr.f32.gmra.mrb[0].mxu0 %v346
      %v519 = vpop.f32.mrb[0].mxu0
      %v520 = vadd.f32 0.0, %v519
      %v521 = vpop.f32.mrb[0].mxu0
      %522 = vmatprep.mubr.f32.mxu0 0.0
      %523 = vmatmul.mubr.f32.gmra.mrb[0].mxu0 %v349
      %v524 = vpop.f32.mrb[0].mxu0
      %v525 = vadd.f32 0.0, %v524
      %v526 = vpop.f32.mrb[0].mxu0
      %527 = vmatprep.mubr.f32.mxu0 0.0
      %528 = vmatmul.mubr.f32.gmra.mrb[0].mxu0 %v352
      %v529 = vpop.f32.mrb[0].mxu0
      %v530 = vadd.f32 0.0, %v529
      %v531 = vpop.f32.mrb[0].mxu0
      %532 = vmatprep.mubr.f32.mxu0 0.0
      %533 = vmatmul.mubr.f32.gmra.mrb[0].mxu0 %v355
      %v534 = vpop.f32.mrb[0].mxu0
      %v535 = vadd.f32 0.0, %v534
      %v536 = vpop.f32.mrb[0].mxu0
      %537 = vmatprep.mubr.f32.mxu0 0.0
      %538 = vmatmul.mubr.f32.gmra.mrb[0].mxu0 %v358
      %v539 = vpop.f32.mrb[0].mxu0
      %v540 = vadd.f32 0.0, %v539
      %v541 = vpop.f32.mrb[0].mxu0
      %542 = vmatprep.mubr.f32.mxu0 0.0
      %543 = vmatmul.mubr.f32.gmra.mrb[0].mxu0 %v361
      %v544 = vpop.f32.mrb[0].mxu0
      %v545 = vadd.f32 0.0, %v544
      %v546 = vpop.f32.mrb[0].mxu0
      %547 = vmatprep.mubr.f32.mxu0 0.0
      %548 = vmatmul.mubr.f32.gmra.mrb[0].mxu0 %v364
      %v549 = vpop.f32.mrb[0].mxu0
      %v550 = vadd.f32 0.0, %v549
      %v551 = vpop.f32.mrb[0].mxu0
      %552 = vmatprep.mubr.f32.mxu0 0.0
      %553 = vmatmul.mubr.f32.gmra.mrb[0].mxu0 %v367
      %v554 = vpop.f32.mrb[0].mxu0
      %v555 = vadd.f32 0.0, %v554
      %v556 = vpop.f32.mrb[0].mxu0
      %557 = vmatprep.mubr.f32.mxu0 0.0
      %558 = vmatmul.mubr.f32.gmra.mrb[0].mxu0 %v370
      %v559 = vpop.f32.mrb[0].mxu0
      %v560 = vadd.f32 0.0, %v559
      %v561 = vpop.f32.mrb[0].mxu0
      %562 = vmatprep.mubr.f32.mxu0 0.0
      %563 = vmatmul.mubr.f32.gmra.mrb[0].mxu0 %v373
      %v564 = vpop.f32.mrb[0].mxu0
      %v565 = vadd.f32 0.0, %v564
      %v566 = vpop.f32.mrb[0].mxu0
      %567 = vmatprep.mubr.f32.mxu0 0.0
      %568 = vmatmul.mubr.f32.gmra.mrb[0].mxu0 %v376
      %v569 = vpop.f32.mrb[0].mxu0
      %v570 = vadd.f32 0.0, %v569
      %v571 = vpop.f32.mrb[0].mxu0
      %572 = vmatprep.mubr.f32.mxu0 0.0
      %573 = vmatmul.mubr.f32.gmra.mrb[0].mxu0 %v379
      %v574 = vpop.f32.mrb[0].mxu0
      %v575 = vadd.f32 0.0, %v574
      %v576 = vpop.f32.mrb[0].mxu0
      %577 = vmatprep.mubr.f32.mxu0 0.0
      %578 = vmatmul.mubr.f32.gmra.mrb[0].mxu0 %v382
      %v579 = vpop.f32.mrb[0].mxu0
      %v580 = vadd.f32 0.0, %v579
      %v581 = vpop.f32.mrb[0].mxu0
      %582 = vmatprep.mubr.f32.mxu0 0.0
      %583 = vmatmul.mubr.f32.gmra.mrb[0].mxu0 %v385
      %v584 = vpop.f32.mrb[0].mxu0
      %v585 = vadd.f32 0.0, %v584
      %v586 = vpop.f32.mrb[0].mxu0
      %587 = vmatprep.mubr.f32.mxu0 0.0
      %588 = vmatmul.mubr.f32.gmra.mrb[0].mxu0 %v388
      %v589 = vpop.f32.mrb[0].mxu0
      %v590 = vadd.f32 0.0, %v589
      %v591 = vpop.f32.mrb[0].mxu0
      %592 = vmatprep.mubr.f32.mxu0 0.0
      %593 = vmatmul.mubr.f32.gmra.mrb[0].mxu0 %v391
      %v594 = vpop.f32.mrb[0].mxu0
      %v595 = vadd.f32 0.0, %v594
      %v596 = vpop.f32.mrb[0].mxu0
      %597 = vmatprep.mubr.f32.mxu0 0.0
      %598 = vmatmul.mubr.f32.gmra.mrb[0].mxu0 %v394
      %v599 = vpop.f32.mrb[0].mxu0
      %v600 = vadd.f32 0.0, %v599
      %v601 = vpop.f32.mrb[0].mxu0
      %602 = vmatprep.mubr.f32.mxu0 0.0
      %603 = vmatmul.mubr.f32.gmra.mrb[0].mxu0 %v397
      %v604 = vpop.f32.mrb[0].mxu0
      %v605 = vadd.f32 0.0, %v604
      %v606 = vpop.f32.mrb[0].mxu0
      %607 = vmatprep.mubr.f32.mxu0 0.0
      %608 = vmatmul.mubr.f32.gmra.mrb[0].mxu0 %v400
      %v609 = vpop.f32.mrb[0].mxu0
      %v610 = vadd.f32 0.0, %v609
      %v611 = vpop.f32.mrb[0].mxu0
      %612 = vmatprep.mubr.f32.mxu0 0.0
      %613 = vmatmul.mubr.f32.gmra.mrb[0].mxu0 %v403
      %v614 = vpop.f32.mrb[0].mxu0
      %v615 = vadd.f32 0.0, %v614
      %v616 = vpop.f32.mrb[0].mxu0
      %617 = vmatprep.mubr.f32.mxu0 0.0
      %618 = vmatmul.mubr.f32.gmra.mrb[0].mxu0 %v406
      %v619 = vpop.f32.mrb[0].mxu0
      %v620 = vadd.f32 0.0, %v619
      %v621 = vpop.f32.mrb[0].mxu0
      %622 = vmatprep.mubr.f32.mxu0 0.0
      %623 = vmatmul.mubr.f32.gmra.mrb[0].mxu0 %v409
      %v624 = vpop.f32.mrb[0].mxu0
      %v625 = vadd.f32 0.0, %v624
      %v626 = vpop.f32.mrb[0].mxu0
      %627 = vmatprep.mubr.f32.mxu0 0.0
      %628 = vmatmul.mubr.f32.gmra.mrb[0].mxu0 %v412
      %v629 = vpop.f32.mrb[0].mxu0
      %v630 = vadd.f32 0.0, %v629
      %v631 = vpop.f32.mrb[0].mxu0
      %632 = vmatprep.mubr.f32.mxu0 0.0
      %633 = vmatmul.mubr.f32.gmra.mrb[0].mxu0 %v415
      %v634 = vpop.f32.mrb[0].mxu0
      %v635 = vadd.f32 0.0, %v634
      %v636 = vpop.f32.mrb[0].mxu0
      %637 = vmatprep.mubr.f32.mxu0 0.0
      %638 = vmatmul.mubr.f32.gmra.mrb[0].mxu0 %v418
      %v639 = vpop.f32.mrb[0].mxu0
      %v640 = vadd.f32 0.0, %v639
      %v641 = vpop.f32.mrb[0].mxu0
      %642 = vmatprep.mubr.f32.mxu0 0.0
      %643 = vmatmul.mubr.f32.gmra.mrb[0].mxu0 %v421
      %v644 = vpop.f32.mrb[0].mxu0
      %v645 = vadd.f32 0.0, %v644
      %v646 = vpop.f32.mrb[0].mxu0
      %647 = vmatprep.mubr.f32.mxu0 0.0
      %648 = vmatmul.mubr.f32.gmra.mrb[0].mxu0 %v424
      %v649 = vpop.f32.mrb[0].mxu0
      %v650 = vadd.f32 0.0, %v649
      %v651 = vpop.f32.mrb[0].mxu0
      %652 = vmatprep.mubr.f32.mxu0 0.0
      %653 = vmatmul.mubr.f32.gmra.mrb[0].mxu0 %v427
      %v654 = vpop.f32.mrb[0].mxu0
      %v655 = vadd.f32 0.0, %v654
      %v656 = vpop.f32.mrb[0].mxu0
      %657 = vdwg.mxu0
      %v658 = vld [vmem:[%s288] sm:$0xff]
      %v659 = vld [vmem:[%s288 + $0x8] sm:$0xff]
      %v660 = vld [vmem:[%s288 + $0x10] sm:$0xff]
      %v661 = vld [vmem:[%s288 + $0x18] sm:$0xff]
      %v662 = vld [vmem:[%s288 + $0x20] sm:$0xff]
      %v663 = vld [vmem:[%s288 + $0x28] sm:$0xff]
      %v664 = vld [vmem:[%s288 + $0x30] sm:$0xff]
      %v665 = vld [vmem:[%s288 + $0x38] sm:$0xff]
      %v666 = vld [vmem:[%s288 + $0x40] sm:$0xff]
      %v667 = vld [vmem:[%s288 + $0x48] sm:$0xff]
      %v668 = vld [vmem:[%s288 + $0x50] sm:$0xff]
      %v669 = vld [vmem:[%s288 + $0x58] sm:$0xff]
      %v670 = vld [vmem:[%s288 + $0x60] sm:$0xff]
      %v671 = vld [vmem:[%s288 + $0x68] sm:$0xff]
      %v672 = vld [vmem:[%s288 + $0x70] sm:$0xff]
      %v673 = vld [vmem:[%s288 + $0x78] sm:$0xff]
      %v674 = vld [vmem:[%s288 + $0x80] sm:$0xff]
      %v675 = vld [vmem:[%s288 + $0x88] sm:$0xff]
      %v676 = vld [vmem:[%s288 + $0x90] sm:$0xff]
      %v677 = vld [vmem:[%s288 + $0x98] sm:$0xff]
      %v678 = vld [vmem:[%s288 + $0xa0] sm:$0xff]
      %v679 = vld [vmem:[%s288 + $0xa8] sm:$0xff]
      %v680 = vld [vmem:[%s288 + $0xb0] sm:$0xff]
      %v681 = vld [vmem:[%s288 + $0xb8] sm:$0xff]
      %v682 = vld [vmem:[%s288 + $0xc0] sm:$0xff]
      %v683 = vld [vmem:[%s288 + $0xc8] sm:$0xff]
      %v684 = vld [vmem:[%s288 + $0xd0] sm:$0xff]
      %v685 = vld [vmem:[%s288 + $0xd8] sm:$0xff]
      %v686 = vld [vmem:[%s288 + $0xe0] sm:$0xff]
      %v687 = vld [vmem:[%s288 + $0xe8] sm:$0xff]
      %v688 = vld [vmem:[%s288 + $0xf0] sm:$0xff]
      %v689 = vld [vmem:[%s288 + $0xf8] sm:$0xff]
      %v690 = vld [vmem:[%s3] sm:$0x1]
      %v692 = vlaneseq
      %v693 = vshrl.u32 %v692, 7
      %v694 = vsub.s32 0, %v693
      %v695 = vrot.slane %v690, %v694
      %v697 = vmul.f32 %v658, %v695
      %v698 = vmul.f32 %v659, %v695
      %v699 = vmul.f32 %v660, %v695
      %v700 = vmul.f32 %v661, %v695
      %v701 = vmul.f32 %v662, %v695
      %v702 = vmul.f32 %v663, %v695
      %v703 = vmul.f32 %v664, %v695
      %v704 = vmul.f32 %v665, %v695
      %v705 = vmul.f32 %v666, %v695
      %v706 = vmul.f32 %v667, %v695
      %v707 = vmul.f32 %v668, %v695
      %v708 = vmul.f32 %v669, %v695
      %v709 = vmul.f32 %v670, %v695
      %v710 = vmul.f32 %v671, %v695
      %v711 = vmul.f32 %v672, %v695
      %v712 = vmul.f32 %v673, %v695
      %v713 = vmul.f32 %v674, %v695
      %v714 = vmul.f32 %v675, %v695
      %v715 = vmul.f32 %v676, %v695
      %v716 = vmul.f32 %v677, %v695
      %v717 = vmul.f32 %v678, %v695
      %v718 = vmul.f32 %v679, %v695
      %v719 = vmul.f32 %v680, %v695
      %v720 = vmul.f32 %v681, %v695
      %v721 = vmul.f32 %v682, %v695
      %v722 = vmul.f32 %v683, %v695
      %v723 = vmul.f32 %v684, %v695
      %v724 = vmul.f32 %v685, %v695
      %v725 = vmul.f32 %v686, %v695
      %v726 = vmul.f32 %v687, %v695
      %v727 = vmul.f32 %v688, %v695
      %v728 = vmul.f32 %v689, %v695
      %v729 = vld [vmem:[%s4] sm:$0x1]
      %v731 = vlaneseq
      %v732 = vshrl.u32 %v731, 7
      %v733 = vsub.s32 0, %v732
      %v734 = vrot.slane %v729, %v733
      %v736 = vadd.f32 %v697, %v734
      %v737 = vadd.f32 %v698, %v734
      %v738 = vadd.f32 %v699, %v734
      %v739 = vadd.f32 %v700, %v734
      %v740 = vadd.f32 %v701, %v734
      %v741 = vadd.f32 %v702, %v734
      %v742 = vadd.f32 %v703, %v734
      %v743 = vadd.f32 %v704, %v734
      %v744 = vadd.f32 %v705, %v734
      %v745 = vadd.f32 %v706, %v734
      %v746 = vadd.f32 %v707, %v734
      %v747 = vadd.f32 %v708, %v734
      %v748 = vadd.f32 %v709, %v734
      %v749 = vadd.f32 %v710, %v734
      %v750 = vadd.f32 %v711, %v734
      %v751 = vadd.f32 %v712, %v734
      %v752 = vadd.f32 %v713, %v734
      %v753 = vadd.f32 %v714, %v734
      %v754 = vadd.f32 %v715, %v734
      %v755 = vadd.f32 %v716, %v734
      %v756 = vadd.f32 %v717, %v734
      %v757 = vadd.f32 %v718, %v734
      %v758 = vadd.f32 %v719, %v734
      %v759 = vadd.f32 %v720, %v734
      %v760 = vadd.f32 %v721, %v734
      %v761 = vadd.f32 %v722, %v734
      %v762 = vadd.f32 %v723, %v734
      %v763 = vadd.f32 %v724, %v734
      %v764 = vadd.f32 %v725, %v734
      %v765 = vadd.f32 %v726, %v734
      %v766 = vadd.f32 %v727, %v734
      %v767 = vadd.f32 %v728, %v734
      %v768 = vld [vmem:[%s5] sm:$0x1]
      %v770 = vlaneseq
      %v771 = vshrl.u32 %v770, 7
      %v772 = vsub.s32 0, %v771
      %v773 = vrot.slane %v768, %v772
      %v775 = vmul.f32 %v500, %v773
      %v776 = vmul.f32 %v505, %v773
      %v777 = vmul.f32 %v510, %v773
      %v778 = vmul.f32 %v515, %v773
      %v779 = vmul.f32 %v520, %v773
      %v780 = vmul.f32 %v525, %v773
      %v781 = vmul.f32 %v530, %v773
      %v782 = vmul.f32 %v535, %v773
      %v783 = vmul.f32 %v540, %v773
      %v784 = vmul.f32 %v545, %v773
      %v785 = vmul.f32 %v550, %v773
      %v786 = vmul.f32 %v555, %v773
      %v787 = vmul.f32 %v560, %v773
      %v788 = vmul.f32 %v565, %v773
      %v789 = vmul.f32 %v570, %v773
      %v790 = vmul.f32 %v575, %v773
      %v791 = vmul.f32 %v580, %v773
      %v792 = vmul.f32 %v585, %v773
      %v793 = vmul.f32 %v590, %v773
      %v794 = vmul.f32 %v595, %v773
      %v795 = vmul.f32 %v600, %v773
      %v796 = vmul.f32 %v605, %v773
      %v797 = vmul.f32 %v610, %v773
      %v798 = vmul.f32 %v615, %v773
      %v799 = vmul.f32 %v620, %v773
      %v800 = vmul.f32 %v625, %v773
      %v801 = vmul.f32 %v630, %v773
      %v802 = vmul.f32 %v635, %v773
      %v803 = vmul.f32 %v640, %v773
      %v804 = vmul.f32 %v645, %v773
      %v805 = vmul.f32 %v650, %v773
      %v806 = vmul.f32 %v655, %v773
      %v807 = vadd.f32 %v736, %v775
      %v808 = vadd.f32 %v737, %v776
      %v809 = vadd.f32 %v738, %v777
      %v810 = vadd.f32 %v739, %v778
      %v811 = vadd.f32 %v740, %v779
      %v812 = vadd.f32 %v741, %v780
      %v813 = vadd.f32 %v742, %v781
      %v814 = vadd.f32 %v743, %v782
      %v815 = vadd.f32 %v744, %v783
      %v816 = vadd.f32 %v745, %v784
      %v817 = vadd.f32 %v746, %v785
      %v818 = vadd.f32 %v747, %v786
      %v819 = vadd.f32 %v748, %v787
      %v820 = vadd.f32 %v749, %v788
      %v821 = vadd.f32 %v750, %v789
      %v822 = vadd.f32 %v751, %v790
      %v823 = vadd.f32 %v752, %v791
      %v824 = vadd.f32 %v753, %v792
      %v825 = vadd.f32 %v754, %v793
      %v826 = vadd.f32 %v755, %v794
      %v827 = vadd.f32 %v756, %v795
      %v828 = vadd.f32 %v757, %v796
      %v829 = vadd.f32 %v758, %v797
      %v830 = vadd.f32 %v759, %v798
      %v831 = vadd.f32 %v760, %v799
      %v832 = vadd.f32 %v761, %v800
      %v833 = vadd.f32 %v762, %v801
      %v834 = vadd.f32 %v763, %v802
      %v835 = vadd.f32 %v764, %v803
      %v836 = vadd.f32 %v765, %v804
      %v837 = vadd.f32 %v766, %v805
      %v838 = vadd.f32 %v767, %v806
      %v839 = vld [vmem:[%s6] sm:$0x1]
      %v841 = vlaneseq
      %v842 = vshrl.u32 %v841, 7
      %v843 = vsub.s32 0, %v842
      %v844 = vrot.slane %v839, %v843
      %v846 = vadd.f32 %v807, %v844
      %v847 = vadd.f32 %v808, %v844
      %v848 = vadd.f32 %v809, %v844
      %v849 = vadd.f32 %v810, %v844
      %v850 = vadd.f32 %v811, %v844
      %v851 = vadd.f32 %v812, %v844
      %v852 = vadd.f32 %v813, %v844
      %v853 = vadd.f32 %v814, %v844
      %v854 = vadd.f32 %v815, %v844
      %v855 = vadd.f32 %v816, %v844
      %v856 = vadd.f32 %v817, %v844
      %v857 = vadd.f32 %v818, %v844
      %v858 = vadd.f32 %v819, %v844
      %v859 = vadd.f32 %v820, %v844
      %v860 = vadd.f32 %v821, %v844
      %v861 = vadd.f32 %v822, %v844
      %v862 = vadd.f32 %v823, %v844
      %v863 = vadd.f32 %v824, %v844
      %v864 = vadd.f32 %v825, %v844
      %v865 = vadd.f32 %v826, %v844
      %v866 = vadd.f32 %v827, %v844
      %v867 = vadd.f32 %v828, %v844
      %v868 = vadd.f32 %v829, %v844
      %v869 = vadd.f32 %v830, %v844
      %v870 = vadd.f32 %v831, %v844
      %v871 = vadd.f32 %v832, %v844
      %v872 = vadd.f32 %v833, %v844
      %v873 = vadd.f32 %v834, %v844
      %v874 = vadd.f32 %v835, %v844
      %v875 = vadd.f32 %v836, %v844
      %v876 = vadd.f32 %v837, %v844
      %v877 = vadd.f32 %v838, %v844
      %v878 = vmax.f32 %v846, 0.0
      %v879 = vmax.f32 %v847, 0.0
      %v880 = vmax.f32 %v848, 0.0
      %v881 = vmax.f32 %v849, 0.0
      %v882 = vmax.f32 %v850, 0.0
      %v883 = vmax.f32 %v851, 0.0
      %v884 = vmax.f32 %v852, 0.0
      %v885 = vmax.f32 %v853, 0.0
      %v886 = vmax.f32 %v854, 0.0
      %v887 = vmax.f32 %v855, 0.0
      %v888 = vmax.f32 %v856, 0.0
      %v889 = vmax.f32 %v857, 0.0
      %v890 = vmax.f32 %v858, 0.0
      %v891 = vmax.f32 %v859, 0.0
      %v892 = vmax.f32 %v860, 0.0
      %v893 = vmax.f32 %v861, 0.0
      %v894 = vmax.f32 %v862, 0.0
      %v895 = vmax.f32 %v863, 0.0
      %v896 = vmax.f32 %v864, 0.0
      %v897 = vmax.f32 %v865, 0.0
      %v898 = vmax.f32 %v866, 0.0
      %v899 = vmax.f32 %v867, 0.0
      %v900 = vmax.f32 %v868, 0.0
      %v901 = vmax.f32 %v869, 0.0
      %v902 = vmax.f32 %v870, 0.0
      %v903 = vmax.f32 %v871, 0.0
      %v904 = vmax.f32 %v872, 0.0
      %v905 = vmax.f32 %v873, 0.0
      %v906 = vmax.f32 %v874, 0.0
      %v907 = vmax.f32 %v875, 0.0
      %v908 = vmax.f32 %v876, 0.0
      %v909 = vmax.f32 %v877, 0.0
      %vm910 = vcmask 64512
      %911 = vst.msk [vmem:[%s298] sm:$0xff] %vm910, %v878
      %912 = vst.msk [vmem:[%s298 + $0x8] sm:$0xff] %vm910, %v879
      %913 = vst.msk [vmem:[%s298 + $0x10] sm:$0xff] %vm910, %v880
      %914 = vst.msk [vmem:[%s298 + $0x18] sm:$0xff] %vm910, %v881
      %915 = vst.msk [vmem:[%s298 + $0x20] sm:$0xff] %vm910, %v882
      %916 = vst.msk [vmem:[%s298 + $0x28] sm:$0xff] %vm910, %v883
      %917 = vst.msk [vmem:[%s298 + $0x30] sm:$0xff] %vm910, %v884
      %918 = vst.msk [vmem:[%s298 + $0x38] sm:$0xff] %vm910, %v885
      %919 = vst.msk [vmem:[%s298 + $0x40] sm:$0xff] %vm910, %v886
      %920 = vst.msk [vmem:[%s298 + $0x48] sm:$0xff] %vm910, %v887
      %921 = vst.msk [vmem:[%s298 + $0x50] sm:$0xff] %vm910, %v888
      %922 = vst.msk [vmem:[%s298 + $0x58] sm:$0xff] %vm910, %v889
      %923 = vst.msk [vmem:[%s298 + $0x60] sm:$0xff] %vm910, %v890
      %924 = vst.msk [vmem:[%s298 + $0x68] sm:$0xff] %vm910, %v891
      %925 = vst.msk [vmem:[%s298 + $0x70] sm:$0xff] %vm910, %v892
      %926 = vst.msk [vmem:[%s298 + $0x78] sm:$0xff] %vm910, %v893
      %927 = vst.msk [vmem:[%s298 + $0x80] sm:$0xff] %vm910, %v894
      %928 = vst.msk [vmem:[%s298 + $0x88] sm:$0xff] %vm910, %v895
      %929 = vst.msk [vmem:[%s298 + $0x90] sm:$0xff] %vm910, %v896
      %930 = vst.msk [vmem:[%s298 + $0x98] sm:$0xff] %vm910, %v897
      %931 = vst.msk [vmem:[%s298 + $0xa0] sm:$0xff] %vm910, %v898
      %932 = vst.msk [vmem:[%s298 + $0xa8] sm:$0xff] %vm910, %v899
      %933 = vst.msk [vmem:[%s298 + $0xb0] sm:$0xff] %vm910, %v900
      %934 = vst.msk [vmem:[%s298 + $0xb8] sm:$0xff] %vm910, %v901
      %935 = vst.msk [vmem:[%s298 + $0xc0] sm:$0xff] %vm910, %v902
      %936 = vst.msk [vmem:[%s298 + $0xc8] sm:$0xff] %vm910, %v903
      %937 = vst.msk [vmem:[%s298 + $0xd0] sm:$0xff] %vm910, %v904
      %938 = vst.msk [vmem:[%s298 + $0xd8] sm:$0xff] %vm910, %v905
      %939 = vst.msk [vmem:[%s298 + $0xe0] sm:$0xff] %vm910, %v906
      %940 = vst.msk [vmem:[%s298 + $0xe8] sm:$0xff] %vm910, %v907
      %941 = vst.msk [vmem:[%s298 + $0xf0] sm:$0xff] %vm910, %v908
      %942 = vst.msk [vmem:[%s298 + $0xf8] sm:$0xff] %vm910, %v909
      %p943 = scmp.lt.s32.totalorder %s18, 1
      %s944 = scalar_select %p943, %s18, 1
      %s945 = smul.addr %s944, 32
      %s946 = smul.addr %s945, 8
      %s947 = scalar_lea.vmem %s7, %s946
      // Predicated region
      $region49: #{basic_block.5} parent=47 // pred_check
        %p948 = pneg %p193
      $region50: #{basic_block.5} parent=47 // pred_check_branch
        %950 = sbr.rel (%p948) target = $region52
      $region51: #{basic_block.5} parent=47 // pred_region
        _
      $region52: #{basic_block.5} parent=47 // pred_fallthru
        _
    $region48: #{basic_block.5} parent=5 // pred_fallthru
      _
    %p951 = scmp.le.s32.totalorder 2, %s13
    // Predicated region
    $region53: #{basic_block.5} parent=5 // pred_check
      %p952 = pneg %p951
    $region54: #{basic_block.5} parent=5 // pred_check_branch
      %954 = sbr.rel (%p952) target = $region56
    $region55: #{basic_block.5} parent=5 // pred_region
      %s955 = ssub.s32 %s13, 2
      // Predicated region
      $region57: #{basic_block.5} parent=55 // pred_check
        %p956 = pneg %p199
      $region58: #{basic_block.5} parent=55 // pred_check_branch
        %958 = sbr.rel (%p956) target = $region60
      $region59: #{basic_block.5} parent=55 // pred_region
        %p959 = scmp.lt.s32.totalorder %s19, 1
        %s960 = scalar_select %p959, %s19, 1
        %s961 = smul.addr %s960, 32
        %s962 = smul.addr %s961, 8
        %s963 = scalar_lea.vmem %s7, %s962
      $region60: #{basic_block.5} parent=55 // pred_fallthru
        _
    $region56: #{basic_block.5} parent=5 // pred_fallthru
      _
  $region6: #{basic_block.5} parent=0 // loop_footer
    %s17 = sadd.s32 1, %s13
  $region7: #{basic_block.5} parent=0 // loop_footer_branch
    %12 = sbr.rel target = $region3
  $region8: #{basic_block.5} parent=0 // loop_exit
    _

// kernel: basic_block.4
$region0: #{basic_block.4}
  #allocation0 [shape = 'u32[]', space=smem, size = 0x4, offset = 0x4, fixed_abs, tag = 'smem constant byte address 0x4 - core index']
  #allocation1 [shape = 'u32[144,128]{1,0:T(1,128)}', space=vmem, size = 0x12000, scoped, tag = 'internal scratch']
  #allocation2 [shape = 'f32[18,18,8]{2,1,0:T(8,128)}', space=vmem, size = 0x36000, scoped, tag = 'scratch operand']
  %s0 = inlined_call_operand.vmem [shape: f32[2,256,8], index: 0, kind: input, shape index: {}]
  %s1 = inlined_call_operand.vmem [shape: f32[1,8], index: 1, kind: input, shape index: {}]
  %s2 = inlined_call_operand.vmem [shape: f32[1,8], index: 2, kind: input, shape index: {}]
  %s3 = inlined_call_operand.vmem [shape: f32[9,8,8], index: 3, kind: input, shape index: {}]
  %s4 = inlined_call_operand.vmem [shape: f32[2,256,8], index: 4, kind: output, shape index: {0}]
  %s5 = inlined_call_operand.vmem [shape: f32[2,8], index: 5, kind: output, shape index: {1}]
  %6 = xla_tuple %s4, %s5
  %s7 = sld [smem:[#allocation0]]
  $region61: #{basic_block.4} parent=0
    _
  %s9 = ssub.s32 1, %s7
  %s10 = scalar_select 0, %s9, %s7
  loop: start=0, step=1, limit=4
  $region2: #{basic_block.4} parent=0 // loop_pre_header
    _
  $region3: #{basic_block.4} parent=0 // loop_header
    %s12 = sphi 0, %s16
    %p13 = scmp.ge.s32.totalorder %s12, 4
    %s22 = sphi 0, %s24
    %s25 = sphi 0, %s22
    %s26 = sphi 0, %s25
    %s42 = sphi 0, %s26
    %s46 = sphi 0, %s46
    %s48 = sphi 0, %s46
    %s49 = sphi 0, %s48
    %s63 = sphi 0, %s49
    %s67 = sphi 0, %s67
    %s69 = sphi 0, %s67
    %s70 = sphi 0, %s69
    %s84 = sphi 0, %s70
    %s88 = sphi 0, %s88
    %s90 = sphi 0, %s88
    %s91 = sphi 0, %s90
    %s105 = sphi 0, %s91
    %s111 = sphi 0, %s113
    %s114 = sphi 0, %s111
    %s115 = sphi 0, %s114
    %s131 = sphi 0, %s115
    %s135 = sphi 0, %s135
    %s137 = sphi 0, %s135
    %s138 = sphi 0, %s137
    %s152 = sphi 0, %s138
  $region4: #{basic_block.4} parent=0 // loop_header_branch
    %15 = sbr.rel (%p13) target = $region8
  $region5: #{basic_block.4} parent=0 // loop_body
    %s17 = ssub.s32 %s12, 1
    %s18 = ssub.s32 %s12, 2
    %s19 = sadd.s32 %s12, 1
    %s20 = ssub.s32 %s12, %s19
    %p21 = scmp.eq.s32.totalorder %s20, 0
    %s23 = sadd.s32 %s22, 1
    %s24 = scalar_select %p21, %s22, %s23
    %p27 = pneg %p21
    %p28 = scmp.eq.s32.totalorder %s12, 1
    %p29 = por %p27, %p28
    %p30 = scmp.ne.s32.totalorder %s22, %s25
    %p31 = scmp.eq.s32.totalorder %s12, 0
    %p32 = por %p30, %p31
    %p33 = scmp.ne.s32.totalorder %s22, %s25
    %p34 = scmp.eq.s32.totalorder %s17, 1
    %p35 = por %p33, %p34
    %p36 = scmp.ne.s32.totalorder %s25, %s26
    %p37 = scmp.eq.s32.totalorder %s17, 0
    %p38 = por %p36, %p37
    %p39 = scmp.ne.s32.totalorder %s25, %s26
    %p40 = scmp.eq.s32.totalorder %s18, 1
    %p41 = por %p39, %p40
    %p43 = scmp.ne.s32.totalorder %s26, %s42
    %p44 = scmp.eq.s32.totalorder %s18, 0
    %p45 = por %p43, %p44
    %s47 = sadd.s32 %s46, 1
    %p50 = scmp.eq.s32.totalorder %s12, 1
    %p51 = scmp.ne.s32.totalorder %s46, %s48
    %p52 = scmp.eq.s32.totalorder %s12, 0
    %p53 = por %p51, %p52
    %p54 = scmp.ne.s32.totalorder %s46, %s48
    %p55 = scmp.eq.s32.totalorder %s17, 1
    %p56 = por %p54, %p55
    %p57 = scmp.ne.s32.totalorder %s48, %s49
    %p58 = scmp.eq.s32.totalorder %s17, 0
    %p59 = por %p57, %p58
    %p60 = scmp.ne.s32.totalorder %s48, %s49
    %p61 = scmp.eq.s32.totalorder %s18, 1
    %p62 = por %p60, %p61
    %p64 = scmp.ne.s32.totalorder %s49, %s63
    %p65 = scmp.eq.s32.totalorder %s18, 0
    %p66 = por %p64, %p65
    %s68 = sadd.s32 %s67, 1
    %p71 = scmp.eq.s32.totalorder %s12, 1
    %p72 = scmp.ne.s32.totalorder %s67, %s69
    %p73 = scmp.eq.s32.totalorder %s12, 0
    %p74 = por %p72, %p73
    %p75 = scmp.ne.s32.totalorder %s67, %s69
    %p76 = scmp.eq.s32.totalorder %s17, 1
    %p77 = por %p75, %p76
    %p78 = scmp.ne.s32.totalorder %s69, %s70
    %p79 = scmp.eq.s32.totalorder %s17, 0
    %p80 = por %p78, %p79
    %p81 = scmp.ne.s32.totalorder %s69, %s70
    %p82 = scmp.eq.s32.totalorder %s18, 1
    %p83 = por %p81, %p82
    %p85 = scmp.ne.s32.totalorder %s70, %s84
    %p86 = scmp.eq.s32.totalorder %s18, 0
    %p87 = por %p85, %p86
    %s89 = sadd.s32 %s88, 1
    %p92 = scmp.eq.s32.totalorder %s12, 1
    %p93 = scmp.ne.s32.totalorder %s88, %s90
    %p94 = scmp.eq.s32.totalorder %s12, 0
    %p95 = por %p93, %p94
    %p96 = scmp.ne.s32.totalorder %s88, %s90
    %p97 = scmp.eq.s32.totalorder %s17, 1
    %p98 = por %p96, %p97
    %p99 = scmp.ne.s32.totalorder %s90, %s91
    %p100 = scmp.eq.s32.totalorder %s17, 0
    %p101 = por %p99, %p100
    %p102 = scmp.ne.s32.totalorder %s90, %s91
    %p103 = scmp.eq.s32.totalorder %s18, 1
    %p104 = por %p102, %p103
    %p106 = scmp.ne.s32.totalorder %s91, %s105
    %p107 = scmp.eq.s32.totalorder %s18, 0
    %p108 = por %p106, %p107
    %s109 = ssub.s32 %s12, %s19
    %p110 = scmp.eq.s32.totalorder %s109, 0
    %s112 = sadd.s32 %s111, 1
    %s113 = scalar_select %p110, %s111, %s112
    %p116 = pneg %p110
    %p117 = scmp.eq.s32.totalorder %s12, 1
    %p118 = por %p116, %p117
    %p119 = scmp.ne.s32.totalorder %s111, %s114
    %p120 = scmp.eq.s32.totalorder %s12, 0
    %p121 = por %p119, %p120
    %p122 = scmp.ne.s32.totalorder %s111, %s114
    %p123 = scmp.eq.s32.totalorder %s17, 1
    %p124 = por %p122, %p123
    %p125 = scmp.ne.s32.totalorder %s114, %s115
    %p126 = scmp.eq.s32.totalorder %s17, 0
    %p127 = por %p125, %p126
    %p128 = scmp.ne.s32.totalorder %s114, %s115
    %p129 = scmp.eq.s32.totalorder %s18, 1
    %p130 = por %p128, %p129
    %p132 = scmp.ne.s32.totalorder %s115, %s131
    %p133 = scmp.eq.s32.totalorder %s18, 0
    %p134 = por %p132, %p133
    %s136 = sadd.s32 %s135, 1
    %p139 = scmp.eq.s32.totalorder %s12, 1
    %p140 = scmp.ne.s32.totalorder %s135, %s137
    %p141 = scmp.eq.s32.totalorder %s12, 0
    %p142 = por %p140, %p141
    %p143 = scmp.ne.s32.totalorder %s135, %s137
    %p144 = scmp.eq.s32.totalorder %s17, 1
    %p145 = por %p143, %p144
    %p146 = scmp.ne.s32.totalorder %s137, %s138
    %p147 = scmp.eq.s32.totalorder %s17, 0
    %p148 = por %p146, %p147
    %p149 = scmp.ne.s32.totalorder %s137, %s138
    %p150 = scmp.eq.s32.totalorder %s18, 1
    %p151 = por %p149, %p150
    %p153 = scmp.ne.s32.totalorder %s138, %s152
    %p154 = scmp.eq.s32.totalorder %s18, 0
    %p155 = por %p153, %p154
    %p156 = scmp.le.s32.totalorder 1, %s12
    %p157 = scmp.lt.s32.totalorder %s12, 3
    %p158 = pnand %p156, %p157
    %p159 = pneg %p158
    // Predicated region
    $region9: #{basic_block.4} parent=5 // pred_check
      _
    $region10: #{basic_block.4} parent=5 // pred_check_branch
      %161 = sbr.rel (%p158) target = $region12
    $region11: #{basic_block.4} parent=5 // pred_region
      %s162 = ssub.s32 %s12, 1
      // Predicated region
      $region13: #{basic_block.4} parent=11 // pred_check
        %p163 = pneg %p59
      $region14: #{basic_block.4} parent=11 // pred_check_branch
        %165 = sbr.rel (%p163) target = $region16
      $region15: #{basic_block.4} parent=11 // pred_region
        _
      $region16: #{basic_block.4} parent=11 // pred_fallthru
        _
      // Predicated region
      $region17: #{basic_block.4} parent=11 // pred_check
        %p166 = pneg %p80
      $region18: #{basic_block.4} parent=11 // pred_check_branch
        %168 = sbr.rel (%p166) target = $region20
      $region19: #{basic_block.4} parent=11 // pred_region
        _
      $region20: #{basic_block.4} parent=11 // pred_fallthru
        _
      // Predicated region
      $region21: #{basic_block.4} parent=11 // pred_check
        %p169 = pneg %p101
      $region22: #{basic_block.4} parent=11 // pred_check_branch
        %171 = sbr.rel (%p169) target = $region24
      $region23: #{basic_block.4} parent=11 // pred_region
        _
      $region24: #{basic_block.4} parent=11 // pred_fallthru
        _
    $region12: #{basic_block.4} parent=5 // pred_fallthru
      _
    %p172 = scmp.lt.s32.totalorder %s12, 2
    // Predicated region
    $region25: #{basic_block.4} parent=5 // pred_check
      %p173 = pneg %p172
    $region26: #{basic_block.4} parent=5 // pred_check_branch
      %175 = sbr.rel (%p173) target = $region28
    $region27: #{basic_block.4} parent=5 // pred_region
      // Predicated region
      $region29: #{basic_block.4} parent=27 // pred_check
        %p176 = pneg %p32
      $region30: #{basic_block.4} parent=27 // pred_check_branch
        %178 = sbr.rel (%p176) target = $region32
      $region31: #{basic_block.4} parent=27 // pred_region
        %p179 = scmp.lt.s32.totalorder %s12, 1
        %s180 = scalar_select %p179, %s12, 1
        %s181 = smul.addr %s180, 32
        %s182 = smul.addr %s181, 8
        %s183 = scalar_lea.vmem %s0, %s182
      $region32: #{basic_block.4} parent=27 // pred_fallthru
        _
    $region28: #{basic_block.4} parent=5 // pred_fallthru
      _
    %p184 = scmp.le.s32.totalorder 1, %s12
    %p185 = scmp.lt.s32.totalorder %s12, 3
    %p186 = pnand %p184, %p185
    %p187 = pneg %p186
    // Predicated region
    $region33: #{basic_block.4} parent=5 // pred_check
      _
    $region34: #{basic_block.4} parent=5 // pred_check_branch
      %189 = sbr.rel (%p186) target = $region36
    $region35: #{basic_block.4} parent=5 // pred_region
      %s190 = ssub.s32 %s12, 1
      %p191 = scmp.lt.s32.totalorder %s17, 1
      %s192 = scalar_select %p191, %s17, 1
      %s193 = smul.addr %s192, 32
      %s194 = smul.addr %s193, 8
      %s195 = scalar_lea.vmem %s0, %s194
      %p196 = pneg %p38
      %p197 = pneg %p35
      %p198 = pneg %p59
      %p199 = pneg %p56
      %p200 = pneg %p80
      %p201 = pneg %p77
      %p202 = pneg %p101
      %p203 = pneg %p98
      %p204 = pneg %p127
      %p205 = pneg %p124
      %p206 = scmp.lt.s32.totalorder %s17, 1
      %s207 = scalar_select %p206, %s17, 1
      %s208 = smul.addr %s207, 32
      %s209 = smul.addr %s208, 8
      %s210 = scalar_lea.vmem %s4, %s209
      %p211 = pneg %p148
      %p212 = pneg %p145
      %p213 = scmp.lt.s32.totalorder %s17, 1
      %s214 = scalar_select %p213, %s17, 1
      %s215 = smul.addr %s214, 32
      %s216 = smul.addr %s215, 8
      %s217 = scalar_lea.vmem %s0, %s216
      %p218 = scmp.lt.s32.totalorder %s17, 1
      %s219 = scalar_select %p218, %s17, 1
      %s220 = smul.addr %s219, 32
      %s221 = smul.addr %s220, 8
      %s222 = scalar_lea.vmem %s4, %s221
      %p223 = scmp.eq.s32.totalorder %s17, 0
      // Predicated region
      $region37: #{basic_block.4} parent=35 // pred_check
        %p224 = pneg %p223
      $region38: #{basic_block.4} parent=35 // pred_check_branch
        %226 = sbr.rel (%p224) target = $region40
      $region39: #{basic_block.4} parent=35 // pred_region
        %vm227 = vcmask 64512
        %228 = vst.msk [vmem:[#allocation2] sm:$0xff] %vm227, 0.0
        %229 = vst.msk [vmem:[#allocation2 + $0x8] sm:$0xff] %vm227, 0.0
        %vm230 = vcmask 58368
        %231 = vst.msk [vmem:[#allocation2 + $0x10] sm:$0x3] %vm230, 0.0
        %232 = vst.msk [vmem:[#allocation2 + $0x18] sm:$0xff] %vm227, 0.0
        %233 = vst.msk [vmem:[#allocation2 + $0x20] sm:$0xff] %vm227, 0.0
        %234 = vst.msk [vmem:[#allocation2 + $0x28] sm:$0x3] %vm230, 0.0
        %235 = vst.msk [vmem:[#allocation2 + $0x30] sm:$0xff] %vm227, 0.0
        %236 = vst.msk [vmem:[#allocation2 + $0x38] sm:$0xff] %vm227, 0.0
        %237 = vst.msk [vmem:[#allocation2 + $0x40] sm:$0x3] %vm230, 0.0
        %238 = vst.msk [vmem:[#allocation2 + $0x48] sm:$0xff] %vm227, 0.0
        %239 = vst.msk [vmem:[#allocation2 + $0x50] sm:$0xff] %vm227, 0.0
        %240 = vst.msk [vmem:[#allocation2 + $0x58] sm:$0x3] %vm230, 0.0
        %241 = vst.msk [vmem:[#allocation2 + $0x60] sm:$0xff] %vm227, 0.0
        %242 = vst.msk [vmem:[#allocation2 + $0x68] sm:$0xff] %vm227, 0.0
        %243 = vst.msk [vmem:[#allocation2 + $0x70] sm:$0x3] %vm230, 0.0
        %244 = vst.msk [vmem:[#allocation2 + $0x78] sm:$0xff] %vm227, 0.0
        %245 = vst.msk [vmem:[#allocation2 + $0x80] sm:$0xff] %vm227, 0.0
        %246 = vst.msk [vmem:[#allocation2 + $0x88] sm:$0x3] %vm230, 0.0
        %247 = vst.msk [vmem:[#allocation2 + $0x90] sm:$0xff] %vm227, 0.0
        %248 = vst.msk [vmem:[#allocation2 + $0x98] sm:$0xff] %vm227, 0.0
        %249 = vst.msk [vmem:[#allocation2 + $0xa0] sm:$0x3] %vm230, 0.0
        %250 = vst.msk [vmem:[#allocation2 + $0xa8] sm:$0xff] %vm227, 0.0
        %251 = vst.msk [vmem:[#allocation2 + $0xb0] sm:$0xff] %vm227, 0.0
        %252 = vst.msk [vmem:[#allocation2 + $0xb8] sm:$0x3] %vm230, 0.0
        %253 = vst.msk [vmem:[#allocation2 + $0xc0] sm:$0xff] %vm227, 0.0
        %254 = vst.msk [vmem:[#allocation2 + $0xc8] sm:$0xff] %vm227, 0.0
        %255 = vst.msk [vmem:[#allocation2 + $0xd0] sm:$0x3] %vm230, 0.0
        %256 = vst.msk [vmem:[#allocation2 + $0xd8] sm:$0xff] %vm227, 0.0
        %257 = vst.msk [vmem:[#allocation2 + $0xe0] sm:$0xff] %vm227, 0.0
        %258 = vst.msk [vmem:[#allocation2 + $0xe8] sm:$0x3] %vm230, 0.0
        %259 = vst.msk [vmem:[#allocation2 + $0xf0] sm:$0xff] %vm227, 0.0
        %260 = vst.msk [vmem:[#allocation2 + $0xf8] sm:$0xff] %vm227, 0.0
        %261 = vst.msk [vmem:[#allocation2 + $0x100] sm:$0x3] %vm230, 0.0
        %262 = vst.msk [vmem:[#allocation2 + $0x108] sm:$0xff] %vm227, 0.0
        %263 = vst.msk [vmem:[#allocation2 + $0x110] sm:$0xff] %vm227, 0.0
        %264 = vst.msk [vmem:[#allocation2 + $0x118] sm:$0x3] %vm230, 0.0
        %265 = vst.msk [vmem:[#allocation2 + $0x120] sm:$0xff] %vm227, 0.0
        %266 = vst.msk [vmem:[#allocation2 + $0x128] sm:$0xff] %vm227, 0.0
        %267 = vst.msk [vmem:[#allocation2 + $0x130] sm:$0x3] %vm230, 0.0
        %268 = vst.msk [vmem:[#allocation2 + $0x138] sm:$0xff] %vm227, 0.0
        %269 = vst.msk [vmem:[#allocation2 + $0x140] sm:$0xff] %vm227, 0.0
        %270 = vst.msk [vmem:[#allocation2 + $0x148] sm:$0x3] %vm230, 0.0
        %271 = vst.msk [vmem:[#allocation2 + $0x150] sm:$0xff] %vm227, 0.0
        %272 = vst.msk [vmem:[#allocation2 + $0x158] sm:$0xff] %vm227, 0.0
        %273 = vst.msk [vmem:[#allocation2 + $0x160] sm:$0x3] %vm230, 0.0
        %274 = vst.msk [vmem:[#allocation2 + $0x168] sm:$0xff] %vm227, 0.0
        %275 = vst.msk [vmem:[#allocation2 + $0x170] sm:$0xff] %vm227, 0.0
        %276 = vst.msk [vmem:[#allocation2 + $0x178] sm:$0x3] %vm230, 0.0
        %277 = vst.msk [vmem:[#allocation2 + $0x180] sm:$0xff] %vm227, 0.0
        %278 = vst.msk [vmem:[#allocation2 + $0x188] sm:$0xff] %vm227, 0.0
        %279 = vst.msk [vmem:[#allocation2 + $0x190] sm:$0x3] %vm230, 0.0
        %280 = vst.msk [vmem:[#allocation2 + $0x198] sm:$0xff] %vm227, 0.0
        %281 = vst.msk [vmem:[#allocation2 + $0x1a0] sm:$0xff] %vm227, 0.0
        %282 = vst.msk [vmem:[#allocation2 + $0x1a8] sm:$0x3] %vm230, 0.0
        %283 = vst.msk [vmem:[%s5] sm:$0x3] %vm230, 0.0
      $region40: #{basic_block.4} parent=35 // pred_fallthru
        _
      %v284 = vld [vmem:[%s217] sm:$0xff]
      %v285 = vld [vmem:[%s217 + $0x8] sm:$0xff]
      %v286 = vld [vmem:[%s217 + $0x10] sm:$0xff]
      %v287 = vld [vmem:[%s217 + $0x18] sm:$0xff]
      %v288 = vld [vmem:[%s217 + $0x20] sm:$0xff]
      %v289 = vld [vmem:[%s217 + $0x28] sm:$0xff]
      %v290 = vld [vmem:[%s217 + $0x30] sm:$0xff]
      %v291 = vld [vmem:[%s217 + $0x38] sm:$0xff]
      %v292 = vld [vmem:[%s217 + $0x40] sm:$0xff]
      %v293 = vld [vmem:[%s217 + $0x48] sm:$0xff]
      %v294 = vld [vmem:[%s217 + $0x50] sm:$0xff]
      %v295 = vld [vmem:[%s217 + $0x58] sm:$0xff]
      %v296 = vld [vmem:[%s217 + $0x60] sm:$0xff]
      %v297 = vld [vmem:[%s217 + $0x68] sm:$0xff]
      %v298 = vld [vmem:[%s217 + $0x70] sm:$0xff]
      %v299 = vld [vmem:[%s217 + $0x78] sm:$0xff]
      %v300 = vld [vmem:[%s217 + $0x80] sm:$0xff]
      %v301 = vld [vmem:[%s217 + $0x88] sm:$0xff]
      %v302 = vld [vmem:[%s217 + $0x90] sm:$0xff]
      %v303 = vld [vmem:[%s217 + $0x98] sm:$0xff]
      %v304 = vld [vmem:[%s217 + $0xa0] sm:$0xff]
      %v305 = vld [vmem:[%s217 + $0xa8] sm:$0xff]
      %v306 = vld [vmem:[%s217 + $0xb0] sm:$0xff]
      %v307 = vld [vmem:[%s217 + $0xb8] sm:$0xff]
      %v308 = vld [vmem:[%s217 + $0xc0] sm:$0xff]
      %v309 = vld [vmem:[%s217 + $0xc8] sm:$0xff]
      %v310 = vld [vmem:[%s217 + $0xd0] sm:$0xff]
      %v311 = vld [vmem:[%s217 + $0xd8] sm:$0xff]
      %v312 = vld [vmem:[%s217 + $0xe0] sm:$0xff]
      %v313 = vld [vmem:[%s217 + $0xe8] sm:$0xff]
      %v314 = vld [vmem:[%s217 + $0xf0] sm:$0xff]
      %v315 = vld [vmem:[%s217 + $0xf8] sm:$0xff]
      %v316 = vld [vmem:[%s1] sm:$0x1]
      %v318 = vlaneseq
      %v319 = vshrl.u32 %v318, 7
      %v320 = vsub.s32 0, %v319
      %v321 = vrot.slane %v316, %v320
      %v323 = vmul.f32 %v284, %v321
      %v324 = vmul.f32 %v285, %v321
      %v325 = vmul.f32 %v286, %v321
      %v326 = vmul.f32 %v287, %v321
      %v327 = vmul.f32 %v288, %v321
      %v328 = vmul.f32 %v289, %v321
      %v329 = vmul.f32 %v290, %v321
      %v330 = vmul.f32 %v291, %v321
      %v331 = vmul.f32 %v292, %v321
      %v332 = vmul.f32 %v293, %v321
      %v333 = vmul.f32 %v294, %v321
      %v334 = vmul.f32 %v295, %v321
      %v335 = vmul.f32 %v296, %v321
      %v336 = vmul.f32 %v297, %v321
      %v337 = vmul.f32 %v298, %v321
      %v338 = vmul.f32 %v299, %v321
      %v339 = vmul.f32 %v300, %v321
      %v340 = vmul.f32 %v301, %v321
      %v341 = vmul.f32 %v302, %v321
      %v342 = vmul.f32 %v303, %v321
      %v343 = vmul.f32 %v304, %v321
      %v344 = vmul.f32 %v305, %v321
      %v345 = vmul.f32 %v306, %v321
      %v346 = vmul.f32 %v307, %v321
      %v347 = vmul.f32 %v308, %v321
      %v348 = vmul.f32 %v309, %v321
      %v349 = vmul.f32 %v310, %v321
      %v350 = vmul.f32 %v311, %v321
      %v351 = vmul.f32 %v312, %v321
      %v352 = vmul.f32 %v313, %v321
      %v353 = vmul.f32 %v314, %v321
      %v354 = vmul.f32 %v315, %v321
      %v355 = vld [vmem:[%s2] sm:$0x1]
      %v357 = vlaneseq
      %v358 = vshrl.u32 %v357, 7
      %v359 = vsub.s32 0, %v358
      %v360 = vrot.slane %v355, %v359
      %v362 = vadd.f32 %v323, %v360
      %v363 = vadd.f32 %v324, %v360
      %v364 = vadd.f32 %v325, %v360
      %v365 = vadd.f32 %v326, %v360
      %v366 = vadd.f32 %v327, %v360
      %v367 = vadd.f32 %v328, %v360
      %v368 = vadd.f32 %v329, %v360
      %v369 = vadd.f32 %v330, %v360
      %v370 = vadd.f32 %v331, %v360
      %v371 = vadd.f32 %v332, %v360
      %v372 = vadd.f32 %v333, %v360
      %v373 = vadd.f32 %v334, %v360
      %v374 = vadd.f32 %v335, %v360
      %v375 = vadd.f32 %v336, %v360
      %v376 = vadd.f32 %v337, %v360
      %v377 = vadd.f32 %v338, %v360
      %v378 = vadd.f32 %v339, %v360
      %v379 = vadd.f32 %v340, %v360
      %v380 = vadd.f32 %v341, %v360
      %v381 = vadd.f32 %v342, %v360
      %v382 = vadd.f32 %v343, %v360
      %v383 = vadd.f32 %v344, %v360
      %v384 = vadd.f32 %v345, %v360
      %v385 = vadd.f32 %v346, %v360
      %v386 = vadd.f32 %v347, %v360
      %v387 = vadd.f32 %v348, %v360
      %v388 = vadd.f32 %v349, %v360
      %v389 = vadd.f32 %v350, %v360
      %v390 = vadd.f32 %v351, %v360
      %v391 = vadd.f32 %v352, %v360
      %v392 = vadd.f32 %v353, %v360
      %v393 = vadd.f32 %v354, %v360
      %v394 = vmax.f32 %v362, 0.0
      %v395 = vmax.f32 %v363, 0.0
      %v396 = vmax.f32 %v364, 0.0
      %v397 = vmax.f32 %v365, 0.0
      %v398 = vmax.f32 %v366, 0.0
      %v399 = vmax.f32 %v367, 0.0
      %v400 = vmax.f32 %v368, 0.0
      %v401 = vmax.f32 %v369, 0.0
      %v402 = vmax.f32 %v370, 0.0
      %v403 = vmax.f32 %v371, 0.0
      %v404 = vmax.f32 %v372, 0.0
      %v405 = vmax.f32 %v373, 0.0
      %v406 = vmax.f32 %v374, 0.0
      %v407 = vmax.f32 %v375, 0.0
      %v408 = vmax.f32 %v376, 0.0
      %v409 = vmax.f32 %v377, 0.0
      %v410 = vmax.f32 %v378, 0.0
      %v411 = vmax.f32 %v379, 0.0
      %v412 = vmax.f32 %v380, 0.0
      %v413 = vmax.f32 %v381, 0.0
      %v414 = vmax.f32 %v382, 0.0
      %v415 = vmax.f32 %v383, 0.0
      %v416 = vmax.f32 %v384, 0.0
      %v417 = vmax.f32 %v385, 0.0
      %v418 = vmax.f32 %v386, 0.0
      %v419 = vmax.f32 %v387, 0.0
      %v420 = vmax.f32 %v388, 0.0
      %v421 = vmax.f32 %v389, 0.0
      %v422 = vmax.f32 %v390, 0.0
      %v423 = vmax.f32 %v391, 0.0
      %v424 = vmax.f32 %v392, 0.0
      %v425 = vmax.f32 %v393, 0.0
      %s426 = scalar_lea.vmem [#allocation2], 24
      %vm427 = vcmask 64512
      %428 = vst.msk [vmem:[%s426 + $0x1] sm:$0xff] %vm427, %v394
      %429 = vst.msk [vmem:[%s426 + $0x9] sm:$0xff] %vm427, %v395
      %430 = vst.msk [vmem:[%s426 + $0x19] sm:$0xff] %vm427, %v396
      %431 = vst.msk [vmem:[%s426 + $0x21] sm:$0xff] %vm427, %v397
      %432 = vst.msk [vmem:[%s426 + $0x31] sm:$0xff] %vm427, %v398
      %433 = vst.msk [vmem:[%s426 + $0x39] sm:$0xff] %vm427, %v399
      %434 = vst.msk [vmem:[%s426 + $0x49] sm:$0xff] %vm427, %v400
      %435 = vst.msk [vmem:[%s426 + $0x51] sm:$0xff] %vm427, %v401
      %436 = vst.msk [vmem:[%s426 + $0x61] sm:$0xff] %vm427, %v402
      %437 = vst.msk [vmem:[%s426 + $0x69] sm:$0xff] %vm427, %v403
      %438 = vst.msk [vmem:[%s426 + $0x79] sm:$0xff] %vm427, %v404
      %439 = vst.msk [vmem:[%s426 + $0x81] sm:$0xff] %vm427, %v405
      %440 = vst.msk [vmem:[%s426 + $0x91] sm:$0xff] %vm427, %v406
      %441 = vst.msk [vmem:[%s426 + $0x99] sm:$0xff] %vm427, %v407
      %442 = vst.msk [vmem:[%s426 + $0xa9] sm:$0xff] %vm427, %v408
      %443 = vst.msk [vmem:[%s426 + $0xb1] sm:$0xff] %vm427, %v409
      %444 = vst.msk [vmem:[%s426 + $0xc1] sm:$0xff] %vm427, %v410
      %445 = vst.msk [vmem:[%s426 + $0xc9] sm:$0xff] %vm427, %v411
      %446 = vst.msk [vmem:[%s426 + $0xd9] sm:$0xff] %vm427, %v412
      %447 = vst.msk [vmem:[%s426 + $0xe1] sm:$0xff] %vm427, %v413
      %448 = vst.msk [vmem:[%s426 + $0xf1] sm:$0xff] %vm427, %v414
      %449 = vst.msk [vmem:[%s426 + $0xf9] sm:$0xff] %vm427, %v415
      %450 = vst.msk [vmem:[%s426 + $0x109] sm:$0xff] %vm427, %v416
      %451 = vst.msk [vmem:[%s426 + $0x111] sm:$0xff] %vm427, %v417
      %452 = vst.msk [vmem:[%s426 + $0x121] sm:$0xff] %vm427, %v418
      %453 = vst.msk [vmem:[%s426 + $0x129] sm:$0xff] %vm427, %v419
      %454 = vst.msk [vmem:[%s426 + $0x139] sm:$0xff] %vm427, %v420
      %455 = vst.msk [vmem:[%s426 + $0x141] sm:$0xff] %vm427, %v421
      %456 = vst.msk [vmem:[%s426 + $0x151] sm:$0xff] %vm427, %v422
      %457 = vst.msk [vmem:[%s426 + $0x159] sm:$0xff] %vm427, %v423
      %458 = vst.msk [vmem:[%s426 + $0x169] sm:$0xff] %vm427, %v424
      %459 = vst.msk [vmem:[%s426 + $0x171] sm:$0xff] %vm427, %v425
      %v460 = vld [vmem:[#allocation2] sm:$0xff]
      %v461 = vld [vmem:[#allocation2 + $0x8] sm:$0xff]
      %v462 = vld [vmem:[#allocation2 + $0x18] sm:$0xff]
      %v463 = vld [vmem:[#allocation2 + $0x20] sm:$0xff]
      %v464 = vld [vmem:[#allocation2 + $0x30] sm:$0xff]
      %v465 = vld [vmem:[#allocation2 + $0x38] sm:$0xff]
      %v466 = vld [vmem:[#allocation2 + $0x48] sm:$0xff]
      %v467 = vld [vmem:[#allocation2 + $0x50] sm:$0xff]
      %v468 = vld [vmem:[#allocation2 + $0x60] sm:$0xff]
      %v469 = vld [vmem:[#allocation2 + $0x68] sm:$0xff]
      %v470 = vld [vmem:[#allocation2 + $0x78] sm:$0xff]
      %v471 = vld [vmem:[#allocation2 + $0x80] sm:$0xff]
      %v472 = vld [vmem:[#allocation2 + $0x90] sm:$0xff]
      %v473 = vld [vmem:[#allocation2 + $0x98] sm:$0xff]
      %v474 = vld [vmem:[#allocation2 + $0xa8] sm:$0xff]
      %v475 = vld [vmem:[#allocation2 + $0xb0] sm:$0xff]
      %v476 = vld [vmem:[#allocation2 + $0xc0] sm:$0xff]
      %v477 = vld [vmem:[#allocation2 + $0xc8] sm:$0xff]
      %v478 = vld [vmem:[#allocation2 + $0xd8] sm:$0xff]
      %v479 = vld [vmem:[#allocation2 + $0xe0] sm:$0xff]
      %v480 = vld [vmem:[#allocation2 + $0xf0] sm:$0xff]
      %v481 = vld [vmem:[#allocation2 + $0xf8] sm:$0xff]
      %v482 = vld [vmem:[#allocation2 + $0x108] sm:$0xff]
      %v483 = vld [vmem:[#allocation2 + $0x110] sm:$0xff]
      %v484 = vld [vmem:[#allocation2 + $0x120] sm:$0xff]
      %v485 = vld [vmem:[#allocation2 + $0x128] sm:$0xff]
      %v486 = vld [vmem:[#allocation2 + $0x138] sm:$0xff]
      %v487 = vld [vmem:[#allocation2 + $0x140] sm:$0xff]
      %v488 = vld [vmem:[#allocation2 + $0x150] sm:$0xff]
      %v489 = vld [vmem:[#allocation2 + $0x158] sm:$0xff]
      %v490 = vld [vmem:[#allocation2 + $0x168] sm:$0xff]
      %v491 = vld [vmem:[#allocation2 + $0x170] sm:$0xff]
      %v492 = vld [vmem:[%s3] sm:$0xff]
      %v493 = vld [vmem:[#allocation2 + $0x1] sm:$0xff]
      %v494 = vld [vmem:[#allocation2 + $0x9] sm:$0xff]
      %v495 = vld [vmem:[#allocation2 + $0x19] sm:$0xff]
      %v496 = vld [vmem:[#allocation2 + $0x21] sm:$0xff]
      %v497 = vld [vmem:[#allocation2 + $0x31] sm:$0xff]
      %v498 = vld [vmem:[#allocation2 + $0x39] sm:$0xff]
      %v499 = vld [vmem:[#allocation2 + $0x49] sm:$0xff]
      %v500 = vld [vmem:[#allocation2 + $0x51] sm:$0xff]
      %v501 = vld [vmem:[#allocation2 + $0x61] sm:$0xff]
      %v502 = vld [vmem:[#allocation2 + $0x69] sm:$0xff]
      %v503 = vld [vmem:[#allocation2 + $0x79] sm:$0xff]
      %v504 = vld [vmem:[#allocation2 + $0x81] sm:$0xff]
      %v505 = vld [vmem:[#allocation2 + $0x91] sm:$0xff]
      %v506 = vld [vmem:[#allocation2 + $0x99] sm:$0xff]
      %v507 = vld [vmem:[#allocation2 + $0xa9] sm:$0xff]
      %v508 = vld [vmem:[#allocation2 + $0xb1] sm:$0xff]
      %v509 = vld [vmem:[#allocation2 + $0xc1] sm:$0xff]
      %v510 = vld [vmem:[#allocation2 + $0xc9] sm:$0xff]
      %v511 = vld [vmem:[#allocation2 + $0xd9] sm:$0xff]
      %v512 = vld [vmem:[#allocation2 + $0xe1] sm:$0xff]
      %v513 = vld [vmem:[#allocation2 + $0xf1] sm:$0xff]
      %v514 = vld [vmem:[#allocation2 + $0xf9] sm:$0xff]
      %v515 = vld [vmem:[#allocation2 + $0x109] sm:$0xff]
      %v516 = vld [vmem:[#allocation2 + $0x111] sm:$0xff]
      %v517 = vld [vmem:[#allocation2 + $0x121] sm:$0xff]
      %v518 = vld [vmem:[#allocation2 + $0x129] sm:$0xff]
      %v519 = vld [vmem:[#allocation2 + $0x139] sm:$0xff]
      %v520 = vld [vmem:[#allocation2 + $0x141] sm:$0xff]
      %v521 = vld [vmem:[#allocation2 + $0x151] sm:$0xff]
      %v522 = vld [vmem:[#allocation2 + $0x159] sm:$0xff]
      %v523 = vld [vmem:[#allocation2 + $0x169] sm:$0xff]
      %v524 = vld [vmem:[#allocation2 + $0x171] sm:$0xff]
      %s525 = scalar_lea.vmem %s3, 8
      %v526 = vld [vmem:[%s525] sm:$0xff]
      %v528 = vsel %vm427, %v493, 0
      %v531 = vsel %vm427, %v494, 0
      %v534 = vsel %vm427, %v495, 0
      %v537 = vsel %vm427, %v496, 0
      %v540 = vsel %vm427, %v497, 0
      %v543 = vsel %vm427, %v498, 0
      %v546 = vsel %vm427, %v499, 0
      %v549 = vsel %vm427, %v500, 0
      %v552 = vsel %vm427, %v501, 0
      %v555 = vsel %vm427, %v502, 0
      %v558 = vsel %vm427, %v503, 0
      %v561 = vsel %vm427, %v504, 0
      %v564 = vsel %vm427, %v505, 0
      %v567 = vsel %vm427, %v506, 0
      %v570 = vsel %vm427, %v507, 0
      %v573 = vsel %vm427, %v508, 0
      %v576 = vsel %vm427, %v509, 0
      %v579 = vsel %vm427, %v510, 0
      %v582 = vsel %vm427, %v511, 0
      %v585 = vsel %vm427, %v512, 0
      %v588 = vsel %vm427, %v513, 0
      %v591 = vsel %vm427, %v514, 0
      %v594 = vsel %vm427, %v515, 0
      %v597 = vsel %vm427, %v516, 0
      %v600 = vsel %vm427, %v517, 0
      %v603 = vsel %vm427, %v518, 0
      %v606 = vsel %vm427, %v519, 0
      %v609 = vsel %vm427, %v520, 0
      %v612 = vsel %vm427, %v521, 0
      %v615 = vsel %vm427, %v522, 0
      %v618 = vsel %vm427, %v523, 0
      %v621 = vsel %vm427, %v524, 0
      %623 = vmatprep.subr.mxu0 0.0
      %624 = vmatpush1.msra.mxu0 %v526
      %625 = vmatprep.subr.mxu0 0.0
      %626 = vmatpush1.msra.mxu0 0.0
      %627 = vmatprep.subr.mxu0 0.0
      %628 = vmatpush1.msra.mxu0 0.0
      %629 = vmatprep.subr.mxu0 0.0
      %630 = vmatpush1.msra.mxu0 0.0
      %631 = vmatprep.subr.mxu0 0.0
      %632 = vmatpush1.msra.mxu0 0.0
      %633 = vmatprep.subr.mxu0 0.0
      %634 = vmatpush1.msra.mxu0 0.0
      %635 = vmatprep.subr.mxu0 0.0
      %636 = vmatpush1.msra.mxu0 0.0
      %637 = vmatprep.subr.mxu0 0.0
      %638 = vmatpush1.msra.mxu0 0.0
      %639 = vmatprep.subr.mxu0 0.0
      %640 = vmatpush1.msra.mxu0 0.0
      %641 = vmatprep.subr.mxu0 0.0
      %642 = vmatpush1.msra.mxu0 0.0
      %643 = vmatprep.subr.mxu0 0.0
      %644 = vmatpush1.msra.mxu0 0.0
      %645 = vmatprep.subr.mxu0 0.0
      %646 = vmatpush1.msra.mxu0 0.0
      %647 = vmatprep.subr.mxu0 0.0
      %648 = vmatpush1.msra.mxu0 0.0
      %649 = vmatprep.subr.mxu0 0.0
      %650 = vmatpush1.msra.mxu0 0.0
      %651 = vmatprep.subr.mxu0 0.0
      %652 = vmatpush1.msra.mxu0 0.0
      %653 = vmatprep.subr.mxu0 0.0
      %654 = vmatpush1.msra.mxu0 0.0
      %655 = vmatprep.subr.mxu0 0.0
      %656 = vmatpush1.msra.mxu0 0.0
      %657 = vmatprep.subr.mxu0 0.0
      %658 = vmatpush1.msra.mxu0 0.0
      %659 = vmatprep.subr.mxu0 0.0
      %660 = vmatpush1.msra.mxu0 0.0
      %661 = vmatprep.subr.mxu0 0.0
      %662 = vmatpush1.msra.mxu0 0.0
      %663 = vmatprep.subr.mxu0 0.0
      %664 = vmatpush1.msra.mxu0 0.0
      %665 = vmatprep.subr.mxu0 0.0
      %666 = vmatpush1.msra.mxu0 0.0
      %667 = vmatprep.subr.mxu0 0.0
      %668 = vmatpush1.msra.mxu0 0.0
      %669 = vmatprep.subr.mxu0 0.0
      %670 = vmatpush1.msra.mxu0 0.0
      %671 = vmatprep.subr.mxu0 0.0
      %672 = vmatpush1.msra.mxu0 0.0
      %673 = vmatprep.subr.mxu0 0.0
      %674 = vmatpush1.msra.mxu0 0.0
      %675 = vmatprep.subr.mxu0 0.0
      %676 = vmatpush1.msra.mxu0 0.0
      %677 = vmatprep.subr.mxu0 0.0
      %678 = vmatpush1.msra.mxu0 0.0
      %679 = vmatprep.subr.mxu0 0.0
      %680 = vmatpush1.msra.mxu0 0.0
      %681 = vmatprep.subr.mxu0 0.0
      %682 = vmatpush1.msra.mxu0 0.0
      %683 = vmatprep.subr.mxu0 0.0
      %684 = vmatpush1.msra.mxu0 0.0
      %685 = vmatprep.subr.mxu0 0.0
      %686 = vmatpush1.msra.mxu0 0.0
      %687 = vmatprep.mubr.f32.mxu0 0.0
      %688 = vmatmul.mubr.f32.gmra.mrb[0].mxu0 %v528
      %v689 = vpop.f32.mrb[0].mxu0
      %v690 = vadd.f32 0.0, %v689
      %v691 = vpop.f32.mrb[0].mxu0
      %692 = vmatprep.mubr.f32.mxu0 0.0
      %693 = vmatmul.mubr.f32.gmra.mrb[0].mxu0 %v531
      %v694 = vpop.f32.mrb[0].mxu0
      %v695 = vadd.f32 0.0, %v694
      %v696 = vpop.f32.mrb[0].mxu0
      %697 = vmatprep.mubr.f32.mxu0 0.0
      %698 = vmatmul.mubr.f32.gmra.mrb[0].mxu0 %v534
      %v699 = vpop.f32.mrb[0].mxu0
      %v700 = vadd.f32 0.0, %v699
      %v701 = vpop.f32.mrb[0].mxu0
      %702 = vmatprep.mubr.f32.mxu0 0.0
      %703 = vmatmul.mubr.f32.gmra.mrb[0].mxu0 %v537
      %v704 = vpop.f32.mrb[0].mxu0
      %v705 = vadd.f32 0.0, %v704
      %v706 = vpop.f32.mrb[0].mxu0
      %707 = vmatprep.mubr.f32.mxu0 0.0
      %708 = vmatmul.mubr.f32.gmra.mrb[0].mxu0 %v540
      %v709 = vpop.f32.mrb[0].mxu0
      %v710 = vadd.f32 0.0, %v709
      %v711 = vpop.f32.mrb[0].mxu0
      %712 = vmatprep.mubr.f32.mxu0 0.0
      %713 = vmatmul.mubr.f32.gmra.mrb[0].mxu0 %v543
      %v714 = vpop.f32.mrb[0].mxu0
      %v715 = vadd.f32 0.0, %v714
      %v716 = vpop.f32.mrb[0].mxu0
      %717 = vmatprep.mubr.f32.mxu0 0.0
      %718 = vmatmul.mubr.f32.gmra.mrb[0].mxu0 %v546
      %v719 = vpop.f32.mrb[0].mxu0
      %v720 = vadd.f32 0.0, %v719
      %v721 = vpop.f32.mrb[0].mxu0
      %722 = vmatprep.mubr.f32.mxu0 0.0
      %723 = vmatmul.mubr.f32.gmra.mrb[0].mxu0 %v549
      %v724 = vpop.f32.mrb[0].mxu0
      %v725 = vadd.f32 0.0, %v724
      %v726 = vpop.f32.mrb[0].mxu0
      %727 = vmatprep.mubr.f32.mxu0 0.0
      %728 = vmatmul.mubr.f32.gmra.mrb[0].mxu0 %v552
      %v729 = vpop.f32.mrb[0].mxu0
      %v730 = vadd.f32 0.0, %v729
      %v731 = vpop.f32.mrb[0].mxu0
      %732 = vmatprep.mubr.f32.mxu0 0.0
      %733 = vmatmul.mubr.f32.gmra.mrb[0].mxu0 %v555
      %v734 = vpop.f32.mrb[0].mxu0
      %v735 = vadd.f32 0.0, %v734
      %v736 = vpop.f32.mrb[0].mxu0
      %737 = vmatprep.mubr.f32.mxu0 0.0
      %738 = vmatmul.mubr.f32.gmra.mrb[0].mxu0 %v558
      %v739 = vpop.f32.mrb[0].mxu0
      %v740 = vadd.f32 0.0, %v739
      %v741 = vpop.f32.mrb[0].mxu0
      %742 = vmatprep.mubr.f32.mxu0 0.0
      %743 = vmatmul.mubr.f32.gmra.mrb[0].mxu0 %v561
      %v744 = vpop.f32.mrb[0].mxu0
      %v745 = vadd.f32 0.0, %v744
      %v746 = vpop.f32.mrb[0].mxu0
      %747 = vmatprep.mubr.f32.mxu0 0.0
      %748 = vmatmul.mubr.f32.gmra.mrb[0].mxu0 %v564
      %v749 = vpop.f32.mrb[0].mxu0
      %v750 = vadd.f32 0.0, %v749
      %v751 = vpop.f32.mrb[0].mxu0
      %752 = vmatprep.mubr.f32.mxu0 0.0
      %753 = vmatmul.mubr.f32.gmra.mrb[0].mxu0 %v567
      %v754 = vpop.f32.mrb[0].mxu0
      %v755 = vadd.f32 0.0, %v754
      %v756 = vpop.f32.mrb[0].mxu0
      %757 = vmatprep.mubr.f32.mxu0 0.0
      %758 = vmatmul.mubr.f32.gmra.mrb[0].mxu0 %v570
      %v759 = vpop.f32.mrb[0].mxu0
      %v760 = vadd.f32 0.0, %v759
      %v761 = vpop.f32.mrb[0].mxu0
      %762 = vmatprep.mubr.f32.mxu0 0.0
      %763 = vmatmul.mubr.f32.gmra.mrb[0].mxu0 %v573
      %v764 = vpop.f32.mrb[0].mxu0
      %v765 = vadd.f32 0.0, %v764
      %v766 = vpop.f32.mrb[0].mxu0
      %767 = vmatprep.mubr.f32.mxu0 0.0
      %768 = vmatmul.mubr.f32.gmra.mrb[0].mxu0 %v576
      %v769 = vpop.f32.mrb[0].mxu0
      %v770 = vadd.f32 0.0, %v769
      %v771 = vpop.f32.mrb[0].mxu0
      %772 = vmatprep.mubr.f32.mxu0 0.0
      %773 = vmatmul.mubr.f32.gmra.mrb[0].mxu0 %v579
      %v774 = vpop.f32.mrb[0].mxu0
      %v775 = vadd.f32 0.0, %v774
      %v776 = vpop.f32.mrb[0].mxu0
      %777 = vmatprep.mubr.f32.mxu0 0.0
      %778 = vmatmul.mubr.f32.gmra.mrb[0].mxu0 %v582
      %v779 = vpop.f32.mrb[0].mxu0
      %v780 = vadd.f32 0.0, %v779
      %v781 = vpop.f32.mrb[0].mxu0
      %782 = vmatprep.mubr.f32.mxu0 0.0
      %783 = vmatmul.mubr.f32.gmra.mrb[0].mxu0 %v585
      %v784 = vpop.f32.mrb[0].mxu0
      %v785 = vadd.f32 0.0, %v784
      %v786 = vpop.f32.mrb[0].mxu0
      %787 = vmatprep.mubr.f32.mxu0 0.0
      %788 = vmatmul.mubr.f32.gmra.mrb[0].mxu0 %v588
      %v789 = vpop.f32.mrb[0].mxu0
      %v790 = vadd.f32 0.0, %v789
      %v791 = vpop.f32.mrb[0].mxu0
      %792 = vmatprep.mubr.f32.mxu0 0.0
      %793 = vmatmul.mubr.f32.gmra.mrb[0].mxu0 %v591
      %v794 = vpop.f32.mrb[0].mxu0
      %v795 = vadd.f32 0.0, %v794
      %v796 = vpop.f32.mrb[0].mxu0
      %797 = vmatprep.mubr.f32.mxu0 0.0
      %798 = vmatmul.mubr.f32.gmra.mrb[0].mxu0 %v594
      %v799 = vpop.f32.mrb[0].mxu0
      %v800 = vadd.f32 0.0, %v799
      %v801 = vpop.f32.mrb[0].mxu0
      %802 = vmatprep.mubr.f32.mxu0 0.0
      %803 = vmatmul.mubr.f32.gmra.mrb[0].mxu0 %v597
      %v804 = vpop.f32.mrb[0].mxu0
      %v805 = vadd.f32 0.0, %v804
      %v806 = vpop.f32.mrb[0].mxu0
      %807 = vmatprep.mubr.f32.mxu0 0.0
      %808 = vmatmul.mubr.f32.gmra.mrb[0].mxu0 %v600
      %v809 = vpop.f32.mrb[0].mxu0
      %v810 = vadd.f32 0.0, %v809
      %v811 = vpop.f32.mrb[0].mxu0
      %812 = vmatprep.mubr.f32.mxu0 0.0
      %813 = vmatmul.mubr.f32.gmra.mrb[0].mxu0 %v603
      %v814 = vpop.f32.mrb[0].mxu0
      %v815 = vadd.f32 0.0, %v814
      %v816 = vpop.f32.mrb[0].mxu0
      %817 = vmatprep.mubr.f32.mxu0 0.0
      %818 = vmatmul.mubr.f32.gmra.mrb[0].mxu0 %v606
      %v819 = vpop.f32.mrb[0].mxu0
      %v820 = vadd.f32 0.0, %v819
      %v821 = vpop.f32.mrb[0].mxu0
      %822 = vmatprep.mubr.f32.mxu0 0.0
      %823 = vmatmul.mubr.f32.gmra.mrb[0].mxu0 %v609
      %v824 = vpop.f32.mrb[0].mxu0
      %v825 = vadd.f32 0.0, %v824
      %v826 = vpop.f32.mrb[0].mxu0
      %827 = vmatprep.mubr.f32.mxu0 0.0
      %828 = vmatmul.mubr.f32.gmra.mrb[0].mxu0 %v612
      %v829 = vpop.f32.mrb[0].mxu0
      %v830 = vadd.f32 0.0, %v829
      %v831 = vpop.f32.mrb[0].mxu0
      %832 = vmatprep.mubr.f32.mxu0 0.0
      %833 = vmatmul.mubr.f32.gmra.mrb[0].mxu0 %v615
      %v834 = vpop.f32.mrb[0].mxu0
      %v835 = vadd.f32 0.0, %v834
      %v836 = vpop.f32.mrb[0].mxu0
      %837 = vmatprep.mubr.f32.mxu0 0.0
      %838 = vmatmul.mubr.f32.gmra.mrb[0].mxu0 %v618
      %v839 = vpop.f32.mrb[0].mxu0
      %v840 = vadd.f32 0.0, %v839
      %v841 = vpop.f32.mrb[0].mxu0
      %842 = vmatprep.mubr.f32.mxu0 0.0
      %843 = vmatmul.mubr.f32.gmra.mrb[0].mxu0 %v621
      %v844 = vpop.f32.mrb[0].mxu0
      %v845 = vadd.f32 0.0, %v844
      %v846 = vpop.f32.mrb[0].mxu0
      %847 = vdwg.mxu0
      %v849 = vsel %vm427, %v460, 0
      %v852 = vsel %vm427, %v461, 0
      %v855 = vsel %vm427, %v462, 0
      %v858 = vsel %vm427, %v463, 0
      %v861 = vsel %vm427, %v464, 0
      %v864 = vsel %vm427, %v465, 0
      %v867 = vsel %vm427, %v466, 0
      %v870 = vsel %vm427, %v467, 0
      %v873 = vsel %vm427, %v468, 0
      %v876 = vsel %vm427, %v469, 0
      %v879 = vsel %vm427, %v470, 0
      %v882 = vsel %vm427, %v471, 0
      %v885 = vsel %vm427, %v472, 0
      %v888 = vsel %vm427, %v473, 0
      %v891 = vsel %vm427, %v474, 0
      %v894 = vsel %vm427, %v475, 0
      %v897 = vsel %vm427, %v476, 0
      %v900 = vsel %vm427, %v477, 0
      %v903 = vsel %vm427, %v478, 0
      %v906 = vsel %vm427, %v479, 0
      %v909 = vsel %vm427, %v480, 0
      %v912 = vsel %vm427, %v481, 0
      %v915 = vsel %vm427, %v482, 0
      %v918 = vsel %vm427, %v483, 0
      %v921 = vsel %vm427, %v484, 0
      %v924 = vsel %vm427, %v485, 0
      %v927 = vsel %vm427, %v486, 0
      %v930 = vsel %vm427, %v487, 0
      %v933 = vsel %vm427, %v488, 0
      %v936 = vsel %vm427, %v489, 0
      %v939 = vsel %vm427, %v490, 0
      %v942 = vsel %vm427, %v491, 0
      %944 = vmatprep.subr.mxu0 0.0
      %945 = vmatpush1.msra.mxu0 %v492
      %946 = vmatprep.subr.mxu0 0.0
      %947 = vmatpush1.msra.mxu0 0.0
      %948 = vmatprep.subr.mxu0 0.0
      %949 = vmatpush1.msra.mxu0 0.0
      %950 = vmatprep.subr.mxu0 0.0
      %951 = vmatpush1.msra.mxu0 0.0
      %952 = vmatprep.subr.mxu0 0.0
      %953 = vmatpush1.msra.mxu0 0.0
      %954 = vmatprep.subr.mxu0 0.0
      %955 = vmatpush1.msra.mxu0 0.0
      %956 = vmatprep.subr.mxu0 0.0
      %957 = vmatpush1.msra.mxu0 0.0
      %958 = vmatprep.subr.mxu0 0.0
      %959 = vmatpush1.msra.mxu0 0.0
      %960 = vmatprep.subr.mxu0 0.0
      %961 = vmatpush1.msra.mxu0 0.0
      %962 = vmatprep.subr.mxu0 0.0
      %963 = vmatpush1.msra.mxu0 0.0
      %964 = vmatprep.subr.mxu0 0.0
      %965 = vmatpush1.msra.mxu0 0.0
      %966 = vmatprep.subr.mxu0 0.0
      %967 = vmatpush1.msra.mxu0 0.0
      %968 = vmatprep.subr.mxu0 0.0
      %969 = vmatpush1.msra.mxu0 0.0
      %970 = vmatprep.subr.mxu0 0.0
      %971 = vmatpush1.msra.mxu0 0.0
      %972 = vmatprep.subr.mxu0 0.0
      %973 = vmatpush1.msra.mxu0 0.0
      %974 = vmatprep.subr.mxu0 0.0
      %975 = vmatpush1.msra.mxu0 0.0
      %976 = vmatprep.subr.mxu0 0.0
      %977 = vmatpush1.msra.mxu0 0.0
      %978 = vmatprep.subr.mxu0 0.0
      %979 = vmatpush1.msra.mxu0 0.0
      %980 = vmatprep.subr.mxu0 0.0
      %981 = vmatpush1.msra.mxu0 0.0
      %982 = vmatprep.subr.mxu0 0.0
      %983 = vmatpush1.msra.mxu0 0.0
      %984 = vmatprep.subr.mxu0 0.0
      %985 = vmatpush1.msra.mxu0 0.0
      %986 = vmatprep.subr.mxu0 0.0
      %987 = vmatpush1.msra.mxu0 0.0
      %988 = vmatprep.subr.mxu0 0.0
      %989 = vmatpush1.msra.mxu0 0.0
      %990 = vmatprep.subr.mxu0 0.0
      %991 = vmatpush1.msra.mxu0 0.0
      %992 = vmatprep.subr.mxu0 0.0
      %993 = vmatpush1.msra.mxu0 0.0
      %994 = vmatprep.subr.mxu0 0.0
      %995 = vmatpush1.msra.mxu0 0.0
      %996 = vmatprep.subr.mxu0 0.0
      %997 = vmatpush1.msra.mxu0 0.0
      %998 = vmatprep.subr.mxu0 0.0
      %999 = vmatpush1.msra.mxu0 0.0
      %1000 = vmatprep.subr.mxu0 0.0
      %1001 = vmatpush1.msra.mxu0 0.0
      %1002 = vmatprep.subr.mxu0 0.0
      %1003 = vmatpush1.msra.mxu0 0.0
      %1004 = vmatprep.subr.mxu0 0.0
      %1005 = vmatpush1.msra.mxu0 0.0
      %1006 = vmatprep.subr.mxu0 0.0
      %1007 = vmatpush1.msra.mxu0 0.0
      %1008 = vmatprep.mubr.f32.mxu0 0.0
      %1009 = vmatmul.mubr.f32.gmra.mrb[0].mxu0 %v849
      %v1010 = vpop.f32.mrb[0].mxu0
      %v1011 = vadd.f32 %v690, %v1010
      %v1012 = vpop.f32.mrb[0].mxu0
      %1013 = vmatprep.mubr.f32.mxu0 0.0
      %1014 = vmatmul.mubr.f32.gmra.mrb[0].mxu0 %v852
      %v1015 = vpop.f32.mrb[0].mxu0
      %v1016 = vadd.f32 %v695, %v1015
      %v1017 = vpop.f32.mrb[0].mxu0
      %1018 = vmatprep.mubr.f32.mxu0 0.0
      %1019 = vmatmul.mubr.f32.gmra.mrb[0].mxu0 %v855
      %v1020 = vpop.f32.mrb[0].mxu0
      %v1021 = vadd.f32 %v700, %v1020
      %v1022 = vpop.f32.mrb[0].mxu0
      %1023 = vmatprep.mubr.f32.mxu0 0.0
      %1024 = vmatmul.mubr.f32.gmra.mrb[0].mxu0 %v858
      %v1025 = vpop.f32.mrb[0].mxu0
      %v1026 = vadd.f32 %v705, %v1025
      %v1027 = vpop.f32.mrb[0].mxu0
      %1028 = vmatprep.mubr.f32.mxu0 0.0
      %1029 = vmatmul.mubr.f32.gmra.mrb[0].mxu0 %v861
      %v1030 = vpop.f32.mrb[0].mxu0
      %v1031 = vadd.f32 %v710, %v1030
      %v1032 = vpop.f32.mrb[0].mxu0
      %1033 = vmatprep.mubr.f32.mxu0 0.0
      %1034 = vmatmul.mubr.f32.gmra.mrb[0].mxu0 %v864
      %v1035 = vpop.f32.mrb[0].mxu0
      %v1036 = vadd.f32 %v715, %v1035
      %v1037 = vpop.f32.mrb[0].mxu0
      %1038 = vmatprep.mubr.f32.mxu0 0.0
      %1039 = vmatmul.mubr.f32.gmra.mrb[0].mxu0 %v867
      %v1040 = vpop.f32.mrb[0].mxu0
      %v1041 = vadd.f32 %v720, %v1040
      %v1042 = vpop.f32.mrb[0].mxu0
      %1043 = vmatprep.mubr.f32.mxu0 0.0
      %1044 = vmatmul.mubr.f32.gmra.mrb[0].mxu0 %v870
      %v1045 = vpop.f32.mrb[0].mxu0
      %v1046 = vadd.f32 %v725, %v1045
      %v1047 = vpop.f32.mrb[0].mxu0
      %1048 = vmatprep.mubr.f32.mxu0 0.0
      %1049 = vmatmul.mubr.f32.gmra.mrb[0].mxu0 %v873
      %v1050 = vpop.f32.mrb[0].mxu0
      %v1051 = vadd.f32 %v730, %v1050
      %v1052 = vpop.f32.mrb[0].mxu0
      %1053 = vmatprep.mubr.f32.mxu0 0.0
      %1054 = vmatmul.mubr.f32.gmra.mrb[0].mxu0 %v876
      %v1055 = vpop.f32.mrb[0].mxu0
      %v1056 = vadd.f32 %v735, %v1055
      %v1057 = vpop.f32.mrb[0].mxu0
      %1058 = vmatprep.mubr.f32.mxu0 0.0
      %1059 = vmatmul.mubr.f32.gmra.mrb[0].mxu0 %v879
      %v1060 = vpop.f32.mrb[0].mxu0
      %v1061 = vadd.f32 %v740, %v1060
      %v1062 = vpop.f32.mrb[0].mxu0
      %1063 = vmatprep.mubr.f32.mxu0 0.0
      %1064 = vmatmul.mubr.f32.gmra.mrb[0].mxu0 %v882
      %v1065 = vpop.f32.mrb[0].mxu0
      %v1066 = vadd.f32 %v745, %v1065
      %v1067 = vpop.f32.mrb[0].mxu0
      %1068 = vmatprep.mubr.f32.mxu0 0.0
      %1069 = vmatmul.mubr.f32.gmra.mrb[0].mxu0 %v885
      %v1070 = vpop.f32.mrb[0].mxu0
      %v1071 = vadd.f32 %v750, %v1070
      %v1072 = vpop.f32.mrb[0].mxu0
      %1073 = vmatprep.mubr.f32.mxu0 0.0
      %1074 = vmatmul.mubr.f32.gmra.mrb[0].mxu0 %v888
      %v1075 = vpop.f32.mrb[0].mxu0
      %v1076 = vadd.f32 %v755, %v1075
      %v1077 = vpop.f32.mrb[0].mxu0
      %1078 = vmatprep.mubr.f32.mxu0 0.0
      %1079 = vmatmul.mubr.f32.gmra.mrb[0].mxu0 %v891
      %v1080 = vpop.f32.mrb[0].mxu0
      %v1081 = vadd.f32 %v760, %v1080
      %v1082 = vpop.f32.mrb[0].mxu0
      %1083 = vmatprep.mubr.f32.mxu0 0.0
      %1084 = vmatmul.mubr.f32.gmra.mrb[0].mxu0 %v894
      %v1085 = vpop.f32.mrb[0].mxu0
      %v1086 = vadd.f32 %v765, %v1085
      %v1087 = vpop.f32.mrb[0].mxu0
      %1088 = vmatprep.mubr.f32.mxu0 0.0
      %1089 = vmatmul.mubr.f32.gmra.mrb[0].mxu0 %v897
      %v1090 = vpop.f32.mrb[0].mxu0
      %v1091 = vadd.f32 %v770, %v1090
      %v1092 = vpop.f32.mrb[0].mxu0
      %1093 = vmatprep.mubr.f32.mxu0 0.0
      %1094 = vmatmul.mubr.f32.gmra.mrb[0].mxu0 %v900
      %v1095 = vpop.f32.mrb[0].mxu0
      %v1096 = vadd.f32 %v775, %v1095
      %v1097 = vpop.f32.mrb[0].mxu0
      %1098 = vmatprep.mubr.f32.mxu0 0.0
      %1099 = vmatmul.mubr.f32.gmra.mrb[0].mxu0 %v903
      %v1100 = vpop.f32.mrb[0].mxu0
      %v1101 = vadd.f32 %v780, %v1100
      %v1102 = vpop.f32.mrb[0].mxu0
      %1103 = vmatprep.mubr.f32.mxu0 0.0
      %1104 = vmatmul.mubr.f32.gmra.mrb[0].mxu0 %v906
      %v1105 = vpop.f32.mrb[0].mxu0
      %v1106 = vadd.f32 %v785, %v1105
      %v1107 = vpop.f32.mrb[0].mxu0
      %1108 = vmatprep.mubr.f32.mxu0 0.0
      %1109 = vmatmul.mubr.f32.gmra.mrb[0].mxu0 %v909
      %v1110 = vpop.f32.mrb[0].mxu0
      %v1111 = vadd.f32 %v790, %v1110
      %v1112 = vpop.f32.mrb[0].mxu0
      %1113 = vmatprep.mubr.f32.mxu0 0.0
      %1114 = vmatmul.mubr.f32.gmra.mrb[0].mxu0 %v912
      %v1115 = vpop.f32.mrb[0].mxu0
      %v1116 = vadd.f32 %v795, %v1115
      %v1117 = vpop.f32.mrb[0].mxu0
      %1118 = vmatprep.mubr.f32.mxu0 0.0
      %1119 = vmatmul.mubr.f32.gmra.mrb[0].mxu0 %v915
      %v1120 = vpop.f32.mrb[0].mxu0
      %v1121 = vadd.f32 %v800, %v1120
      %v1122 = vpop.f32.mrb[0].mxu0
      %1123 = vmatprep.mubr.f32.mxu0 0.0
      %1124 = vmatmul.mubr.f32.gmra.mrb[0].mxu0 %v918
      %v1125 = vpop.f32.mrb[0].mxu0
      %v1126 = vadd.f32 %v805, %v1125
      %v1127 = vpop.f32.mrb[0].mxu0
      %1128 = vmatprep.mubr.f32.mxu0 0.0
      %1129 = vmatmul.mubr.f32.gmra.mrb[0].mxu0 %v921
      %v1130 = vpop.f32.mrb[0].mxu0
      %v1131 = vadd.f32 %v810, %v1130
      %v1132 = vpop.f32.mrb[0].mxu0
      %1133 = vmatprep.mubr.f32.mxu0 0.0
      %1134 = vmatmul.mubr.f32.gmra.mrb[0].mxu0 %v924
      %v1135 = vpop.f32.mrb[0].mxu0
      %v1136 = vadd.f32 %v815, %v1135
      %v1137 = vpop.f32.mrb[0].mxu0
      %1138 = vmatprep.mubr.f32.mxu0 0.0
      %1139 = vmatmul.mubr.f32.gmra.mrb[0].mxu0 %v927
      %v1140 = vpop.f32.mrb[0].mxu0
      %v1141 = vadd.f32 %v820, %v1140
      %v1142 = vpop.f32.mrb[0].mxu0
      %1143 = vmatprep.mubr.f32.mxu0 0.0
      %1144 = vmatmul.mubr.f32.gmra.mrb[0].mxu0 %v930
      %v1145 = vpop.f32.mrb[0].mxu0
      %v1146 = vadd.f32 %v825, %v1145
      %v1147 = vpop.f32.mrb[0].mxu0
      %1148 = vmatprep.mubr.f32.mxu0 0.0
      %1149 = vmatmul.mubr.f32.gmra.mrb[0].mxu0 %v933
      %v1150 = vpop.f32.mrb[0].mxu0
      %v1151 = vadd.f32 %v830, %v1150
      %v1152 = vpop.f32.mrb[0].mxu0
      %1153 = vmatprep.mubr.f32.mxu0 0.0
      %1154 = vmatmul.mubr.f32.gmra.mrb[0].mxu0 %v936
      %v1155 = vpop.f32.mrb[0].mxu0
      %v1156 = vadd.f32 %v835, %v1155
      %v1157 = vpop.f32.mrb[0].mxu0
      %1158 = vmatprep.mubr.f32.mxu0 0.0
      %1159 = vmatmul.mubr.f32.gmra.mrb[0].mxu0 %v939
      %v1160 = vpop.f32.mrb[0].mxu0
      %v1161 = vadd.f32 %v840, %v1160
      %v1162 = vpop.f32.mrb[0].mxu0
      %1163 = vmatprep.mubr.f32.mxu0 0.0
      %1164 = vmatmul.mubr.f32.gmra.mrb[0].mxu0 %v942
      %v1165 = vpop.f32.mrb[0].mxu0
      %v1166 = vadd.f32 %v845, %v1165
      %v1167 = vpop.f32.mrb[0].mxu0
      %1168 = vdwg.mxu0
      %v1169 = vld [vmem:[#allocation2 + $0x2] sm:$0xff]
      %v1170 = vld [vmem:[#allocation2 + $0xa] sm:$0xff]
      %v1171 = vld [vmem:[#allocation2 + $0x1a] sm:$0xff]
      %v1172 = vld [vmem:[#allocation2 + $0x22] sm:$0xff]
      %v1173 = vld [vmem:[#allocation2 + $0x32] sm:$0xff]
      %v1174 = vld [vmem:[#allocation2 + $0x3a] sm:$0xff]
      %v1175 = vld [vmem:[#allocation2 + $0x4a] sm:$0xff]
      %v1176 = vld [vmem:[#allocation2 + $0x52] sm:$0xff]
      %v1177 = vld [vmem:[#allocation2 + $0x62] sm:$0xff]
      %v1178 = vld [vmem:[#allocation2 + $0x6a] sm:$0xff]
      %v1179 = vld [vmem:[#allocation2 + $0x7a] sm:$0xff]
      %v1180 = vld [vmem:[#allocation2 + $0x82] sm:$0xff]
      %v1181 = vld [vmem:[#allocation2 + $0x92] sm:$0xff]
      %v1182 = vld [vmem:[#allocation2 + $0x9a] sm:$0xff]
      %v1183 = vld [vmem:[#allocation2 + $0xaa] sm:$0xff]
      %v1184 = vld [vmem:[#allocation2 + $0xb2] sm:$0xff]
      %v1185 = vld [vmem:[#allocation2 + $0xc2] sm:$0xff]
      %v1186 = vld [vmem:[#allocation2 + $0xca] sm:$0xff]
      %v1187 = vld [vmem:[#allocation2 + $0xda] sm:$0xff]
      %v1188 = vld [vmem:[#allocation2 + $0xe2] sm:$0xff]
      %v1189 = vld [vmem:[#allocation2 + $0xf2] sm:$0xff]
      %v1190 = vld [vmem:[#allocation2 + $0xfa] sm:$0xff]
      %v1191 = vld [vmem:[#allocation2 + $0x10a] sm:$0xff]
      %v1192 = vld [vmem:[#allocation2 + $0x112] sm:$0xff]
      %v1193 = vld [vmem:[#allocation2 + $0x122] sm:$0xff]
      %v1194 = vld [vmem:[#allocation2 + $0x12a] sm:$0xff]
      %v1195 = vld [vmem:[#allocation2 + $0x13a] sm:$0xff]
      %v1196 = vld [vmem:[#allocation2 + $0x142] sm:$0xff]
      %v1197 = vld [vmem:[#allocation2 + $0x152] sm:$0xff]
      %v1198 = vld [vmem:[#allocation2 + $0x15a] sm:$0xff]
      %v1199 = vld [vmem:[#allocation2 + $0x16a] sm:$0xff]
      %v1200 = vld [vmem:[#allocation2 + $0x172] sm:$0xff]
      %s1201 = scalar_lea.vmem %s3, 16
      %v1202 = vld [vmem:[%s1201] sm:$0xff]
      %v1204 = vsel %vm427, %v1169, 0
      %v1207 = vsel %vm427, %v1170, 0
      %v1210 = vsel %vm427, %v1171, 0
      %v1213 = vsel %vm427, %v1172, 0
      %v1216 = vsel %vm427, %v1173, 0
      %v1219 = vsel %vm427, %v1174, 0
      %v1222 = vsel %vm427, %v1175, 0
      %v1225 = vsel %vm427, %v1176, 0
      %v1228 = vsel %vm427, %v1177, 0
      %v1231 = vsel %vm427, %v1178, 0
      %v1234 = vsel %vm427, %v1179, 0
      %v1237 = vsel %vm427, %v1180, 0
      %v1240 = vsel %vm427, %v1181, 0
      %v1243 = vsel %vm427, %v1182, 0
      %v1246 = vsel %vm427, %v1183, 0
      %v1249 = vsel %vm427, %v1184, 0
      %v1252 = vsel %vm427, %v1185, 0
      %v1255 = vsel %vm427, %v1186, 0
      %v1258 = vsel %vm427, %v1187, 0
      %v1261 = vsel %vm427, %v1188, 0
      %v1264 = vsel %vm427, %v1189, 0
      %v1267 = vsel %vm427, %v1190, 0
      %v1270 = vsel %vm427, %v1191, 0
      %v1273 = vsel %vm427, %v1192, 0
      %v1276 = vsel %vm427, %v1193, 0
      %v1279 = vsel %vm427, %v1194, 0
      %v1282 = vsel %vm427, %v1195, 0
      %v1285 = vsel %vm427, %v1196, 0
      %v1288 = vsel %vm427, %v1197, 0
      %v1291 = vsel %vm427, %v1198, 0
      %v1294 = vsel %vm427, %v1199, 0
      %v1297 = vsel %vm427, %v1200, 0
      %1299 = vmatprep.subr.mxu0 0.0
      %1300 = vmatpush1.msra.mxu0 %v1202
      %1301 = vmatprep.subr.mxu0 0.0
      %1302 = vmatpush1.msra.mxu0 0.0
      %1303 = vmatprep.subr.mxu0 0.0
      %1304 = vmatpush1.msra.mxu0 0.0
      %1305 = vmatprep.subr.mxu0 0.0
      %1306 = vmatpush1.msra.mxu0 0.0
      %1307 = vmatprep.subr.mxu0 0.0
      %1308 = vmatpush1.msra.mxu0 0.0
      %1309 = vmatprep.subr.mxu0 0.0
      %1310 = vmatpush1.msra.mxu0 0.0
      %1311 = vmatprep.subr.mxu0 0.0
      %1312 = vmatpush1.msra.mxu0 0.0
      %1313 = vmatprep.subr.mxu0 0.0
      %1314 = vmatpush1.msra.mxu0 0.0
      %1315 = vmatprep.subr.mxu0 0.0
      %1316 = vmatpush1.msra.mxu0 0.0
      %1317 = vmatprep.subr.mxu0 0.0
      %1318 = vmatpush1.msra.mxu0 0.0
      %1319 = vmatprep.subr.mxu0 0.0
      %1320 = vmatpush1.msra.mxu0 0.0
      %1321 = vmatprep.subr.mxu0 0.0
      %1322 = vmatpush1.msra.mxu0 0.0
      %1323 = vmatprep.subr.mxu0 0.0
      %1324 = vmatpush1.msra.mxu0 0.0
      %1325 = vmatprep.subr.mxu0 0.0
      %1326 = vmatpush1.msra.mxu0 0.0
      %1327 = vmatprep.subr.mxu0 0.0
      %1328 = vmatpush1.msra.mxu0 0.0
      %1329 = vmatprep.subr.mxu0 0.0
      %1330 = vmatpush1.msra.mxu0 0.0
      %1331 = vmatprep.subr.mxu0 0.0
      %1332 = vmatpush1.msra.mxu0 0.0
      %1333 = vmatprep.subr.mxu0 0.0
      %1334 = vmatpush1.msra.mxu0 0.0
      %1335 = vmatprep.subr.mxu0 0.0
      %1336 = vmatpush1.msra.mxu0 0.0
      %1337 = vmatprep.subr.mxu0 0.0
      %1338 = vmatpush1.msra.mxu0 0.0
      %1339 = vmatprep.subr.mxu0 0.0
      %1340 = vmatpush1.msra.mxu0 0.0
      %1341 = vmatprep.subr.mxu0 0.0
      %1342 = vmatpush1.msra.mxu0 0.0
      %1343 = vmatprep.subr.mxu0 0.0
      %1344 = vmatpush1.msra.mxu0 0.0
      %1345 = vmatprep.subr.mxu0 0.0
      %1346 = vmatpush1.msra.mxu0 0.0
      %1347 = vmatprep.subr.mxu0 0.0
      %1348 = vmatpush1.msra.mxu0 0.0
      %1349 = vmatprep.subr.mxu0 0.0
      %1350 = vmatpush1.msra.mxu0 0.0
      %1351 = vmatprep.subr.mxu0 0.0
      %1352 = vmatpush1.msra.mxu0 0.0
      %1353 = vmatprep.subr.mxu0 0.0
      %1354 = vmatpush1.msra.mxu0 0.0
      %1355 = vmatprep.subr.mxu0 0.0
      %1356 = vmatpush1.msra.mxu0 0.0
      %1357 = vmatprep.subr.mxu0 0.0
      %1358 = vmatpush1.msra.mxu0 0.0
      %1359 = vmatprep.subr.mxu0 0.0
      %1360 = vmatpush1.msra.mxu0 0.0
      %1361 = vmatprep.subr.mxu0 0.0
      %1362 = vmatpush1.msra.mxu0 0.0
      %1363 = vmatprep.mubr.f32.mxu0 0.0
      %1364 = vmatmul.mubr.f32.gmra.mrb[0].mxu0 %v1204
      %v1365 = vpop.f32.mrb[0].mxu0
      %v1366 = vadd.f32 0.0, %v1365
      %v1367 = vpop.f32.mrb[0].mxu0
      %1368 = vmatprep.mubr.f32.mxu0 0.0
      %1369 = vmatmul.mubr.f32.gmra.mrb[0].mxu0 %v1207
      %v1370 = vpop.f32.mrb[0].mxu0
      %v1371 = vadd.f32 0.0, %v1370
      %v1372 = vpop.f32.mrb[0].mxu0
      %1373 = vmatprep.mubr.f32.mxu0 0.0
      %1374 = vmatmul.mubr.f32.gmra.mrb[0].mxu0 %v1210
      %v1375 = vpop.f32.mrb[0].mxu0
      %v1376 = vadd.f32 0.0, %v1375
      %v1377 = vpop.f32.mrb[0].mxu0
      %1378 = vmatprep.mubr.f32.mxu0 0.0
      %1379 = vmatmul.mubr.f32.gmra.mrb[0].mxu0 %v1213
      %v1380 = vpop.f32.mrb[0].mxu0
      %v1381 = vadd.f32 0.0, %v1380
      %v1382 = vpop.f32.mrb[0].mxu0
      %1383 = vmatprep.mubr.f32.mxu0 0.0
      %1384 = vmatmul.mubr.f32.gmra.mrb[0].mxu0 %v1216
      %v1385 = vpop.f32.mrb[0].mxu0
      %v1386 = vadd.f32 0.0, %v1385
      %v1387 = vpop.f32.mrb[0].mxu0
      %1388 = vmatprep.mubr.f32.mxu0 0.0
      %1389 = vmatmul.mubr.f32.gmra.mrb[0].mxu0 %v1219
      %v1390 = vpop.f32.mrb[0].mxu0
      %v1391 = vadd.f32 0.0, %v1390
      %v1392 = vpop.f32.mrb[0].mxu0
      %1393 = vmatprep.mubr.f32.mxu0 0.0
      %1394 = vmatmul.mubr.f32.gmra.mrb[0].mxu0 %v1222
      %v1395 = vpop.f32.mrb[0].mxu0
      %v1396 = vadd.f32 0.0, %v1395
      %v1397 = vpop.f32.mrb[0].mxu0
      %1398 = vmatprep.mubr.f32.mxu0 0.0
      %1399 = vmatmul.mubr.f32.gmra.mrb[0].mxu0 %v1225
      %v1400 = vpop.f32.mrb[0].mxu0
      %v1401 = vadd.f32 0.0, %v1400
      %v1402 = vpop.f32.mrb[0].mxu0
      %1403 = vmatprep.mubr.f32.mxu0 0.0
      %1404 = vmatmul.mubr.f32.gmra.mrb[0].mxu0 %v1228
      %v1405 = vpop.f32.mrb[0].mxu0
      %v1406 = vadd.f32 0.0, %v1405
      %v1407 = vpop.f32.mrb[0].mxu0
      %1408 = vmatprep.mubr.f32.mxu0 0.0
      %1409 = vmatmul.mubr.f32.gmra.mrb[0].mxu0 %v1231
      %v1410 = vpop.f32.mrb[0].mxu0
      %v1411 = vadd.f32 0.0, %v1410
      %v1412 = vpop.f32.mrb[0].mxu0
      %1413 = vmatprep.mubr.f32.mxu0 0.0
      %1414 = vmatmul.mubr.f32.gmra.mrb[0].mxu0 %v1234
      %v1415 = vpop.f32.mrb[0].mxu0
      %v1416 = vadd.f32 0.0, %v1415
      %v1417 = vpop.f32.mrb[0].mxu0
      %1418 = vmatprep.mubr.f32.mxu0 0.0
      %1419 = vmatmul.mubr.f32.gmra.mrb[0].mxu0 %v1237
      %v1420 = vpop.f32.mrb[0].mxu0
      %v1421 = vadd.f32 0.0, %v1420
      %v1422 = vpop.f32.mrb[0].mxu0
      %1423 = vmatprep.mubr.f32.mxu0 0.0
      %1424 = vmatmul.mubr.f32.gmra.mrb[0].mxu0 %v1240
      %v1425 = vpop.f32.mrb[0].mxu0
      %v1426 = vadd.f32 0.0, %v1425
      %v1427 = vpop.f32.mrb[0].mxu0
      %1428 = vmatprep.mubr.f32.mxu0 0.0
      %1429 = vmatmul.mubr.f32.gmra.mrb[0].mxu0 %v1243
      %v1430 = vpop.f32.mrb[0].mxu0
      %v1431 = vadd.f32 0.0, %v1430
      %v1432 = vpop.f32.mrb[0].mxu0
      %1433 = vmatprep.mubr.f32.mxu0 0.0
      %1434 = vmatmul.mubr.f32.gmra.mrb[0].mxu0 %v1246
      %v1435 = vpop.f32.mrb[0].mxu0
      %v1436 = vadd.f32 0.0, %v1435
      %v1437 = vpop.f32.mrb[0].mxu0
      %1438 = vmatprep.mubr.f32.mxu0 0.0
      %1439 = vmatmul.mubr.f32.gmra.mrb[0].mxu0 %v1249
      %v1440 = vpop.f32.mrb[0].mxu0
      %v1441 = vadd.f32 0.0, %v1440
      %v1442 = vpop.f32.mrb[0].mxu0
      %1443 = vmatprep.mubr.f32.mxu0 0.0
      %1444 = vmatmul.mubr.f32.gmra.mrb[0].mxu0 %v1252
      %v1445 = vpop.f32.mrb[0].mxu0
      %v1446 = vadd.f32 0.0, %v1445
      %v1447 = vpop.f32.mrb[0].mxu0
      %1448 = vmatprep.mubr.f32.mxu0 0.0
      %1449 = vmatmul.mubr.f32.gmra.mrb[0].mxu0 %v1255
      %v1450 = vpop.f32.mrb[0].mxu0
      %v1451 = vadd.f32 0.0, %v1450
      %v1452 = vpop.f32.mrb[0].mxu0
      %1453 = vmatprep.mubr.f32.mxu0 0.0
      %1454 = vmatmul.mubr.f32.gmra.mrb[0].mxu0 %v1258
      %v1455 = vpop.f32.mrb[0].mxu0
      %v1456 = vadd.f32 0.0, %v1455
      %v1457 = vpop.f32.mrb[0].mxu0
      %1458 = vmatprep.mubr.f32.mxu0 0.0
      %1459 = vmatmul.mubr.f32.gmra.mrb[0].mxu0 %v1261
      %v1460 = vpop.f32.mrb[0].mxu0
      %v1461 = vadd.f32 0.0, %v1460
      %v1462 = vpop.f32.mrb[0].mxu0
      %1463 = vmatprep.mubr.f32.mxu0 0.0
      %1464 = vmatmul.mubr.f32.gmra.mrb[0].mxu0 %v1264
      %v1465 = vpop.f32.mrb[0].mxu0
      %v1466 = vadd.f32 0.0, %v1465
      %v1467 = vpop.f32.mrb[0].mxu0
      %1468 = vmatprep.mubr.f32.mxu0 0.0
      %1469 = vmatmul.mubr.f32.gmra.mrb[0].mxu0 %v1267
      %v1470 = vpop.f32.mrb[0].mxu0
      %v1471 = vadd.f32 0.0, %v1470
      %v1472 = vpop.f32.mrb[0].mxu0
      %1473 = vmatprep.mubr.f32.mxu0 0.0
      %1474 = vmatmul.mubr.f32.gmra.mrb[0].mxu0 %v1270
      %v1475 = vpop.f32.mrb[0].mxu0
      %v1476 = vadd.f32 0.0, %v1475
      %v1477 = vpop.f32.mrb[0].mxu0
      %1478 = vmatprep.mubr.f32.mxu0 0.0
      %1479 = vmatmul.mubr.f32.gmra.mrb[0].mxu0 %v1273
      %v1480 = vpop.f32.mrb[0].mxu0
      %v1481 = vadd.f32 0.0, %v1480
      %v1482 = vpop.f32.mrb[0].mxu0
      %1483 = vmatprep.mubr.f32.mxu0 0.0
      %1484 = vmatmul.mubr.f32.gmra.mrb[0].mxu0 %v1276
      %v1485 = vpop.f32.mrb[0].mxu0
      %v1486 = vadd.f32 0.0, %v1485
      %v1487 = vpop.f32.mrb[0].mxu0
      %1488 = vmatprep.mubr.f32.mxu0 0.0
      %1489 = vmatmul.mubr.f32.gmra.mrb[0].mxu0 %v1279
      %v1490 = vpop.f32.mrb[0].mxu0
      %v1491 = vadd.f32 0.0, %v1490
      %v1492 = vpop.f32.mrb[0].mxu0
      %1493 = vmatprep.mubr.f32.mxu0 0.0
      %1494 = vmatmul.mubr.f32.gmra.mrb[0].mxu0 %v1282
      %v1495 = vpop.f32.mrb[0].mxu0
      %v1496 = vadd.f32 0.0, %v1495
      %v1497 = vpop.f32.mrb[0].mxu0
      %1498 = vmatprep.mubr.f32.mxu0 0.0
      %1499 = vmatmul.mubr.f32.gmra.mrb[0].mxu0 %v1285
      %v1500 = vpop.f32.mrb[0].mxu0
      %v1501 = vadd.f32 0.0, %v1500
      %v1502 = vpop.f32.mrb[0].mxu0
      %1503 = vmatprep.mubr.f32.mxu0 0.0
      %1504 = vmatmul.mubr.f32.gmra.mrb[0].mxu0 %v1288
      %v1505 = vpop.f32.mrb[0].mxu0
      %v1506 = vadd.f32 0.0, %v1505
      %v1507 = vpop.f32.mrb[0].mxu0
      %1508 = vmatprep.mubr.f32.mxu0 0.0
      %1509 = vmatmul.mubr.f32.gmra.mrb[0].mxu0 %v1291
      %v1510 = vpop.f32.mrb[0].mxu0
      %v1511 = vadd.f32 0.0, %v1510
      %v1512 = vpop.f32.mrb[0].mxu0
      %1513 = vmatprep.mubr.f32.mxu0 0.0
      %1514 = vmatmul.mubr.f32.gmra.mrb[0].mxu0 %v1294
      %v1515 = vpop.f32.mrb[0].mxu0
      %v1516 = vadd.f32 0.0, %v1515
      %v1517 = vpop.f32.mrb[0].mxu0
      %1518 = vmatprep.mubr.f32.mxu0 0.0
      %1519 = vmatmul.mubr.f32.gmra.mrb[0].mxu0 %v1297
      %v1520 = vpop.f32.mrb[0].mxu0
      %v1521 = vadd.f32 0.0, %v1520
      %v1522 = vpop.f32.mrb[0].mxu0
      %1523 = vdwg.mxu0
      %v1524 = vadd.f32 %v1011, %v1366
      %v1525 = vadd.f32 %v1016, %v1371
      %v1526 = vadd.f32 %v1021, %v1376
      %v1527 = vadd.f32 %v1026, %v1381
      %v1528 = vadd.f32 %v1031, %v1386
      %v1529 = vadd.f32 %v1036, %v1391
      %v1530 = vadd.f32 %v1041, %v1396
      %v1531 = vadd.f32 %v1046, %v1401
      %v1532 = vadd.f32 %v1051, %v1406
      %v1533 = vadd.f32 %v1056, %v1411
      %v1534 = vadd.f32 %v1061, %v1416
      %v1535 = vadd.f32 %v1066, %v1421
      %v1536 = vadd.f32 %v1071, %v1426
      %v1537 = vadd.f32 %v1076, %v1431
      %v1538 = vadd.f32 %v1081, %v1436
      %v1539 = vadd.f32 %v1086, %v1441
      %v1540 = vadd.f32 %v1091, %v1446
      %v1541 = vadd.f32 %v1096, %v1451
      %v1542 = vadd.f32 %v1101, %v1456
      %v1543 = vadd.f32 %v1106, %v1461
      %v1544 = vadd.f32 %v1111, %v1466
      %v1545 = vadd.f32 %v1116, %v1471
      %v1546 = vadd.f32 %v1121, %v1476
      %v1547 = vadd.f32 %v1126, %v1481
      %v1548 = vadd.f32 %v1131, %v1486
      %v1549 = vadd.f32 %v1136, %v1491
      %v1550 = vadd.f32 %v1141, %v1496
      %v1551 = vadd.f32 %v1146, %v1501
      %v1552 = vadd.f32 %v1151, %v1506
      %v1553 = vadd.f32 %v1156, %v1511
      %v1554 = vadd.f32 %v1161, %v1516
      %v1555 = vadd.f32 %v1166, %v1521
      %v1556 = vld [vmem:[%s426] sm:$0xff]
      %v1557 = vld [vmem:[%s426 + $0x8] sm:$0xff]
      %v1558 = vld [vmem:[%s426 + $0x18] sm:$0xff]
      %v1559 = vld [vmem:[%s426 + $0x20] sm:$0xff]
      %v1560 = vld [vmem:[%s426 + $0x30] sm:$0xff]
      %v1561 = vld [vmem:[%s426 + $0x38] sm:$0xff]
      %v1562 = vld [vmem:[%s426 + $0x48] sm:$0xff]
      %v1563 = vld [vmem:[%s426 + $0x50] sm:$0xff]
      %v1564 = vld [vmem:[%s426 + $0x60] sm:$0xff]
      %v1565 = vld [vmem:[%s426 + $0x68] sm:$0xff]
      %v1566 = vld [vmem:[%s426 + $0x78] sm:$0xff]
      %v1567 = vld [vmem:[%s426 + $0x80] sm:$0xff]
      %v1568 = vld [vmem:[%s426 + $0x90] sm:$0xff]
      %v1569 = vld [vmem:[%s426 + $0x98] sm:$0xff]
      %v1570 = vld [vmem:[%s426 + $0xa8] sm:$0xff]
      %v1571 = vld [vmem:[%s426 + $0xb0] sm:$0xff]
      %v1572 = vld [vmem:[%s426 + $0xc0] sm:$0xff]
      %v1573 = vld [vmem:[%s426 + $0xc8] sm:$0xff]
      %v1574 = vld [vmem:[%s426 + $0xd8] sm:$0xff]
      %v1575 = vld [vmem:[%s426 + $0xe0] sm:$0xff]
      %v1576 = vld [vmem:[%s426 + $0xf0] sm:$0xff]
      %v1577 = vld [vmem:[%s426 + $0xf8] sm:$0xff]
      %v1578 = vld [vmem:[%s426 + $0x108] sm:$0xff]
      %v1579 = vld [vmem:[%s426 + $0x110] sm:$0xff]
      %v1580 = vld [vmem:[%s426 + $0x120] sm:$0xff]
      %v1581 = vld [vmem:[%s426 + $0x128] sm:$0xff]
      %v1582 = vld [vmem:[%s426 + $0x138] sm:$0xff]
      %v1583 = vld [vmem:[%s426 + $0x140] sm:$0xff]
      %v1584 = vld [vmem:[%s426 + $0x150] sm:$0xff]
      %v1585 = vld [vmem:[%s426 + $0x158] sm:$0xff]
      %v1586 = vld [vmem:[%s426 + $0x168] sm:$0xff]
      %v1587 = vld [vmem:[%s426 + $0x170] sm:$0xff]
      %s1588 = scalar_lea.vmem %s3, 24
      %v1589 = vld [vmem:[%s1588] sm:$0xff]
      %v1591 = vsel %vm427, %v1556, 0
      %v1594 = vsel %vm427, %v1557, 0
      %v1597 = vsel %vm427, %v1558, 0
      %v1600 = vsel %vm427, %v1559, 0
      %v1603 = vsel %vm427, %v1560, 0
      %v1606 = vsel %vm427, %v1561, 0
      %v1609 = vsel %vm427, %v1562, 0
      %v1612 = vsel %vm427, %v1563, 0
      %v1615 = vsel %vm427, %v1564, 0
      %v1618 = vsel %vm427, %v1565, 0
      %v1621 = vsel %vm427, %v1566, 0
      %v1624 = vsel %vm427, %v1567, 0
      %v1627 = vsel %vm427, %v1568, 0
      %v1630 = vsel %vm427, %v1569, 0
      %v1633 = vsel %vm427, %v1570, 0
      %v1636 = vsel %vm427, %v1571, 0
      %v1639 = vsel %vm427, %v1572, 0
      %v1642 = vsel %vm427, %v1573, 0
      %v1645 = vsel %vm427, %v1574, 0
      %v1648 = vsel %vm427, %v1575, 0
      %v1651 = vsel %vm427, %v1576, 0
      %v1654 = vsel %vm427, %v1577, 0
      %v1657 = vsel %vm427, %v1578, 0
      %v1660 = vsel %vm427, %v1579, 0
      %v1663 = vsel %vm427, %v1580, 0
      %v1666 = vsel %vm427, %v1581, 0
      %v1669 = vsel %vm427, %v1582, 0
      %v1672 = vsel %vm427, %v1583, 0
      %v1675 = vsel %vm427, %v1584, 0
      %v1678 = vsel %vm427, %v1585, 0
      %v1681 = vsel %vm427, %v1586, 0
      %v1684 = vsel %vm427, %v1587, 0
      %1686 = vmatprep.subr.mxu0 0.0
      %1687 = vmatpush1.msra.mxu0 %v1589
      %1688 = vmatprep.subr.mxu0 0.0
      %1689 = vmatpush1.msra.mxu0 0.0
      %1690 = vmatprep.subr.mxu0 0.0
      %1691 = vmatpush1.msra.mxu0 0.0
      %1692 = vmatprep.subr.mxu0 0.0
      %1693 = vmatpush1.msra.mxu0 0.0
      %1694 = vmatprep.subr.mxu0 0.0
      %1695 = vmatpush1.msra.mxu0 0.0
      %1696 = vmatprep.subr.mxu0 0.0
      %1697 = vmatpush1.msra.mxu0 0.0
      %1698 = vmatprep.subr.mxu0 0.0
      %1699 = vmatpush1.msra.mxu0 0.0
      %1700 = vmatprep.subr.mxu0 0.0
      %1701 = vmatpush1.msra.mxu0 0.0
      %1702 = vmatprep.subr.mxu0 0.0
      %1703 = vmatpush1.msra.mxu0 0.0
      %1704 = vmatprep.subr.mxu0 0.0
      %1705 = vmatpush1.msra.mxu0 0.0
      %1706 = vmatprep.subr.mxu0 0.0
      %1707 = vmatpush1.msra.mxu0 0.0
      %1708 = vmatprep.subr.mxu0 0.0
      %1709 = vmatpush1.msra.mxu0 0.0
      %1710 = vmatprep.subr.mxu0 0.0
      %1711 = vmatpush1.msra.mxu0 0.0
      %1712 = vmatprep.subr.mxu0 0.0
      %1713 = vmatpush1.msra.mxu0 0.0
      %1714 = vmatprep.subr.mxu0 0.0
      %1715 = vmatpush1.msra.mxu0 0.0
      %1716 = vmatprep.subr.mxu0 0.0
      %1717 = vmatpush1.msra.mxu0 0.0
      %1718 = vmatprep.subr.mxu0 0.0
      %1719 = vmatpush1.msra.mxu0 0.0
      %1720 = vmatprep.subr.mxu0 0.0
      %1721 = vmatpush1.msra.mxu0 0.0
      %1722 = vmatprep.subr.mxu0 0.0
      %1723 = vmatpush1.msra.mxu0 0.0
      %1724 = vmatprep.subr.mxu0 0.0
      %1725 = vmatpush1.msra.mxu0 0.0
      %1726 = vmatprep.subr.mxu0 0.0
      %1727 = vmatpush1.msra.mxu0 0.0
      %1728 = vmatprep.subr.mxu0 0.0
      %1729 = vmatpush1.msra.mxu0 0.0
      %1730 = vmatprep.subr.mxu0 0.0
      %1731 = vmatpush1.msra.mxu0 0.0
      %1732 = vmatprep.subr.mxu0 0.0
      %1733 = vmatpush1.msra.mxu0 0.0
      %1734 = vmatprep.subr.mxu0 0.0
      %1735 = vmatpush1.msra.mxu0 0.0
      %1736 = vmatprep.subr.mxu0 0.0
      %1737 = vmatpush1.msra.mxu0 0.0
      %1738 = vmatprep.subr.mxu0 0.0
      %1739 = vmatpush1.msra.mxu0 0.0
      %1740 = vmatprep.subr.mxu0 0.0
      %1741 = vmatpush1.msra.mxu0 0.0
      %1742 = vmatprep.subr.mxu0 0.0
      %1743 = vmatpush1.msra.mxu0 0.0
      %1744 = vmatprep.subr.mxu0 0.0
      %1745 = vmatpush1.msra.mxu0 0.0
      %1746 = vmatprep.subr.mxu0 0.0
      %1747 = vmatpush1.msra.mxu0 0.0
      %1748 = vmatprep.subr.mxu0 0.0
      %1749 = vmatpush1.msra.mxu0 0.0
      %1750 = vmatprep.mubr.f32.mxu0 0.0
      %1751 = vmatmul.mubr.f32.gmra.mrb[0].mxu0 %v1591
      %v1752 = vpop.f32.mrb[0].mxu0
      %v1753 = vadd.f32 0.0, %v1752
      %v1754 = vpop.f32.mrb[0].mxu0
      %1755 = vmatprep.mubr.f32.mxu0 0.0
      %1756 = vmatmul.mubr.f32.gmra.mrb[0].mxu0 %v1594
      %v1757 = vpop.f32.mrb[0].mxu0
      %v1758 = vadd.f32 0.0, %v1757
      %v1759 = vpop.f32.mrb[0].mxu0
      %1760 = vmatprep.mubr.f32.mxu0 0.0
      %1761 = vmatmul.mubr.f32.gmra.mrb[0].mxu0 %v1597
      %v1762 = vpop.f32.mrb[0].mxu0
      %v1763 = vadd.f32 0.0, %v1762
      %v1764 = vpop.f32.mrb[0].mxu0
      %1765 = vmatprep.mubr.f32.mxu0 0.0
      %1766 = vmatmul.mubr.f32.gmra.mrb[0].mxu0 %v1600
      %v1767 = vpop.f32.mrb[0].mxu0
      %v1768 = vadd.f32 0.0, %v1767
      %v1769 = vpop.f32.mrb[0].mxu0
      %1770 = vmatprep.mubr.f32.mxu0 0.0
      %1771 = vmatmul.mubr.f32.gmra.mrb[0].mxu0 %v1603
      %v1772 = vpop.f32.mrb[0].mxu0
      %v1773 = vadd.f32 0.0, %v1772
      %v1774 = vpop.f32.mrb[0].mxu0
      %1775 = vmatprep.mubr.f32.mxu0 0.0
      %1776 = vmatmul.mubr.f32.gmra.mrb[0].mxu0 %v1606
      %v1777 = vpop.f32.mrb[0].mxu0
      %v1778 = vadd.f32 0.0, %v1777
      %v1779 = vpop.f32.mrb[0].mxu0
      %1780 = vmatprep.mubr.f32.mxu0 0.0
      %1781 = vmatmul.mubr.f32.gmra.mrb[0].mxu0 %v1609
      %v1782 = vpop.f32.mrb[0].mxu0
      %v1783 = vadd.f32 0.0, %v1782
      %v1784 = vpop.f32.mrb[0].mxu0
      %1785 = vmatprep.mubr.f32.mxu0 0.0
      %1786 = vmatmul.mubr.f32.gmra.mrb[0].mxu0 %v1612
      %v1787 = vpop.f32.mrb[0].mxu0
      %v1788 = vadd.f32 0.0, %v1787
      %v1789 = vpop.f32.mrb[0].mxu0
      %1790 = vmatprep.mubr.f32.mxu0 0.0
      %1791 = vmatmul.mubr.f32.gmra.mrb[0].mxu0 %v1615
      %v1792 = vpop.f32.mrb[0].mxu0
      %v1793 = vadd.f32 0.0, %v1792
      %v1794 = vpop.f32.mrb[0].mxu0
      %1795 = vmatprep.mubr.f32.mxu0 0.0
      %1796 = vmatmul.mubr.f32.gmra.mrb[0].mxu0 %v1618
      %v1797 = vpop.f32.mrb[0].mxu0
      %v1798 = vadd.f32 0.0, %v1797
      %v1799 = vpop.f32.mrb[0].mxu0
      %1800 = vmatprep.mubr.f32.mxu0 0.0
      %1801 = vmatmul.mubr.f32.gmra.mrb[0].mxu0 %v1621
      %v1802 = vpop.f32.mrb[0].mxu0
      %v1803 = vadd.f32 0.0, %v1802
      %v1804 = vpop.f32.mrb[0].mxu0
      %1805 = vmatprep.mubr.f32.mxu0 0.0
      %1806 = vmatmul.mubr.f32.gmra.mrb[0].mxu0 %v1624
      %v1807 = vpop.f32.mrb[0].mxu0
      %v1808 = vadd.f32 0.0, %v1807
      %v1809 = vpop.f32.mrb[0].mxu0
      %1810 = vmatprep.mubr.f32.mxu0 0.0
      %1811 = vmatmul.mubr.f32.gmra.mrb[0].mxu0 %v1627
      %v1812 = vpop.f32.mrb[0].mxu0
      %v1813 = vadd.f32 0.0, %v1812
      %v1814 = vpop.f32.mrb[0].mxu0
      %1815 = vmatprep.mubr.f32.mxu0 0.0
      %1816 = vmatmul.mubr.f32.gmra.mrb[0].mxu0 %v1630
      %v1817 = vpop.f32.mrb[0].mxu0
      %v1818 = vadd.f32 0.0, %v1817
      %v1819 = vpop.f32.mrb[0].mxu0
      %1820 = vmatprep.mubr.f32.mxu0 0.0
      %1821 = vmatmul.mubr.f32.gmra.mrb[0].mxu0 %v1633
      %v1822 = vpop.f32.mrb[0].mxu0
      %v1823 = vadd.f32 0.0, %v1822
      %v1824 = vpop.f32.mrb[0].mxu0
      %1825 = vmatprep.mubr.f32.mxu0 0.0
      %1826 = vmatmul.mubr.f32.gmra.mrb[0].mxu0 %v1636
      %v1827 = vpop.f32.mrb[0].mxu0
      %v1828 = vadd.f32 0.0, %v1827
      %v1829 = vpop.f32.mrb[0].mxu0
      %1830 = vmatprep.mubr.f32.mxu0 0.0
      %1831 = vmatmul.mubr.f32.gmra.mrb[0].mxu0 %v1639
      %v1832 = vpop.f32.mrb[0].mxu0
      %v1833 = vadd.f32 0.0, %v1832
      %v1834 = vpop.f32.mrb[0].mxu0
      %1835 = vmatprep.mubr.f32.mxu0 0.0
      %1836 = vmatmul.mubr.f32.gmra.mrb[0].mxu0 %v1642
      %v1837 = vpop.f32.mrb[0].mxu0
      %v1838 = vadd.f32 0.0, %v1837
      %v1839 = vpop.f32.mrb[0].mxu0
      %1840 = vmatprep.mubr.f32.mxu0 0.0
      %1841 = vmatmul.mubr.f32.gmra.mrb[0].mxu0 %v1645
      %v1842 = vpop.f32.mrb[0].mxu0
      %v1843 = vadd.f32 0.0, %v1842
      %v1844 = vpop.f32.mrb[0].mxu0
      %1845 = vmatprep.mubr.f32.mxu0 0.0
      %1846 = vmatmul.mubr.f32.gmra.mrb[0].mxu0 %v1648
      %v1847 = vpop.f32.mrb[0].mxu0
      %v1848 = vadd.f32 0.0, %v1847
      %v1849 = vpop.f32.mrb[0].mxu0
      %1850 = vmatprep.mubr.f32.mxu0 0.0
      %1851 = vmatmul.mubr.f32.gmra.mrb[0].mxu0 %v1651
      %v1852 = vpop.f32.mrb[0].mxu0
      %v1853 = vadd.f32 0.0, %v1852
      %v1854 = vpop.f32.mrb[0].mxu0
      %1855 = vmatprep.mubr.f32.mxu0 0.0
      %1856 = vmatmul.mubr.f32.gmra.mrb[0].mxu0 %v1654
      %v1857 = vpop.f32.mrb[0].mxu0
      %v1858 = vadd.f32 0.0, %v1857
      %v1859 = vpop.f32.mrb[0].mxu0
      %1860 = vmatprep.mubr.f32.mxu0 0.0
      %1861 = vmatmul.mubr.f32.gmra.mrb[0].mxu0 %v1657
      %v1862 = vpop.f32.mrb[0].mxu0
      %v1863 = vadd.f32 0.0, %v1862
      %v1864 = vpop.f32.mrb[0].mxu0
      %1865 = vmatprep.mubr.f32.mxu0 0.0
      %1866 = vmatmul.mubr.f32.gmra.mrb[0].mxu0 %v1660
      %v1867 = vpop.f32.mrb[0].mxu0
      %v1868 = vadd.f32 0.0, %v1867
      %v1869 = vpop.f32.mrb[0].mxu0
      %1870 = vmatprep.mubr.f32.mxu0 0.0
      %1871 = vmatmul.mubr.f32.gmra.mrb[0].mxu0 %v1663
      %v1872 = vpop.f32.mrb[0].mxu0
      %v1873 = vadd.f32 0.0, %v1872
      %v1874 = vpop.f32.mrb[0].mxu0
      %1875 = vmatprep.mubr.f32.mxu0 0.0
      %1876 = vmatmul.mubr.f32.gmra.mrb[0].mxu0 %v1666
      %v1877 = vpop.f32.mrb[0].mxu0
      %v1878 = vadd.f32 0.0, %v1877
      %v1879 = vpop.f32.mrb[0].mxu0
      %1880 = vmatprep.mubr.f32.mxu0 0.0
      %1881 = vmatmul.mubr.f32.gmra.mrb[0].mxu0 %v1669
      %v1882 = vpop.f32.mrb[0].mxu0
      %v1883 = vadd.f32 0.0, %v1882
      %v1884 = vpop.f32.mrb[0].mxu0
      %1885 = vmatprep.mubr.f32.mxu0 0.0
      %1886 = vmatmul.mubr.f32.gmra.mrb[0].mxu0 %v1672
      %v1887 = vpop.f32.mrb[0].mxu0
      %v1888 = vadd.f32 0.0, %v1887
      %v1889 = vpop.f32.mrb[0].mxu0
      %1890 = vmatprep.mubr.f32.mxu0 0.0
      %1891 = vmatmul.mubr.f32.gmra.mrb[0].mxu0 %v1675
      %v1892 = vpop.f32.mrb[0].mxu0
      %v1893 = vadd.f32 0.0, %v1892
      %v1894 = vpop.f32.mrb[0].mxu0
      %1895 = vmatprep.mubr.f32.mxu0 0.0
      %1896 = vmatmul.mubr.f32.gmra.mrb[0].mxu0 %v1678
      %v1897 = vpop.f32.mrb[0].mxu0
      %v1898 = vadd.f32 0.0, %v1897
      %v1899 = vpop.f32.mrb[0].mxu0
      %1900 = vmatprep.mubr.f32.mxu0 0.0
      %1901 = vmatmul.mubr.f32.gmra.mrb[0].mxu0 %v1681
      %v1902 = vpop.f32.mrb[0].mxu0
      %v1903 = vadd.f32 0.0, %v1902
      %v1904 = vpop.f32.mrb[0].mxu0
      %1905 = vmatprep.mubr.f32.mxu0 0.0
      %1906 = vmatmul.mubr.f32.gmra.mrb[0].mxu0 %v1684
      %v1907 = vpop.f32.mrb[0].mxu0
      %v1908 = vadd.f32 0.0, %v1907
      %v1909 = vpop.f32.mrb[0].mxu0
      %1910 = vdwg.mxu0
      %v1911 = vadd.f32 %v1524, %v1753
      %v1912 = vadd.f32 %v1525, %v1758
      %v1913 = vadd.f32 %v1526, %v1763
      %v1914 = vadd.f32 %v1527, %v1768
      %v1915 = vadd.f32 %v1528, %v1773
      %v1916 = vadd.f32 %v1529, %v1778
      %v1917 = vadd.f32 %v1530, %v1783
      %v1918 = vadd.f32 %v1531, %v1788
      %v1919 = vadd.f32 %v1532, %v1793
      %v1920 = vadd.f32 %v1533, %v1798
      %v1921 = vadd.f32 %v1534, %v1803
      %v1922 = vadd.f32 %v1535, %v1808
      %v1923 = vadd.f32 %v1536, %v1813
      %v1924 = vadd.f32 %v1537, %v1818
      %v1925 = vadd.f32 %v1538, %v1823
      %v1926 = vadd.f32 %v1539, %v1828
      %v1927 = vadd.f32 %v1540, %v1833
      %v1928 = vadd.f32 %v1541, %v1838
      %v1929 = vadd.f32 %v1542, %v1843
      %v1930 = vadd.f32 %v1543, %v1848
      %v1931 = vadd.f32 %v1544, %v1853
      %v1932 = vadd.f32 %v1545, %v1858
      %v1933 = vadd.f32 %v1546, %v1863
      %v1934 = vadd.f32 %v1547, %v1868
      %v1935 = vadd.f32 %v1548, %v1873
      %v1936 = vadd.f32 %v1549, %v1878
      %v1937 = vadd.f32 %v1550, %v1883
      %v1938 = vadd.f32 %v1551, %v1888
      %v1939 = vadd.f32 %v1552, %v1893
      %v1940 = vadd.f32 %v1553, %v1898
      %v1941 = vadd.f32 %v1554, %v1903
      %v1942 = vadd.f32 %v1555, %v1908
      %v1943 = vld [vmem:[%s426 + $0x1] sm:$0xff]
      %v1944 = vld [vmem:[%s426 + $0x9] sm:$0xff]
      %v1945 = vld [vmem:[%s426 + $0x19] sm:$0xff]
      %v1946 = vld [vmem:[%s426 + $0x21] sm:$0xff]
      %v1947 = vld [vmem:[%s426 + $0x31] sm:$0xff]
      %v1948 = vld [vmem:[%s426 + $0x39] sm:$0xff]
      %v1949 = vld [vmem:[%s426 + $0x49] sm:$0xff]
      %v1950 = vld [vmem:[%s426 + $0x51] sm:$0xff]
      %v1951 = vld [vmem:[%s426 + $0x61] sm:$0xff]
      %v1952 = vld [vmem:[%s426 + $0x69] sm:$0xff]
      %v1953 = vld [vmem:[%s426 + $0x79] sm:$0xff]
      %v1954 = vld [vmem:[%s426 + $0x81] sm:$0xff]
      %v1955 = vld [vmem:[%s426 + $0x91] sm:$0xff]
      %v1956 = vld [vmem:[%s426 + $0x99] sm:$0xff]
      %v1957 = vld [vmem:[%s426 + $0xa9] sm:$0xff]
      %v1958 = vld [vmem:[%s426 + $0xb1] sm:$0xff]
      %v1959 = vld [vmem:[%s426 + $0xc1] sm:$0xff]
      %v1960 = vld [vmem:[%s426 + $0xc9] sm:$0xff]
      %v1961 = vld [vmem:[%s426 + $0xd9] sm:$0xff]
      %v1962 = vld [vmem:[%s426 + $0xe1] sm:$0xff]
      %v1963 = vld [vmem:[%s426 + $0xf1] sm:$0xff]
      %v1964 = vld [vmem:[%s426 + $0xf9] sm:$0xff]
      %v1965 = vld [vmem:[%s426 + $0x109] sm:$0xff]
      %v1966 = vld [vmem:[%s426 + $0x111] sm:$0xff]
      %v1967 = vld [vmem:[%s426 + $0x121] sm:$0xff]
      %v1968 = vld [vmem:[%s426 + $0x129] sm:$0xff]
      %v1969 = vld [vmem:[%s426 + $0x139] sm:$0xff]
      %v1970 = vld [vmem:[%s426 + $0x141] sm:$0xff]
      %v1971 = vld [vmem:[%s426 + $0x151] sm:$0xff]
      %v1972 = vld [vmem:[%s426 + $0x159] sm:$0xff]
      %v1973 = vld [vmem:[%s426 + $0x169] sm:$0xff]
      %v1974 = vld [vmem:[%s426 + $0x171] sm:$0xff]
      %s1975 = scalar_lea.vmem %s3, 32
      %v1976 = vld [vmem:[%s1975] sm:$0xff]
      %v1978 = vsel %vm427, %v1943, 0
      %v1981 = vsel %vm427, %v1944, 0
      %v1984 = vsel %vm427, %v1945, 0
      %v1987 = vsel %vm427, %v1946, 0
      %v1990 = vsel %vm427, %v1947, 0
      %v1993 = vsel %vm427, %v1948, 0
      %v1996 = vsel %vm427, %v1949, 0
      %v1999 = vsel %vm427, %v1950, 0
      %v2002 = vsel %vm427, %v1951, 0
      %v2005 = vsel %vm427, %v1952, 0
      %v2008 = vsel %vm427, %v1953, 0
      %v2011 = vsel %vm427, %v1954, 0
      %v2014 = vsel %vm427, %v1955, 0
      %v2017 = vsel %vm427, %v1956, 0
      %v2020 = vsel %vm427, %v1957, 0
      %v2023 = vsel %vm427, %v1958, 0
      %v2026 = vsel %vm427, %v1959, 0
      %v2029 = vsel %vm427, %v1960, 0
      %v2032 = vsel %vm427, %v1961, 0
      %v2035 = vsel %vm427, %v1962, 0
      %v2038 = vsel %vm427, %v1963, 0
      %v2041 = vsel %vm427, %v1964, 0
      %v2044 = vsel %vm427, %v1965, 0
      %v2047 = vsel %vm427, %v1966, 0
      %v2050 = vsel %vm427, %v1967, 0
      %v2053 = vsel %vm427, %v1968, 0
      %v2056 = vsel %vm427, %v1969, 0
      %v2059 = vsel %vm427, %v1970, 0
      %v2062 = vsel %vm427, %v1971, 0
      %v2065 = vsel %vm427, %v1972, 0
      %v2068 = vsel %vm427, %v1973, 0
      %v2071 = vsel %vm427, %v1974, 0
      %2073 = vmatprep.subr.mxu0 0.0
      %2074 = vmatpush1.msra.mxu0 %v1976
      %2075 = vmatprep.subr.mxu0 0.0
      %2076 = vmatpush1.msra.mxu0 0.0
      %2077 = vmatprep.subr.mxu0 0.0
      %2078 = vmatpush1.msra.mxu0 0.0
      %2079 = vmatprep.subr.mxu0 0.0
      %2080 = vmatpush1.msra.mxu0 0.0
      %2081 = vmatprep.subr.mxu0 0.0
      %2082 = vmatpush1.msra.mxu0 0.0
      %2083 = vmatprep.subr.mxu0 0.0
      %2084 = vmatpush1.msra.mxu0 0.0
      %2085 = vmatprep.subr.mxu0 0.0
      %2086 = vmatpush1.msra.mxu0 0.0
      %2087 = vmatprep.subr.mxu0 0.0
      %2088 = vmatpush1.msra.mxu0 0.0
      %2089 = vmatprep.subr.mxu0 0.0
      %2090 = vmatpush1.msra.mxu0 0.0
      %2091 = vmatprep.subr.mxu0 0.0
      %2092 = vmatpush1.msra.mxu0 0.0
      %2093 = vmatprep.subr.mxu0 0.0
      %2094 = vmatpush1.msra.mxu0 0.0
      %2095 = vmatprep.subr.mxu0 0.0
      %2096 = vmatpush1.msra.mxu0 0.0
      %2097 = vmatprep.subr.mxu0 0.0
      %2098 = vmatpush1.msra.mxu0 0.0
      %2099 = vmatprep.subr.mxu0 0.0
      %2100 = vmatpush1.msra.mxu0 0.0
      %2101 = vmatprep.subr.mxu0 0.0
      %2102 = vmatpush1.msra.mxu0 0.0
      %2103 = vmatprep.subr.mxu0 0.0
      %2104 = vmatpush1.msra.mxu0 0.0
      %2105 = vmatprep.subr.mxu0 0.0
      %2106 = vmatpush1.msra.mxu0 0.0
      %2107 = vmatprep.subr.mxu0 0.0
      %2108 = vmatpush1.msra.mxu0 0.0
      %2109 = vmatprep.subr.mxu0 0.0
      %2110 = vmatpush1.msra.mxu0 0.0
      %2111 = vmatprep.subr.mxu0 0.0
      %2112 = vmatpush1.msra.mxu0 0.0
      %2113 = vmatprep.subr.mxu0 0.0
      %2114 = vmatpush1.msra.mxu0 0.0
      %2115 = vmatprep.subr.mxu0 0.0
      %2116 = vmatpush1.msra.mxu0 0.0
      %2117 = vmatprep.subr.mxu0 0.0
      %2118 = vmatpush1.msra.mxu0 0.0
      %2119 = vmatprep.subr.mxu0 0.0
      %2120 = vmatpush1.msra.mxu0 0.0
      %2121 = vmatprep.subr.mxu0 0.0
      %2122 = vmatpush1.msra.mxu0 0.0
      %2123 = vmatprep.subr.mxu0 0.0
      %2124 = vmatpush1.msra.mxu0 0.0
      %2125 = vmatprep.subr.mxu0 0.0
      %2126 = vmatpush1.msra.mxu0 0.0
      %2127 = vmatprep.subr.mxu0 0.0
      %2128 = vmatpush1.msra.mxu0 0.0
      %2129 = vmatprep.subr.mxu0 0.0
      %2130 = vmatpush1.msra.mxu0 0.0
      %2131 = vmatprep.subr.mxu0 0.0
      %2132 = vmatpush1.msra.mxu0 0.0
      %2133 = vmatprep.subr.mxu0 0.0
      %2134 = vmatpush1.msra.mxu0 0.0
      %2135 = vmatprep.subr.mxu0 0.0
      %2136 = vmatpush1.msra.mxu0 0.0
      %2137 = vmatprep.mubr.f32.mxu0 0.0
      %2138 = vmatmul.mubr.f32.gmra.mrb[0].mxu0 %v1978
      %v2139 = vpop.f32.mrb[0].mxu0
      %v2140 = vadd.f32 0.0, %v2139
      %v2141 = vpop.f32.mrb[0].mxu0
      %2142 = vmatprep.mubr.f32.mxu0 0.0
      %2143 = vmatmul.mubr.f32.gmra.mrb[0].mxu0 %v1981
      %v2144 = vpop.f32.mrb[0].mxu0
      %v2145 = vadd.f32 0.0, %v2144
      %v2146 = vpop.f32.mrb[0].mxu0
      %2147 = vmatprep.mubr.f32.mxu0 0.0
      %2148 = vmatmul.mubr.f32.gmra.mrb[0].mxu0 %v1984
      %v2149 = vpop.f32.mrb[0].mxu0
      %v2150 = vadd.f32 0.0, %v2149
      %v2151 = vpop.f32.mrb[0].mxu0
      %2152 = vmatprep.mubr.f32.mxu0 0.0
      %2153 = vmatmul.mubr.f32.gmra.mrb[0].mxu0 %v1987
      %v2154 = vpop.f32.mrb[0].mxu0
      %v2155 = vadd.f32 0.0, %v2154
      %v2156 = vpop.f32.mrb[0].mxu0
      %2157 = vmatprep.mubr.f32.mxu0 0.0
      %2158 = vmatmul.mubr.f32.gmra.mrb[0].mxu0 %v1990
      %v2159 = vpop.f32.mrb[0].mxu0
      %v2160 = vadd.f32 0.0, %v2159
      %v2161 = vpop.f32.mrb[0].mxu0
      %2162 = vmatprep.mubr.f32.mxu0 0.0
      %2163 = vmatmul.mubr.f32.gmra.mrb[0].mxu0 %v1993
      %v2164 = vpop.f32.mrb[0].mxu0
      %v2165 = vadd.f32 0.0, %v2164
      %v2166 = vpop.f32.mrb[0].mxu0
      %2167 = vmatprep.mubr.f32.mxu0 0.0
      %2168 = vmatmul.mubr.f32.gmra.mrb[0].mxu0 %v1996
      %v2169 = vpop.f32.mrb[0].mxu0
      %v2170 = vadd.f32 0.0, %v2169
      %v2171 = vpop.f32.mrb[0].mxu0
      %2172 = vmatprep.mubr.f32.mxu0 0.0
      %2173 = vmatmul.mubr.f32.gmra.mrb[0].mxu0 %v1999
      %v2174 = vpop.f32.mrb[0].mxu0
      %v2175 = vadd.f32 0.0, %v2174
      %v2176 = vpop.f32.mrb[0].mxu0
      %2177 = vmatprep.mubr.f32.mxu0 0.0
      %2178 = vmatmul.mubr.f32.gmra.mrb[0].mxu0 %v2002
      %v2179 = vpop.f32.mrb[0].mxu0
      %v2180 = vadd.f32 0.0, %v2179
      %v2181 = vpop.f32.mrb[0].mxu0
      %2182 = vmatprep.mubr.f32.mxu0 0.0
      %2183 = vmatmul.mubr.f32.gmra.mrb[0].mxu0 %v2005
      %v2184 = vpop.f32.mrb[0].mxu0
      %v2185 = vadd.f32 0.0, %v2184
      %v2186 = vpop.f32.mrb[0].mxu0
      %2187 = vmatprep.mubr.f32.mxu0 0.0
      %2188 = vmatmul.mubr.f32.gmra.mrb[0].mxu0 %v2008
      %v2189 = vpop.f32.mrb[0].mxu0
      %v2190 = vadd.f32 0.0, %v2189
      %v2191 = vpop.f32.mrb[0].mxu0
      %2192 = vmatprep.mubr.f32.mxu0 0.0
      %2193 = vmatmul.mubr.f32.gmra.mrb[0].mxu0 %v2011
      %v2194 = vpop.f32.mrb[0].mxu0
      %v2195 = vadd.f32 0.0, %v2194
      %v2196 = vpop.f32.mrb[0].mxu0
      %2197 = vmatprep.mubr.f32.mxu0 0.0
      %2198 = vmatmul.mubr.f32.gmra.mrb[0].mxu0 %v2014
      %v2199 = vpop.f32.mrb[0].mxu0
      %v2200 = vadd.f32 0.0, %v2199
      %v2201 = vpop.f32.mrb[0].mxu0
      %2202 = vmatprep.mubr.f32.mxu0 0.0
      %2203 = vmatmul.mubr.f32.gmra.mrb[0].mxu0 %v2017
      %v2204 = vpop.f32.mrb[0].mxu0
      %v2205 = vadd.f32 0.0, %v2204
      %v2206 = vpop.f32.mrb[0].mxu0
      %2207 = vmatprep.mubr.f32.mxu0 0.0
      %2208 = vmatmul.mubr.f32.gmra.mrb[0].mxu0 %v2020
      %v2209 = vpop.f32.mrb[0].mxu0
      %v2210 = vadd.f32 0.0, %v2209
      %v2211 = vpop.f32.mrb[0].mxu0
      %2212 = vmatprep.mubr.f32.mxu0 0.0
      %2213 = vmatmul.mubr.f32.gmra.mrb[0].mxu0 %v2023
      %v2214 = vpop.f32.mrb[0].mxu0
      %v2215 = vadd.f32 0.0, %v2214
      %v2216 = vpop.f32.mrb[0].mxu0
      %2217 = vmatprep.mubr.f32.mxu0 0.0
      %2218 = vmatmul.mubr.f32.gmra.mrb[0].mxu0 %v2026
      %v2219 = vpop.f32.mrb[0].mxu0
      %v2220 = vadd.f32 0.0, %v2219
      %v2221 = vpop.f32.mrb[0].mxu0
      %2222 = vmatprep.mubr.f32.mxu0 0.0
      %2223 = vmatmul.mubr.f32.gmra.mrb[0].mxu0 %v2029
      %v2224 = vpop.f32.mrb[0].mxu0
      %v2225 = vadd.f32 0.0, %v2224
      %v2226 = vpop.f32.mrb[0].mxu0
      %2227 = vmatprep.mubr.f32.mxu0 0.0
      %2228 = vmatmul.mubr.f32.gmra.mrb[0].mxu0 %v2032
      %v2229 = vpop.f32.mrb[0].mxu0
      %v2230 = vadd.f32 0.0, %v2229
      %v2231 = vpop.f32.mrb[0].mxu0
      %2232 = vmatprep.mubr.f32.mxu0 0.0
      %2233 = vmatmul.mubr.f32.gmra.mrb[0].mxu0 %v2035
      %v2234 = vpop.f32.mrb[0].mxu0
      %v2235 = vadd.f32 0.0, %v2234
      %v2236 = vpop.f32.mrb[0].mxu0
      %2237 = vmatprep.mubr.f32.mxu0 0.0
      %2238 = vmatmul.mubr.f32.gmra.mrb[0].mxu0 %v2038
      %v2239 = vpop.f32.mrb[0].mxu0
      %v2240 = vadd.f32 0.0, %v2239
      %v2241 = vpop.f32.mrb[0].mxu0
      %2242 = vmatprep.mubr.f32.mxu0 0.0
      %2243 = vmatmul.mubr.f32.gmra.mrb[0].mxu0 %v2041
      %v2244 = vpop.f32.mrb[0].mxu0
      %v2245 = vadd.f32 0.0, %v2244
      %v2246 = vpop.f32.mrb[0].mxu0
      %2247 = vmatprep.mubr.f32.mxu0 0.0
      %2248 = vmatmul.mubr.f32.gmra.mrb[0].mxu0 %v2044
      %v2249 = vpop.f32.mrb[0].mxu0
      %v2250 = vadd.f32 0.0, %v2249
      %v2251 = vpop.f32.mrb[0].mxu0
      %2252 = vmatprep.mubr.f32.mxu0 0.0
      %2253 = vmatmul.mubr.f32.gmra.mrb[0].mxu0 %v2047
      %v2254 = vpop.f32.mrb[0].mxu0
      %v2255 = vadd.f32 0.0, %v2254
      %v2256 = vpop.f32.mrb[0].mxu0
      %2257 = vmatprep.mubr.f32.mxu0 0.0
      %2258 = vmatmul.mubr.f32.gmra.mrb[0].mxu0 %v2050
      %v2259 = vpop.f32.mrb[0].mxu0
      %v2260 = vadd.f32 0.0, %v2259
      %v2261 = vpop.f32.mrb[0].mxu0
      %2262 = vmatprep.mubr.f32.mxu0 0.0
      %2263 = vmatmul.mubr.f32.gmra.mrb[0].mxu0 %v2053
      %v2264 = vpop.f32.mrb[0].mxu0
      %v2265 = vadd.f32 0.0, %v2264
      %v2266 = vpop.f32.mrb[0].mxu0
      %2267 = vmatprep.mubr.f32.mxu0 0.0
      %2268 = vmatmul.mubr.f32.gmra.mrb[0].mxu0 %v2056
      %v2269 = vpop.f32.mrb[0].mxu0
      %v2270 = vadd.f32 0.0, %v2269
      %v2271 = vpop.f32.mrb[0].mxu0
      %2272 = vmatprep.mubr.f32.mxu0 0.0
      %2273 = vmatmul.mubr.f32.gmra.mrb[0].mxu0 %v2059
      %v2274 = vpop.f32.mrb[0].mxu0
      %v2275 = vadd.f32 0.0, %v2274
      %v2276 = vpop.f32.mrb[0].mxu0
      %2277 = vmatprep.mubr.f32.mxu0 0.0
      %2278 = vmatmul.mubr.f32.gmra.mrb[0].mxu0 %v2062
      %v2279 = vpop.f32.mrb[0].mxu0
      %v2280 = vadd.f32 0.0, %v2279
      %v2281 = vpop.f32.mrb[0].mxu0
      %2282 = vmatprep.mubr.f32.mxu0 0.0
      %2283 = vmatmul.mubr.f32.gmra.mrb[0].mxu0 %v2065
      %v2284 = vpop.f32.mrb[0].mxu0
      %v2285 = vadd.f32 0.0, %v2284
      %v2286 = vpop.f32.mrb[0].mxu0
      %2287 = vmatprep.mubr.f32.mxu0 0.0
      %2288 = vmatmul.mubr.f32.gmra.mrb[0].mxu0 %v2068
      %v2289 = vpop.f32.mrb[0].mxu0
      %v2290 = vadd.f32 0.0, %v2289
      %v2291 = vpop.f32.mrb[0].mxu0
      %2292 = vmatprep.mubr.f32.mxu0 0.0
      %2293 = vmatmul.mubr.f32.gmra.mrb[0].mxu0 %v2071
      %v2294 = vpop.f32.mrb[0].mxu0
      %v2295 = vadd.f32 0.0, %v2294
      %v2296 = vpop.f32.mrb[0].mxu0
      %2297 = vdwg.mxu0
      %v2298 = vadd.f32 %v1911, %v2140
      %v2299 = vadd.f32 %v1912, %v2145
      %v2300 = vadd.f32 %v1913, %v2150
      %v2301 = vadd.f32 %v1914, %v2155
      %v2302 = vadd.f32 %v1915, %v2160
      %v2303 = vadd.f32 %v1916, %v2165
      %v2304 = vadd.f32 %v1917, %v2170
      %v2305 = vadd.f32 %v1918, %v2175
      %v2306 = vadd.f32 %v1919, %v2180
      %v2307 = vadd.f32 %v1920, %v2185
      %v2308 = vadd.f32 %v1921, %v2190
      %v2309 = vadd.f32 %v1922, %v2195
      %v2310 = vadd.f32 %v1923, %v2200
      %v2311 = vadd.f32 %v1924, %v2205
      %v2312 = vadd.f32 %v1925, %v2210
      %v2313 = vadd.f32 %v1926, %v2215
      %v2314 = vadd.f32 %v1927, %v2220
      %v2315 = vadd.f32 %v1928, %v2225
      %v2316 = vadd.f32 %v1929, %v2230
      %v2317 = vadd.f32 %v1930, %v2235
      %v2318 = vadd.f32 %v1931, %v2240
      %v2319 = vadd.f32 %v1932, %v2245
      %v2320 = vadd.f32 %v1933, %v2250
      %v2321 = vadd.f32 %v1934, %v2255
      %v2322 = vadd.f32 %v1935, %v2260
      %v2323 = vadd.f32 %v1936, %v2265
      %v2324 = vadd.f32 %v1937, %v2270
      %v2325 = vadd.f32 %v1938, %v2275
      %v2326 = vadd.f32 %v1939, %v2280
      %v2327 = vadd.f32 %v1940, %v2285
      %v2328 = vadd.f32 %v1941, %v2290
      %v2329 = vadd.f32 %v1942, %v2295
      %v2330 = vld [vmem:[%s426 + $0x2] sm:$0xff]
      %v2331 = vld [vmem:[%s426 + $0xa] sm:$0xff]
      %v2332 = vld [vmem:[%s426 + $0x1a] sm:$0xff]
      %v2333 = vld [vmem:[%s426 + $0x22] sm:$0xff]
      %v2334 = vld [vmem:[%s426 + $0x32] sm:$0xff]
      %v2335 = vld [vmem:[%s426 + $0x3a] sm:$0xff]
      %v2336 = vld [vmem:[%s426 + $0x4a] sm:$0xff]
      %v2337 = vld [vmem:[%s426 + $0x52] sm:$0xff]
      %v2338 = vld [vmem:[%s426 + $0x62] sm:$0xff]
      %v2339 = vld [vmem:[%s426 + $0x6a] sm:$0xff]
      %v2340 = vld [vmem:[%s426 + $0x7a] sm:$0xff]
      %v2341 = vld [vmem:[%s426 + $0x82] sm:$0xff]
      %v2342 = vld [vmem:[%s426 + $0x92] sm:$0xff]
      %v2343 = vld [vmem:[%s426 + $0x9a] sm:$0xff]
      %v2344 = vld [vmem:[%s426 + $0xaa] sm:$0xff]
      %v2345 = vld [vmem:[%s426 + $0xb2] sm:$0xff]
      %v2346 = vld [vmem:[%s426 + $0xc2] sm:$0xff]
      %v2347 = vld [vmem:[%s426 + $0xca] sm:$0xff]
      %v2348 = vld [vmem:[%s426 + $0xda] sm:$0xff]
      %v2349 = vld [vmem:[%s426 + $0xe2] sm:$0xff]
      %v2350 = vld [vmem:[%s426 + $0xf2] sm:$0xff]
      %v2351 = vld [vmem:[%s426 + $0xfa] sm:$0xff]
      %v2352 = vld [vmem:[%s426 + $0x10a] sm:$0xff]
      %v2353 = vld [vmem:[%s426 + $0x112] sm:$0xff]
      %v2354 = vld [vmem:[%s426 + $0x122] sm:$0xff]
      %v2355 = vld [vmem:[%s426 + $0x12a] sm:$0xff]
      %v2356 = vld [vmem:[%s426 + $0x13a] sm:$0xff]
      %v2357 = vld [vmem:[%s426 + $0x142] sm:$0xff]
      %v2358 = vld [vmem:[%s426 + $0x152] sm:$0xff]
      %v2359 = vld [vmem:[%s426 + $0x15a] sm:$0xff]
      %v2360 = vld [vmem:[%s426 + $0x16a] sm:$0xff]
      %v2361 = vld [vmem:[%s426 + $0x172] sm:$0xff]
      %s2362 = scalar_lea.vmem %s3, 40
      %v2363 = vld [vmem:[%s2362] sm:$0xff]
      %v2365 = vsel %vm427, %v2330, 0
      %v2368 = vsel %vm427, %v2331, 0
      %v2371 = vsel %vm427, %v2332, 0
      %v2374 = vsel %vm427, %v2333, 0
      %v2377 = vsel %vm427, %v2334, 0
      %v2380 = vsel %vm427, %v2335, 0
      %v2383 = vsel %vm427, %v2336, 0
      %v2386 = vsel %vm427, %v2337, 0
      %v2389 = vsel %vm427, %v2338, 0
      %v2392 = vsel %vm427, %v2339, 0
      %v2395 = vsel %vm427, %v2340, 0
      %v2398 = vsel %vm427, %v2341, 0
      %v2401 = vsel %vm427, %v2342, 0
      %v2404 = vsel %vm427, %v2343, 0
      %v2407 = vsel %vm427, %v2344, 0
      %v2410 = vsel %vm427, %v2345, 0
      %v2413 = vsel %vm427, %v2346, 0
      %v2416 = vsel %vm427, %v2347, 0
      %v2419 = vsel %vm427, %v2348, 0
      %v2422 = vsel %vm427, %v2349, 0
      %v2425 = vsel %vm427, %v2350, 0
      %v2428 = vsel %vm427, %v2351, 0
      %v2431 = vsel %vm427, %v2352, 0
      %v2434 = vsel %vm427, %v2353, 0
      %v2437 = vsel %vm427, %v2354, 0
      %v2440 = vsel %vm427, %v2355, 0
      %v2443 = vsel %vm427, %v2356, 0
      %v2446 = vsel %vm427, %v2357, 0
      %v2449 = vsel %vm427, %v2358, 0
      %v2452 = vsel %vm427, %v2359, 0
      %v2455 = vsel %vm427, %v2360, 0
      %v2458 = vsel %vm427, %v2361, 0
      %2460 = vmatprep.subr.mxu0 0.0
      %2461 = vmatpush1.msra.mxu0 %v2363
      %2462 = vmatprep.subr.mxu0 0.0
      %2463 = vmatpush1.msra.mxu0 0.0
      %2464 = vmatprep.subr.mxu0 0.0
      %2465 = vmatpush1.msra.mxu0 0.0
      %2466 = vmatprep.subr.mxu0 0.0
      %2467 = vmatpush1.msra.mxu0 0.0
      %2468 = vmatprep.subr.mxu0 0.0
      %2469 = vmatpush1.msra.mxu0 0.0
      %2470 = vmatprep.subr.mxu0 0.0
      %2471 = vmatpush1.msra.mxu0 0.0
      %2472 = vmatprep.subr.mxu0 0.0
      %2473 = vmatpush1.msra.mxu0 0.0
      %2474 = vmatprep.subr.mxu0 0.0
      %2475 = vmatpush1.msra.mxu0 0.0
      %2476 = vmatprep.subr.mxu0 0.0
      %2477 = vmatpush1.msra.mxu0 0.0
      %2478 = vmatprep.subr.mxu0 0.0
      %2479 = vmatpush1.msra.mxu0 0.0
      %2480 = vmatprep.subr.mxu0 0.0
      %2481 = vmatpush1.msra.mxu0 0.0
      %2482 = vmatprep.subr.mxu0 0.0
      %2483 = vmatpush1.msra.mxu0 0.0
      %2484 = vmatprep.subr.mxu0 0.0
      %2485 = vmatpush1.msra.mxu0 0.0
      %2486 = vmatprep.subr.mxu0 0.0
      %2487 = vmatpush1.msra.mxu0 0.0
      %2488 = vmatprep.subr.mxu0 0.0
      %2489 = vmatpush1.msra.mxu0 0.0
      %2490 = vmatprep.subr.mxu0 0.0
      %2491 = vmatpush1.msra.mxu0 0.0
      %2492 = vmatprep.subr.mxu0 0.0
      %2493 = vmatpush1.msra.mxu0 0.0
      %2494 = vmatprep.subr.mxu0 0.0
      %2495 = vmatpush1.msra.mxu0 0.0
      %2496 = vmatprep.subr.mxu0 0.0
      %2497 = vmatpush1.msra.mxu0 0.0
      %2498 = vmatprep.subr.mxu0 0.0
      %2499 = vmatpush1.msra.mxu0 0.0
      %2500 = vmatprep.subr.mxu0 0.0
      %2501 = vmatpush1.msra.mxu0 0.0
      %2502 = vmatprep.subr.mxu0 0.0
      %2503 = vmatpush1.msra.mxu0 0.0
      %2504 = vmatprep.subr.mxu0 0.0
      %2505 = vmatpush1.msra.mxu0 0.0
      %2506 = vmatprep.subr.mxu0 0.0
      %2507 = vmatpush1.msra.mxu0 0.0
      %2508 = vmatprep.subr.mxu0 0.0
      %2509 = vmatpush1.msra.mxu0 0.0
      %2510 = vmatprep.subr.mxu0 0.0
      %2511 = vmatpush1.msra.mxu0 0.0
      %2512 = vmatprep.subr.mxu0 0.0
      %2513 = vmatpush1.msra.mxu0 0.0
      %2514 = vmatprep.subr.mxu0 0.0
      %2515 = vmatpush1.msra.mxu0 0.0
      %2516 = vmatprep.subr.mxu0 0.0
      %2517 = vmatpush1.msra.mxu0 0.0
      %2518 = vmatprep.subr.mxu0 0.0
      %2519 = vmatpush1.msra.mxu0 0.0
      %2520 = vmatprep.subr.mxu0 0.0
      %2521 = vmatpush1.msra.mxu0 0.0
      %2522 = vmatprep.subr.mxu0 0.0
      %2523 = vmatpush1.msra.mxu0 0.0
      %2524 = vmatprep.mubr.f32.mxu0 0.0
      %2525 = vmatmul.mubr.f32.gmra.mrb[0].mxu0 %v2365
      %v2526 = vpop.f32.mrb[0].mxu0
      %v2527 = vadd.f32 0.0, %v2526
      %v2528 = vpop.f32.mrb[0].mxu0
      %2529 = vmatprep.mubr.f32.mxu0 0.0
      %2530 = vmatmul.mubr.f32.gmra.mrb[0].mxu0 %v2368
      %v2531 = vpop.f32.mrb[0].mxu0
      %v2532 = vadd.f32 0.0, %v2531
      %v2533 = vpop.f32.mrb[0].mxu0
      %2534 = vmatprep.mubr.f32.mxu0 0.0
      %2535 = vmatmul.mubr.f32.gmra.mrb[0].mxu0 %v2371
      %v2536 = vpop.f32.mrb[0].mxu0
      %v2537 = vadd.f32 0.0, %v2536
      %v2538 = vpop.f32.mrb[0].mxu0
      %2539 = vmatprep.mubr.f32.mxu0 0.0
      %2540 = vmatmul.mubr.f32.gmra.mrb[0].mxu0 %v2374
      %v2541 = vpop.f32.mrb[0].mxu0
      %v2542 = vadd.f32 0.0, %v2541
      %v2543 = vpop.f32.mrb[0].mxu0
      %2544 = vmatprep.mubr.f32.mxu0 0.0
      %2545 = vmatmul.mubr.f32.gmra.mrb[0].mxu0 %v2377
      %v2546 = vpop.f32.mrb[0].mxu0
      %v2547 = vadd.f32 0.0, %v2546
      %v2548 = vpop.f32.mrb[0].mxu0
      %2549 = vmatprep.mubr.f32.mxu0 0.0
      %2550 = vmatmul.mubr.f32.gmra.mrb[0].mxu0 %v2380
      %v2551 = vpop.f32.mrb[0].mxu0
      %v2552 = vadd.f32 0.0, %v2551
      %v2553 = vpop.f32.mrb[0].mxu0
      %2554 = vmatprep.mubr.f32.mxu0 0.0
      %2555 = vmatmul.mubr.f32.gmra.mrb[0].mxu0 %v2383
      %v2556 = vpop.f32.mrb[0].mxu0
      %v2557 = vadd.f32 0.0, %v2556
      %v2558 = vpop.f32.mrb[0].mxu0
      %2559 = vmatprep.mubr.f32.mxu0 0.0
      %2560 = vmatmul.mubr.f32.gmra.mrb[0].mxu0 %v2386
      %v2561 = vpop.f32.mrb[0].mxu0
      %v2562 = vadd.f32 0.0, %v2561
      %v2563 = vpop.f32.mrb[0].mxu0
      %2564 = vmatprep.mubr.f32.mxu0 0.0
      %2565 = vmatmul.mubr.f32.gmra.mrb[0].mxu0 %v2389
      %v2566 = vpop.f32.mrb[0].mxu0
      %v2567 = vadd.f32 0.0, %v2566
      %v2568 = vpop.f32.mrb[0].mxu0
      %2569 = vmatprep.mubr.f32.mxu0 0.0
      %2570 = vmatmul.mubr.f32.gmra.mrb[0].mxu0 %v2392
      %v2571 = vpop.f32.mrb[0].mxu0
      %v2572 = vadd.f32 0.0, %v2571
      %v2573 = vpop.f32.mrb[0].mxu0
      %2574 = vmatprep.mubr.f32.mxu0 0.0
      %2575 = vmatmul.mubr.f32.gmra.mrb[0].mxu0 %v2395
      %v2576 = vpop.f32.mrb[0].mxu0
      %v2577 = vadd.f32 0.0, %v2576
      %v2578 = vpop.f32.mrb[0].mxu0
      %2579 = vmatprep.mubr.f32.mxu0 0.0
      %2580 = vmatmul.mubr.f32.gmra.mrb[0].mxu0 %v2398
      %v2581 = vpop.f32.mrb[0].mxu0
      %v2582 = vadd.f32 0.0, %v2581
      %v2583 = vpop.f32.mrb[0].mxu0
      %2584 = vmatprep.mubr.f32.mxu0 0.0
      %2585 = vmatmul.mubr.f32.gmra.mrb[0].mxu0 %v2401
      %v2586 = vpop.f32.mrb[0].mxu0
      %v2587 = vadd.f32 0.0, %v2586
      %v2588 = vpop.f32.mrb[0].mxu0
      %2589 = vmatprep.mubr.f32.mxu0 0.0
      %2590 = vmatmul.mubr.f32.gmra.mrb[0].mxu0 %v2404
      %v2591 = vpop.f32.mrb[0].mxu0
      %v2592 = vadd.f32 0.0, %v2591
      %v2593 = vpop.f32.mrb[0].mxu0
      %2594 = vmatprep.mubr.f32.mxu0 0.0
      %2595 = vmatmul.mubr.f32.gmra.mrb[0].mxu0 %v2407
      %v2596 = vpop.f32.mrb[0].mxu0
      %v2597 = vadd.f32 0.0, %v2596
      %v2598 = vpop.f32.mrb[0].mxu0
      %2599 = vmatprep.mubr.f32.mxu0 0.0
      %2600 = vmatmul.mubr.f32.gmra.mrb[0].mxu0 %v2410
      %v2601 = vpop.f32.mrb[0].mxu0
      %v2602 = vadd.f32 0.0, %v2601
      %v2603 = vpop.f32.mrb[0].mxu0
      %2604 = vmatprep.mubr.f32.mxu0 0.0
      %2605 = vmatmul.mubr.f32.gmra.mrb[0].mxu0 %v2413
      %v2606 = vpop.f32.mrb[0].mxu0
      %v2607 = vadd.f32 0.0, %v2606
      %v2608 = vpop.f32.mrb[0].mxu0
      %2609 = vmatprep.mubr.f32.mxu0 0.0
      %2610 = vmatmul.mubr.f32.gmra.mrb[0].mxu0 %v2416
      %v2611 = vpop.f32.mrb[0].mxu0
      %v2612 = vadd.f32 0.0, %v2611
      %v2613 = vpop.f32.mrb[0].mxu0
      %2614 = vmatprep.mubr.f32.mxu0 0.0
      %2615 = vmatmul.mubr.f32.gmra.mrb[0].mxu0 %v2419
      %v2616 = vpop.f32.mrb[0].mxu0
      %v2617 = vadd.f32 0.0, %v2616
      %v2618 = vpop.f32.mrb[0].mxu0
      %2619 = vmatprep.mubr.f32.mxu0 0.0
      %2620 = vmatmul.mubr.f32.gmra.mrb[0].mxu0 %v2422
      %v2621 = vpop.f32.mrb[0].mxu0
      %v2622 = vadd.f32 0.0, %v2621
      %v2623 = vpop.f32.mrb[0].mxu0
      %2624 = vmatprep.mubr.f32.mxu0 0.0
      %2625 = vmatmul.mubr.f32.gmra.mrb[0].mxu0 %v2425
      %v2626 = vpop.f32.mrb[0].mxu0
      %v2627 = vadd.f32 0.0, %v2626
      %v2628 = vpop.f32.mrb[0].mxu0
      %2629 = vmatprep.mubr.f32.mxu0 0.0
      %2630 = vmatmul.mubr.f32.gmra.mrb[0].mxu0 %v2428
      %v2631 = vpop.f32.mrb[0].mxu0
      %v2632 = vadd.f32 0.0, %v2631
      %v2633 = vpop.f32.mrb[0].mxu0
      %2634 = vmatprep.mubr.f32.mxu0 0.0
      %2635 = vmatmul.mubr.f32.gmra.mrb[0].mxu0 %v2431
      %v2636 = vpop.f32.mrb[0].mxu0
      %v2637 = vadd.f32 0.0, %v2636
      %v2638 = vpop.f32.mrb[0].mxu0
      %2639 = vmatprep.mubr.f32.mxu0 0.0
      %2640 = vmatmul.mubr.f32.gmra.mrb[0].mxu0 %v2434
      %v2641 = vpop.f32.mrb[0].mxu0
      %v2642 = vadd.f32 0.0, %v2641
      %v2643 = vpop.f32.mrb[0].mxu0
      %2644 = vmatprep.mubr.f32.mxu0 0.0
      %2645 = vmatmul.mubr.f32.gmra.mrb[0].mxu0 %v2437
      %v2646 = vpop.f32.mrb[0].mxu0
      %v2647 = vadd.f32 0.0, %v2646
      %v2648 = vpop.f32.mrb[0].mxu0
      %2649 = vmatprep.mubr.f32.mxu0 0.0
      %2650 = vmatmul.mubr.f32.gmra.mrb[0].mxu0 %v2440
      %v2651 = vpop.f32.mrb[0].mxu0
      %v2652 = vadd.f32 0.0, %v2651
      %v2653 = vpop.f32.mrb[0].mxu0
      %2654 = vmatprep.mubr.f32.mxu0 0.0
      %2655 = vmatmul.mubr.f32.gmra.mrb[0].mxu0 %v2443
      %v2656 = vpop.f32.mrb[0].mxu0
      %v2657 = vadd.f32 0.0, %v2656
      %v2658 = vpop.f32.mrb[0].mxu0
      %2659 = vmatprep.mubr.f32.mxu0 0.0
      %2660 = vmatmul.mubr.f32.gmra.mrb[0].mxu0 %v2446
      %v2661 = vpop.f32.mrb[0].mxu0
      %v2662 = vadd.f32 0.0, %v2661
      %v2663 = vpop.f32.mrb[0].mxu0
      %2664 = vmatprep.mubr.f32.mxu0 0.0
      %2665 = vmatmul.mubr.f32.gmra.mrb[0].mxu0 %v2449
      %v2666 = vpop.f32.mrb[0].mxu0
      %v2667 = vadd.f32 0.0, %v2666
      %v2668 = vpop.f32.mrb[0].mxu0
      %2669 = vmatprep.mubr.f32.mxu0 0.0
      %2670 = vmatmul.mubr.f32.gmra.mrb[0].mxu0 %v2452
      %v2671 = vpop.f32.mrb[0].mxu0
      %v2672 = vadd.f32 0.0, %v2671
      %v2673 = vpop.f32.mrb[0].mxu0
      %2674 = vmatprep.mubr.f32.mxu0 0.0
      %2675 = vmatmul.mubr.f32.gmra.mrb[0].mxu0 %v2455
      %v2676 = vpop.f32.mrb[0].mxu0
      %v2677 = vadd.f32 0.0, %v2676
      %v2678 = vpop.f32.mrb[0].mxu0
      %2679 = vmatprep.mubr.f32.mxu0 0.0
      %2680 = vmatmul.mubr.f32.gmra.mrb[0].mxu0 %v2458
      %v2681 = vpop.f32.mrb[0].mxu0
      %v2682 = vadd.f32 0.0, %v2681
      %v2683 = vpop.f32.mrb[0].mxu0
      %2684 = vdwg.mxu0
      %v2685 = vadd.f32 %v2298, %v2527
      %v2686 = vadd.f32 %v2299, %v2532
      %v2687 = vadd.f32 %v2300, %v2537
      %v2688 = vadd.f32 %v2301, %v2542
      %v2689 = vadd.f32 %v2302, %v2547
      %v2690 = vadd.f32 %v2303, %v2552
      %v2691 = vadd.f32 %v2304, %v2557
      %v2692 = vadd.f32 %v2305, %v2562
      %v2693 = vadd.f32 %v2306, %v2567
      %v2694 = vadd.f32 %v2307, %v2572
      %v2695 = vadd.f32 %v2308, %v2577
      %v2696 = vadd.f32 %v2309, %v2582
      %v2697 = vadd.f32 %v2310, %v2587
      %v2698 = vadd.f32 %v2311, %v2592
      %v2699 = vadd.f32 %v2312, %v2597
      %v2700 = vadd.f32 %v2313, %v2602
      %v2701 = vadd.f32 %v2314, %v2607
      %v2702 = vadd.f32 %v2315, %v2612
      %v2703 = vadd.f32 %v2316, %v2617
      %v2704 = vadd.f32 %v2317, %v2622
      %v2705 = vadd.f32 %v2318, %v2627
      %v2706 = vadd.f32 %v2319, %v2632
      %v2707 = vadd.f32 %v2320, %v2637
      %v2708 = vadd.f32 %v2321, %v2642
      %v2709 = vadd.f32 %v2322, %v2647
      %v2710 = vadd.f32 %v2323, %v2652
      %v2711 = vadd.f32 %v2324, %v2657
      %v2712 = vadd.f32 %v2325, %v2662
      %v2713 = vadd.f32 %v2326, %v2667
      %v2714 = vadd.f32 %v2327, %v2672
      %v2715 = vadd.f32 %v2328, %v2677
      %v2716 = vadd.f32 %v2329, %v2682
      %s2717 = scalar_lea.vmem [#allocation2], 48
      %v2718 = vld [vmem:[%s2717] sm:$0xff]
      %v2719 = vld [vmem:[%s2717 + $0x8] sm:$0xff]
      %v2720 = vld [vmem:[%s2717 + $0x18] sm:$0xff]
      %v2721 = vld [vmem:[%s2717 + $0x20] sm:$0xff]
      %v2722 = vld [vmem:[%s2717 + $0x30] sm:$0xff]
      %v2723 = vld [vmem:[%s2717 + $0x38] sm:$0xff]
      %v2724 = vld [vmem:[%s2717 + $0x48] sm:$0xff]
      %v2725 = vld [vmem:[%s2717 + $0x50] sm:$0xff]
      %v2726 = vld [vmem:[%s2717 + $0x60] sm:$0xff]
      %v2727 = vld [vmem:[%s2717 + $0x68] sm:$0xff]
      %v2728 = vld [vmem:[%s2717 + $0x78] sm:$0xff]
      %v2729 = vld [vmem:[%s2717 + $0x80] sm:$0xff]
      %v2730 = vld [vmem:[%s2717 + $0x90] sm:$0xff]
      %v2731 = vld [vmem:[%s2717 + $0x98] sm:$0xff]
      %v2732 = vld [vmem:[%s2717 + $0xa8] sm:$0xff]
      %v2733 = vld [vmem:[%s2717 + $0xb0] sm:$0xff]
      %v2734 = vld [vmem:[%s2717 + $0xc0] sm:$0xff]
      %v2735 = vld [vmem:[%s2717 + $0xc8] sm:$0xff]
      %v2736 = vld [vmem:[%s2717 + $0xd8] sm:$0xff]
      %v2737 = vld [vmem:[%s2717 + $0xe0] sm:$0xff]
      %v2738 = vld [vmem:[%s2717 + $0xf0] sm:$0xff]
      %v2739 = vld [vmem:[%s2717 + $0xf8] sm:$0xff]
      %v2740 = vld [vmem:[%s2717 + $0x108] sm:$0xff]
      %v2741 = vld [vmem:[%s2717 + $0x110] sm:$0xff]
      %v2742 = vld [vmem:[%s2717 + $0x120] sm:$0xff]
      %v2743 = vld [vmem:[%s2717 + $0x128] sm:$0xff]
      %v2744 = vld [vmem:[%s2717 + $0x138] sm:$0xff]
      %v2745 = vld [vmem:[%s2717 + $0x140] sm:$0xff]
      %v2746 = vld [vmem:[%s2717 + $0x150] sm:$0xff]
      %v2747 = vld [vmem:[%s2717 + $0x158] sm:$0xff]
      %v2748 = vld [vmem:[%s2717 + $0x168] sm:$0xff]
      %v2749 = vld [vmem:[%s2717 + $0x170] sm:$0xff]
      %s2750 = scalar_lea.vmem %s3, 48
      %v2751 = vld [vmem:[%s2750] sm:$0xff]
      %v2753 = vsel %vm427, %v2718, 0
      %v2756 = vsel %vm427, %v2719, 0
      %v2759 = vsel %vm427, %v2720, 0
      %v2762 = vsel %vm427, %v2721, 0
      %v2765 = vsel %vm427, %v2722, 0
      %v2768 = vsel %vm427, %v2723, 0
      %v2771 = vsel %vm427, %v2724, 0
      %v2774 = vsel %vm427, %v2725, 0
      %v2777 = vsel %vm427, %v2726, 0
      %v2780 = vsel %vm427, %v2727, 0
      %v2783 = vsel %vm427, %v2728, 0
      %v2786 = vsel %vm427, %v2729, 0
      %v2789 = vsel %vm427, %v2730, 0
      %v2792 = vsel %vm427, %v2731, 0
      %v2795 = vsel %vm427, %v2732, 0
      %v2798 = vsel %vm427, %v2733, 0
      %v2801 = vsel %vm427, %v2734, 0
      %v2804 = vsel %vm427, %v2735, 0
      %v2807 = vsel %vm427, %v2736, 0
      %v2810 = vsel %vm427, %v2737, 0
      %v2813 = vsel %vm427, %v2738, 0
      %v2816 = vsel %vm427, %v2739, 0
      %v2819 = vsel %vm427, %v2740, 0
      %v2822 = vsel %vm427, %v2741, 0
      %v2825 = vsel %vm427, %v2742, 0
      %v2828 = vsel %vm427, %v2743, 0
      %v2831 = vsel %vm427, %v2744, 0
      %v2834 = vsel %vm427, %v2745, 0
      %v2837 = vsel %vm427, %v2746, 0
      %v2840 = vsel %vm427, %v2747, 0
      %v2843 = vsel %vm427, %v2748, 0
      %v2846 = vsel %vm427, %v2749, 0
      %2848 = vmatprep.subr.mxu0 0.0
      %2849 = vmatpush1.msra.mxu0 %v2751
      %2850 = vmatprep.subr.mxu0 0.0
      %2851 = vmatpush1.msra.mxu0 0.0
      %2852 = vmatprep.subr.mxu0 0.0
      %2853 = vmatpush1.msra.mxu0 0.0
      %2854 = vmatprep.subr.mxu0 0.0
      %2855 = vmatpush1.msra.mxu0 0.0
      %2856 = vmatprep.subr.mxu0 0.0
      %2857 = vmatpush1.msra.mxu0 0.0
      %2858 = vmatprep.subr.mxu0 0.0
      %2859 = vmatpush1.msra.mxu0 0.0
      %2860 = vmatprep.subr.mxu0 0.0
      %2861 = vmatpush1.msra.mxu0 0.0
      %2862 = vmatprep.subr.mxu0 0.0
      %2863 = vmatpush1.msra.mxu0 0.0
      %2864 = vmatprep.subr.mxu0 0.0
      %2865 = vmatpush1.msra.mxu0 0.0
      %2866 = vmatprep.subr.mxu0 0.0
      %2867 = vmatpush1.msra.mxu0 0.0
      %2868 = vmatprep.subr.mxu0 0.0
      %2869 = vmatpush1.msra.mxu0 0.0
      %2870 = vmatprep.subr.mxu0 0.0
      %2871 = vmatpush1.msra.mxu0 0.0
      %2872 = vmatprep.subr.mxu0 0.0
      %2873 = vmatpush1.msra.mxu0 0.0
      %2874 = vmatprep.subr.mxu0 0.0
      %2875 = vmatpush1.msra.mxu0 0.0
      %2876 = vmatprep.subr.mxu0 0.0
      %2877 = vmatpush1.msra.mxu0 0.0
      %2878 = vmatprep.subr.mxu0 0.0
      %2879 = vmatpush1.msra.mxu0 0.0
      %2880 = vmatprep.subr.mxu0 0.0
      %2881 = vmatpush1.msra.mxu0 0.0
      %2882 = vmatprep.subr.mxu0 0.0
      %2883 = vmatpush1.msra.mxu0 0.0
      %2884 = vmatprep.subr.mxu0 0.0
      %2885 = vmatpush1.msra.mxu0 0.0
      %2886 = vmatprep.subr.mxu0 0.0
      %2887 = vmatpush1.msra.mxu0 0.0
      %2888 = vmatprep.subr.mxu0 0.0
      %2889 = vmatpush1.msra.mxu0 0.0
      %2890 = vmatprep.subr.mxu0 0.0
      %2891 = vmatpush1.msra.mxu0 0.0
      %2892 = vmatprep.subr.mxu0 0.0
      %2893 = vmatpush1.msra.mxu0 0.0
      %2894 = vmatprep.subr.mxu0 0.0
      %2895 = vmatpush1.msra.mxu0 0.0
      %2896 = vmatprep.subr.mxu0 0.0
      %2897 = vmatpush1.msra.mxu0 0.0
      %2898 = vmatprep.subr.mxu0 0.0
      %2899 = vmatpush1.msra.mxu0 0.0
      %2900 = vmatprep.subr.mxu0 0.0
      %2901 = vmatpush1.msra.mxu0 0.0
      %2902 = vmatprep.subr.mxu0 0.0
      %2903 = vmatpush1.msra.mxu0 0.0
      %2904 = vmatprep.subr.mxu0 0.0
      %2905 = vmatpush1.msra.mxu0 0.0
      %2906 = vmatprep.subr.mxu0 0.0
      %2907 = vmatpush1.msra.mxu0 0.0
      %2908 = vmatprep.subr.mxu0 0.0
      %2909 = vmatpush1.msra.mxu0 0.0
      %2910 = vmatprep.subr.mxu0 0.0
      %2911 = vmatpush1.msra.mxu0 0.0
      %2912 = vmatprep.mubr.f32.mxu0 0.0
      %2913 = vmatmul.mubr.f32.gmra.mrb[0].mxu0 %v2753
      %v2914 = vpop.f32.mrb[0].mxu0
      %v2915 = vadd.f32 0.0, %v2914
      %v2916 = vpop.f32.mrb[0].mxu0
      %2917 = vmatprep.mubr.f32.mxu0 0.0
      %2918 = vmatmul.mubr.f32.gmra.mrb[0].mxu0 %v2756
      %v2919 = vpop.f32.mrb[0].mxu0
      %v2920 = vadd.f32 0.0, %v2919
      %v2921 = vpop.f32.mrb[0].mxu0
      %2922 = vmatprep.mubr.f32.mxu0 0.0
      %2923 = vmatmul.mubr.f32.gmra.mrb[0].mxu0 %v2759
      %v2924 = vpop.f32.mrb[0].mxu0
      %v2925 = vadd.f32 0.0, %v2924
      %v2926 = vpop.f32.mrb[0].mxu0
      %2927 = vmatprep.mubr.f32.mxu0 0.0
      %2928 = vmatmul.mubr.f32.gmra.mrb[0].mxu0 %v2762
      %v2929 = vpop.f32.mrb[0].mxu0
      %v2930 = vadd.f32 0.0, %v2929
      %v2931 = vpop.f32.mrb[0].mxu0
      %2932 = vmatprep.mubr.f32.mxu0 0.0
      %2933 = vmatmul.mubr.f32.gmra.mrb[0].mxu0 %v2765
      %v2934 = vpop.f32.mrb[0].mxu0
      %v2935 = vadd.f32 0.0, %v2934
      %v2936 = vpop.f32.mrb[0].mxu0
      %2937 = vmatprep.mubr.f32.mxu0 0.0
      %2938 = vmatmul.mubr.f32.gmra.mrb[0].mxu0 %v2768
      %v2939 = vpop.f32.mrb[0].mxu0
      %v2940 = vadd.f32 0.0, %v2939
      %v2941 = vpop.f32.mrb[0].mxu0
      %2942 = vmatprep.mubr.f32.mxu0 0.0
      %2943 = vmatmul.mubr.f32.gmra.mrb[0].mxu0 %v2771
      %v2944 = vpop.f32.mrb[0].mxu0
      %v2945 = vadd.f32 0.0, %v2944
      %v2946 = vpop.f32.mrb[0].mxu0
      %2947 = vmatprep.mubr.f32.mxu0 0.0
      %2948 = vmatmul.mubr.f32.gmra.mrb[0].mxu0 %v2774
      %v2949 = vpop.f32.mrb[0].mxu0
      %v2950 = vadd.f32 0.0, %v2949
      %v2951 = vpop.f32.mrb[0].mxu0
      %2952 = vmatprep.mubr.f32.mxu0 0.0
      %2953 = vmatmul.mubr.f32.gmra.mrb[0].mxu0 %v2777
      %v2954 = vpop.f32.mrb[0].mxu0
      %v2955 = vadd.f32 0.0, %v2954
      %v2956 = vpop.f32.mrb[0].mxu0
      %2957 = vmatprep.mubr.f32.mxu0 0.0
      %2958 = vmatmul.mubr.f32.gmra.mrb[0].mxu0 %v2780
      %v2959 = vpop.f32.mrb[0].mxu0
      %v2960 = vadd.f32 0.0, %v2959
      %v2961 = vpop.f32.mrb[0].mxu0
      %2962 = vmatprep.mubr.f32.mxu0 0.0
      %2963 = vmatmul.mubr.f32.gmra.mrb[0].mxu0 %v2783
      %v2964 = vpop.f32.mrb[0].mxu0
      %v2965 = vadd.f32 0.0, %v2964
      %v2966 = vpop.f32.mrb[0].mxu0
      %2967 = vmatprep.mubr.f32.mxu0 0.0
      %2968 = vmatmul.mubr.f32.gmra.mrb[0].mxu0 %v2786
      %v2969 = vpop.f32.mrb[0].mxu0
      %v2970 = vadd.f32 0.0, %v2969
      %v2971 = vpop.f32.mrb[0].mxu0
      %2972 = vmatprep.mubr.f32.mxu0 0.0
      %2973 = vmatmul.mubr.f32.gmra.mrb[0].mxu0 %v2789
      %v2974 = vpop.f32.mrb[0].mxu0
      %v2975 = vadd.f32 0.0, %v2974
      %v2976 = vpop.f32.mrb[0].mxu0
      %2977 = vmatprep.mubr.f32.mxu0 0.0
      %2978 = vmatmul.mubr.f32.gmra.mrb[0].mxu0 %v2792
      %v2979 = vpop.f32.mrb[0].mxu0
      %v2980 = vadd.f32 0.0, %v2979
      %v2981 = vpop.f32.mrb[0].mxu0
      %2982 = vmatprep.mubr.f32.mxu0 0.0
      %2983 = vmatmul.mubr.f32.gmra.mrb[0].mxu0 %v2795
      %v2984 = vpop.f32.mrb[0].mxu0
      %v2985 = vadd.f32 0.0, %v2984
      %v2986 = vpop.f32.mrb[0].mxu0
      %2987 = vmatprep.mubr.f32.mxu0 0.0
      %2988 = vmatmul.mubr.f32.gmra.mrb[0].mxu0 %v2798
      %v2989 = vpop.f32.mrb[0].mxu0
      %v2990 = vadd.f32 0.0, %v2989
      %v2991 = vpop.f32.mrb[0].mxu0
      %2992 = vmatprep.mubr.f32.mxu0 0.0
      %2993 = vmatmul.mubr.f32.gmra.mrb[0].mxu0 %v2801
      %v2994 = vpop.f32.mrb[0].mxu0
      %v2995 = vadd.f32 0.0, %v2994
      %v2996 = vpop.f32.mrb[0].mxu0
      %2997 = vmatprep.mubr.f32.mxu0 0.0
      %2998 = vmatmul.mubr.f32.gmra.mrb[0].mxu0 %v2804
      %v2999 = vpop.f32.mrb[0].mxu0
      %v3000 = vadd.f32 0.0, %v2999
      %v3001 = vpop.f32.mrb[0].mxu0
      %3002 = vmatprep.mubr.f32.mxu0 0.0
      %3003 = vmatmul.mubr.f32.gmra.mrb[0].mxu0 %v2807
      %v3004 = vpop.f32.mrb[0].mxu0
      %v3005 = vadd.f32 0.0, %v3004
      %v3006 = vpop.f32.mrb[0].mxu0
      %3007 = vmatprep.mubr.f32.mxu0 0.0
      %3008 = vmatmul.mubr.f32.gmra.mrb[0].mxu0 %v2810
      %v3009 = vpop.f32.mrb[0].mxu0
      %v3010 = vadd.f32 0.0, %v3009
      %v3011 = vpop.f32.mrb[0].mxu0
      %3012 = vmatprep.mubr.f32.mxu0 0.0
      %3013 = vmatmul.mubr.f32.gmra.mrb[0].mxu0 %v2813
      %v3014 = vpop.f32.mrb[0].mxu0
      %v3015 = vadd.f32 0.0, %v3014
      %v3016 = vpop.f32.mrb[0].mxu0
      %3017 = vmatprep.mubr.f32.mxu0 0.0
      %3018 = vmatmul.mubr.f32.gmra.mrb[0].mxu0 %v2816
      %v3019 = vpop.f32.mrb[0].mxu0
      %v3020 = vadd.f32 0.0, %v3019
      %v3021 = vpop.f32.mrb[0].mxu0
      %3022 = vmatprep.mubr.f32.mxu0 0.0
      %3023 = vmatmul.mubr.f32.gmra.mrb[0].mxu0 %v2819
      %v3024 = vpop.f32.mrb[0].mxu0
      %v3025 = vadd.f32 0.0, %v3024
      %v3026 = vpop.f32.mrb[0].mxu0
      %3027 = vmatprep.mubr.f32.mxu0 0.0
      %3028 = vmatmul.mubr.f32.gmra.mrb[0].mxu0 %v2822
      %v3029 = vpop.f32.mrb[0].mxu0
      %v3030 = vadd.f32 0.0, %v3029
      %v3031 = vpop.f32.mrb[0].mxu0
      %3032 = vmatprep.mubr.f32.mxu0 0.0
      %3033 = vmatmul.mubr.f32.gmra.mrb[0].mxu0 %v2825
      %v3034 = vpop.f32.mrb[0].mxu0
      %v3035 = vadd.f32 0.0, %v3034
      %v3036 = vpop.f32.mrb[0].mxu0
      %3037 = vmatprep.mubr.f32.mxu0 0.0
      %3038 = vmatmul.mubr.f32.gmra.mrb[0].mxu0 %v2828
      %v3039 = vpop.f32.mrb[0].mxu0
      %v3040 = vadd.f32 0.0, %v3039
      %v3041 = vpop.f32.mrb[0].mxu0
      %3042 = vmatprep.mubr.f32.mxu0 0.0
      %3043 = vmatmul.mubr.f32.gmra.mrb[0].mxu0 %v2831
      %v3044 = vpop.f32.mrb[0].mxu0
      %v3045 = vadd.f32 0.0, %v3044
      %v3046 = vpop.f32.mrb[0].mxu0
      %3047 = vmatprep.mubr.f32.mxu0 0.0
      %3048 = vmatmul.mubr.f32.gmra.mrb[0].mxu0 %v2834
      %v3049 = vpop.f32.mrb[0].mxu0
      %v3050 = vadd.f32 0.0, %v3049
      %v3051 = vpop.f32.mrb[0].mxu0
      %3052 = vmatprep.mubr.f32.mxu0 0.0
      %3053 = vmatmul.mubr.f32.gmra.mrb[0].mxu0 %v2837
      %v3054 = vpop.f32.mrb[0].mxu0
      %v3055 = vadd.f32 0.0, %v3054
      %v3056 = vpop.f32.mrb[0].mxu0
      %3057 = vmatprep.mubr.f32.mxu0 0.0
      %3058 = vmatmul.mubr.f32.gmra.mrb[0].mxu0 %v2840
      %v3059 = vpop.f32.mrb[0].mxu0
      %v3060 = vadd.f32 0.0, %v3059
      %v3061 = vpop.f32.mrb[0].mxu0
      %3062 = vmatprep.mubr.f32.mxu0 0.0
      %3063 = vmatmul.mubr.f32.gmra.mrb[0].mxu0 %v2843
      %v3064 = vpop.f32.mrb[0].mxu0
      %v3065 = vadd.f32 0.0, %v3064
      %v3066 = vpop.f32.mrb[0].mxu0
      %3067 = vmatprep.mubr.f32.mxu0 0.0
      %3068 = vmatmul.mubr.f32.gmra.mrb[0].mxu0 %v2846
      %v3069 = vpop.f32.mrb[0].mxu0
      %v3070 = vadd.f32 0.0, %v3069
      %v3071 = vpop.f32.mrb[0].mxu0
      %3072 = vdwg.mxu0
      %v3073 = vadd.f32 %v2685, %v2915
      %v3074 = vadd.f32 %v2686, %v2920
      %v3075 = vadd.f32 %v2687, %v2925
      %v3076 = vadd.f32 %v2688, %v2930
      %v3077 = vadd.f32 %v2689, %v2935
      %v3078 = vadd.f32 %v2690, %v2940
      %v3079 = vadd.f32 %v2691, %v2945
      %v3080 = vadd.f32 %v2692, %v2950
      %v3081 = vadd.f32 %v2693, %v2955
      %v3082 = vadd.f32 %v2694, %v2960
      %v3083 = vadd.f32 %v2695, %v2965
      %v3084 = vadd.f32 %v2696, %v2970
      %v3085 = vadd.f32 %v2697, %v2975
      %v3086 = vadd.f32 %v2698, %v2980
      %v3087 = vadd.f32 %v2699, %v2985
      %v3088 = vadd.f32 %v2700, %v2990
      %v3089 = vadd.f32 %v2701, %v2995
      %v3090 = vadd.f32 %v2702, %v3000
      %v3091 = vadd.f32 %v2703, %v3005
      %v3092 = vadd.f32 %v2704, %v3010
      %v3093 = vadd.f32 %v2705, %v3015
      %v3094 = vadd.f32 %v2706, %v3020
      %v3095 = vadd.f32 %v2707, %v3025
      %v3096 = vadd.f32 %v2708, %v3030
      %v3097 = vadd.f32 %v2709, %v3035
      %v3098 = vadd.f32 %v2710, %v3040
      %v3099 = vadd.f32 %v2711, %v3045
      %v3100 = vadd.f32 %v2712, %v3050
      %v3101 = vadd.f32 %v2713, %v3055
      %v3102 = vadd.f32 %v2714, %v3060
      %v3103 = vadd.f32 %v2715, %v3065
      %v3104 = vadd.f32 %v2716, %v3070
      %v3105 = vld [vmem:[%s2717 + $0x1] sm:$0xff]
      %v3106 = vld [vmem:[%s2717 + $0x9] sm:$0xff]
      %v3107 = vld [vmem:[%s2717 + $0x19] sm:$0xff]
      %v3108 = vld [vmem:[%s2717 + $0x21] sm:$0xff]
      %v3109 = vld [vmem:[%s2717 + $0x31] sm:$0xff]
      %v3110 = vld [vmem:[%s2717 + $0x39] sm:$0xff]
      %v3111 = vld [vmem:[%s2717 + $0x49] sm:$0xff]
      %v3112 = vld [vmem:[%s2717 + $0x51] sm:$0xff]
      %v3113 = vld [vmem:[%s2717 + $0x61] sm:$0xff]
      %v3114 = vld [vmem:[%s2717 + $0x69] sm:$0xff]
      %v3115 = vld [vmem:[%s2717 + $0x79] sm:$0xff]
      %v3116 = vld [vmem:[%s2717 + $0x81] sm:$0xff]
      %v3117 = vld [vmem:[%s2717 + $0x91] sm:$0xff]
      %v3118 = vld [vmem:[%s2717 + $0x99] sm:$0xff]
      %v3119 = vld [vmem:[%s2717 + $0xa9] sm:$0xff]
      %v3120 = vld [vmem:[%s2717 + $0xb1] sm:$0xff]
      %v3121 = vld [vmem:[%s2717 + $0xc1] sm:$0xff]
      %v3122 = vld [vmem:[%s2717 + $0xc9] sm:$0xff]
      %v3123 = vld [vmem:[%s2717 + $0xd9] sm:$0xff]
      %v3124 = vld [vmem:[%s2717 + $0xe1] sm:$0xff]
      %v3125 = vld [vmem:[%s2717 + $0xf1] sm:$0xff]
      %v3126 = vld [vmem:[%s2717 + $0xf9] sm:$0xff]
      %v3127 = vld [vmem:[%s2717 + $0x109] sm:$0xff]
      %v3128 = vld [vmem:[%s2717 + $0x111] sm:$0xff]
      %v3129 = vld [vmem:[%s2717 + $0x121] sm:$0xff]
      %v3130 = vld [vmem:[%s2717 + $0x129] sm:$0xff]
      %v3131 = vld [vmem:[%s2717 + $0x139] sm:$0xff]
      %v3132 = vld [vmem:[%s2717 + $0x141] sm:$0xff]
      %v3133 = vld [vmem:[%s2717 + $0x151] sm:$0xff]
      %v3134 = vld [vmem:[%s2717 + $0x159] sm:$0xff]
      %v3135 = vld [vmem:[%s2717 + $0x169] sm:$0xff]
      %v3136 = vld [vmem:[%s2717 + $0x171] sm:$0xff]
      %s3137 = scalar_lea.vmem %s3, 56
      %v3138 = vld [vmem:[%s3137] sm:$0xff]
      %v3140 = vsel %vm427, %v3105, 0
      %v3143 = vsel %vm427, %v3106, 0
      %v3146 = vsel %vm427, %v3107, 0
      %v3149 = vsel %vm427, %v3108, 0
      %v3152 = vsel %vm427, %v3109, 0
      %v3155 = vsel %vm427, %v3110, 0
      %v3158 = vsel %vm427, %v3111, 0
      %v3161 = vsel %vm427, %v3112, 0
      %v3164 = vsel %vm427, %v3113, 0
      %v3167 = vsel %vm427, %v3114, 0
      %v3170 = vsel %vm427, %v3115, 0
      %v3173 = vsel %vm427, %v3116, 0
      %v3176 = vsel %vm427, %v3117, 0
      %v3179 = vsel %vm427, %v3118, 0
      %v3182 = vsel %vm427, %v3119, 0
      %v3185 = vsel %vm427, %v3120, 0
      %v3188 = vsel %vm427, %v3121, 0
      %v3191 = vsel %vm427, %v3122, 0
      %v3194 = vsel %vm427, %v3123, 0
      %v3197 = vsel %vm427, %v3124, 0
      %v3200 = vsel %vm427, %v3125, 0
      %v3203 = vsel %vm427, %v3126, 0
      %v3206 = vsel %vm427, %v3127, 0
      %v3209 = vsel %vm427, %v3128, 0
      %v3212 = vsel %vm427, %v3129, 0
      %v3215 = vsel %vm427, %v3130, 0
      %v3218 = vsel %vm427, %v3131, 0
      %v3221 = vsel %vm427, %v3132, 0
      %v3224 = vsel %vm427, %v3133, 0
      %v3227 = vsel %vm427, %v3134, 0
      %v3230 = vsel %vm427, %v3135, 0
      %v3233 = vsel %vm427, %v3136, 0
      %3235 = vmatprep.subr.mxu0 0.0
      %3236 = vmatpush1.msra.mxu0 %v3138
      %3237 = vmatprep.subr.mxu0 0.0
      %3238 = vmatpush1.msra.mxu0 0.0
      %3239 = vmatprep.subr.mxu0 0.0
      %3240 = vmatpush1.msra.mxu0 0.0
      %3241 = vmatprep.subr.mxu0 0.0
      %3242 = vmatpush1.msra.mxu0 0.0
      %3243 = vmatprep.subr.mxu0 0.0
      %3244 = vmatpush1.msra.mxu0 0.0
      %3245 = vmatprep.subr.mxu0 0.0
      %3246 = vmatpush1.msra.mxu0 0.0
      %3247 = vmatprep.subr.mxu0 0.0
      %3248 = vmatpush1.msra.mxu0 0.0
      %3249 = vmatprep.subr.mxu0 0.0
      %3250 = vmatpush1.msra.mxu0 0.0
      %3251 = vmatprep.subr.mxu0 0.0
      %3252 = vmatpush1.msra.mxu0 0.0
      %3253 = vmatprep.subr.mxu0 0.0
      %3254 = vmatpush1.msra.mxu0 0.0
      %3255 = vmatprep.subr.mxu0 0.0
      %3256 = vmatpush1.msra.mxu0 0.0
      %3257 = vmatprep.subr.mxu0 0.0
      %3258 = vmatpush1.msra.mxu0 0.0
      %3259 = vmatprep.subr.mxu0 0.0
      %3260 = vmatpush1.msra.mxu0 0.0
      %3261 = vmatprep.subr.mxu0 0.0
      %3262 = vmatpush1.msra.mxu0 0.0
      %3263 = vmatprep.subr.mxu0 0.0
      %3264 = vmatpush1.msra.mxu0 0.0
      %3265 = vmatprep.subr.mxu0 0.0
      %3266 = vmatpush1.msra.mxu0 0.0
      %3267 = vmatprep.subr.mxu0 0.0
      %3268 = vmatpush1.msra.mxu0 0.0
      %3269 = vmatprep.subr.mxu0 0.0
      %3270 = vmatpush1.msra.mxu0 0.0
      %3271 = vmatprep.subr.mxu0 0.0
      %3272 = vmatpush1.msra.mxu0 0.0
      %3273 = vmatprep.subr.mxu0 0.0
      %3274 = vmatpush1.msra.mxu0 0.0
      %3275 = vmatprep.subr.mxu0 0.0
      %3276 = vmatpush1.msra.mxu0 0.0
      %3277 = vmatprep.subr.mxu0 0.0
      %3278 = vmatpush1.msra.mxu0 0.0
      %3279 = vmatprep.subr.mxu0 0.0
      %3280 = vmatpush1.msra.mxu0 0.0
      %3281 = vmatprep.subr.mxu0 0.0
      %3282 = vmatpush1.msra.mxu0 0.0
      %3283 = vmatprep.subr.mxu0 0.0
      %3284 = vmatpush1.msra.mxu0 0.0
      %3285 = vmatprep.subr.mxu0 0.0
      %3286 = vmatpush1.msra.mxu0 0.0
      %3287 = vmatprep.subr.mxu0 0.0
      %3288 = vmatpush1.msra.mxu0 0.0
      %3289 = vmatprep.subr.mxu0 0.0
      %3290 = vmatpush1.msra.mxu0 0.0
      %3291 = vmatprep.subr.mxu0 0.0
      %3292 = vmatpush1.msra.mxu0 0.0
      %3293 = vmatprep.subr.mxu0 0.0
      %3294 = vmatpush1.msra.mxu0 0.0
      %3295 = vmatprep.subr.mxu0 0.0
      %3296 = vmatpush1.msra.mxu0 0.0
      %3297 = vmatprep.subr.mxu0 0.0
      %3298 = vmatpush1.msra.mxu0 0.0
      %3299 = vmatprep.mubr.f32.mxu0 0.0
      %3300 = vmatmul.mubr.f32.gmra.mrb[0].mxu0 %v3140
      %v3301 = vpop.f32.mrb[0].mxu0
      %v3302 = vadd.f32 0.0, %v3301
      %v3303 = vpop.f32.mrb[0].mxu0
      %3304 = vmatprep.mubr.f32.mxu0 0.0
      %3305 = vmatmul.mubr.f32.gmra.mrb[0].mxu0 %v3143
      %v3306 = vpop.f32.mrb[0].mxu0
      %v3307 = vadd.f32 0.0, %v3306
      %v3308 = vpop.f32.mrb[0].mxu0
      %3309 = vmatprep.mubr.f32.mxu0 0.0
      %3310 = vmatmul.mubr.f32.gmra.mrb[0].mxu0 %v3146
      %v3311 = vpop.f32.mrb[0].mxu0
      %v3312 = vadd.f32 0.0, %v3311
      %v3313 = vpop.f32.mrb[0].mxu0
      %3314 = vmatprep.mubr.f32.mxu0 0.0
      %3315 = vmatmul.mubr.f32.gmra.mrb[0].mxu0 %v3149
      %v3316 = vpop.f32.mrb[0].mxu0
      %v3317 = vadd.f32 0.0, %v3316
      %v3318 = vpop.f32.mrb[0].mxu0
      %3319 = vmatprep.mubr.f32.mxu0 0.0
      %3320 = vmatmul.mubr.f32.gmra.mrb[0].mxu0 %v3152
      %v3321 = vpop.f32.mrb[0].mxu0
      %v3322 = vadd.f32 0.0, %v3321
      %v3323 = vpop.f32.mrb[0].mxu0
      %3324 = vmatprep.mubr.f32.mxu0 0.0
      %3325 = vmatmul.mubr.f32.gmra.mrb[0].mxu0 %v3155
      %v3326 = vpop.f32.mrb[0].mxu0
      %v3327 = vadd.f32 0.0, %v3326
      %v3328 = vpop.f32.mrb[0].mxu0
      %3329 = vmatprep.mubr.f32.mxu0 0.0
      %3330 = vmatmul.mubr.f32.gmra.mrb[0].mxu0 %v3158
      %v3331 = vpop.f32.mrb[0].mxu0
      %v3332 = vadd.f32 0.0, %v3331
      %v3333 = vpop.f32.mrb[0].mxu0
      %3334 = vmatprep.mubr.f32.mxu0 0.0
      %3335 = vmatmul.mubr.f32.gmra.mrb[0].mxu0 %v3161
      %v3336 = vpop.f32.mrb[0].mxu0
      %v3337 = vadd.f32 0.0, %v3336
      %v3338 = vpop.f32.mrb[0].mxu0
      %3339 = vmatprep.mubr.f32.mxu0 0.0
      %3340 = vmatmul.mubr.f32.gmra.mrb[0].mxu0 %v3164
      %v3341 = vpop.f32.mrb[0].mxu0
      %v3342 = vadd.f32 0.0, %v3341
      %v3343 = vpop.f32.mrb[0].mxu0
      %3344 = vmatprep.mubr.f32.mxu0 0.0
      %3345 = vmatmul.mubr.f32.gmra.mrb[0].mxu0 %v3167
      %v3346 = vpop.f32.mrb[0].mxu0
      %v3347 = vadd.f32 0.0, %v3346
      %v3348 = vpop.f32.mrb[0].mxu0
      %3349 = vmatprep.mubr.f32.mxu0 0.0
      %3350 = vmatmul.mubr.f32.gmra.mrb[0].mxu0 %v3170
      %v3351 = vpop.f32.mrb[0].mxu0
      %v3352 = vadd.f32 0.0, %v3351
      %v3353 = vpop.f32.mrb[0].mxu0
      %3354 = vmatprep.mubr.f32.mxu0 0.0
      %3355 = vmatmul.mubr.f32.gmra.mrb[0].mxu0 %v3173
      %v3356 = vpop.f32.mrb[0].mxu0
      %v3357 = vadd.f32 0.0, %v3356
      %v3358 = vpop.f32.mrb[0].mxu0
      %3359 = vmatprep.mubr.f32.mxu0 0.0
      %3360 = vmatmul.mubr.f32.gmra.mrb[0].mxu0 %v3176
      %v3361 = vpop.f32.mrb[0].mxu0
      %v3362 = vadd.f32 0.0, %v3361
      %v3363 = vpop.f32.mrb[0].mxu0
      %3364 = vmatprep.mubr.f32.mxu0 0.0
      %3365 = vmatmul.mubr.f32.gmra.mrb[0].mxu0 %v3179
      %v3366 = vpop.f32.mrb[0].mxu0
      %v3367 = vadd.f32 0.0, %v3366
      %v3368 = vpop.f32.mrb[0].mxu0
      %3369 = vmatprep.mubr.f32.mxu0 0.0
      %3370 = vmatmul.mubr.f32.gmra.mrb[0].mxu0 %v3182
      %v3371 = vpop.f32.mrb[0].mxu0
      %v3372 = vadd.f32 0.0, %v3371
      %v3373 = vpop.f32.mrb[0].mxu0
      %3374 = vmatprep.mubr.f32.mxu0 0.0
      %3375 = vmatmul.mubr.f32.gmra.mrb[0].mxu0 %v3185
      %v3376 = vpop.f32.mrb[0].mxu0
      %v3377 = vadd.f32 0.0, %v3376
      %v3378 = vpop.f32.mrb[0].mxu0
      %3379 = vmatprep.mubr.f32.mxu0 0.0
      %3380 = vmatmul.mubr.f32.gmra.mrb[0].mxu0 %v3188
      %v3381 = vpop.f32.mrb[0].mxu0
      %v3382 = vadd.f32 0.0, %v3381
      %v3383 = vpop.f32.mrb[0].mxu0
      %3384 = vmatprep.mubr.f32.mxu0 0.0
      %3385 = vmatmul.mubr.f32.gmra.mrb[0].mxu0 %v3191
      %v3386 = vpop.f32.mrb[0].mxu0
      %v3387 = vadd.f32 0.0, %v3386
      %v3388 = vpop.f32.mrb[0].mxu0
      %3389 = vmatprep.mubr.f32.mxu0 0.0
      %3390 = vmatmul.mubr.f32.gmra.mrb[0].mxu0 %v3194
      %v3391 = vpop.f32.mrb[0].mxu0
      %v3392 = vadd.f32 0.0, %v3391
      %v3393 = vpop.f32.mrb[0].mxu0
      %3394 = vmatprep.mubr.f32.mxu0 0.0
      %3395 = vmatmul.mubr.f32.gmra.mrb[0].mxu0 %v3197
      %v3396 = vpop.f32.mrb[0].mxu0
      %v3397 = vadd.f32 0.0, %v3396
      %v3398 = vpop.f32.mrb[0].mxu0
      %3399 = vmatprep.mubr.f32.mxu0 0.0
      %3400 = vmatmul.mubr.f32.gmra.mrb[0].mxu0 %v3200
      %v3401 = vpop.f32.mrb[0].mxu0
      %v3402 = vadd.f32 0.0, %v3401
      %v3403 = vpop.f32.mrb[0].mxu0
      %3404 = vmatprep.mubr.f32.mxu0 0.0
      %3405 = vmatmul.mubr.f32.gmra.mrb[0].mxu0 %v3203
      %v3406 = vpop.f32.mrb[0].mxu0
      %v3407 = vadd.f32 0.0, %v3406
      %v3408 = vpop.f32.mrb[0].mxu0
      %3409 = vmatprep.mubr.f32.mxu0 0.0
      %3410 = vmatmul.mubr.f32.gmra.mrb[0].mxu0 %v3206
      %v3411 = vpop.f32.mrb[0].mxu0
      %v3412 = vadd.f32 0.0, %v3411
      %v3413 = vpop.f32.mrb[0].mxu0
      %3414 = vmatprep.mubr.f32.mxu0 0.0
      %3415 = vmatmul.mubr.f32.gmra.mrb[0].mxu0 %v3209
      %v3416 = vpop.f32.mrb[0].mxu0
      %v3417 = vadd.f32 0.0, %v3416
      %v3418 = vpop.f32.mrb[0].mxu0
      %3419 = vmatprep.mubr.f32.mxu0 0.0
      %3420 = vmatmul.mubr.f32.gmra.mrb[0].mxu0 %v3212
      %v3421 = vpop.f32.mrb[0].mxu0
      %v3422 = vadd.f32 0.0, %v3421
      %v3423 = vpop.f32.mrb[0].mxu0
      %3424 = vmatprep.mubr.f32.mxu0 0.0
      %3425 = vmatmul.mubr.f32.gmra.mrb[0].mxu0 %v3215
      %v3426 = vpop.f32.mrb[0].mxu0
      %v3427 = vadd.f32 0.0, %v3426
      %v3428 = vpop.f32.mrb[0].mxu0
      %3429 = vmatprep.mubr.f32.mxu0 0.0
      %3430 = vmatmul.mubr.f32.gmra.mrb[0].mxu0 %v3218
      %v3431 = vpop.f32.mrb[0].mxu0
      %v3432 = vadd.f32 0.0, %v3431
      %v3433 = vpop.f32.mrb[0].mxu0
      %3434 = vmatprep.mubr.f32.mxu0 0.0
      %3435 = vmatmul.mubr.f32.gmra.mrb[0].mxu0 %v3221
      %v3436 = vpop.f32.mrb[0].mxu0
      %v3437 = vadd.f32 0.0, %v3436
      %v3438 = vpop.f32.mrb[0].mxu0
      %3439 = vmatprep.mubr.f32.mxu0 0.0
      %3440 = vmatmul.mubr.f32.gmra.mrb[0].mxu0 %v3224
      %v3441 = vpop.f32.mrb[0].mxu0
      %v3442 = vadd.f32 0.0, %v3441
      %v3443 = vpop.f32.mrb[0].mxu0
      %3444 = vmatprep.mubr.f32.mxu0 0.0
      %3445 = vmatmul.mubr.f32.gmra.mrb[0].mxu0 %v3227
      %v3446 = vpop.f32.mrb[0].mxu0
      %v3447 = vadd.f32 0.0, %v3446
      %v3448 = vpop.f32.mrb[0].mxu0
      %3449 = vmatprep.mubr.f32.mxu0 0.0
      %3450 = vmatmul.mubr.f32.gmra.mrb[0].mxu0 %v3230
      %v3451 = vpop.f32.mrb[0].mxu0
      %v3452 = vadd.f32 0.0, %v3451
      %v3453 = vpop.f32.mrb[0].mxu0
      %3454 = vmatprep.mubr.f32.mxu0 0.0
      %3455 = vmatmul.mubr.f32.gmra.mrb[0].mxu0 %v3233
      %v3456 = vpop.f32.mrb[0].mxu0
      %v3457 = vadd.f32 0.0, %v3456
      %v3458 = vpop.f32.mrb[0].mxu0
      %3459 = vdwg.mxu0
      %v3460 = vadd.f32 %v3073, %v3302
      %v3461 = vadd.f32 %v3074, %v3307
      %v3462 = vadd.f32 %v3075, %v3312
      %v3463 = vadd.f32 %v3076, %v3317
      %v3464 = vadd.f32 %v3077, %v3322
      %v3465 = vadd.f32 %v3078, %v3327
      %v3466 = vadd.f32 %v3079, %v3332
      %v3467 = vadd.f32 %v3080, %v3337
      %v3468 = vadd.f32 %v3081, %v3342
      %v3469 = vadd.f32 %v3082, %v3347
      %v3470 = vadd.f32 %v3083, %v3352
      %v3471 = vadd.f32 %v3084, %v3357
      %v3472 = vadd.f32 %v3085, %v3362
      %v3473 = vadd.f32 %v3086, %v3367
      %v3474 = vadd.f32 %v3087, %v3372
      %v3475 = vadd.f32 %v3088, %v3377
      %v3476 = vadd.f32 %v3089, %v3382
      %v3477 = vadd.f32 %v3090, %v3387
      %v3478 = vadd.f32 %v3091, %v3392
      %v3479 = vadd.f32 %v3092, %v3397
      %v3480 = vadd.f32 %v3093, %v3402
      %v3481 = vadd.f32 %v3094, %v3407
      %v3482 = vadd.f32 %v3095, %v3412
      %v3483 = vadd.f32 %v3096, %v3417
      %v3484 = vadd.f32 %v3097, %v3422
      %v3485 = vadd.f32 %v3098, %v3427
      %v3486 = vadd.f32 %v3099, %v3432
      %v3487 = vadd.f32 %v3100, %v3437
      %v3488 = vadd.f32 %v3101, %v3442
      %v3489 = vadd.f32 %v3102, %v3447
      %v3490 = vadd.f32 %v3103, %v3452
      %v3491 = vadd.f32 %v3104, %v3457
      %v3492 = vld [vmem:[%s2717 + $0x2] sm:$0xff]
      %v3493 = vld [vmem:[%s2717 + $0xa] sm:$0xff]
      %v3494 = vld [vmem:[%s2717 + $0x1a] sm:$0xff]
      %v3495 = vld [vmem:[%s2717 + $0x22] sm:$0xff]
      %v3496 = vld [vmem:[%s2717 + $0x32] sm:$0xff]
      %v3497 = vld [vmem:[%s2717 + $0x3a] sm:$0xff]
      %v3498 = vld [vmem:[%s2717 + $0x4a] sm:$0xff]
      %v3499 = vld [vmem:[%s2717 + $0x52] sm:$0xff]
      %v3500 = vld [vmem:[%s2717 + $0x62] sm:$0xff]
      %v3501 = vld [vmem:[%s2717 + $0x6a] sm:$0xff]
      %v3502 = vld [vmem:[%s2717 + $0x7a] sm:$0xff]
      %v3503 = vld [vmem:[%s2717 + $0x82] sm:$0xff]
      %v3504 = vld [vmem:[%s2717 + $0x92] sm:$0xff]
      %v3505 = vld [vmem:[%s2717 + $0x9a] sm:$0xff]
      %v3506 = vld [vmem:[%s2717 + $0xaa] sm:$0xff]
      %v3507 = vld [vmem:[%s2717 + $0xb2] sm:$0xff]
      %v3508 = vld [vmem:[%s2717 + $0xc2] sm:$0xff]
      %v3509 = vld [vmem:[%s2717 + $0xca] sm:$0xff]
      %v3510 = vld [vmem:[%s2717 + $0xda] sm:$0xff]
      %v3511 = vld [vmem:[%s2717 + $0xe2] sm:$0xff]
      %v3512 = vld [vmem:[%s2717 + $0xf2] sm:$0xff]
      %v3513 = vld [vmem:[%s2717 + $0xfa] sm:$0xff]
      %v3514 = vld [vmem:[%s2717 + $0x10a] sm:$0xff]
      %v3515 = vld [vmem:[%s2717 + $0x112] sm:$0xff]
      %v3516 = vld [vmem:[%s2717 + $0x122] sm:$0xff]
      %v3517 = vld [vmem:[%s2717 + $0x12a] sm:$0xff]
      %v3518 = vld [vmem:[%s2717 + $0x13a] sm:$0xff]
      %v3519 = vld [vmem:[%s2717 + $0x142] sm:$0xff]
      %v3520 = vld [vmem:[%s2717 + $0x152] sm:$0xff]
      %v3521 = vld [vmem:[%s2717 + $0x15a] sm:$0xff]
      %v3522 = vld [vmem:[%s2717 + $0x16a] sm:$0xff]
      %v3523 = vld [vmem:[%s2717 + $0x172] sm:$0xff]
      %s3524 = scalar_lea.vmem %s3, 64
      %v3525 = vld [vmem:[%s3524] sm:$0xff]
      %v3527 = vsel %vm427, %v3492, 0
      %v3530 = vsel %vm427, %v3493, 0
      %v3533 = vsel %vm427, %v3494, 0
      %v3536 = vsel %vm427, %v3495, 0
      %v3539 = vsel %vm427, %v3496, 0
      %v3542 = vsel %vm427, %v3497, 0
      %v3545 = vsel %vm427, %v3498, 0
      %v3548 = vsel %vm427, %v3499, 0
      %v3551 = vsel %vm427, %v3500, 0
      %v3554 = vsel %vm427, %v3501, 0
      %v3557 = vsel %vm427, %v3502, 0
      %v3560 = vsel %vm427, %v3503, 0
      %v3563 = vsel %vm427, %v3504, 0
      %v3566 = vsel %vm427, %v3505, 0
      %v3569 = vsel %vm427, %v3506, 0
      %v3572 = vsel %vm427, %v3507, 0
      %v3575 = vsel %vm427, %v3508, 0
      %v3578 = vsel %vm427, %v3509, 0
      %v3581 = vsel %vm427, %v3510, 0
      %v3584 = vsel %vm427, %v3511, 0
      %v3587 = vsel %vm427, %v3512, 0
      %v3590 = vsel %vm427, %v3513, 0
      %v3593 = vsel %vm427, %v3514, 0
      %v3596 = vsel %vm427, %v3515, 0
      %v3599 = vsel %vm427, %v3516, 0
      %v3602 = vsel %vm427, %v3517, 0
      %v3605 = vsel %vm427, %v3518, 0
      %v3608 = vsel %vm427, %v3519, 0
      %v3611 = vsel %vm427, %v3520, 0
      %v3614 = vsel %vm427, %v3521, 0
      %v3617 = vsel %vm427, %v3522, 0
      %v3620 = vsel %vm427, %v3523, 0
      %3622 = vmatprep.subr.mxu0 0.0
      %3623 = vmatpush1.msra.mxu0 %v3525
      %3624 = vmatprep.subr.mxu0 0.0
      %3625 = vmatpush1.msra.mxu0 0.0
      %3626 = vmatprep.subr.mxu0 0.0
      %3627 = vmatpush1.msra.mxu0 0.0
      %3628 = vmatprep.subr.mxu0 0.0
      %3629 = vmatpush1.msra.mxu0 0.0
      %3630 = vmatprep.subr.mxu0 0.0
      %3631 = vmatpush1.msra.mxu0 0.0
      %3632 = vmatprep.subr.mxu0 0.0
      %3633 = vmatpush1.msra.mxu0 0.0
      %3634 = vmatprep.subr.mxu0 0.0
      %3635 = vmatpush1.msra.mxu0 0.0
      %3636 = vmatprep.subr.mxu0 0.0
      %3637 = vmatpush1.msra.mxu0 0.0
      %3638 = vmatprep.subr.mxu0 0.0
      %3639 = vmatpush1.msra.mxu0 0.0
      %3640 = vmatprep.subr.mxu0 0.0
      %3641 = vmatpush1.msra.mxu0 0.0
      %3642 = vmatprep.subr.mxu0 0.0
      %3643 = vmatpush1.msra.mxu0 0.0
      %3644 = vmatprep.subr.mxu0 0.0
      %3645 = vmatpush1.msra.mxu0 0.0
      %3646 = vmatprep.subr.mxu0 0.0
      %3647 = vmatpush1.msra.mxu0 0.0
      %3648 = vmatprep.subr.mxu0 0.0
      %3649 = vmatpush1.msra.mxu0 0.0
      %3650 = vmatprep.subr.mxu0 0.0
      %3651 = vmatpush1.msra.mxu0 0.0
      %3652 = vmatprep.subr.mxu0 0.0
      %3653 = vmatpush1.msra.mxu0 0.0
      %3654 = vmatprep.subr.mxu0 0.0
      %3655 = vmatpush1.msra.mxu0 0.0
      %3656 = vmatprep.subr.mxu0 0.0
      %3657 = vmatpush1.msra.mxu0 0.0
      %3658 = vmatprep.subr.mxu0 0.0
      %3659 = vmatpush1.msra.mxu0 0.0
      %3660 = vmatprep.subr.mxu0 0.0
      %3661 = vmatpush1.msra.mxu0 0.0
      %3662 = vmatprep.subr.mxu0 0.0
      %3663 = vmatpush1.msra.mxu0 0.0
      %3664 = vmatprep.subr.mxu0 0.0
      %3665 = vmatpush1.msra.mxu0 0.0
      %3666 = vmatprep.subr.mxu0 0.0
      %3667 = vmatpush1.msra.mxu0 0.0
      %3668 = vmatprep.subr.mxu0 0.0
      %3669 = vmatpush1.msra.mxu0 0.0
      %3670 = vmatprep.subr.mxu0 0.0
      %3671 = vmatpush1.msra.mxu0 0.0
      %3672 = vmatprep.subr.mxu0 0.0
      %3673 = vmatpush1.msra.mxu0 0.0
      %3674 = vmatprep.subr.mxu0 0.0
      %3675 = vmatpush1.msra.mxu0 0.0
      %3676 = vmatprep.subr.mxu0 0.0
      %3677 = vmatpush1.msra.mxu0 0.0
      %3678 = vmatprep.subr.mxu0 0.0
      %3679 = vmatpush1.msra.mxu0 0.0
      %3680 = vmatprep.subr.mxu0 0.0
      %3681 = vmatpush1.msra.mxu0 0.0
      %3682 = vmatprep.subr.mxu0 0.0
      %3683 = vmatpush1.msra.mxu0 0.0
      %3684 = vmatprep.subr.mxu0 0.0
      %3685 = vmatpush1.msra.mxu0 0.0
      %3686 = vmatprep.mubr.f32.mxu0 0.0
      %3687 = vmatmul.mubr.f32.gmra.mrb[0].mxu0 %v3527
      %v3688 = vpop.f32.mrb[0].mxu0
      %v3689 = vadd.f32 0.0, %v3688
      %v3690 = vpop.f32.mrb[0].mxu0
      %3691 = vmatprep.mubr.f32.mxu0 0.0
      %3692 = vmatmul.mubr.f32.gmra.mrb[0].mxu0 %v3530
      %v3693 = vpop.f32.mrb[0].mxu0
      %v3694 = vadd.f32 0.0, %v3693
      %v3695 = vpop.f32.mrb[0].mxu0
      %3696 = vmatprep.mubr.f32.mxu0 0.0
      %3697 = vmatmul.mubr.f32.gmra.mrb[0].mxu0 %v3533
      %v3698 = vpop.f32.mrb[0].mxu0
      %v3699 = vadd.f32 0.0, %v3698
      %v3700 = vpop.f32.mrb[0].mxu0
      %3701 = vmatprep.mubr.f32.mxu0 0.0
      %3702 = vmatmul.mubr.f32.gmra.mrb[0].mxu0 %v3536
      %v3703 = vpop.f32.mrb[0].mxu0
      %v3704 = vadd.f32 0.0, %v3703
      %v3705 = vpop.f32.mrb[0].mxu0
      %3706 = vmatprep.mubr.f32.mxu0 0.0
      %3707 = vmatmul.mubr.f32.gmra.mrb[0].mxu0 %v3539
      %v3708 = vpop.f32.mrb[0].mxu0
      %v3709 = vadd.f32 0.0, %v3708
      %v3710 = vpop.f32.mrb[0].mxu0
      %3711 = vmatprep.mubr.f32.mxu0 0.0
      %3712 = vmatmul.mubr.f32.gmra.mrb[0].mxu0 %v3542
      %v3713 = vpop.f32.mrb[0].mxu0
      %v3714 = vadd.f32 0.0, %v3713
      %v3715 = vpop.f32.mrb[0].mxu0
      %3716 = vmatprep.mubr.f32.mxu0 0.0
      %3717 = vmatmul.mubr.f32.gmra.mrb[0].mxu0 %v3545
      %v3718 = vpop.f32.mrb[0].mxu0
      %v3719 = vadd.f32 0.0, %v3718
      %v3720 = vpop.f32.mrb[0].mxu0
      %3721 = vmatprep.mubr.f32.mxu0 0.0
      %3722 = vmatmul.mubr.f32.gmra.mrb[0].mxu0 %v3548
      %v3723 = vpop.f32.mrb[0].mxu0
      %v3724 = vadd.f32 0.0, %v3723
      %v3725 = vpop.f32.mrb[0].mxu0
      %3726 = vmatprep.mubr.f32.mxu0 0.0
      %3727 = vmatmul.mubr.f32.gmra.mrb[0].mxu0 %v3551
      %v3728 = vpop.f32.mrb[0].mxu0
      %v3729 = vadd.f32 0.0, %v3728
      %v3730 = vpop.f32.mrb[0].mxu0
      %3731 = vmatprep.mubr.f32.mxu0 0.0
      %3732 = vmatmul.mubr.f32.gmra.mrb[0].mxu0 %v3554
      %v3733 = vpop.f32.mrb[0].mxu0
      %v3734 = vadd.f32 0.0, %v3733
      %v3735 = vpop.f32.mrb[0].mxu0
      %3736 = vmatprep.mubr.f32.mxu0 0.0
      %3737 = vmatmul.mubr.f32.gmra.mrb[0].mxu0 %v3557
      %v3738 = vpop.f32.mrb[0].mxu0
      %v3739 = vadd.f32 0.0, %v3738
      %v3740 = vpop.f32.mrb[0].mxu0
      %3741 = vmatprep.mubr.f32.mxu0 0.0
      %3742 = vmatmul.mubr.f32.gmra.mrb[0].mxu0 %v3560
      %v3743 = vpop.f32.mrb[0].mxu0
      %v3744 = vadd.f32 0.0, %v3743
      %v3745 = vpop.f32.mrb[0].mxu0
      %3746 = vmatprep.mubr.f32.mxu0 0.0
      %3747 = vmatmul.mubr.f32.gmra.mrb[0].mxu0 %v3563
      %v3748 = vpop.f32.mrb[0].mxu0
      %v3749 = vadd.f32 0.0, %v3748
      %v3750 = vpop.f32.mrb[0].mxu0
      %3751 = vmatprep.mubr.f32.mxu0 0.0
      %3752 = vmatmul.mubr.f32.gmra.mrb[0].mxu0 %v3566
      %v3753 = vpop.f32.mrb[0].mxu0
      %v3754 = vadd.f32 0.0, %v3753
      %v3755 = vpop.f32.mrb[0].mxu0
      %3756 = vmatprep.mubr.f32.mxu0 0.0
      %3757 = vmatmul.mubr.f32.gmra.mrb[0].mxu0 %v3569
      %v3758 = vpop.f32.mrb[0].mxu0
      %v3759 = vadd.f32 0.0, %v3758
      %v3760 = vpop.f32.mrb[0].mxu0
      %3761 = vmatprep.mubr.f32.mxu0 0.0
      %3762 = vmatmul.mubr.f32.gmra.mrb[0].mxu0 %v3572
      %v3763 = vpop.f32.mrb[0].mxu0
      %v3764 = vadd.f32 0.0, %v3763
      %v3765 = vpop.f32.mrb[0].mxu0
      %3766 = vmatprep.mubr.f32.mxu0 0.0
      %3767 = vmatmul.mubr.f32.gmra.mrb[0].mxu0 %v3575
      %v3768 = vpop.f32.mrb[0].mxu0
      %v3769 = vadd.f32 0.0, %v3768
      %v3770 = vpop.f32.mrb[0].mxu0
      %3771 = vmatprep.mubr.f32.mxu0 0.0
      %3772 = vmatmul.mubr.f32.gmra.mrb[0].mxu0 %v3578
      %v3773 = vpop.f32.mrb[0].mxu0
      %v3774 = vadd.f32 0.0, %v3773
      %v3775 = vpop.f32.mrb[0].mxu0
      %3776 = vmatprep.mubr.f32.mxu0 0.0
      %3777 = vmatmul.mubr.f32.gmra.mrb[0].mxu0 %v3581
      %v3778 = vpop.f32.mrb[0].mxu0
      %v3779 = vadd.f32 0.0, %v3778
      %v3780 = vpop.f32.mrb[0].mxu0
      %3781 = vmatprep.mubr.f32.mxu0 0.0
      %3782 = vmatmul.mubr.f32.gmra.mrb[0].mxu0 %v3584
      %v3783 = vpop.f32.mrb[0].mxu0
      %v3784 = vadd.f32 0.0, %v3783
      %v3785 = vpop.f32.mrb[0].mxu0
      %3786 = vmatprep.mubr.f32.mxu0 0.0
      %3787 = vmatmul.mubr.f32.gmra.mrb[0].mxu0 %v3587
      %v3788 = vpop.f32.mrb[0].mxu0
      %v3789 = vadd.f32 0.0, %v3788
      %v3790 = vpop.f32.mrb[0].mxu0
      %3791 = vmatprep.mubr.f32.mxu0 0.0
      %3792 = vmatmul.mubr.f32.gmra.mrb[0].mxu0 %v3590
      %v3793 = vpop.f32.mrb[0].mxu0
      %v3794 = vadd.f32 0.0, %v3793
      %v3795 = vpop.f32.mrb[0].mxu0
      %3796 = vmatprep.mubr.f32.mxu0 0.0
      %3797 = vmatmul.mubr.f32.gmra.mrb[0].mxu0 %v3593
      %v3798 = vpop.f32.mrb[0].mxu0
      %v3799 = vadd.f32 0.0, %v3798
      %v3800 = vpop.f32.mrb[0].mxu0
      %3801 = vmatprep.mubr.f32.mxu0 0.0
      %3802 = vmatmul.mubr.f32.gmra.mrb[0].mxu0 %v3596
      %v3803 = vpop.f32.mrb[0].mxu0
      %v3804 = vadd.f32 0.0, %v3803
      %v3805 = vpop.f32.mrb[0].mxu0
      %3806 = vmatprep.mubr.f32.mxu0 0.0
      %3807 = vmatmul.mubr.f32.gmra.mrb[0].mxu0 %v3599
      %v3808 = vpop.f32.mrb[0].mxu0
      %v3809 = vadd.f32 0.0, %v3808
      %v3810 = vpop.f32.mrb[0].mxu0
      %3811 = vmatprep.mubr.f32.mxu0 0.0
      %3812 = vmatmul.mubr.f32.gmra.mrb[0].mxu0 %v3602
      %v3813 = vpop.f32.mrb[0].mxu0
      %v3814 = vadd.f32 0.0, %v3813
      %v3815 = vpop.f32.mrb[0].mxu0
      %3816 = vmatprep.mubr.f32.mxu0 0.0
      %3817 = vmatmul.mubr.f32.gmra.mrb[0].mxu0 %v3605
      %v3818 = vpop.f32.mrb[0].mxu0
      %v3819 = vadd.f32 0.0, %v3818
      %v3820 = vpop.f32.mrb[0].mxu0
      %3821 = vmatprep.mubr.f32.mxu0 0.0
      %3822 = vmatmul.mubr.f32.gmra.mrb[0].mxu0 %v3608
      %v3823 = vpop.f32.mrb[0].mxu0
      %v3824 = vadd.f32 0.0, %v3823
      %v3825 = vpop.f32.mrb[0].mxu0
      %3826 = vmatprep.mubr.f32.mxu0 0.0
      %3827 = vmatmul.mubr.f32.gmra.mrb[0].mxu0 %v3611
      %v3828 = vpop.f32.mrb[0].mxu0
      %v3829 = vadd.f32 0.0, %v3828
      %v3830 = vpop.f32.mrb[0].mxu0
      %3831 = vmatprep.mubr.f32.mxu0 0.0
      %3832 = vmatmul.mubr.f32.gmra.mrb[0].mxu0 %v3614
      %v3833 = vpop.f32.mrb[0].mxu0
      %v3834 = vadd.f32 0.0, %v3833
      %v3835 = vpop.f32.mrb[0].mxu0
      %3836 = vmatprep.mubr.f32.mxu0 0.0
      %3837 = vmatmul.mubr.f32.gmra.mrb[0].mxu0 %v3617
      %v3838 = vpop.f32.mrb[0].mxu0
      %v3839 = vadd.f32 0.0, %v3838
      %v3840 = vpop.f32.mrb[0].mxu0
      %3841 = vmatprep.mubr.f32.mxu0 0.0
      %3842 = vmatmul.mubr.f32.gmra.mrb[0].mxu0 %v3620
      %v3843 = vpop.f32.mrb[0].mxu0
      %v3844 = vadd.f32 0.0, %v3843
      %v3845 = vpop.f32.mrb[0].mxu0
      %3846 = vdwg.mxu0
      %v3847 = vadd.f32 %v3460, %v3689
      %v3848 = vadd.f32 %v3461, %v3694
      %v3849 = vadd.f32 %v3462, %v3699
      %v3850 = vadd.f32 %v3463, %v3704
      %v3851 = vadd.f32 %v3464, %v3709
      %v3852 = vadd.f32 %v3465, %v3714
      %v3853 = vadd.f32 %v3466, %v3719
      %v3854 = vadd.f32 %v3467, %v3724
      %v3855 = vadd.f32 %v3468, %v3729
      %v3856 = vadd.f32 %v3469, %v3734
      %v3857 = vadd.f32 %v3470, %v3739
      %v3858 = vadd.f32 %v3471, %v3744
      %v3859 = vadd.f32 %v3472, %v3749
      %v3860 = vadd.f32 %v3473, %v3754
      %v3861 = vadd.f32 %v3474, %v3759
      %v3862 = vadd.f32 %v3475, %v3764
      %v3863 = vadd.f32 %v3476, %v3769
      %v3864 = vadd.f32 %v3477, %v3774
      %v3865 = vadd.f32 %v3478, %v3779
      %v3866 = vadd.f32 %v3479, %v3784
      %v3867 = vadd.f32 %v3480, %v3789
      %v3868 = vadd.f32 %v3481, %v3794
      %v3869 = vadd.f32 %v3482, %v3799
      %v3870 = vadd.f32 %v3483, %v3804
      %v3871 = vadd.f32 %v3484, %v3809
      %v3872 = vadd.f32 %v3485, %v3814
      %v3873 = vadd.f32 %v3486, %v3819
      %v3874 = vadd.f32 %v3487, %v3824
      %v3875 = vadd.f32 %v3488, %v3829
      %v3876 = vadd.f32 %v3489, %v3834
      %v3877 = vadd.f32 %v3490, %v3839
      %v3878 = vadd.f32 %v3491, %v3844
      %3879 = vst.msk [vmem:[%s222] sm:$0xff] %vm427, %v3847
      %3880 = vst.msk [vmem:[%s222 + $0x8] sm:$0xff] %vm427, %v3848
      %3881 = vst.msk [vmem:[%s222 + $0x10] sm:$0xff] %vm427, %v3849
      %3882 = vst.msk [vmem:[%s222 + $0x18] sm:$0xff] %vm427, %v3850
      %3883 = vst.msk [vmem:[%s222 + $0x20] sm:$0xff] %vm427, %v3851
      %3884 = vst.msk [vmem:[%s222 + $0x28] sm:$0xff] %vm427, %v3852
      %3885 = vst.msk [vmem:[%s222 + $0x30] sm:$0xff] %vm427, %v3853
      %3886 = vst.msk [vmem:[%s222 + $0x38] sm:$0xff] %vm427, %v3854
      %3887 = vst.msk [vmem:[%s222 + $0x40] sm:$0xff] %vm427, %v3855
      %3888 = vst.msk [vmem:[%s222 + $0x48] sm:$0xff] %vm427, %v3856
      %3889 = vst.msk [vmem:[%s222 + $0x50] sm:$0xff] %vm427, %v3857
      %3890 = vst.msk [vmem:[%s222 + $0x58] sm:$0xff] %vm427, %v3858
      %3891 = vst.msk [vmem:[%s222 + $0x60] sm:$0xff] %vm427, %v3859
      %3892 = vst.msk [vmem:[%s222 + $0x68] sm:$0xff] %vm427, %v3860
      %3893 = vst.msk [vmem:[%s222 + $0x70] sm:$0xff] %vm427, %v3861
      %3894 = vst.msk [vmem:[%s222 + $0x78] sm:$0xff] %vm427, %v3862
      %3895 = vst.msk [vmem:[%s222 + $0x80] sm:$0xff] %vm427, %v3863
      %3896 = vst.msk [vmem:[%s222 + $0x88] sm:$0xff] %vm427, %v3864
      %3897 = vst.msk [vmem:[%s222 + $0x90] sm:$0xff] %vm427, %v3865
      %3898 = vst.msk [vmem:[%s222 + $0x98] sm:$0xff] %vm427, %v3866
      %3899 = vst.msk [vmem:[%s222 + $0xa0] sm:$0xff] %vm427, %v3867
      %3900 = vst.msk [vmem:[%s222 + $0xa8] sm:$0xff] %vm427, %v3868
      %3901 = vst.msk [vmem:[%s222 + $0xb0] sm:$0xff] %vm427, %v3869
      %3902 = vst.msk [vmem:[%s222 + $0xb8] sm:$0xff] %vm427, %v3870
      %3903 = vst.msk [vmem:[%s222 + $0xc0] sm:$0xff] %vm427, %v3871
      %3904 = vst.msk [vmem:[%s222 + $0xc8] sm:$0xff] %vm427, %v3872
      %3905 = vst.msk [vmem:[%s222 + $0xd0] sm:$0xff] %vm427, %v3873
      %3906 = vst.msk [vmem:[%s222 + $0xd8] sm:$0xff] %vm427, %v3874
      %3907 = vst.msk [vmem:[%s222 + $0xe0] sm:$0xff] %vm427, %v3875
      %3908 = vst.msk [vmem:[%s222 + $0xe8] sm:$0xff] %vm427, %v3876
      %3909 = vst.msk [vmem:[%s222 + $0xf0] sm:$0xff] %vm427, %v3877
      %3910 = vst.msk [vmem:[%s222 + $0xf8] sm:$0xff] %vm427, %v3878
      %v3911 = vld [vmem:[%s5] sm:$0x3]
      %v3912 = vsel %vm427, %v3847, 0.0
      %v3913 = vsel %vm427, %v3848, 0.0
      %v3914 = vadd.f32 %v3912, %v3913
      %v3915 = vsel %vm427, %v3849, 0.0
      %v3916 = vadd.f32 %v3914, %v3915
      %v3917 = vsel %vm427, %v3850, 0.0
      %v3918 = vadd.f32 %v3916, %v3917
      %v3919 = vsel %vm427, %v3851, 0.0
      %v3920 = vadd.f32 %v3918, %v3919
      %v3921 = vsel %vm427, %v3852, 0.0
      %v3922 = vadd.f32 %v3920, %v3921
      %v3923 = vsel %vm427, %v3853, 0.0
      %v3924 = vadd.f32 %v3922, %v3923
      %v3925 = vsel %vm427, %v3854, 0.0
      %v3926 = vadd.f32 %v3924, %v3925
      %v3927 = vsel %vm427, %v3855, 0.0
      %v3928 = vadd.f32 %v3926, %v3927
      %v3929 = vsel %vm427, %v3856, 0.0
      %v3930 = vadd.f32 %v3928, %v3929
      %v3931 = vsel %vm427, %v3857, 0.0
      %v3932 = vadd.f32 %v3930, %v3931
      %v3933 = vsel %vm427, %v3858, 0.0
      %v3934 = vadd.f32 %v3932, %v3933
      %v3935 = vsel %vm427, %v3859, 0.0
      %v3936 = vadd.f32 %v3934, %v3935
      %v3937 = vsel %vm427, %v3860, 0.0
      %v3938 = vadd.f32 %v3936, %v3937
      %v3939 = vsel %vm427, %v3861, 0.0
      %v3940 = vadd.f32 %v3938, %v3939
      %v3941 = vsel %vm427, %v3862, 0.0
      %v3942 = vadd.f32 %v3940, %v3941
      %v3943 = vsel %vm427, %v3863, 0.0
      %v3944 = vadd.f32 %v3942, %v3943
      %v3945 = vsel %vm427, %v3864, 0.0
      %v3946 = vadd.f32 %v3944, %v3945
      %v3947 = vsel %vm427, %v3865, 0.0
      %v3948 = vadd.f32 %v3946, %v3947
      %v3949 = vsel %vm427, %v3866, 0.0
      %v3950 = vadd.f32 %v3948, %v3949
      %v3951 = vsel %vm427, %v3867, 0.0
      %v3952 = vadd.f32 %v3950, %v3951
      %v3953 = vsel %vm427, %v3868, 0.0
      %v3954 = vadd.f32 %v3952, %v3953
      %v3955 = vsel %vm427, %v3869, 0.0
      %v3956 = vadd.f32 %v3954, %v3955
      %v3957 = vsel %vm427, %v3870, 0.0
      %v3958 = vadd.f32 %v3956, %v3957
      %v3959 = vsel %vm427, %v3871, 0.0
      %v3960 = vadd.f32 %v3958, %v3959
      %v3961 = vsel %vm427, %v3872, 0.0
      %v3962 = vadd.f32 %v3960, %v3961
      %v3963 = vsel %vm427, %v3873, 0.0
      %v3964 = vadd.f32 %v3962, %v3963
      %v3965 = vsel %vm427, %v3874, 0.0
      %v3966 = vadd.f32 %v3964, %v3965
      %v3967 = vsel %vm427, %v3875, 0.0
      %v3968 = vadd.f32 %v3966, %v3967
      %v3969 = vsel %vm427, %v3876, 0.0
      %v3970 = vadd.f32 %v3968, %v3969
      %v3971 = vsel %vm427, %v3877, 0.0
      %v3972 = vadd.f32 %v3970, %v3971
      %v3973 = vsel %vm427, %v3878, 0.0
      %v3974 = vadd.f32 %v3972, %v3973
      %v3975 = vrot.slane %v3974, 4
      %v3976 = vadd.f32 %v3974, %v3975
      %v3977 = vrot.slane %v3976, 2
      %v3978 = vadd.f32 %v3976, %v3977
      %v3979 = vrot.slane %v3978, 1
      %v3980 = vadd.f32 %v3978, %v3979
      %v3981 = vmul.f32 %v3847, %v3847
      %v3982 = vmul.f32 %v3848, %v3848
      %v3983 = vmul.f32 %v3849, %v3849
      %v3984 = vmul.f32 %v3850, %v3850
      %v3985 = vmul.f32 %v3851, %v3851
      %v3986 = vmul.f32 %v3852, %v3852
      %v3987 = vmul.f32 %v3853, %v3853
      %v3988 = vmul.f32 %v3854, %v3854
      %v3989 = vmul.f32 %v3855, %v3855
      %v3990 = vmul.f32 %v3856, %v3856
      %v3991 = vmul.f32 %v3857, %v3857
      %v3992 = vmul.f32 %v3858, %v3858
      %v3993 = vmul.f32 %v3859, %v3859
      %v3994 = vmul.f32 %v3860, %v3860
      %v3995 = vmul.f32 %v3861, %v3861
      %v3996 = vmul.f32 %v3862, %v3862
      %v3997 = vmul.f32 %v3863, %v3863
      %v3998 = vmul.f32 %v3864, %v3864
      %v3999 = vmul.f32 %v3865, %v3865
      %v4000 = vmul.f32 %v3866, %v3866
      %v4001 = vmul.f32 %v3867, %v3867
      %v4002 = vmul.f32 %v3868, %v3868
      %v4003 = vmul.f32 %v3869, %v3869
      %v4004 = vmul.f32 %v3870, %v3870
      %v4005 = vmul.f32 %v3871, %v3871
      %v4006 = vmul.f32 %v3872, %v3872
      %v4007 = vmul.f32 %v3873, %v3873
      %v4008 = vmul.f32 %v3874, %v3874
      %v4009 = vmul.f32 %v3875, %v3875
      %v4010 = vmul.f32 %v3876, %v3876
      %v4011 = vmul.f32 %v3877, %v3877
      %v4012 = vmul.f32 %v3878, %v3878
      %v4013 = vsel %vm427, %v3981, 0.0
      %v4014 = vsel %vm427, %v3982, 0.0
      %v4015 = vadd.f32 %v4013, %v4014
      %v4016 = vsel %vm427, %v3983, 0.0
      %v4017 = vadd.f32 %v4015, %v4016
      %v4018 = vsel %vm427, %v3984, 0.0
      %v4019 = vadd.f32 %v4017, %v4018
      %v4020 = vsel %vm427, %v3985, 0.0
      %v4021 = vadd.f32 %v4019, %v4020
      %v4022 = vsel %vm427, %v3986, 0.0
      %v4023 = vadd.f32 %v4021, %v4022
      %v4024 = vsel %vm427, %v3987, 0.0
      %v4025 = vadd.f32 %v4023, %v4024
      %v4026 = vsel %vm427, %v3988, 0.0
      %v4027 = vadd.f32 %v4025, %v4026
      %v4028 = vsel %vm427, %v3989, 0.0
      %v4029 = vadd.f32 %v4027, %v4028
      %v4030 = vsel %vm427, %v3990, 0.0
      %v4031 = vadd.f32 %v4029, %v4030
      %v4032 = vsel %vm427, %v3991, 0.0
      %v4033 = vadd.f32 %v4031, %v4032
      %v4034 = vsel %vm427, %v3992, 0.0
      %v4035 = vadd.f32 %v4033, %v4034
      %v4036 = vsel %vm427, %v3993, 0.0
      %v4037 = vadd.f32 %v4035, %v4036
      %v4038 = vsel %vm427, %v3994, 0.0
      %v4039 = vadd.f32 %v4037, %v4038
      %v4040 = vsel %vm427, %v3995, 0.0
      %v4041 = vadd.f32 %v4039, %v4040
      %v4042 = vsel %vm427, %v3996, 0.0
      %v4043 = vadd.f32 %v4041, %v4042
      %v4044 = vsel %vm427, %v3997, 0.0
      %v4045 = vadd.f32 %v4043, %v4044
      %v4046 = vsel %vm427, %v3998, 0.0
      %v4047 = vadd.f32 %v4045, %v4046
      %v4048 = vsel %vm427, %v3999, 0.0
      %v4049 = vadd.f32 %v4047, %v4048
      %v4050 = vsel %vm427, %v4000, 0.0
      %v4051 = vadd.f32 %v4049, %v4050
      %v4052 = vsel %vm427, %v4001, 0.0
      %v4053 = vadd.f32 %v4051, %v4052
      %v4054 = vsel %vm427, %v4002, 0.0
      %v4055 = vadd.f32 %v4053, %v4054
      %v4056 = vsel %vm427, %v4003, 0.0
      %v4057 = vadd.f32 %v4055, %v4056
      %v4058 = vsel %vm427, %v4004, 0.0
      %v4059 = vadd.f32 %v4057, %v4058
      %v4060 = vsel %vm427, %v4005, 0.0
      %v4061 = vadd.f32 %v4059, %v4060
      %v4062 = vsel %vm427, %v4006, 0.0
      %v4063 = vadd.f32 %v4061, %v4062
      %v4064 = vsel %vm427, %v4007, 0.0
      %v4065 = vadd.f32 %v4063, %v4064
      %v4066 = vsel %vm427, %v4008, 0.0
      %v4067 = vadd.f32 %v4065, %v4066
      %v4068 = vsel %vm427, %v4009, 0.0
      %v4069 = vadd.f32 %v4067, %v4068
      %v4070 = vsel %vm427, %v4010, 0.0
      %v4071 = vadd.f32 %v4069, %v4070
      %v4072 = vsel %vm427, %v4011, 0.0
      %v4073 = vadd.f32 %v4071, %v4072
      %v4074 = vsel %vm427, %v4012, 0.0
      %v4075 = vadd.f32 %v4073, %v4074
      %v4076 = vrot.slane %v4075, 4
      %v4077 = vadd.f32 %v4075, %v4076
      %v4078 = vrot.slane %v4077, 2
      %v4079 = vadd.f32 %v4077, %v4078
      %v4080 = vrot.slane %v4079, 1
      %v4081 = vadd.f32 %v4079, %v4080
      %vm4082 = vcmask 1040384
      %v4083 = vsel %vm4082, %v3980, %v4081
      %v4084 = vadd.f32 %v3911, %v4083
      %vm4085 = vcmask 58368
      %4086 = vst.msk [vmem:[%s5] sm:$0x3] %vm4085, %v4084
      %p4087 = scmp.lt.s32.totalorder %s17, 1
      %s4088 = scalar_select %p4087, %s17, 1
      %s4089 = smul.addr %s4088, 32
      %s4090 = smul.addr %s4089, 8
      %s4091 = scalar_lea.vmem %s4, %s4090
      // Predicated region
      $region41: #{basic_block.4} parent=35 // pred_check
        %p4092 = pneg %p124
      $region42: #{basic_block.4} parent=35 // pred_check_branch
        %4094 = sbr.rel (%p4092) target = $region44
      $region43: #{basic_block.4} parent=35 // pred_region
        _
      $region44: #{basic_block.4} parent=35 // pred_fallthru
        _
      // Predicated region
      $region45: #{basic_block.4} parent=35 // pred_check
        %p4095 = pneg %p145
      $region46: #{basic_block.4} parent=35 // pred_check_branch
        %4097 = sbr.rel (%p4095) target = $region48
      $region47: #{basic_block.4} parent=35 // pred_region
        _
      $region48: #{basic_block.4} parent=35 // pred_fallthru
        _
      // Predicated region
      $region49: #{basic_block.4} parent=35 // pred_check
        %p4098 = pneg %p145
      $region50: #{basic_block.4} parent=35 // pred_check_branch
        %4100 = sbr.rel (%p4098) target = $region52
      $region51: #{basic_block.4} parent=35 // pred_region
        _
      $region52: #{basic_block.4} parent=35 // pred_fallthru
        _
    $region36: #{basic_block.4} parent=5 // pred_fallthru
      _
    %p4101 = scmp.le.s32.totalorder 2, %s12
    // Predicated region
    $region53: #{basic_block.4} parent=5 // pred_check
      %p4102 = pneg %p4101
    $region54: #{basic_block.4} parent=5 // pred_check_branch
      %4104 = sbr.rel (%p4102) target = $region56
    $region55: #{basic_block.4} parent=5 // pred_region
      %s4105 = ssub.s32 %s12, 2
      // Predicated region
      $region57: #{basic_block.4} parent=55 // pred_check
        %p4106 = pneg %p130
      $region58: #{basic_block.4} parent=55 // pred_check_branch
        %4108 = sbr.rel (%p4106) target = $region60
      $region59: #{basic_block.4} parent=55 // pred_region
        %p4109 = scmp.lt.s32.totalorder %s18, 1
        %s4110 = scalar_select %p4109, %s18, 1
        %s4111 = smul.addr %s4110, 32
        %s4112 = smul.addr %s4111, 8
        %s4113 = scalar_lea.vmem %s4, %s4112
      $region60: #{basic_block.4} parent=55 // pred_fallthru
        _
    $region56: #{basic_block.4} parent=5 // pred_fallthru
      _
  $region6: #{basic_block.4} parent=0 // loop_footer
    %s16 = sadd.s32 1, %s12
  $region7: #{basic_block.4} parent=0 // loop_footer_branch
    %11 = sbr.rel target = $region3
  $region8: #{basic_block.4} parent=0 // loop_exit
    _

// kernel: basic_block.3
$region0: #{basic_block.3}
  #allocation0 [shape = 'u32[]', space=smem, size = 0x4, offset = 0x4, fixed_abs, tag = 'smem constant byte address 0x4 - core index']
  #allocation1 [shape = 'u32[144,128]{1,0:T(1,128)}', space=vmem, size = 0x12000, scoped, tag = 'internal scratch']
  #allocation2 [shape = 'f32[18,18,4]{2,1,0:T(8,128)}', space=vmem, size = 0x36000, scoped, tag = 'scratch operand']
  %s0 = inlined_call_operand.vmem [shape: f32[2,16,16,4], index: 0, kind: input, shape index: {}]
  %s1 = inlined_call_operand.vmem [shape: f32[9,4,8], index: 1, kind: input, shape index: {}]
  %s2 = inlined_call_operand.vmem [shape: f32[4,8], index: 2, kind: input, shape index: {}]
  %s3 = inlined_call_operand.vmem [shape: f32[2,256,8], index: 3, kind: output, shape index: {0}]
  %s4 = inlined_call_operand.vmem [shape: f32[4,8], index: 4, kind: output, shape index: {1}]
  %5 = xla_tuple %s3, %s4
  %s6 = sld [smem:[#allocation0]]
  $region57: #{basic_block.3} parent=0
    _
  %s8 = ssub.s32 1, %s6
  %s9 = scalar_select 0, %s8, %s6
  loop: start=0, step=1, limit=4
  $region2: #{basic_block.3} parent=0 // loop_pre_header
    _
  $region3: #{basic_block.3} parent=0 // loop_header
    %s11 = sphi 0, %s15
    %p12 = scmp.ge.s32.totalorder %s11, 4
    %s21 = sphi 0, %s23
    %s24 = sphi 0, %s21
    %s25 = sphi 0, %s24
    %s41 = sphi 0, %s25
    %s45 = sphi 0, %s45
    %s47 = sphi 0, %s45
    %s48 = sphi 0, %s47
    %s62 = sphi 0, %s48
    %s66 = sphi 0, %s66
    %s68 = sphi 0, %s66
    %s69 = sphi 0, %s68
    %s83 = sphi 0, %s69
    %s89 = sphi 0, %s91
    %s92 = sphi 0, %s89
    %s93 = sphi 0, %s92
    %s109 = sphi 0, %s93
    %s113 = sphi 0, %s113
    %s115 = sphi 0, %s113
    %s116 = sphi 0, %s115
    %s130 = sphi 0, %s116
  $region4: #{basic_block.3} parent=0 // loop_header_branch
    %14 = sbr.rel (%p12) target = $region8
  $region5: #{basic_block.3} parent=0 // loop_body
    %s16 = ssub.s32 %s11, 1
    %s17 = ssub.s32 %s11, 2
    %s18 = sadd.s32 %s11, 1
    %s19 = ssub.s32 %s11, %s18
    %p20 = scmp.eq.s32.totalorder %s19, 0
    %s22 = sadd.s32 %s21, 1
    %s23 = scalar_select %p20, %s21, %s22
    %p26 = pneg %p20
    %p27 = scmp.eq.s32.totalorder %s11, 1
    %p28 = por %p26, %p27
    %p29 = scmp.ne.s32.totalorder %s21, %s24
    %p30 = scmp.eq.s32.totalorder %s11, 0
    %p31 = por %p29, %p30
    %p32 = scmp.ne.s32.totalorder %s21, %s24
    %p33 = scmp.eq.s32.totalorder %s16, 1
    %p34 = por %p32, %p33
    %p35 = scmp.ne.s32.totalorder %s24, %s25
    %p36 = scmp.eq.s32.totalorder %s16, 0
    %p37 = por %p35, %p36
    %p38 = scmp.ne.s32.totalorder %s24, %s25
    %p39 = scmp.eq.s32.totalorder %s17, 1
    %p40 = por %p38, %p39
    %p42 = scmp.ne.s32.totalorder %s25, %s41
    %p43 = scmp.eq.s32.totalorder %s17, 0
    %p44 = por %p42, %p43
    %s46 = sadd.s32 %s45, 1
    %p49 = scmp.eq.s32.totalorder %s11, 1
    %p50 = scmp.ne.s32.totalorder %s45, %s47
    %p51 = scmp.eq.s32.totalorder %s11, 0
    %p52 = por %p50, %p51
    %p53 = scmp.ne.s32.totalorder %s45, %s47
    %p54 = scmp.eq.s32.totalorder %s16, 1
    %p55 = por %p53, %p54
    %p56 = scmp.ne.s32.totalorder %s47, %s48
    %p57 = scmp.eq.s32.totalorder %s16, 0
    %p58 = por %p56, %p57
    %p59 = scmp.ne.s32.totalorder %s47, %s48
    %p60 = scmp.eq.s32.totalorder %s17, 1
    %p61 = por %p59, %p60
    %p63 = scmp.ne.s32.totalorder %s48, %s62
    %p64 = scmp.eq.s32.totalorder %s17, 0
    %p65 = por %p63, %p64
    %s67 = sadd.s32 %s66, 1
    %p70 = scmp.eq.s32.totalorder %s11, 1
    %p71 = scmp.ne.s32.totalorder %s66, %s68
    %p72 = scmp.eq.s32.totalorder %s11, 0
    %p73 = por %p71, %p72
    %p74 = scmp.ne.s32.totalorder %s66, %s68
    %p75 = scmp.eq.s32.totalorder %s16, 1
    %p76 = por %p74, %p75
    %p77 = scmp.ne.s32.totalorder %s68, %s69
    %p78 = scmp.eq.s32.totalorder %s16, 0
    %p79 = por %p77, %p78
    %p80 = scmp.ne.s32.totalorder %s68, %s69
    %p81 = scmp.eq.s32.totalorder %s17, 1
    %p82 = por %p80, %p81
    %p84 = scmp.ne.s32.totalorder %s69, %s83
    %p85 = scmp.eq.s32.totalorder %s17, 0
    %p86 = por %p84, %p85
    %s87 = ssub.s32 %s11, %s18
    %p88 = scmp.eq.s32.totalorder %s87, 0
    %s90 = sadd.s32 %s89, 1
    %s91 = scalar_select %p88, %s89, %s90
    %p94 = pneg %p88
    %p95 = scmp.eq.s32.totalorder %s11, 1
    %p96 = por %p94, %p95
    %p97 = scmp.ne.s32.totalorder %s89, %s92
    %p98 = scmp.eq.s32.totalorder %s11, 0
    %p99 = por %p97, %p98
    %p100 = scmp.ne.s32.totalorder %s89, %s92
    %p101 = scmp.eq.s32.totalorder %s16, 1
    %p102 = por %p100, %p101
    %p103 = scmp.ne.s32.totalorder %s92, %s93
    %p104 = scmp.eq.s32.totalorder %s16, 0
    %p105 = por %p103, %p104
    %p106 = scmp.ne.s32.totalorder %s92, %s93
    %p107 = scmp.eq.s32.totalorder %s17, 1
    %p108 = por %p106, %p107
    %p110 = scmp.ne.s32.totalorder %s93, %s109
    %p111 = scmp.eq.s32.totalorder %s17, 0
    %p112 = por %p110, %p111
    %s114 = sadd.s32 %s113, 1
    %p117 = scmp.eq.s32.totalorder %s11, 1
    %p118 = scmp.ne.s32.totalorder %s113, %s115
    %p119 = scmp.eq.s32.totalorder %s11, 0
    %p120 = por %p118, %p119
    %p121 = scmp.ne.s32.totalorder %s113, %s115
    %p122 = scmp.eq.s32.totalorder %s16, 1
    %p123 = por %p121, %p122
    %p124 = scmp.ne.s32.totalorder %s115, %s116
    %p125 = scmp.eq.s32.totalorder %s16, 0
    %p126 = por %p124, %p125
    %p127 = scmp.ne.s32.totalorder %s115, %s116
    %p128 = scmp.eq.s32.totalorder %s17, 1
    %p129 = por %p127, %p128
    %p131 = scmp.ne.s32.totalorder %s116, %s130
    %p132 = scmp.eq.s32.totalorder %s17, 0
    %p133 = por %p131, %p132
    %p134 = scmp.le.s32.totalorder 1, %s11
    %p135 = scmp.lt.s32.totalorder %s11, 3
    %p136 = pnand %p134, %p135
    %p137 = pneg %p136
    // Predicated region
    $region9: #{basic_block.3} parent=5 // pred_check
      _
    $region10: #{basic_block.3} parent=5 // pred_check_branch
      %139 = sbr.rel (%p136) target = $region12
    $region11: #{basic_block.3} parent=5 // pred_region
      %s140 = ssub.s32 %s11, 1
      // Predicated region
      $region13: #{basic_block.3} parent=11 // pred_check
        %p141 = pneg %p58
      $region14: #{basic_block.3} parent=11 // pred_check_branch
        %143 = sbr.rel (%p141) target = $region16
      $region15: #{basic_block.3} parent=11 // pred_region
        _
      $region16: #{basic_block.3} parent=11 // pred_fallthru
        _
      // Predicated region
      $region17: #{basic_block.3} parent=11 // pred_check
        %p144 = pneg %p79
      $region18: #{basic_block.3} parent=11 // pred_check_branch
        %146 = sbr.rel (%p144) target = $region20
      $region19: #{basic_block.3} parent=11 // pred_region
        _
      $region20: #{basic_block.3} parent=11 // pred_fallthru
        _
    $region12: #{basic_block.3} parent=5 // pred_fallthru
      _
    %p147 = scmp.lt.s32.totalorder %s11, 2
    // Predicated region
    $region21: #{basic_block.3} parent=5 // pred_check
      %p148 = pneg %p147
    $region22: #{basic_block.3} parent=5 // pred_check_branch
      %150 = sbr.rel (%p148) target = $region24
    $region23: #{basic_block.3} parent=5 // pred_region
      // Predicated region
      $region25: #{basic_block.3} parent=23 // pred_check
        %p151 = pneg %p31
      $region26: #{basic_block.3} parent=23 // pred_check_branch
        %153 = sbr.rel (%p151) target = $region28
      $region27: #{basic_block.3} parent=23 // pred_region
        %p154 = scmp.lt.s32.totalorder %s11, 1
        %s155 = scalar_select %p154, %s11, 1
        %s156 = smul.addr %s155, 32
        %s157 = smul.addr %s156, 8
        %s158 = scalar_lea.vmem %s0, %s157
      $region28: #{basic_block.3} parent=23 // pred_fallthru
        _
    $region24: #{basic_block.3} parent=5 // pred_fallthru
      _
    %p159 = scmp.le.s32.totalorder 1, %s11
    %p160 = scmp.lt.s32.totalorder %s11, 3
    %p161 = pnand %p159, %p160
    %p162 = pneg %p161
    // Predicated region
    $region29: #{basic_block.3} parent=5 // pred_check
      _
    $region30: #{basic_block.3} parent=5 // pred_check_branch
      %164 = sbr.rel (%p161) target = $region32
    $region31: #{basic_block.3} parent=5 // pred_region
      %s165 = ssub.s32 %s11, 1
      %p166 = scmp.lt.s32.totalorder %s16, 1
      %s167 = scalar_select %p166, %s16, 1
      %s168 = smul.addr %s167, 32
      %s169 = smul.addr %s168, 8
      %s170 = scalar_lea.vmem %s0, %s169
      %p171 = pneg %p37
      %p172 = pneg %p34
      %p173 = pneg %p58
      %p174 = pneg %p55
      %p175 = pneg %p79
      %p176 = pneg %p76
      %p177 = pneg %p105
      %p178 = pneg %p102
      %p179 = scmp.lt.s32.totalorder %s16, 1
      %s180 = scalar_select %p179, %s16, 1
      %s181 = smul.addr %s180, 32
      %s182 = smul.addr %s181, 8
      %s183 = scalar_lea.vmem %s3, %s182
      %p184 = pneg %p126
      %p185 = pneg %p123
      %p186 = scmp.lt.s32.totalorder %s16, 1
      %s187 = scalar_select %p186, %s16, 1
      %s188 = smul.addr %s187, 32
      %s189 = smul.addr %s188, 8
      %s190 = scalar_lea.vmem %s0, %s189
      %p191 = scmp.lt.s32.totalorder %s16, 1
      %s192 = scalar_select %p191, %s16, 1
      %s193 = smul.addr %s192, 32
      %s194 = smul.addr %s193, 8
      %s195 = scalar_lea.vmem %s3, %s194
      %p196 = scmp.eq.s32.totalorder %s16, 0
      // Predicated region
      $region33: #{basic_block.3} parent=31 // pred_check
        %p197 = pneg %p196
      $region34: #{basic_block.3} parent=31 // pred_check_branch
        %199 = sbr.rel (%p197) target = $region36
      $region35: #{basic_block.3} parent=31 // pred_region
        %vm200 = vcmask 31744
        %201 = vst.msk [vmem:[#allocation2] sm:$0xff] %vm200, 0.0
        %202 = vst.msk [vmem:[#allocation2 + $0x8] sm:$0xff] %vm200, 0.0
        %vm203 = vcmask 25600
        %204 = vst.msk [vmem:[#allocation2 + $0x10] sm:$0x3] %vm203, 0.0
        %205 = vst.msk [vmem:[#allocation2 + $0x18] sm:$0xff] %vm200, 0.0
        %206 = vst.msk [vmem:[#allocation2 + $0x20] sm:$0xff] %vm200, 0.0
        %207 = vst.msk [vmem:[#allocation2 + $0x28] sm:$0x3] %vm203, 0.0
        %208 = vst.msk [vmem:[#allocation2 + $0x30] sm:$0xff] %vm200, 0.0
        %209 = vst.msk [vmem:[#allocation2 + $0x38] sm:$0xff] %vm200, 0.0
        %210 = vst.msk [vmem:[#allocation2 + $0x40] sm:$0x3] %vm203, 0.0
        %211 = vst.msk [vmem:[#allocation2 + $0x48] sm:$0xff] %vm200, 0.0
        %212 = vst.msk [vmem:[#allocation2 + $0x50] sm:$0xff] %vm200, 0.0
        %213 = vst.msk [vmem:[#allocation2 + $0x58] sm:$0x3] %vm203, 0.0
        %214 = vst.msk [vmem:[#allocation2 + $0x60] sm:$0xff] %vm200, 0.0
        %215 = vst.msk [vmem:[#allocation2 + $0x68] sm:$0xff] %vm200, 0.0
        %216 = vst.msk [vmem:[#allocation2 + $0x70] sm:$0x3] %vm203, 0.0
        %217 = vst.msk [vmem:[#allocation2 + $0x78] sm:$0xff] %vm200, 0.0
        %218 = vst.msk [vmem:[#allocation2 + $0x80] sm:$0xff] %vm200, 0.0
        %219 = vst.msk [vmem:[#allocation2 + $0x88] sm:$0x3] %vm203, 0.0
        %220 = vst.msk [vmem:[#allocation2 + $0x90] sm:$0xff] %vm200, 0.0
        %221 = vst.msk [vmem:[#allocation2 + $0x98] sm:$0xff] %vm200, 0.0
        %222 = vst.msk [vmem:[#allocation2 + $0xa0] sm:$0x3] %vm203, 0.0
        %223 = vst.msk [vmem:[#allocation2 + $0xa8] sm:$0xff] %vm200, 0.0
        %224 = vst.msk [vmem:[#allocation2 + $0xb0] sm:$0xff] %vm200, 0.0
        %225 = vst.msk [vmem:[#allocation2 + $0xb8] sm:$0x3] %vm203, 0.0
        %226 = vst.msk [vmem:[#allocation2 + $0xc0] sm:$0xff] %vm200, 0.0
        %227 = vst.msk [vmem:[#allocation2 + $0xc8] sm:$0xff] %vm200, 0.0
        %228 = vst.msk [vmem:[#allocation2 + $0xd0] sm:$0x3] %vm203, 0.0
        %229 = vst.msk [vmem:[#allocation2 + $0xd8] sm:$0xff] %vm200, 0.0
        %230 = vst.msk [vmem:[#allocation2 + $0xe0] sm:$0xff] %vm200, 0.0
        %231 = vst.msk [vmem:[#allocation2 + $0xe8] sm:$0x3] %vm203, 0.0
        %232 = vst.msk [vmem:[#allocation2 + $0xf0] sm:$0xff] %vm200, 0.0
        %233 = vst.msk [vmem:[#allocation2 + $0xf8] sm:$0xff] %vm200, 0.0
        %234 = vst.msk [vmem:[#allocation2 + $0x100] sm:$0x3] %vm203, 0.0
        %235 = vst.msk [vmem:[#allocation2 + $0x108] sm:$0xff] %vm200, 0.0
        %236 = vst.msk [vmem:[#allocation2 + $0x110] sm:$0xff] %vm200, 0.0
        %237 = vst.msk [vmem:[#allocation2 + $0x118] sm:$0x3] %vm203, 0.0
        %238 = vst.msk [vmem:[#allocation2 + $0x120] sm:$0xff] %vm200, 0.0
        %239 = vst.msk [vmem:[#allocation2 + $0x128] sm:$0xff] %vm200, 0.0
        %240 = vst.msk [vmem:[#allocation2 + $0x130] sm:$0x3] %vm203, 0.0
        %241 = vst.msk [vmem:[#allocation2 + $0x138] sm:$0xff] %vm200, 0.0
        %242 = vst.msk [vmem:[#allocation2 + $0x140] sm:$0xff] %vm200, 0.0
        %243 = vst.msk [vmem:[#allocation2 + $0x148] sm:$0x3] %vm203, 0.0
        %244 = vst.msk [vmem:[#allocation2 + $0x150] sm:$0xff] %vm200, 0.0
        %245 = vst.msk [vmem:[#allocation2 + $0x158] sm:$0xff] %vm200, 0.0
        %246 = vst.msk [vmem:[#allocation2 + $0x160] sm:$0x3] %vm203, 0.0
        %247 = vst.msk [vmem:[#allocation2 + $0x168] sm:$0xff] %vm200, 0.0
        %248 = vst.msk [vmem:[#allocation2 + $0x170] sm:$0xff] %vm200, 0.0
        %249 = vst.msk [vmem:[#allocation2 + $0x178] sm:$0x3] %vm203, 0.0
        %250 = vst.msk [vmem:[#allocation2 + $0x180] sm:$0xff] %vm200, 0.0
        %251 = vst.msk [vmem:[#allocation2 + $0x188] sm:$0xff] %vm200, 0.0
        %252 = vst.msk [vmem:[#allocation2 + $0x190] sm:$0x3] %vm203, 0.0
        %253 = vst.msk [vmem:[#allocation2 + $0x198] sm:$0xff] %vm200, 0.0
        %254 = vst.msk [vmem:[#allocation2 + $0x1a0] sm:$0xff] %vm200, 0.0
        %255 = vst.msk [vmem:[#allocation2 + $0x1a8] sm:$0x3] %vm203, 0.0
        %vm256 = vcmask 60416
        %257 = vst.msk [vmem:[%s4] sm:$0xf] %vm256, 0.0
      $region36: #{basic_block.3} parent=31 // pred_fallthru
        _
      %v258 = vld [vmem:[%s190] sm:$0xff]
      %v259 = vld [vmem:[%s190 + $0x8] sm:$0xff]
      %v260 = vld [vmem:[%s190 + $0x10] sm:$0xff]
      %v261 = vld [vmem:[%s190 + $0x18] sm:$0xff]
      %v262 = vld [vmem:[%s190 + $0x20] sm:$0xff]
      %v263 = vld [vmem:[%s190 + $0x28] sm:$0xff]
      %v264 = vld [vmem:[%s190 + $0x30] sm:$0xff]
      %v265 = vld [vmem:[%s190 + $0x38] sm:$0xff]
      %v266 = vld [vmem:[%s190 + $0x40] sm:$0xff]
      %v267 = vld [vmem:[%s190 + $0x48] sm:$0xff]
      %v268 = vld [vmem:[%s190 + $0x50] sm:$0xff]
      %v269 = vld [vmem:[%s190 + $0x58] sm:$0xff]
      %v270 = vld [vmem:[%s190 + $0x60] sm:$0xff]
      %v271 = vld [vmem:[%s190 + $0x68] sm:$0xff]
      %v272 = vld [vmem:[%s190 + $0x70] sm:$0xff]
      %v273 = vld [vmem:[%s190 + $0x78] sm:$0xff]
      %v274 = vld [vmem:[%s190 + $0x80] sm:$0xff]
      %v275 = vld [vmem:[%s190 + $0x88] sm:$0xff]
      %v276 = vld [vmem:[%s190 + $0x90] sm:$0xff]
      %v277 = vld [vmem:[%s190 + $0x98] sm:$0xff]
      %v278 = vld [vmem:[%s190 + $0xa0] sm:$0xff]
      %v279 = vld [vmem:[%s190 + $0xa8] sm:$0xff]
      %v280 = vld [vmem:[%s190 + $0xb0] sm:$0xff]
      %v281 = vld [vmem:[%s190 + $0xb8] sm:$0xff]
      %v282 = vld [vmem:[%s190 + $0xc0] sm:$0xff]
      %v283 = vld [vmem:[%s190 + $0xc8] sm:$0xff]
      %v284 = vld [vmem:[%s190 + $0xd0] sm:$0xff]
      %v285 = vld [vmem:[%s190 + $0xd8] sm:$0xff]
      %v286 = vld [vmem:[%s190 + $0xe0] sm:$0xff]
      %v287 = vld [vmem:[%s190 + $0xe8] sm:$0xff]
      %v288 = vld [vmem:[%s190 + $0xf0] sm:$0xff]
      %v289 = vld [vmem:[%s190 + $0xf8] sm:$0xff]
      %s290 = scalar_lea.vmem [#allocation2], 24
      %vm291 = vcmask 31744
      %292 = vst.msk [vmem:[%s290 + $0x1] sm:$0xff] %vm291, %v258
      %293 = vst.msk [vmem:[%s290 + $0x9] sm:$0xff] %vm291, %v259
      %294 = vst.msk [vmem:[%s290 + $0x19] sm:$0xff] %vm291, %v260
      %295 = vst.msk [vmem:[%s290 + $0x21] sm:$0xff] %vm291, %v261
      %296 = vst.msk [vmem:[%s290 + $0x31] sm:$0xff] %vm291, %v262
      %297 = vst.msk [vmem:[%s290 + $0x39] sm:$0xff] %vm291, %v263
      %298 = vst.msk [vmem:[%s290 + $0x49] sm:$0xff] %vm291, %v264
      %299 = vst.msk [vmem:[%s290 + $0x51] sm:$0xff] %vm291, %v265
      %300 = vst.msk [vmem:[%s290 + $0x61] sm:$0xff] %vm291, %v266
      %301 = vst.msk [vmem:[%s290 + $0x69] sm:$0xff] %vm291, %v267
      %302 = vst.msk [vmem:[%s290 + $0x79] sm:$0xff] %vm291, %v268
      %303 = vst.msk [vmem:[%s290 + $0x81] sm:$0xff] %vm291, %v269
      %304 = vst.msk [vmem:[%s290 + $0x91] sm:$0xff] %vm291, %v270
      %305 = vst.msk [vmem:[%s290 + $0x99] sm:$0xff] %vm291, %v271
      %306 = vst.msk [vmem:[%s290 + $0xa9] sm:$0xff] %vm291, %v272
      %307 = vst.msk [vmem:[%s290 + $0xb1] sm:$0xff] %vm291, %v273
      %308 = vst.msk [vmem:[%s290 + $0xc1] sm:$0xff] %vm291, %v274
      %309 = vst.msk [vmem:[%s290 + $0xc9] sm:$0xff] %vm291, %v275
      %310 = vst.msk [vmem:[%s290 + $0xd9] sm:$0xff] %vm291, %v276
      %311 = vst.msk [vmem:[%s290 + $0xe1] sm:$0xff] %vm291, %v277
      %312 = vst.msk [vmem:[%s290 + $0xf1] sm:$0xff] %vm291, %v278
      %313 = vst.msk [vmem:[%s290 + $0xf9] sm:$0xff] %vm291, %v279
      %314 = vst.msk [vmem:[%s290 + $0x109] sm:$0xff] %vm291, %v280
      %315 = vst.msk [vmem:[%s290 + $0x111] sm:$0xff] %vm291, %v281
      %316 = vst.msk [vmem:[%s290 + $0x121] sm:$0xff] %vm291, %v282
      %317 = vst.msk [vmem:[%s290 + $0x129] sm:$0xff] %vm291, %v283
      %318 = vst.msk [vmem:[%s290 + $0x139] sm:$0xff] %vm291, %v284
      %319 = vst.msk [vmem:[%s290 + $0x141] sm:$0xff] %vm291, %v285
      %320 = vst.msk [vmem:[%s290 + $0x151] sm:$0xff] %vm291, %v286
      %321 = vst.msk [vmem:[%s290 + $0x159] sm:$0xff] %vm291, %v287
      %322 = vst.msk [vmem:[%s290 + $0x169] sm:$0xff] %vm291, %v288
      %323 = vst.msk [vmem:[%s290 + $0x171] sm:$0xff] %vm291, %v289
      %v324 = vld [vmem:[#allocation2] sm:$0xff]
      %v325 = vld [vmem:[#allocation2 + $0x8] sm:$0xff]
      %v326 = vld [vmem:[#allocation2 + $0x18] sm:$0xff]
      %v327 = vld [vmem:[#allocation2 + $0x20] sm:$0xff]
      %v328 = vld [vmem:[#allocation2 + $0x30] sm:$0xff]
      %v329 = vld [vmem:[#allocation2 + $0x38] sm:$0xff]
      %v330 = vld [vmem:[#allocation2 + $0x48] sm:$0xff]
      %v331 = vld [vmem:[#allocation2 + $0x50] sm:$0xff]
      %v332 = vld [vmem:[#allocation2 + $0x60] sm:$0xff]
      %v333 = vld [vmem:[#allocation2 + $0x68] sm:$0xff]
      %v334 = vld [vmem:[#allocation2 + $0x78] sm:$0xff]
      %v335 = vld [vmem:[#allocation2 + $0x80] sm:$0xff]
      %v336 = vld [vmem:[#allocation2 + $0x90] sm:$0xff]
      %v337 = vld [vmem:[#allocation2 + $0x98] sm:$0xff]
      %v338 = vld [vmem:[#allocation2 + $0xa8] sm:$0xff]
      %v339 = vld [vmem:[#allocation2 + $0xb0] sm:$0xff]
      %v340 = vld [vmem:[#allocation2 + $0xc0] sm:$0xff]
      %v341 = vld [vmem:[#allocation2 + $0xc8] sm:$0xff]
      %v342 = vld [vmem:[#allocation2 + $0xd8] sm:$0xff]
      %v343 = vld [vmem:[#allocation2 + $0xe0] sm:$0xff]
      %v344 = vld [vmem:[#allocation2 + $0xf0] sm:$0xff]
      %v345 = vld [vmem:[#allocation2 + $0xf8] sm:$0xff]
      %v346 = vld [vmem:[#allocation2 + $0x108] sm:$0xff]
      %v347 = vld [vmem:[#allocation2 + $0x110] sm:$0xff]
      %v348 = vld [vmem:[#allocation2 + $0x120] sm:$0xff]
      %v349 = vld [vmem:[#allocation2 + $0x128] sm:$0xff]
      %v350 = vld [vmem:[#allocation2 + $0x138] sm:$0xff]
      %v351 = vld [vmem:[#allocation2 + $0x140] sm:$0xff]
      %v352 = vld [vmem:[#allocation2 + $0x150] sm:$0xff]
      %v353 = vld [vmem:[#allocation2 + $0x158] sm:$0xff]
      %v354 = vld [vmem:[#allocation2 + $0x168] sm:$0xff]
      %v355 = vld [vmem:[#allocation2 + $0x170] sm:$0xff]
      %v356 = vld [vmem:[%s1] sm:$0xf]
      %v357 = vld [vmem:[#allocation2 + $0x1] sm:$0xff]
      %v358 = vld [vmem:[#allocation2 + $0x9] sm:$0xff]
      %v359 = vld [vmem:[#allocation2 + $0x19] sm:$0xff]
      %v360 = vld [vmem:[#allocation2 + $0x21] sm:$0xff]
      %v361 = vld [vmem:[#allocation2 + $0x31] sm:$0xff]
      %v362 = vld [vmem:[#allocation2 + $0x39] sm:$0xff]
      %v363 = vld [vmem:[#allocation2 + $0x49] sm:$0xff]
      %v364 = vld [vmem:[#allocation2 + $0x51] sm:$0xff]
      %v365 = vld [vmem:[#allocation2 + $0x61] sm:$0xff]
      %v366 = vld [vmem:[#allocation2 + $0x69] sm:$0xff]
      %v367 = vld [vmem:[#allocation2 + $0x79] sm:$0xff]
      %v368 = vld [vmem:[#allocation2 + $0x81] sm:$0xff]
      %v369 = vld [vmem:[#allocation2 + $0x91] sm:$0xff]
      %v370 = vld [vmem:[#allocation2 + $0x99] sm:$0xff]
      %v371 = vld [vmem:[#allocation2 + $0xa9] sm:$0xff]
      %v372 = vld [vmem:[#allocation2 + $0xb1] sm:$0xff]
      %v373 = vld [vmem:[#allocation2 + $0xc1] sm:$0xff]
      %v374 = vld [vmem:[#allocation2 + $0xc9] sm:$0xff]
      %v375 = vld [vmem:[#allocation2 + $0xd9] sm:$0xff]
      %v376 = vld [vmem:[#allocation2 + $0xe1] sm:$0xff]
      %v377 = vld [vmem:[#allocation2 + $0xf1] sm:$0xff]
      %v378 = vld [vmem:[#allocation2 + $0xf9] sm:$0xff]
      %v379 = vld [vmem:[#allocation2 + $0x109] sm:$0xff]
      %v380 = vld [vmem:[#allocation2 + $0x111] sm:$0xff]
      %v381 = vld [vmem:[#allocation2 + $0x121] sm:$0xff]
      %v382 = vld [vmem:[#allocation2 + $0x129] sm:$0xff]
      %v383 = vld [vmem:[#allocation2 + $0x139] sm:$0xff]
      %v384 = vld [vmem:[#allocation2 + $0x141] sm:$0xff]
      %v385 = vld [vmem:[#allocation2 + $0x151] sm:$0xff]
      %v386 = vld [vmem:[#allocation2 + $0x159] sm:$0xff]
      %v387 = vld [vmem:[#allocation2 + $0x169] sm:$0xff]
      %v388 = vld [vmem:[#allocation2 + $0x171] sm:$0xff]
      %s389 = scalar_lea.vmem %s1, 4
      %v390 = vld [vmem:[%s389] sm:$0xf]
      %v392 = vsel %vm291, %v357, 0
      %v395 = vsel %vm291, %v358, 0
      %v398 = vsel %vm291, %v359, 0
      %v401 = vsel %vm291, %v360, 0
      %v404 = vsel %vm291, %v361, 0
      %v407 = vsel %vm291, %v362, 0
      %v410 = vsel %vm291, %v363, 0
      %v413 = vsel %vm291, %v364, 0
      %v416 = vsel %vm291, %v365, 0
      %v419 = vsel %vm291, %v366, 0
      %v422 = vsel %vm291, %v367, 0
      %v425 = vsel %vm291, %v368, 0
      %v428 = vsel %vm291, %v369, 0
      %v431 = vsel %vm291, %v370, 0
      %v434 = vsel %vm291, %v371, 0
      %v437 = vsel %vm291, %v372, 0
      %v440 = vsel %vm291, %v373, 0
      %v443 = vsel %vm291, %v374, 0
      %v446 = vsel %vm291, %v375, 0
      %v449 = vsel %vm291, %v376, 0
      %v452 = vsel %vm291, %v377, 0
      %v455 = vsel %vm291, %v378, 0
      %v458 = vsel %vm291, %v379, 0
      %v461 = vsel %vm291, %v380, 0
      %v464 = vsel %vm291, %v381, 0
      %v467 = vsel %vm291, %v382, 0
      %v470 = vsel %vm291, %v383, 0
      %v473 = vsel %vm291, %v384, 0
      %v476 = vsel %vm291, %v385, 0
      %v479 = vsel %vm291, %v386, 0
      %v482 = vsel %vm291, %v387, 0
      %v485 = vsel %vm291, %v388, 0
      %vm487 = vcmask 1043456
      %v489 = vsel %vm487, %v390, 0
      %491 = vmatprep.subr.mxu0 0.0
      %492 = vmatpush1.msra.mxu0 %v489
      %493 = vmatprep.subr.mxu0 0.0
      %494 = vmatpush1.msra.mxu0 0.0
      %495 = vmatprep.subr.mxu0 0.0
      %496 = vmatpush1.msra.mxu0 0.0
      %497 = vmatprep.subr.mxu0 0.0
      %498 = vmatpush1.msra.mxu0 0.0
      %499 = vmatprep.subr.mxu0 0.0
      %500 = vmatpush1.msra.mxu0 0.0
      %501 = vmatprep.subr.mxu0 0.0
      %502 = vmatpush1.msra.mxu0 0.0
      %503 = vmatprep.subr.mxu0 0.0
      %504 = vmatpush1.msra.mxu0 0.0
      %505 = vmatprep.subr.mxu0 0.0
      %506 = vmatpush1.msra.mxu0 0.0
      %507 = vmatprep.subr.mxu0 0.0
      %508 = vmatpush1.msra.mxu0 0.0
      %509 = vmatprep.subr.mxu0 0.0
      %510 = vmatpush1.msra.mxu0 0.0
      %511 = vmatprep.subr.mxu0 0.0
      %512 = vmatpush1.msra.mxu0 0.0
      %513 = vmatprep.subr.mxu0 0.0
      %514 = vmatpush1.msra.mxu0 0.0
      %515 = vmatprep.subr.mxu0 0.0
      %516 = vmatpush1.msra.mxu0 0.0
      %517 = vmatprep.subr.mxu0 0.0
      %518 = vmatpush1.msra.mxu0 0.0
      %519 = vmatprep.subr.mxu0 0.0
      %520 = vmatpush1.msra.mxu0 0.0
      %521 = vmatprep.subr.mxu0 0.0
      %522 = vmatpush1.msra.mxu0 0.0
      %523 = vmatprep.subr.mxu0 0.0
      %524 = vmatpush1.msra.mxu0 0.0
      %525 = vmatprep.subr.mxu0 0.0
      %526 = vmatpush1.msra.mxu0 0.0
      %527 = vmatprep.subr.mxu0 0.0
      %528 = vmatpush1.msra.mxu0 0.0
      %529 = vmatprep.subr.mxu0 0.0
      %530 = vmatpush1.msra.mxu0 0.0
      %531 = vmatprep.subr.mxu0 0.0
      %532 = vmatpush1.msra.mxu0 0.0
      %533 = vmatprep.subr.mxu0 0.0
      %534 = vmatpush1.msra.mxu0 0.0
      %535 = vmatprep.subr.mxu0 0.0
      %536 = vmatpush1.msra.mxu0 0.0
      %537 = vmatprep.subr.mxu0 0.0
      %538 = vmatpush1.msra.mxu0 0.0
      %539 = vmatprep.subr.mxu0 0.0
      %540 = vmatpush1.msra.mxu0 0.0
      %541 = vmatprep.subr.mxu0 0.0
      %542 = vmatpush1.msra.mxu0 0.0
      %543 = vmatprep.subr.mxu0 0.0
      %544 = vmatpush1.msra.mxu0 0.0
      %545 = vmatprep.subr.mxu0 0.0
      %546 = vmatpush1.msra.mxu0 0.0
      %547 = vmatprep.subr.mxu0 0.0
      %548 = vmatpush1.msra.mxu0 0.0
      %549 = vmatprep.subr.mxu0 0.0
      %550 = vmatpush1.msra.mxu0 0.0
      %551 = vmatprep.subr.mxu0 0.0
      %552 = vmatpush1.msra.mxu0 0.0
      %553 = vmatprep.subr.mxu0 0.0
      %554 = vmatpush1.msra.mxu0 0.0
      %555 = vmatprep.mubr.f32.mxu0 0.0
      %556 = vmatmul.mubr.f32.gmra.mrb[0].mxu0 %v392
      %v557 = vpop.f32.mrb[0].mxu0
      %v558 = vadd.f32 0.0, %v557
      %v559 = vpop.f32.mrb[0].mxu0
      %560 = vmatprep.mubr.f32.mxu0 0.0
      %561 = vmatmul.mubr.f32.gmra.mrb[0].mxu0 %v395
      %v562 = vpop.f32.mrb[0].mxu0
      %v563 = vadd.f32 0.0, %v562
      %v564 = vpop.f32.mrb[0].mxu0
      %565 = vmatprep.mubr.f32.mxu0 0.0
      %566 = vmatmul.mubr.f32.gmra.mrb[0].mxu0 %v398
      %v567 = vpop.f32.mrb[0].mxu0
      %v568 = vadd.f32 0.0, %v567
      %v569 = vpop.f32.mrb[0].mxu0
      %570 = vmatprep.mubr.f32.mxu0 0.0
      %571 = vmatmul.mubr.f32.gmra.mrb[0].mxu0 %v401
      %v572 = vpop.f32.mrb[0].mxu0
      %v573 = vadd.f32 0.0, %v572
      %v574 = vpop.f32.mrb[0].mxu0
      %575 = vmatprep.mubr.f32.mxu0 0.0
      %576 = vmatmul.mubr.f32.gmra.mrb[0].mxu0 %v404
      %v577 = vpop.f32.mrb[0].mxu0
      %v578 = vadd.f32 0.0, %v577
      %v579 = vpop.f32.mrb[0].mxu0
      %580 = vmatprep.mubr.f32.mxu0 0.0
      %581 = vmatmul.mubr.f32.gmra.mrb[0].mxu0 %v407
      %v582 = vpop.f32.mrb[0].mxu0
      %v583 = vadd.f32 0.0, %v582
      %v584 = vpop.f32.mrb[0].mxu0
      %585 = vmatprep.mubr.f32.mxu0 0.0
      %586 = vmatmul.mubr.f32.gmra.mrb[0].mxu0 %v410
      %v587 = vpop.f32.mrb[0].mxu0
      %v588 = vadd.f32 0.0, %v587
      %v589 = vpop.f32.mrb[0].mxu0
      %590 = vmatprep.mubr.f32.mxu0 0.0
      %591 = vmatmul.mubr.f32.gmra.mrb[0].mxu0 %v413
      %v592 = vpop.f32.mrb[0].mxu0
      %v593 = vadd.f32 0.0, %v592
      %v594 = vpop.f32.mrb[0].mxu0
      %595 = vmatprep.mubr.f32.mxu0 0.0
      %596 = vmatmul.mubr.f32.gmra.mrb[0].mxu0 %v416
      %v597 = vpop.f32.mrb[0].mxu0
      %v598 = vadd.f32 0.0, %v597
      %v599 = vpop.f32.mrb[0].mxu0
      %600 = vmatprep.mubr.f32.mxu0 0.0
      %601 = vmatmul.mubr.f32.gmra.mrb[0].mxu0 %v419
      %v602 = vpop.f32.mrb[0].mxu0
      %v603 = vadd.f32 0.0, %v602
      %v604 = vpop.f32.mrb[0].mxu0
      %605 = vmatprep.mubr.f32.mxu0 0.0
      %606 = vmatmul.mubr.f32.gmra.mrb[0].mxu0 %v422
      %v607 = vpop.f32.mrb[0].mxu0
      %v608 = vadd.f32 0.0, %v607
      %v609 = vpop.f32.mrb[0].mxu0
      %610 = vmatprep.mubr.f32.mxu0 0.0
      %611 = vmatmul.mubr.f32.gmra.mrb[0].mxu0 %v425
      %v612 = vpop.f32.mrb[0].mxu0
      %v613 = vadd.f32 0.0, %v612
      %v614 = vpop.f32.mrb[0].mxu0
      %615 = vmatprep.mubr.f32.mxu0 0.0
      %616 = vmatmul.mubr.f32.gmra.mrb[0].mxu0 %v428
      %v617 = vpop.f32.mrb[0].mxu0
      %v618 = vadd.f32 0.0, %v617
      %v619 = vpop.f32.mrb[0].mxu0
      %620 = vmatprep.mubr.f32.mxu0 0.0
      %621 = vmatmul.mubr.f32.gmra.mrb[0].mxu0 %v431
      %v622 = vpop.f32.mrb[0].mxu0
      %v623 = vadd.f32 0.0, %v622
      %v624 = vpop.f32.mrb[0].mxu0
      %625 = vmatprep.mubr.f32.mxu0 0.0
      %626 = vmatmul.mubr.f32.gmra.mrb[0].mxu0 %v434
      %v627 = vpop.f32.mrb[0].mxu0
      %v628 = vadd.f32 0.0, %v627
      %v629 = vpop.f32.mrb[0].mxu0
      %630 = vmatprep.mubr.f32.mxu0 0.0
      %631 = vmatmul.mubr.f32.gmra.mrb[0].mxu0 %v437
      %v632 = vpop.f32.mrb[0].mxu0
      %v633 = vadd.f32 0.0, %v632
      %v634 = vpop.f32.mrb[0].mxu0
      %635 = vmatprep.mubr.f32.mxu0 0.0
      %636 = vmatmul.mubr.f32.gmra.mrb[0].mxu0 %v440
      %v637 = vpop.f32.mrb[0].mxu0
      %v638 = vadd.f32 0.0, %v637
      %v639 = vpop.f32.mrb[0].mxu0
      %640 = vmatprep.mubr.f32.mxu0 0.0
      %641 = vmatmul.mubr.f32.gmra.mrb[0].mxu0 %v443
      %v642 = vpop.f32.mrb[0].mxu0
      %v643 = vadd.f32 0.0, %v642
      %v644 = vpop.f32.mrb[0].mxu0
      %645 = vmatprep.mubr.f32.mxu0 0.0
      %646 = vmatmul.mubr.f32.gmra.mrb[0].mxu0 %v446
      %v647 = vpop.f32.mrb[0].mxu0
      %v648 = vadd.f32 0.0, %v647
      %v649 = vpop.f32.mrb[0].mxu0
      %650 = vmatprep.mubr.f32.mxu0 0.0
      %651 = vmatmul.mubr.f32.gmra.mrb[0].mxu0 %v449
      %v652 = vpop.f32.mrb[0].mxu0
      %v653 = vadd.f32 0.0, %v652
      %v654 = vpop.f32.mrb[0].mxu0
      %655 = vmatprep.mubr.f32.mxu0 0.0
      %656 = vmatmul.mubr.f32.gmra.mrb[0].mxu0 %v452
      %v657 = vpop.f32.mrb[0].mxu0
      %v658 = vadd.f32 0.0, %v657
      %v659 = vpop.f32.mrb[0].mxu0
      %660 = vmatprep.mubr.f32.mxu0 0.0
      %661 = vmatmul.mubr.f32.gmra.mrb[0].mxu0 %v455
      %v662 = vpop.f32.mrb[0].mxu0
      %v663 = vadd.f32 0.0, %v662
      %v664 = vpop.f32.mrb[0].mxu0
      %665 = vmatprep.mubr.f32.mxu0 0.0
      %666 = vmatmul.mubr.f32.gmra.mrb[0].mxu0 %v458
      %v667 = vpop.f32.mrb[0].mxu0
      %v668 = vadd.f32 0.0, %v667
      %v669 = vpop.f32.mrb[0].mxu0
      %670 = vmatprep.mubr.f32.mxu0 0.0
      %671 = vmatmul.mubr.f32.gmra.mrb[0].mxu0 %v461
      %v672 = vpop.f32.mrb[0].mxu0
      %v673 = vadd.f32 0.0, %v672
      %v674 = vpop.f32.mrb[0].mxu0
      %675 = vmatprep.mubr.f32.mxu0 0.0
      %676 = vmatmul.mubr.f32.gmra.mrb[0].mxu0 %v464
      %v677 = vpop.f32.mrb[0].mxu0
      %v678 = vadd.f32 0.0, %v677
      %v679 = vpop.f32.mrb[0].mxu0
      %680 = vmatprep.mubr.f32.mxu0 0.0
      %681 = vmatmul.mubr.f32.gmra.mrb[0].mxu0 %v467
      %v682 = vpop.f32.mrb[0].mxu0
      %v683 = vadd.f32 0.0, %v682
      %v684 = vpop.f32.mrb[0].mxu0
      %685 = vmatprep.mubr.f32.mxu0 0.0
      %686 = vmatmul.mubr.f32.gmra.mrb[0].mxu0 %v470
      %v687 = vpop.f32.mrb[0].mxu0
      %v688 = vadd.f32 0.0, %v687
      %v689 = vpop.f32.mrb[0].mxu0
      %690 = vmatprep.mubr.f32.mxu0 0.0
      %691 = vmatmul.mubr.f32.gmra.mrb[0].mxu0 %v473
      %v692 = vpop.f32.mrb[0].mxu0
      %v693 = vadd.f32 0.0, %v692
      %v694 = vpop.f32.mrb[0].mxu0
      %695 = vmatprep.mubr.f32.mxu0 0.0
      %696 = vmatmul.mubr.f32.gmra.mrb[0].mxu0 %v476
      %v697 = vpop.f32.mrb[0].mxu0
      %v698 = vadd.f32 0.0, %v697
      %v699 = vpop.f32.mrb[0].mxu0
      %700 = vmatprep.mubr.f32.mxu0 0.0
      %701 = vmatmul.mubr.f32.gmra.mrb[0].mxu0 %v479
      %v702 = vpop.f32.mrb[0].mxu0
      %v703 = vadd.f32 0.0, %v702
      %v704 = vpop.f32.mrb[0].mxu0
      %705 = vmatprep.mubr.f32.mxu0 0.0
      %706 = vmatmul.mubr.f32.gmra.mrb[0].mxu0 %v482
      %v707 = vpop.f32.mrb[0].mxu0
      %v708 = vadd.f32 0.0, %v707
      %v709 = vpop.f32.mrb[0].mxu0
      %710 = vmatprep.mubr.f32.mxu0 0.0
      %711 = vmatmul.mubr.f32.gmra.mrb[0].mxu0 %v485
      %v712 = vpop.f32.mrb[0].mxu0
      %v713 = vadd.f32 0.0, %v712
      %v714 = vpop.f32.mrb[0].mxu0
      %715 = vdwg.mxu0
      %v717 = vsel %vm291, %v324, 0
      %v720 = vsel %vm291, %v325, 0
      %v723 = vsel %vm291, %v326, 0
      %v726 = vsel %vm291, %v327, 0
      %v729 = vsel %vm291, %v328, 0
      %v732 = vsel %vm291, %v329, 0
      %v735 = vsel %vm291, %v330, 0
      %v738 = vsel %vm291, %v331, 0
      %v741 = vsel %vm291, %v332, 0
      %v744 = vsel %vm291, %v333, 0
      %v747 = vsel %vm291, %v334, 0
      %v750 = vsel %vm291, %v335, 0
      %v753 = vsel %vm291, %v336, 0
      %v756 = vsel %vm291, %v337, 0
      %v759 = vsel %vm291, %v338, 0
      %v762 = vsel %vm291, %v339, 0
      %v765 = vsel %vm291, %v340, 0
      %v768 = vsel %vm291, %v341, 0
      %v771 = vsel %vm291, %v342, 0
      %v774 = vsel %vm291, %v343, 0
      %v777 = vsel %vm291, %v344, 0
      %v780 = vsel %vm291, %v345, 0
      %v783 = vsel %vm291, %v346, 0
      %v786 = vsel %vm291, %v347, 0
      %v789 = vsel %vm291, %v348, 0
      %v792 = vsel %vm291, %v349, 0
      %v795 = vsel %vm291, %v350, 0
      %v798 = vsel %vm291, %v351, 0
      %v801 = vsel %vm291, %v352, 0
      %v804 = vsel %vm291, %v353, 0
      %v807 = vsel %vm291, %v354, 0
      %v810 = vsel %vm291, %v355, 0
      %v813 = vsel %vm487, %v356, 0
      %815 = vmatprep.subr.mxu0 0.0
      %816 = vmatpush1.msra.mxu0 %v813
      %817 = vmatprep.subr.mxu0 0.0
      %818 = vmatpush1.msra.mxu0 0.0
      %819 = vmatprep.subr.mxu0 0.0
      %820 = vmatpush1.msra.mxu0 0.0
      %821 = vmatprep.subr.mxu0 0.0
      %822 = vmatpush1.msra.mxu0 0.0
      %823 = vmatprep.subr.mxu0 0.0
      %824 = vmatpush1.msra.mxu0 0.0
      %825 = vmatprep.subr.mxu0 0.0
      %826 = vmatpush1.msra.mxu0 0.0
      %827 = vmatprep.subr.mxu0 0.0
      %828 = vmatpush1.msra.mxu0 0.0
      %829 = vmatprep.subr.mxu0 0.0
      %830 = vmatpush1.msra.mxu0 0.0
      %831 = vmatprep.subr.mxu0 0.0
      %832 = vmatpush1.msra.mxu0 0.0
      %833 = vmatprep.subr.mxu0 0.0
      %834 = vmatpush1.msra.mxu0 0.0
      %835 = vmatprep.subr.mxu0 0.0
      %836 = vmatpush1.msra.mxu0 0.0
      %837 = vmatprep.subr.mxu0 0.0
      %838 = vmatpush1.msra.mxu0 0.0
      %839 = vmatprep.subr.mxu0 0.0
      %840 = vmatpush1.msra.mxu0 0.0
      %841 = vmatprep.subr.mxu0 0.0
      %842 = vmatpush1.msra.mxu0 0.0
      %843 = vmatprep.subr.mxu0 0.0
      %844 = vmatpush1.msra.mxu0 0.0
      %845 = vmatprep.subr.mxu0 0.0
      %846 = vmatpush1.msra.mxu0 0.0
      %847 = vmatprep.subr.mxu0 0.0
      %848 = vmatpush1.msra.mxu0 0.0
      %849 = vmatprep.subr.mxu0 0.0
      %850 = vmatpush1.msra.mxu0 0.0
      %851 = vmatprep.subr.mxu0 0.0
      %852 = vmatpush1.msra.mxu0 0.0
      %853 = vmatprep.subr.mxu0 0.0
      %854 = vmatpush1.msra.mxu0 0.0
      %855 = vmatprep.subr.mxu0 0.0
      %856 = vmatpush1.msra.mxu0 0.0
      %857 = vmatprep.subr.mxu0 0.0
      %858 = vmatpush1.msra.mxu0 0.0
      %859 = vmatprep.subr.mxu0 0.0
      %860 = vmatpush1.msra.mxu0 0.0
      %861 = vmatprep.subr.mxu0 0.0
      %862 = vmatpush1.msra.mxu0 0.0
      %863 = vmatprep.subr.mxu0 0.0
      %864 = vmatpush1.msra.mxu0 0.0
      %865 = vmatprep.subr.mxu0 0.0
      %866 = vmatpush1.msra.mxu0 0.0
      %867 = vmatprep.subr.mxu0 0.0
      %868 = vmatpush1.msra.mxu0 0.0
      %869 = vmatprep.subr.mxu0 0.0
      %870 = vmatpush1.msra.mxu0 0.0
      %871 = vmatprep.subr.mxu0 0.0
      %872 = vmatpush1.msra.mxu0 0.0
      %873 = vmatprep.subr.mxu0 0.0
      %874 = vmatpush1.msra.mxu0 0.0
      %875 = vmatprep.subr.mxu0 0.0
      %876 = vmatpush1.msra.mxu0 0.0
      %877 = vmatprep.subr.mxu0 0.0
      %878 = vmatpush1.msra.mxu0 0.0
      %879 = vmatprep.mubr.f32.mxu0 0.0
      %880 = vmatmul.mubr.f32.gmra.mrb[0].mxu0 %v717
      %v881 = vpop.f32.mrb[0].mxu0
      %v882 = vadd.f32 %v558, %v881
      %v883 = vpop.f32.mrb[0].mxu0
      %884 = vmatprep.mubr.f32.mxu0 0.0
      %885 = vmatmul.mubr.f32.gmra.mrb[0].mxu0 %v720
      %v886 = vpop.f32.mrb[0].mxu0
      %v887 = vadd.f32 %v563, %v886
      %v888 = vpop.f32.mrb[0].mxu0
      %889 = vmatprep.mubr.f32.mxu0 0.0
      %890 = vmatmul.mubr.f32.gmra.mrb[0].mxu0 %v723
      %v891 = vpop.f32.mrb[0].mxu0
      %v892 = vadd.f32 %v568, %v891
      %v893 = vpop.f32.mrb[0].mxu0
      %894 = vmatprep.mubr.f32.mxu0 0.0
      %895 = vmatmul.mubr.f32.gmra.mrb[0].mxu0 %v726
      %v896 = vpop.f32.mrb[0].mxu0
      %v897 = vadd.f32 %v573, %v896
      %v898 = vpop.f32.mrb[0].mxu0
      %899 = vmatprep.mubr.f32.mxu0 0.0
      %900 = vmatmul.mubr.f32.gmra.mrb[0].mxu0 %v729
      %v901 = vpop.f32.mrb[0].mxu0
      %v902 = vadd.f32 %v578, %v901
      %v903 = vpop.f32.mrb[0].mxu0
      %904 = vmatprep.mubr.f32.mxu0 0.0
      %905 = vmatmul.mubr.f32.gmra.mrb[0].mxu0 %v732
      %v906 = vpop.f32.mrb[0].mxu0
      %v907 = vadd.f32 %v583, %v906
      %v908 = vpop.f32.mrb[0].mxu0
      %909 = vmatprep.mubr.f32.mxu0 0.0
      %910 = vmatmul.mubr.f32.gmra.mrb[0].mxu0 %v735
      %v911 = vpop.f32.mrb[0].mxu0
      %v912 = vadd.f32 %v588, %v911
      %v913 = vpop.f32.mrb[0].mxu0
      %914 = vmatprep.mubr.f32.mxu0 0.0
      %915 = vmatmul.mubr.f32.gmra.mrb[0].mxu0 %v738
      %v916 = vpop.f32.mrb[0].mxu0
      %v917 = vadd.f32 %v593, %v916
      %v918 = vpop.f32.mrb[0].mxu0
      %919 = vmatprep.mubr.f32.mxu0 0.0
      %920 = vmatmul.mubr.f32.gmra.mrb[0].mxu0 %v741
      %v921 = vpop.f32.mrb[0].mxu0
      %v922 = vadd.f32 %v598, %v921
      %v923 = vpop.f32.mrb[0].mxu0
      %924 = vmatprep.mubr.f32.mxu0 0.0
      %925 = vmatmul.mubr.f32.gmra.mrb[0].mxu0 %v744
      %v926 = vpop.f32.mrb[0].mxu0
      %v927 = vadd.f32 %v603, %v926
      %v928 = vpop.f32.mrb[0].mxu0
      %929 = vmatprep.mubr.f32.mxu0 0.0
      %930 = vmatmul.mubr.f32.gmra.mrb[0].mxu0 %v747
      %v931 = vpop.f32.mrb[0].mxu0
      %v932 = vadd.f32 %v608, %v931
      %v933 = vpop.f32.mrb[0].mxu0
      %934 = vmatprep.mubr.f32.mxu0 0.0
      %935 = vmatmul.mubr.f32.gmra.mrb[0].mxu0 %v750
      %v936 = vpop.f32.mrb[0].mxu0
      %v937 = vadd.f32 %v613, %v936
      %v938 = vpop.f32.mrb[0].mxu0
      %939 = vmatprep.mubr.f32.mxu0 0.0
      %940 = vmatmul.mubr.f32.gmra.mrb[0].mxu0 %v753
      %v941 = vpop.f32.mrb[0].mxu0
      %v942 = vadd.f32 %v618, %v941
      %v943 = vpop.f32.mrb[0].mxu0
      %944 = vmatprep.mubr.f32.mxu0 0.0
      %945 = vmatmul.mubr.f32.gmra.mrb[0].mxu0 %v756
      %v946 = vpop.f32.mrb[0].mxu0
      %v947 = vadd.f32 %v623, %v946
      %v948 = vpop.f32.mrb[0].mxu0
      %949 = vmatprep.mubr.f32.mxu0 0.0
      %950 = vmatmul.mubr.f32.gmra.mrb[0].mxu0 %v759
      %v951 = vpop.f32.mrb[0].mxu0
      %v952 = vadd.f32 %v628, %v951
      %v953 = vpop.f32.mrb[0].mxu0
      %954 = vmatprep.mubr.f32.mxu0 0.0
      %955 = vmatmul.mubr.f32.gmra.mrb[0].mxu0 %v762
      %v956 = vpop.f32.mrb[0].mxu0
      %v957 = vadd.f32 %v633, %v956
      %v958 = vpop.f32.mrb[0].mxu0
      %959 = vmatprep.mubr.f32.mxu0 0.0
      %960 = vmatmul.mubr.f32.gmra.mrb[0].mxu0 %v765
      %v961 = vpop.f32.mrb[0].mxu0
      %v962 = vadd.f32 %v638, %v961
      %v963 = vpop.f32.mrb[0].mxu0
      %964 = vmatprep.mubr.f32.mxu0 0.0
      %965 = vmatmul.mubr.f32.gmra.mrb[0].mxu0 %v768
      %v966 = vpop.f32.mrb[0].mxu0
      %v967 = vadd.f32 %v643, %v966
      %v968 = vpop.f32.mrb[0].mxu0
      %969 = vmatprep.mubr.f32.mxu0 0.0
      %970 = vmatmul.mubr.f32.gmra.mrb[0].mxu0 %v771
      %v971 = vpop.f32.mrb[0].mxu0
      %v972 = vadd.f32 %v648, %v971
      %v973 = vpop.f32.mrb[0].mxu0
      %974 = vmatprep.mubr.f32.mxu0 0.0
      %975 = vmatmul.mubr.f32.gmra.mrb[0].mxu0 %v774
      %v976 = vpop.f32.mrb[0].mxu0
      %v977 = vadd.f32 %v653, %v976
      %v978 = vpop.f32.mrb[0].mxu0
      %979 = vmatprep.mubr.f32.mxu0 0.0
      %980 = vmatmul.mubr.f32.gmra.mrb[0].mxu0 %v777
      %v981 = vpop.f32.mrb[0].mxu0
      %v982 = vadd.f32 %v658, %v981
      %v983 = vpop.f32.mrb[0].mxu0
      %984 = vmatprep.mubr.f32.mxu0 0.0
      %985 = vmatmul.mubr.f32.gmra.mrb[0].mxu0 %v780
      %v986 = vpop.f32.mrb[0].mxu0
      %v987 = vadd.f32 %v663, %v986
      %v988 = vpop.f32.mrb[0].mxu0
      %989 = vmatprep.mubr.f32.mxu0 0.0
      %990 = vmatmul.mubr.f32.gmra.mrb[0].mxu0 %v783
      %v991 = vpop.f32.mrb[0].mxu0
      %v992 = vadd.f32 %v668, %v991
      %v993 = vpop.f32.mrb[0].mxu0
      %994 = vmatprep.mubr.f32.mxu0 0.0
      %995 = vmatmul.mubr.f32.gmra.mrb[0].mxu0 %v786
      %v996 = vpop.f32.mrb[0].mxu0
      %v997 = vadd.f32 %v673, %v996
      %v998 = vpop.f32.mrb[0].mxu0
      %999 = vmatprep.mubr.f32.mxu0 0.0
      %1000 = vmatmul.mubr.f32.gmra.mrb[0].mxu0 %v789
      %v1001 = vpop.f32.mrb[0].mxu0
      %v1002 = vadd.f32 %v678, %v1001
      %v1003 = vpop.f32.mrb[0].mxu0
      %1004 = vmatprep.mubr.f32.mxu0 0.0
      %1005 = vmatmul.mubr.f32.gmra.mrb[0].mxu0 %v792
      %v1006 = vpop.f32.mrb[0].mxu0
      %v1007 = vadd.f32 %v683, %v1006
      %v1008 = vpop.f32.mrb[0].mxu0
      %1009 = vmatprep.mubr.f32.mxu0 0.0
      %1010 = vmatmul.mubr.f32.gmra.mrb[0].mxu0 %v795
      %v1011 = vpop.f32.mrb[0].mxu0
      %v1012 = vadd.f32 %v688, %v1011
      %v1013 = vpop.f32.mrb[0].mxu0
      %1014 = vmatprep.mubr.f32.mxu0 0.0
      %1015 = vmatmul.mubr.f32.gmra.mrb[0].mxu0 %v798
      %v1016 = vpop.f32.mrb[0].mxu0
      %v1017 = vadd.f32 %v693, %v1016
      %v1018 = vpop.f32.mrb[0].mxu0
      %1019 = vmatprep.mubr.f32.mxu0 0.0
      %1020 = vmatmul.mubr.f32.gmra.mrb[0].mxu0 %v801
      %v1021 = vpop.f32.mrb[0].mxu0
      %v1022 = vadd.f32 %v698, %v1021
      %v1023 = vpop.f32.mrb[0].mxu0
      %1024 = vmatprep.mubr.f32.mxu0 0.0
      %1025 = vmatmul.mubr.f32.gmra.mrb[0].mxu0 %v804
      %v1026 = vpop.f32.mrb[0].mxu0
      %v1027 = vadd.f32 %v703, %v1026
      %v1028 = vpop.f32.mrb[0].mxu0
      %1029 = vmatprep.mubr.f32.mxu0 0.0
      %1030 = vmatmul.mubr.f32.gmra.mrb[0].mxu0 %v807
      %v1031 = vpop.f32.mrb[0].mxu0
      %v1032 = vadd.f32 %v708, %v1031
      %v1033 = vpop.f32.mrb[0].mxu0
      %1034 = vmatprep.mubr.f32.mxu0 0.0
      %1035 = vmatmul.mubr.f32.gmra.mrb[0].mxu0 %v810
      %v1036 = vpop.f32.mrb[0].mxu0
      %v1037 = vadd.f32 %v713, %v1036
      %v1038 = vpop.f32.mrb[0].mxu0
      %1039 = vdwg.mxu0
      %v1040 = vld [vmem:[#allocation2 + $0x2] sm:$0xff]
      %v1041 = vld [vmem:[#allocation2 + $0xa] sm:$0xff]
      %v1042 = vld [vmem:[#allocation2 + $0x1a] sm:$0xff]
      %v1043 = vld [vmem:[#allocation2 + $0x22] sm:$0xff]
      %v1044 = vld [vmem:[#allocation2 + $0x32] sm:$0xff]
      %v1045 = vld [vmem:[#allocation2 + $0x3a] sm:$0xff]
      %v1046 = vld [vmem:[#allocation2 + $0x4a] sm:$0xff]
      %v1047 = vld [vmem:[#allocation2 + $0x52] sm:$0xff]
      %v1048 = vld [vmem:[#allocation2 + $0x62] sm:$0xff]
      %v1049 = vld [vmem:[#allocation2 + $0x6a] sm:$0xff]
      %v1050 = vld [vmem:[#allocation2 + $0x7a] sm:$0xff]
      %v1051 = vld [vmem:[#allocation2 + $0x82] sm:$0xff]
      %v1052 = vld [vmem:[#allocation2 + $0x92] sm:$0xff]
      %v1053 = vld [vmem:[#allocation2 + $0x9a] sm:$0xff]
      %v1054 = vld [vmem:[#allocation2 + $0xaa] sm:$0xff]
      %v1055 = vld [vmem:[#allocation2 + $0xb2] sm:$0xff]
      %v1056 = vld [vmem:[#allocation2 + $0xc2] sm:$0xff]
      %v1057 = vld [vmem:[#allocation2 + $0xca] sm:$0xff]
      %v1058 = vld [vmem:[#allocation2 + $0xda] sm:$0xff]
      %v1059 = vld [vmem:[#allocation2 + $0xe2] sm:$0xff]
      %v1060 = vld [vmem:[#allocation2 + $0xf2] sm:$0xff]
      %v1061 = vld [vmem:[#allocation2 + $0xfa] sm:$0xff]
      %v1062 = vld [vmem:[#allocation2 + $0x10a] sm:$0xff]
      %v1063 = vld [vmem:[#allocation2 + $0x112] sm:$0xff]
      %v1064 = vld [vmem:[#allocation2 + $0x122] sm:$0xff]
      %v1065 = vld [vmem:[#allocation2 + $0x12a] sm:$0xff]
      %v1066 = vld [vmem:[#allocation2 + $0x13a] sm:$0xff]
      %v1067 = vld [vmem:[#allocation2 + $0x142] sm:$0xff]
      %v1068 = vld [vmem:[#allocation2 + $0x152] sm:$0xff]
      %v1069 = vld [vmem:[#allocation2 + $0x15a] sm:$0xff]
      %v1070 = vld [vmem:[#allocation2 + $0x16a] sm:$0xff]
      %v1071 = vld [vmem:[#allocation2 + $0x172] sm:$0xff]
      %s1072 = scalar_lea.vmem %s1, 8
      %v1073 = vld [vmem:[%s1072] sm:$0xf]
      %v1075 = vsel %vm291, %v1040, 0
      %v1078 = vsel %vm291, %v1041, 0
      %v1081 = vsel %vm291, %v1042, 0
      %v1084 = vsel %vm291, %v1043, 0
      %v1087 = vsel %vm291, %v1044, 0
      %v1090 = vsel %vm291, %v1045, 0
      %v1093 = vsel %vm291, %v1046, 0
      %v1096 = vsel %vm291, %v1047, 0
      %v1099 = vsel %vm291, %v1048, 0
      %v1102 = vsel %vm291, %v1049, 0
      %v1105 = vsel %vm291, %v1050, 0
      %v1108 = vsel %vm291, %v1051, 0
      %v1111 = vsel %vm291, %v1052, 0
      %v1114 = vsel %vm291, %v1053, 0
      %v1117 = vsel %vm291, %v1054, 0
      %v1120 = vsel %vm291, %v1055, 0
      %v1123 = vsel %vm291, %v1056, 0
      %v1126 = vsel %vm291, %v1057, 0
      %v1129 = vsel %vm291, %v1058, 0
      %v1132 = vsel %vm291, %v1059, 0
      %v1135 = vsel %vm291, %v1060, 0
      %v1138 = vsel %vm291, %v1061, 0
      %v1141 = vsel %vm291, %v1062, 0
      %v1144 = vsel %vm291, %v1063, 0
      %v1147 = vsel %vm291, %v1064, 0
      %v1150 = vsel %vm291, %v1065, 0
      %v1153 = vsel %vm291, %v1066, 0
      %v1156 = vsel %vm291, %v1067, 0
      %v1159 = vsel %vm291, %v1068, 0
      %v1162 = vsel %vm291, %v1069, 0
      %v1165 = vsel %vm291, %v1070, 0
      %v1168 = vsel %vm291, %v1071, 0
      %v1171 = vsel %vm487, %v1073, 0
      %1173 = vmatprep.subr.mxu0 0.0
      %1174 = vmatpush1.msra.mxu0 %v1171
      %1175 = vmatprep.subr.mxu0 0.0
      %1176 = vmatpush1.msra.mxu0 0.0
      %1177 = vmatprep.subr.mxu0 0.0
      %1178 = vmatpush1.msra.mxu0 0.0
      %1179 = vmatprep.subr.mxu0 0.0
      %1180 = vmatpush1.msra.mxu0 0.0
      %1181 = vmatprep.subr.mxu0 0.0
      %1182 = vmatpush1.msra.mxu0 0.0
      %1183 = vmatprep.subr.mxu0 0.0
      %1184 = vmatpush1.msra.mxu0 0.0
      %1185 = vmatprep.subr.mxu0 0.0
      %1186 = vmatpush1.msra.mxu0 0.0
      %1187 = vmatprep.subr.mxu0 0.0
      %1188 = vmatpush1.msra.mxu0 0.0
      %1189 = vmatprep.subr.mxu0 0.0
      %1190 = vmatpush1.msra.mxu0 0.0
      %1191 = vmatprep.subr.mxu0 0.0
      %1192 = vmatpush1.msra.mxu0 0.0
      %1193 = vmatprep.subr.mxu0 0.0
      %1194 = vmatpush1.msra.mxu0 0.0
      %1195 = vmatprep.subr.mxu0 0.0
      %1196 = vmatpush1.msra.mxu0 0.0
      %1197 = vmatprep.subr.mxu0 0.0
      %1198 = vmatpush1.msra.mxu0 0.0
      %1199 = vmatprep.subr.mxu0 0.0
      %1200 = vmatpush1.msra.mxu0 0.0
      %1201 = vmatprep.subr.mxu0 0.0
      %1202 = vmatpush1.msra.mxu0 0.0
      %1203 = vmatprep.subr.mxu0 0.0
      %1204 = vmatpush1.msra.mxu0 0.0
      %1205 = vmatprep.subr.mxu0 0.0
      %1206 = vmatpush1.msra.mxu0 0.0
      %1207 = vmatprep.subr.mxu0 0.0
      %1208 = vmatpush1.msra.mxu0 0.0
      %1209 = vmatprep.subr.mxu0 0.0
      %1210 = vmatpush1.msra.mxu0 0.0
      %1211 = vmatprep.subr.mxu0 0.0
      %1212 = vmatpush1.msra.mxu0 0.0
      %1213 = vmatprep.subr.mxu0 0.0
      %1214 = vmatpush1.msra.mxu0 0.0
      %1215 = vmatprep.subr.mxu0 0.0
      %1216 = vmatpush1.msra.mxu0 0.0
      %1217 = vmatprep.subr.mxu0 0.0
      %1218 = vmatpush1.msra.mxu0 0.0
      %1219 = vmatprep.subr.mxu0 0.0
      %1220 = vmatpush1.msra.mxu0 0.0
      %1221 = vmatprep.subr.mxu0 0.0
      %1222 = vmatpush1.msra.mxu0 0.0
      %1223 = vmatprep.subr.mxu0 0.0
      %1224 = vmatpush1.msra.mxu0 0.0
      %1225 = vmatprep.subr.mxu0 0.0
      %1226 = vmatpush1.msra.mxu0 0.0
      %1227 = vmatprep.subr.mxu0 0.0
      %1228 = vmatpush1.msra.mxu0 0.0
      %1229 = vmatprep.subr.mxu0 0.0
      %1230 = vmatpush1.msra.mxu0 0.0
      %1231 = vmatprep.subr.mxu0 0.0
      %1232 = vmatpush1.msra.mxu0 0.0
      %1233 = vmatprep.subr.mxu0 0.0
      %1234 = vmatpush1.msra.mxu0 0.0
      %1235 = vmatprep.subr.mxu0 0.0
      %1236 = vmatpush1.msra.mxu0 0.0
      %1237 = vmatprep.mubr.f32.mxu0 0.0
      %1238 = vmatmul.mubr.f32.gmra.mrb[0].mxu0 %v1075
      %v1239 = vpop.f32.mrb[0].mxu0
      %v1240 = vadd.f32 0.0, %v1239
      %v1241 = vpop.f32.mrb[0].mxu0
      %1242 = vmatprep.mubr.f32.mxu0 0.0
      %1243 = vmatmul.mubr.f32.gmra.mrb[0].mxu0 %v1078
      %v1244 = vpop.f32.mrb[0].mxu0
      %v1245 = vadd.f32 0.0, %v1244
      %v1246 = vpop.f32.mrb[0].mxu0
      %1247 = vmatprep.mubr.f32.mxu0 0.0
      %1248 = vmatmul.mubr.f32.gmra.mrb[0].mxu0 %v1081
      %v1249 = vpop.f32.mrb[0].mxu0
      %v1250 = vadd.f32 0.0, %v1249
      %v1251 = vpop.f32.mrb[0].mxu0
      %1252 = vmatprep.mubr.f32.mxu0 0.0
      %1253 = vmatmul.mubr.f32.gmra.mrb[0].mxu0 %v1084
      %v1254 = vpop.f32.mrb[0].mxu0
      %v1255 = vadd.f32 0.0, %v1254
      %v1256 = vpop.f32.mrb[0].mxu0
      %1257 = vmatprep.mubr.f32.mxu0 0.0
      %1258 = vmatmul.mubr.f32.gmra.mrb[0].mxu0 %v1087
      %v1259 = vpop.f32.mrb[0].mxu0
      %v1260 = vadd.f32 0.0, %v1259
      %v1261 = vpop.f32.mrb[0].mxu0
      %1262 = vmatprep.mubr.f32.mxu0 0.0
      %1263 = vmatmul.mubr.f32.gmra.mrb[0].mxu0 %v1090
      %v1264 = vpop.f32.mrb[0].mxu0
      %v1265 = vadd.f32 0.0, %v1264
      %v1266 = vpop.f32.mrb[0].mxu0
      %1267 = vmatprep.mubr.f32.mxu0 0.0
      %1268 = vmatmul.mubr.f32.gmra.mrb[0].mxu0 %v1093
      %v1269 = vpop.f32.mrb[0].mxu0
      %v1270 = vadd.f32 0.0, %v1269
      %v1271 = vpop.f32.mrb[0].mxu0
      %1272 = vmatprep.mubr.f32.mxu0 0.0
      %1273 = vmatmul.mubr.f32.gmra.mrb[0].mxu0 %v1096
      %v1274 = vpop.f32.mrb[0].mxu0
      %v1275 = vadd.f32 0.0, %v1274
      %v1276 = vpop.f32.mrb[0].mxu0
      %1277 = vmatprep.mubr.f32.mxu0 0.0
      %1278 = vmatmul.mubr.f32.gmra.mrb[0].mxu0 %v1099
      %v1279 = vpop.f32.mrb[0].mxu0
      %v1280 = vadd.f32 0.0, %v1279
      %v1281 = vpop.f32.mrb[0].mxu0
      %1282 = vmatprep.mubr.f32.mxu0 0.0
      %1283 = vmatmul.mubr.f32.gmra.mrb[0].mxu0 %v1102
      %v1284 = vpop.f32.mrb[0].mxu0
      %v1285 = vadd.f32 0.0, %v1284
      %v1286 = vpop.f32.mrb[0].mxu0
      %1287 = vmatprep.mubr.f32.mxu0 0.0
      %1288 = vmatmul.mubr.f32.gmra.mrb[0].mxu0 %v1105
      %v1289 = vpop.f32.mrb[0].mxu0
      %v1290 = vadd.f32 0.0, %v1289
      %v1291 = vpop.f32.mrb[0].mxu0
      %1292 = vmatprep.mubr.f32.mxu0 0.0
      %1293 = vmatmul.mubr.f32.gmra.mrb[0].mxu0 %v1108
      %v1294 = vpop.f32.mrb[0].mxu0
      %v1295 = vadd.f32 0.0, %v1294
      %v1296 = vpop.f32.mrb[0].mxu0
      %1297 = vmatprep.mubr.f32.mxu0 0.0
      %1298 = vmatmul.mubr.f32.gmra.mrb[0].mxu0 %v1111
      %v1299 = vpop.f32.mrb[0].mxu0
      %v1300 = vadd.f32 0.0, %v1299
      %v1301 = vpop.f32.mrb[0].mxu0
      %1302 = vmatprep.mubr.f32.mxu0 0.0
      %1303 = vmatmul.mubr.f32.gmra.mrb[0].mxu0 %v1114
      %v1304 = vpop.f32.mrb[0].mxu0
      %v1305 = vadd.f32 0.0, %v1304
      %v1306 = vpop.f32.mrb[0].mxu0
      %1307 = vmatprep.mubr.f32.mxu0 0.0
      %1308 = vmatmul.mubr.f32.gmra.mrb[0].mxu0 %v1117
      %v1309 = vpop.f32.mrb[0].mxu0
      %v1310 = vadd.f32 0.0, %v1309
      %v1311 = vpop.f32.mrb[0].mxu0
      %1312 = vmatprep.mubr.f32.mxu0 0.0
      %1313 = vmatmul.mubr.f32.gmra.mrb[0].mxu0 %v1120
      %v1314 = vpop.f32.mrb[0].mxu0
      %v1315 = vadd.f32 0.0, %v1314
      %v1316 = vpop.f32.mrb[0].mxu0
      %1317 = vmatprep.mubr.f32.mxu0 0.0
      %1318 = vmatmul.mubr.f32.gmra.mrb[0].mxu0 %v1123
      %v1319 = vpop.f32.mrb[0].mxu0
      %v1320 = vadd.f32 0.0, %v1319
      %v1321 = vpop.f32.mrb[0].mxu0
      %1322 = vmatprep.mubr.f32.mxu0 0.0
      %1323 = vmatmul.mubr.f32.gmra.mrb[0].mxu0 %v1126
      %v1324 = vpop.f32.mrb[0].mxu0
      %v1325 = vadd.f32 0.0, %v1324
      %v1326 = vpop.f32.mrb[0].mxu0
      %1327 = vmatprep.mubr.f32.mxu0 0.0
      %1328 = vmatmul.mubr.f32.gmra.mrb[0].mxu0 %v1129
      %v1329 = vpop.f32.mrb[0].mxu0
      %v1330 = vadd.f32 0.0, %v1329
      %v1331 = vpop.f32.mrb[0].mxu0
      %1332 = vmatprep.mubr.f32.mxu0 0.0
      %1333 = vmatmul.mubr.f32.gmra.mrb[0].mxu0 %v1132
      %v1334 = vpop.f32.mrb[0].mxu0
      %v1335 = vadd.f32 0.0, %v1334
      %v1336 = vpop.f32.mrb[0].mxu0
      %1337 = vmatprep.mubr.f32.mxu0 0.0
      %1338 = vmatmul.mubr.f32.gmra.mrb[0].mxu0 %v1135
      %v1339 = vpop.f32.mrb[0].mxu0
      %v1340 = vadd.f32 0.0, %v1339
      %v1341 = vpop.f32.mrb[0].mxu0
      %1342 = vmatprep.mubr.f32.mxu0 0.0
      %1343 = vmatmul.mubr.f32.gmra.mrb[0].mxu0 %v1138
      %v1344 = vpop.f32.mrb[0].mxu0
      %v1345 = vadd.f32 0.0, %v1344
      %v1346 = vpop.f32.mrb[0].mxu0
      %1347 = vmatprep.mubr.f32.mxu0 0.0
      %1348 = vmatmul.mubr.f32.gmra.mrb[0].mxu0 %v1141
      %v1349 = vpop.f32.mrb[0].mxu0
      %v1350 = vadd.f32 0.0, %v1349
      %v1351 = vpop.f32.mrb[0].mxu0
      %1352 = vmatprep.mubr.f32.mxu0 0.0
      %1353 = vmatmul.mubr.f32.gmra.mrb[0].mxu0 %v1144
      %v1354 = vpop.f32.mrb[0].mxu0
      %v1355 = vadd.f32 0.0, %v1354
      %v1356 = vpop.f32.mrb[0].mxu0
      %1357 = vmatprep.mubr.f32.mxu0 0.0
      %1358 = vmatmul.mubr.f32.gmra.mrb[0].mxu0 %v1147
      %v1359 = vpop.f32.mrb[0].mxu0
      %v1360 = vadd.f32 0.0, %v1359
      %v1361 = vpop.f32.mrb[0].mxu0
      %1362 = vmatprep.mubr.f32.mxu0 0.0
      %1363 = vmatmul.mubr.f32.gmra.mrb[0].mxu0 %v1150
      %v1364 = vpop.f32.mrb[0].mxu0
      %v1365 = vadd.f32 0.0, %v1364
      %v1366 = vpop.f32.mrb[0].mxu0
      %1367 = vmatprep.mubr.f32.mxu0 0.0
      %1368 = vmatmul.mubr.f32.gmra.mrb[0].mxu0 %v1153
      %v1369 = vpop.f32.mrb[0].mxu0
      %v1370 = vadd.f32 0.0, %v1369
      %v1371 = vpop.f32.mrb[0].mxu0
      %1372 = vmatprep.mubr.f32.mxu0 0.0
      %1373 = vmatmul.mubr.f32.gmra.mrb[0].mxu0 %v1156
      %v1374 = vpop.f32.mrb[0].mxu0
      %v1375 = vadd.f32 0.0, %v1374
      %v1376 = vpop.f32.mrb[0].mxu0
      %1377 = vmatprep.mubr.f32.mxu0 0.0
      %1378 = vmatmul.mubr.f32.gmra.mrb[0].mxu0 %v1159
      %v1379 = vpop.f32.mrb[0].mxu0
      %v1380 = vadd.f32 0.0, %v1379
      %v1381 = vpop.f32.mrb[0].mxu0
      %1382 = vmatprep.mubr.f32.mxu0 0.0
      %1383 = vmatmul.mubr.f32.gmra.mrb[0].mxu0 %v1162
      %v1384 = vpop.f32.mrb[0].mxu0
      %v1385 = vadd.f32 0.0, %v1384
      %v1386 = vpop.f32.mrb[0].mxu0
      %1387 = vmatprep.mubr.f32.mxu0 0.0
      %1388 = vmatmul.mubr.f32.gmra.mrb[0].mxu0 %v1165
      %v1389 = vpop.f32.mrb[0].mxu0
      %v1390 = vadd.f32 0.0, %v1389
      %v1391 = vpop.f32.mrb[0].mxu0
      %1392 = vmatprep.mubr.f32.mxu0 0.0
      %1393 = vmatmul.mubr.f32.gmra.mrb[0].mxu0 %v1168
      %v1394 = vpop.f32.mrb[0].mxu0
      %v1395 = vadd.f32 0.0, %v1394
      %v1396 = vpop.f32.mrb[0].mxu0
      %1397 = vdwg.mxu0
      %v1398 = vadd.f32 %v882, %v1240
      %v1399 = vadd.f32 %v887, %v1245
      %v1400 = vadd.f32 %v892, %v1250
      %v1401 = vadd.f32 %v897, %v1255
      %v1402 = vadd.f32 %v902, %v1260
      %v1403 = vadd.f32 %v907, %v1265
      %v1404 = vadd.f32 %v912, %v1270
      %v1405 = vadd.f32 %v917, %v1275
      %v1406 = vadd.f32 %v922, %v1280
      %v1407 = vadd.f32 %v927, %v1285
      %v1408 = vadd.f32 %v932, %v1290
      %v1409 = vadd.f32 %v937, %v1295
      %v1410 = vadd.f32 %v942, %v1300
      %v1411 = vadd.f32 %v947, %v1305
      %v1412 = vadd.f32 %v952, %v1310
      %v1413 = vadd.f32 %v957, %v1315
      %v1414 = vadd.f32 %v962, %v1320
      %v1415 = vadd.f32 %v967, %v1325
      %v1416 = vadd.f32 %v972, %v1330
      %v1417 = vadd.f32 %v977, %v1335
      %v1418 = vadd.f32 %v982, %v1340
      %v1419 = vadd.f32 %v987, %v1345
      %v1420 = vadd.f32 %v992, %v1350
      %v1421 = vadd.f32 %v997, %v1355
      %v1422 = vadd.f32 %v1002, %v1360
      %v1423 = vadd.f32 %v1007, %v1365
      %v1424 = vadd.f32 %v1012, %v1370
      %v1425 = vadd.f32 %v1017, %v1375
      %v1426 = vadd.f32 %v1022, %v1380
      %v1427 = vadd.f32 %v1027, %v1385
      %v1428 = vadd.f32 %v1032, %v1390
      %v1429 = vadd.f32 %v1037, %v1395
      %v1430 = vld [vmem:[%s290] sm:$0xff]
      %v1431 = vld [vmem:[%s290 + $0x8] sm:$0xff]
      %v1432 = vld [vmem:[%s290 + $0x18] sm:$0xff]
      %v1433 = vld [vmem:[%s290 + $0x20] sm:$0xff]
      %v1434 = vld [vmem:[%s290 + $0x30] sm:$0xff]
      %v1435 = vld [vmem:[%s290 + $0x38] sm:$0xff]
      %v1436 = vld [vmem:[%s290 + $0x48] sm:$0xff]
      %v1437 = vld [vmem:[%s290 + $0x50] sm:$0xff]
      %v1438 = vld [vmem:[%s290 + $0x60] sm:$0xff]
      %v1439 = vld [vmem:[%s290 + $0x68] sm:$0xff]
      %v1440 = vld [vmem:[%s290 + $0x78] sm:$0xff]
      %v1441 = vld [vmem:[%s290 + $0x80] sm:$0xff]
      %v1442 = vld [vmem:[%s290 + $0x90] sm:$0xff]
      %v1443 = vld [vmem:[%s290 + $0x98] sm:$0xff]
      %v1444 = vld [vmem:[%s290 + $0xa8] sm:$0xff]
      %v1445 = vld [vmem:[%s290 + $0xb0] sm:$0xff]
      %v1446 = vld [vmem:[%s290 + $0xc0] sm:$0xff]
      %v1447 = vld [vmem:[%s290 + $0xc8] sm:$0xff]
      %v1448 = vld [vmem:[%s290 + $0xd8] sm:$0xff]
      %v1449 = vld [vmem:[%s290 + $0xe0] sm:$0xff]
      %v1450 = vld [vmem:[%s290 + $0xf0] sm:$0xff]
      %v1451 = vld [vmem:[%s290 + $0xf8] sm:$0xff]
      %v1452 = vld [vmem:[%s290 + $0x108] sm:$0xff]
      %v1453 = vld [vmem:[%s290 + $0x110] sm:$0xff]
      %v1454 = vld [vmem:[%s290 + $0x120] sm:$0xff]
      %v1455 = vld [vmem:[%s290 + $0x128] sm:$0xff]
      %v1456 = vld [vmem:[%s290 + $0x138] sm:$0xff]
      %v1457 = vld [vmem:[%s290 + $0x140] sm:$0xff]
      %v1458 = vld [vmem:[%s290 + $0x150] sm:$0xff]
      %v1459 = vld [vmem:[%s290 + $0x158] sm:$0xff]
      %v1460 = vld [vmem:[%s290 + $0x168] sm:$0xff]
      %v1461 = vld [vmem:[%s290 + $0x170] sm:$0xff]
      %s1462 = scalar_lea.vmem %s1, 12
      %v1463 = vld [vmem:[%s1462] sm:$0xf]
      %v1465 = vsel %vm291, %v1430, 0
      %v1468 = vsel %vm291, %v1431, 0
      %v1471 = vsel %vm291, %v1432, 0
      %v1474 = vsel %vm291, %v1433, 0
      %v1477 = vsel %vm291, %v1434, 0
      %v1480 = vsel %vm291, %v1435, 0
      %v1483 = vsel %vm291, %v1436, 0
      %v1486 = vsel %vm291, %v1437, 0
      %v1489 = vsel %vm291, %v1438, 0
      %v1492 = vsel %vm291, %v1439, 0
      %v1495 = vsel %vm291, %v1440, 0
      %v1498 = vsel %vm291, %v1441, 0
      %v1501 = vsel %vm291, %v1442, 0
      %v1504 = vsel %vm291, %v1443, 0
      %v1507 = vsel %vm291, %v1444, 0
      %v1510 = vsel %vm291, %v1445, 0
      %v1513 = vsel %vm291, %v1446, 0
      %v1516 = vsel %vm291, %v1447, 0
      %v1519 = vsel %vm291, %v1448, 0
      %v1522 = vsel %vm291, %v1449, 0
      %v1525 = vsel %vm291, %v1450, 0
      %v1528 = vsel %vm291, %v1451, 0
      %v1531 = vsel %vm291, %v1452, 0
      %v1534 = vsel %vm291, %v1453, 0
      %v1537 = vsel %vm291, %v1454, 0
      %v1540 = vsel %vm291, %v1455, 0
      %v1543 = vsel %vm291, %v1456, 0
      %v1546 = vsel %vm291, %v1457, 0
      %v1549 = vsel %vm291, %v1458, 0
      %v1552 = vsel %vm291, %v1459, 0
      %v1555 = vsel %vm291, %v1460, 0
      %v1558 = vsel %vm291, %v1461, 0
      %v1561 = vsel %vm487, %v1463, 0
      %1563 = vmatprep.subr.mxu0 0.0
      %1564 = vmatpush1.msra.mxu0 %v1561
      %1565 = vmatprep.subr.mxu0 0.0
      %1566 = vmatpush1.msra.mxu0 0.0
      %1567 = vmatprep.subr.mxu0 0.0
      %1568 = vmatpush1.msra.mxu0 0.0
      %1569 = vmatprep.subr.mxu0 0.0
      %1570 = vmatpush1.msra.mxu0 0.0
      %1571 = vmatprep.subr.mxu0 0.0
      %1572 = vmatpush1.msra.mxu0 0.0
      %1573 = vmatprep.subr.mxu0 0.0
      %1574 = vmatpush1.msra.mxu0 0.0
      %1575 = vmatprep.subr.mxu0 0.0
      %1576 = vmatpush1.msra.mxu0 0.0
      %1577 = vmatprep.subr.mxu0 0.0
      %1578 = vmatpush1.msra.mxu0 0.0
      %1579 = vmatprep.subr.mxu0 0.0
      %1580 = vmatpush1.msra.mxu0 0.0
      %1581 = vmatprep.subr.mxu0 0.0
      %1582 = vmatpush1.msra.mxu0 0.0
      %1583 = vmatprep.subr.mxu0 0.0
      %1584 = vmatpush1.msra.mxu0 0.0
      %1585 = vmatprep.subr.mxu0 0.0
      %1586 = vmatpush1.msra.mxu0 0.0
      %1587 = vmatprep.subr.mxu0 0.0
      %1588 = vmatpush1.msra.mxu0 0.0
      %1589 = vmatprep.subr.mxu0 0.0
      %1590 = vmatpush1.msra.mxu0 0.0
      %1591 = vmatprep.subr.mxu0 0.0
      %1592 = vmatpush1.msra.mxu0 0.0
      %1593 = vmatprep.subr.mxu0 0.0
      %1594 = vmatpush1.msra.mxu0 0.0
      %1595 = vmatprep.subr.mxu0 0.0
      %1596 = vmatpush1.msra.mxu0 0.0
      %1597 = vmatprep.subr.mxu0 0.0
      %1598 = vmatpush1.msra.mxu0 0.0
      %1599 = vmatprep.subr.mxu0 0.0
      %1600 = vmatpush1.msra.mxu0 0.0
      %1601 = vmatprep.subr.mxu0 0.0
      %1602 = vmatpush1.msra.mxu0 0.0
      %1603 = vmatprep.subr.mxu0 0.0
      %1604 = vmatpush1.msra.mxu0 0.0
      %1605 = vmatprep.subr.mxu0 0.0
      %1606 = vmatpush1.msra.mxu0 0.0
      %1607 = vmatprep.subr.mxu0 0.0
      %1608 = vmatpush1.msra.mxu0 0.0
      %1609 = vmatprep.subr.mxu0 0.0
      %1610 = vmatpush1.msra.mxu0 0.0
      %1611 = vmatprep.subr.mxu0 0.0
      %1612 = vmatpush1.msra.mxu0 0.0
      %1613 = vmatprep.subr.mxu0 0.0
      %1614 = vmatpush1.msra.mxu0 0.0
      %1615 = vmatprep.subr.mxu0 0.0
      %1616 = vmatpush1.msra.mxu0 0.0
      %1617 = vmatprep.subr.mxu0 0.0
      %1618 = vmatpush1.msra.mxu0 0.0
      %1619 = vmatprep.subr.mxu0 0.0
      %1620 = vmatpush1.msra.mxu0 0.0
      %1621 = vmatprep.subr.mxu0 0.0
      %1622 = vmatpush1.msra.mxu0 0.0
      %1623 = vmatprep.subr.mxu0 0.0
      %1624 = vmatpush1.msra.mxu0 0.0
      %1625 = vmatprep.subr.mxu0 0.0
      %1626 = vmatpush1.msra.mxu0 0.0
      %1627 = vmatprep.mubr.f32.mxu0 0.0
      %1628 = vmatmul.mubr.f32.gmra.mrb[0].mxu0 %v1465
      %v1629 = vpop.f32.mrb[0].mxu0
      %v1630 = vadd.f32 0.0, %v1629
      %v1631 = vpop.f32.mrb[0].mxu0
      %1632 = vmatprep.mubr.f32.mxu0 0.0
      %1633 = vmatmul.mubr.f32.gmra.mrb[0].mxu0 %v1468
      %v1634 = vpop.f32.mrb[0].mxu0
      %v1635 = vadd.f32 0.0, %v1634
      %v1636 = vpop.f32.mrb[0].mxu0
      %1637 = vmatprep.mubr.f32.mxu0 0.0
      %1638 = vmatmul.mubr.f32.gmra.mrb[0].mxu0 %v1471
      %v1639 = vpop.f32.mrb[0].mxu0
      %v1640 = vadd.f32 0.0, %v1639
      %v1641 = vpop.f32.mrb[0].mxu0
      %1642 = vmatprep.mubr.f32.mxu0 0.0
      %1643 = vmatmul.mubr.f32.gmra.mrb[0].mxu0 %v1474
      %v1644 = vpop.f32.mrb[0].mxu0
      %v1645 = vadd.f32 0.0, %v1644
      %v1646 = vpop.f32.mrb[0].mxu0
      %1647 = vmatprep.mubr.f32.mxu0 0.0
      %1648 = vmatmul.mubr.f32.gmra.mrb[0].mxu0 %v1477
      %v1649 = vpop.f32.mrb[0].mxu0
      %v1650 = vadd.f32 0.0, %v1649
      %v1651 = vpop.f32.mrb[0].mxu0
      %1652 = vmatprep.mubr.f32.mxu0 0.0
      %1653 = vmatmul.mubr.f32.gmra.mrb[0].mxu0 %v1480
      %v1654 = vpop.f32.mrb[0].mxu0
      %v1655 = vadd.f32 0.0, %v1654
      %v1656 = vpop.f32.mrb[0].mxu0
      %1657 = vmatprep.mubr.f32.mxu0 0.0
      %1658 = vmatmul.mubr.f32.gmra.mrb[0].mxu0 %v1483
      %v1659 = vpop.f32.mrb[0].mxu0
      %v1660 = vadd.f32 0.0, %v1659
      %v1661 = vpop.f32.mrb[0].mxu0
      %1662 = vmatprep.mubr.f32.mxu0 0.0
      %1663 = vmatmul.mubr.f32.gmra.mrb[0].mxu0 %v1486
      %v1664 = vpop.f32.mrb[0].mxu0
      %v1665 = vadd.f32 0.0, %v1664
      %v1666 = vpop.f32.mrb[0].mxu0
      %1667 = vmatprep.mubr.f32.mxu0 0.0
      %1668 = vmatmul.mubr.f32.gmra.mrb[0].mxu0 %v1489
      %v1669 = vpop.f32.mrb[0].mxu0
      %v1670 = vadd.f32 0.0, %v1669
      %v1671 = vpop.f32.mrb[0].mxu0
      %1672 = vmatprep.mubr.f32.mxu0 0.0
      %1673 = vmatmul.mubr.f32.gmra.mrb[0].mxu0 %v1492
      %v1674 = vpop.f32.mrb[0].mxu0
      %v1675 = vadd.f32 0.0, %v1674
      %v1676 = vpop.f32.mrb[0].mxu0
      %1677 = vmatprep.mubr.f32.mxu0 0.0
      %1678 = vmatmul.mubr.f32.gmra.mrb[0].mxu0 %v1495
      %v1679 = vpop.f32.mrb[0].mxu0
      %v1680 = vadd.f32 0.0, %v1679
      %v1681 = vpop.f32.mrb[0].mxu0
      %1682 = vmatprep.mubr.f32.mxu0 0.0
      %1683 = vmatmul.mubr.f32.gmra.mrb[0].mxu0 %v1498
      %v1684 = vpop.f32.mrb[0].mxu0
      %v1685 = vadd.f32 0.0, %v1684
      %v1686 = vpop.f32.mrb[0].mxu0
      %1687 = vmatprep.mubr.f32.mxu0 0.0
      %1688 = vmatmul.mubr.f32.gmra.mrb[0].mxu0 %v1501
      %v1689 = vpop.f32.mrb[0].mxu0
      %v1690 = vadd.f32 0.0, %v1689
      %v1691 = vpop.f32.mrb[0].mxu0
      %1692 = vmatprep.mubr.f32.mxu0 0.0
      %1693 = vmatmul.mubr.f32.gmra.mrb[0].mxu0 %v1504
      %v1694 = vpop.f32.mrb[0].mxu0
      %v1695 = vadd.f32 0.0, %v1694
      %v1696 = vpop.f32.mrb[0].mxu0
      %1697 = vmatprep.mubr.f32.mxu0 0.0
      %1698 = vmatmul.mubr.f32.gmra.mrb[0].mxu0 %v1507
      %v1699 = vpop.f32.mrb[0].mxu0
      %v1700 = vadd.f32 0.0, %v1699
      %v1701 = vpop.f32.mrb[0].mxu0
      %1702 = vmatprep.mubr.f32.mxu0 0.0
      %1703 = vmatmul.mubr.f32.gmra.mrb[0].mxu0 %v1510
      %v1704 = vpop.f32.mrb[0].mxu0
      %v1705 = vadd.f32 0.0, %v1704
      %v1706 = vpop.f32.mrb[0].mxu0
      %1707 = vmatprep.mubr.f32.mxu0 0.0
      %1708 = vmatmul.mubr.f32.gmra.mrb[0].mxu0 %v1513
      %v1709 = vpop.f32.mrb[0].mxu0
      %v1710 = vadd.f32 0.0, %v1709
      %v1711 = vpop.f32.mrb[0].mxu0
      %1712 = vmatprep.mubr.f32.mxu0 0.0
      %1713 = vmatmul.mubr.f32.gmra.mrb[0].mxu0 %v1516
      %v1714 = vpop.f32.mrb[0].mxu0
      %v1715 = vadd.f32 0.0, %v1714
      %v1716 = vpop.f32.mrb[0].mxu0
      %1717 = vmatprep.mubr.f32.mxu0 0.0
      %1718 = vmatmul.mubr.f32.gmra.mrb[0].mxu0 %v1519
      %v1719 = vpop.f32.mrb[0].mxu0
      %v1720 = vadd.f32 0.0, %v1719
      %v1721 = vpop.f32.mrb[0].mxu0
      %1722 = vmatprep.mubr.f32.mxu0 0.0
      %1723 = vmatmul.mubr.f32.gmra.mrb[0].mxu0 %v1522
      %v1724 = vpop.f32.mrb[0].mxu0
      %v1725 = vadd.f32 0.0, %v1724
      %v1726 = vpop.f32.mrb[0].mxu0
      %1727 = vmatprep.mubr.f32.mxu0 0.0
      %1728 = vmatmul.mubr.f32.gmra.mrb[0].mxu0 %v1525
      %v1729 = vpop.f32.mrb[0].mxu0
      %v1730 = vadd.f32 0.0, %v1729
      %v1731 = vpop.f32.mrb[0].mxu0
      %1732 = vmatprep.mubr.f32.mxu0 0.0
      %1733 = vmatmul.mubr.f32.gmra.mrb[0].mxu0 %v1528
      %v1734 = vpop.f32.mrb[0].mxu0
      %v1735 = vadd.f32 0.0, %v1734
      %v1736 = vpop.f32.mrb[0].mxu0
      %1737 = vmatprep.mubr.f32.mxu0 0.0
      %1738 = vmatmul.mubr.f32.gmra.mrb[0].mxu0 %v1531
      %v1739 = vpop.f32.mrb[0].mxu0
      %v1740 = vadd.f32 0.0, %v1739
      %v1741 = vpop.f32.mrb[0].mxu0
      %1742 = vmatprep.mubr.f32.mxu0 0.0
      %1743 = vmatmul.mubr.f32.gmra.mrb[0].mxu0 %v1534
      %v1744 = vpop.f32.mrb[0].mxu0
      %v1745 = vadd.f32 0.0, %v1744
      %v1746 = vpop.f32.mrb[0].mxu0
      %1747 = vmatprep.mubr.f32.mxu0 0.0
      %1748 = vmatmul.mubr.f32.gmra.mrb[0].mxu0 %v1537
      %v1749 = vpop.f32.mrb[0].mxu0
      %v1750 = vadd.f32 0.0, %v1749
      %v1751 = vpop.f32.mrb[0].mxu0
      %1752 = vmatprep.mubr.f32.mxu0 0.0
      %1753 = vmatmul.mubr.f32.gmra.mrb[0].mxu0 %v1540
      %v1754 = vpop.f32.mrb[0].mxu0
      %v1755 = vadd.f32 0.0, %v1754
      %v1756 = vpop.f32.mrb[0].mxu0
      %1757 = vmatprep.mubr.f32.mxu0 0.0
      %1758 = vmatmul.mubr.f32.gmra.mrb[0].mxu0 %v1543
      %v1759 = vpop.f32.mrb[0].mxu0
      %v1760 = vadd.f32 0.0, %v1759
      %v1761 = vpop.f32.mrb[0].mxu0
      %1762 = vmatprep.mubr.f32.mxu0 0.0
      %1763 = vmatmul.mubr.f32.gmra.mrb[0].mxu0 %v1546
      %v1764 = vpop.f32.mrb[0].mxu0
      %v1765 = vadd.f32 0.0, %v1764
      %v1766 = vpop.f32.mrb[0].mxu0
      %1767 = vmatprep.mubr.f32.mxu0 0.0
      %1768 = vmatmul.mubr.f32.gmra.mrb[0].mxu0 %v1549
      %v1769 = vpop.f32.mrb[0].mxu0
      %v1770 = vadd.f32 0.0, %v1769
      %v1771 = vpop.f32.mrb[0].mxu0
      %1772 = vmatprep.mubr.f32.mxu0 0.0
      %1773 = vmatmul.mubr.f32.gmra.mrb[0].mxu0 %v1552
      %v1774 = vpop.f32.mrb[0].mxu0
      %v1775 = vadd.f32 0.0, %v1774
      %v1776 = vpop.f32.mrb[0].mxu0
      %1777 = vmatprep.mubr.f32.mxu0 0.0
      %1778 = vmatmul.mubr.f32.gmra.mrb[0].mxu0 %v1555
      %v1779 = vpop.f32.mrb[0].mxu0
      %v1780 = vadd.f32 0.0, %v1779
      %v1781 = vpop.f32.mrb[0].mxu0
      %1782 = vmatprep.mubr.f32.mxu0 0.0
      %1783 = vmatmul.mubr.f32.gmra.mrb[0].mxu0 %v1558
      %v1784 = vpop.f32.mrb[0].mxu0
      %v1785 = vadd.f32 0.0, %v1784
      %v1786 = vpop.f32.mrb[0].mxu0
      %1787 = vdwg.mxu0
      %v1788 = vadd.f32 %v1398, %v1630
      %v1789 = vadd.f32 %v1399, %v1635
      %v1790 = vadd.f32 %v1400, %v1640
      %v1791 = vadd.f32 %v1401, %v1645
      %v1792 = vadd.f32 %v1402, %v1650
      %v1793 = vadd.f32 %v1403, %v1655
      %v1794 = vadd.f32 %v1404, %v1660
      %v1795 = vadd.f32 %v1405, %v1665
      %v1796 = vadd.f32 %v1406, %v1670
      %v1797 = vadd.f32 %v1407, %v1675
      %v1798 = vadd.f32 %v1408, %v1680
      %v1799 = vadd.f32 %v1409, %v1685
      %v1800 = vadd.f32 %v1410, %v1690
      %v1801 = vadd.f32 %v1411, %v1695
      %v1802 = vadd.f32 %v1412, %v1700
      %v1803 = vadd.f32 %v1413, %v1705
      %v1804 = vadd.f32 %v1414, %v1710
      %v1805 = vadd.f32 %v1415, %v1715
      %v1806 = vadd.f32 %v1416, %v1720
      %v1807 = vadd.f32 %v1417, %v1725
      %v1808 = vadd.f32 %v1418, %v1730
      %v1809 = vadd.f32 %v1419, %v1735
      %v1810 = vadd.f32 %v1420, %v1740
      %v1811 = vadd.f32 %v1421, %v1745
      %v1812 = vadd.f32 %v1422, %v1750
      %v1813 = vadd.f32 %v1423, %v1755
      %v1814 = vadd.f32 %v1424, %v1760
      %v1815 = vadd.f32 %v1425, %v1765
      %v1816 = vadd.f32 %v1426, %v1770
      %v1817 = vadd.f32 %v1427, %v1775
      %v1818 = vadd.f32 %v1428, %v1780
      %v1819 = vadd.f32 %v1429, %v1785
      %v1820 = vld [vmem:[%s290 + $0x1] sm:$0xff]
      %v1821 = vld [vmem:[%s290 + $0x9] sm:$0xff]
      %v1822 = vld [vmem:[%s290 + $0x19] sm:$0xff]
      %v1823 = vld [vmem:[%s290 + $0x21] sm:$0xff]
      %v1824 = vld [vmem:[%s290 + $0x31] sm:$0xff]
      %v1825 = vld [vmem:[%s290 + $0x39] sm:$0xff]
      %v1826 = vld [vmem:[%s290 + $0x49] sm:$0xff]
      %v1827 = vld [vmem:[%s290 + $0x51] sm:$0xff]
      %v1828 = vld [vmem:[%s290 + $0x61] sm:$0xff]
      %v1829 = vld [vmem:[%s290 + $0x69] sm:$0xff]
      %v1830 = vld [vmem:[%s290 + $0x79] sm:$0xff]
      %v1831 = vld [vmem:[%s290 + $0x81] sm:$0xff]
      %v1832 = vld [vmem:[%s290 + $0x91] sm:$0xff]
      %v1833 = vld [vmem:[%s290 + $0x99] sm:$0xff]
      %v1834 = vld [vmem:[%s290 + $0xa9] sm:$0xff]
      %v1835 = vld [vmem:[%s290 + $0xb1] sm:$0xff]
      %v1836 = vld [vmem:[%s290 + $0xc1] sm:$0xff]
      %v1837 = vld [vmem:[%s290 + $0xc9] sm:$0xff]
      %v1838 = vld [vmem:[%s290 + $0xd9] sm:$0xff]
      %v1839 = vld [vmem:[%s290 + $0xe1] sm:$0xff]
      %v1840 = vld [vmem:[%s290 + $0xf1] sm:$0xff]
      %v1841 = vld [vmem:[%s290 + $0xf9] sm:$0xff]
      %v1842 = vld [vmem:[%s290 + $0x109] sm:$0xff]
      %v1843 = vld [vmem:[%s290 + $0x111] sm:$0xff]
      %v1844 = vld [vmem:[%s290 + $0x121] sm:$0xff]
      %v1845 = vld [vmem:[%s290 + $0x129] sm:$0xff]
      %v1846 = vld [vmem:[%s290 + $0x139] sm:$0xff]
      %v1847 = vld [vmem:[%s290 + $0x141] sm:$0xff]
      %v1848 = vld [vmem:[%s290 + $0x151] sm:$0xff]
      %v1849 = vld [vmem:[%s290 + $0x159] sm:$0xff]
      %v1850 = vld [vmem:[%s290 + $0x169] sm:$0xff]
      %v1851 = vld [vmem:[%s290 + $0x171] sm:$0xff]
      %s1852 = scalar_lea.vmem %s1, 16
      %v1853 = vld [vmem:[%s1852] sm:$0xf]
      %v1855 = vsel %vm291, %v1820, 0
      %v1858 = vsel %vm291, %v1821, 0
      %v1861 = vsel %vm291, %v1822, 0
      %v1864 = vsel %vm291, %v1823, 0
      %v1867 = vsel %vm291, %v1824, 0
      %v1870 = vsel %vm291, %v1825, 0
      %v1873 = vsel %vm291, %v1826, 0
      %v1876 = vsel %vm291, %v1827, 0
      %v1879 = vsel %vm291, %v1828, 0
      %v1882 = vsel %vm291, %v1829, 0
      %v1885 = vsel %vm291, %v1830, 0
      %v1888 = vsel %vm291, %v1831, 0
      %v1891 = vsel %vm291, %v1832, 0
      %v1894 = vsel %vm291, %v1833, 0
      %v1897 = vsel %vm291, %v1834, 0
      %v1900 = vsel %vm291, %v1835, 0
      %v1903 = vsel %vm291, %v1836, 0
      %v1906 = vsel %vm291, %v1837, 0
      %v1909 = vsel %vm291, %v1838, 0
      %v1912 = vsel %vm291, %v1839, 0
      %v1915 = vsel %vm291, %v1840, 0
      %v1918 = vsel %vm291, %v1841, 0
      %v1921 = vsel %vm291, %v1842, 0
      %v1924 = vsel %vm291, %v1843, 0
      %v1927 = vsel %vm291, %v1844, 0
      %v1930 = vsel %vm291, %v1845, 0
      %v1933 = vsel %vm291, %v1846, 0
      %v1936 = vsel %vm291, %v1847, 0
      %v1939 = vsel %vm291, %v1848, 0
      %v1942 = vsel %vm291, %v1849, 0
      %v1945 = vsel %vm291, %v1850, 0
      %v1948 = vsel %vm291, %v1851, 0
      %v1951 = vsel %vm487, %v1853, 0
      %1953 = vmatprep.subr.mxu0 0.0
      %1954 = vmatpush1.msra.mxu0 %v1951
      %1955 = vmatprep.subr.mxu0 0.0
      %1956 = vmatpush1.msra.mxu0 0.0
      %1957 = vmatprep.subr.mxu0 0.0
      %1958 = vmatpush1.msra.mxu0 0.0
      %1959 = vmatprep.subr.mxu0 0.0
      %1960 = vmatpush1.msra.mxu0 0.0
      %1961 = vmatprep.subr.mxu0 0.0
      %1962 = vmatpush1.msra.mxu0 0.0
      %1963 = vmatprep.subr.mxu0 0.0
      %1964 = vmatpush1.msra.mxu0 0.0
      %1965 = vmatprep.subr.mxu0 0.0
      %1966 = vmatpush1.msra.mxu0 0.0
      %1967 = vmatprep.subr.mxu0 0.0
      %1968 = vmatpush1.msra.mxu0 0.0
      %1969 = vmatprep.subr.mxu0 0.0
      %1970 = vmatpush1.msra.mxu0 0.0
      %1971 = vmatprep.subr.mxu0 0.0
      %1972 = vmatpush1.msra.mxu0 0.0
      %1973 = vmatprep.subr.mxu0 0.0
      %1974 = vmatpush1.msra.mxu0 0.0
      %1975 = vmatprep.subr.mxu0 0.0
      %1976 = vmatpush1.msra.mxu0 0.0
      %1977 = vmatprep.subr.mxu0 0.0
      %1978 = vmatpush1.msra.mxu0 0.0
      %1979 = vmatprep.subr.mxu0 0.0
      %1980 = vmatpush1.msra.mxu0 0.0
      %1981 = vmatprep.subr.mxu0 0.0
      %1982 = vmatpush1.msra.mxu0 0.0
      %1983 = vmatprep.subr.mxu0 0.0
      %1984 = vmatpush1.msra.mxu0 0.0
      %1985 = vmatprep.subr.mxu0 0.0
      %1986 = vmatpush1.msra.mxu0 0.0
      %1987 = vmatprep.subr.mxu0 0.0
      %1988 = vmatpush1.msra.mxu0 0.0
      %1989 = vmatprep.subr.mxu0 0.0
      %1990 = vmatpush1.msra.mxu0 0.0
      %1991 = vmatprep.subr.mxu0 0.0
      %1992 = vmatpush1.msra.mxu0 0.0
      %1993 = vmatprep.subr.mxu0 0.0
      %1994 = vmatpush1.msra.mxu0 0.0
      %1995 = vmatprep.subr.mxu0 0.0
      %1996 = vmatpush1.msra.mxu0 0.0
      %1997 = vmatprep.subr.mxu0 0.0
      %1998 = vmatpush1.msra.mxu0 0.0
      %1999 = vmatprep.subr.mxu0 0.0
      %2000 = vmatpush1.msra.mxu0 0.0
      %2001 = vmatprep.subr.mxu0 0.0
      %2002 = vmatpush1.msra.mxu0 0.0
      %2003 = vmatprep.subr.mxu0 0.0
      %2004 = vmatpush1.msra.mxu0 0.0
      %2005 = vmatprep.subr.mxu0 0.0
      %2006 = vmatpush1.msra.mxu0 0.0
      %2007 = vmatprep.subr.mxu0 0.0
      %2008 = vmatpush1.msra.mxu0 0.0
      %2009 = vmatprep.subr.mxu0 0.0
      %2010 = vmatpush1.msra.mxu0 0.0
      %2011 = vmatprep.subr.mxu0 0.0
      %2012 = vmatpush1.msra.mxu0 0.0
      %2013 = vmatprep.subr.mxu0 0.0
      %2014 = vmatpush1.msra.mxu0 0.0
      %2015 = vmatprep.subr.mxu0 0.0
      %2016 = vmatpush1.msra.mxu0 0.0
      %2017 = vmatprep.mubr.f32.mxu0 0.0
      %2018 = vmatmul.mubr.f32.gmra.mrb[0].mxu0 %v1855
      %v2019 = vpop.f32.mrb[0].mxu0
      %v2020 = vadd.f32 0.0, %v2019
      %v2021 = vpop.f32.mrb[0].mxu0
      %2022 = vmatprep.mubr.f32.mxu0 0.0
      %2023 = vmatmul.mubr.f32.gmra.mrb[0].mxu0 %v1858
      %v2024 = vpop.f32.mrb[0].mxu0
      %v2025 = vadd.f32 0.0, %v2024
      %v2026 = vpop.f32.mrb[0].mxu0
      %2027 = vmatprep.mubr.f32.mxu0 0.0
      %2028 = vmatmul.mubr.f32.gmra.mrb[0].mxu0 %v1861
      %v2029 = vpop.f32.mrb[0].mxu0
      %v2030 = vadd.f32 0.0, %v2029
      %v2031 = vpop.f32.mrb[0].mxu0
      %2032 = vmatprep.mubr.f32.mxu0 0.0
      %2033 = vmatmul.mubr.f32.gmra.mrb[0].mxu0 %v1864
      %v2034 = vpop.f32.mrb[0].mxu0
      %v2035 = vadd.f32 0.0, %v2034
      %v2036 = vpop.f32.mrb[0].mxu0
      %2037 = vmatprep.mubr.f32.mxu0 0.0
      %2038 = vmatmul.mubr.f32.gmra.mrb[0].mxu0 %v1867
      %v2039 = vpop.f32.mrb[0].mxu0
      %v2040 = vadd.f32 0.0, %v2039
      %v2041 = vpop.f32.mrb[0].mxu0
      %2042 = vmatprep.mubr.f32.mxu0 0.0
      %2043 = vmatmul.mubr.f32.gmra.mrb[0].mxu0 %v1870
      %v2044 = vpop.f32.mrb[0].mxu0
      %v2045 = vadd.f32 0.0, %v2044
      %v2046 = vpop.f32.mrb[0].mxu0
      %2047 = vmatprep.mubr.f32.mxu0 0.0
      %2048 = vmatmul.mubr.f32.gmra.mrb[0].mxu0 %v1873
      %v2049 = vpop.f32.mrb[0].mxu0
      %v2050 = vadd.f32 0.0, %v2049
      %v2051 = vpop.f32.mrb[0].mxu0
      %2052 = vmatprep.mubr.f32.mxu0 0.0
      %2053 = vmatmul.mubr.f32.gmra.mrb[0].mxu0 %v1876
      %v2054 = vpop.f32.mrb[0].mxu0
      %v2055 = vadd.f32 0.0, %v2054
      %v2056 = vpop.f32.mrb[0].mxu0
      %2057 = vmatprep.mubr.f32.mxu0 0.0
      %2058 = vmatmul.mubr.f32.gmra.mrb[0].mxu0 %v1879
      %v2059 = vpop.f32.mrb[0].mxu0
      %v2060 = vadd.f32 0.0, %v2059
      %v2061 = vpop.f32.mrb[0].mxu0
      %2062 = vmatprep.mubr.f32.mxu0 0.0
      %2063 = vmatmul.mubr.f32.gmra.mrb[0].mxu0 %v1882
      %v2064 = vpop.f32.mrb[0].mxu0
      %v2065 = vadd.f32 0.0, %v2064
      %v2066 = vpop.f32.mrb[0].mxu0
      %2067 = vmatprep.mubr.f32.mxu0 0.0
      %2068 = vmatmul.mubr.f32.gmra.mrb[0].mxu0 %v1885
      %v2069 = vpop.f32.mrb[0].mxu0
      %v2070 = vadd.f32 0.0, %v2069
      %v2071 = vpop.f32.mrb[0].mxu0
      %2072 = vmatprep.mubr.f32.mxu0 0.0
      %2073 = vmatmul.mubr.f32.gmra.mrb[0].mxu0 %v1888
      %v2074 = vpop.f32.mrb[0].mxu0
      %v2075 = vadd.f32 0.0, %v2074
      %v2076 = vpop.f32.mrb[0].mxu0
      %2077 = vmatprep.mubr.f32.mxu0 0.0
      %2078 = vmatmul.mubr.f32.gmra.mrb[0].mxu0 %v1891
      %v2079 = vpop.f32.mrb[0].mxu0
      %v2080 = vadd.f32 0.0, %v2079
      %v2081 = vpop.f32.mrb[0].mxu0
      %2082 = vmatprep.mubr.f32.mxu0 0.0
      %2083 = vmatmul.mubr.f32.gmra.mrb[0].mxu0 %v1894
      %v2084 = vpop.f32.mrb[0].mxu0
      %v2085 = vadd.f32 0.0, %v2084
      %v2086 = vpop.f32.mrb[0].mxu0
      %2087 = vmatprep.mubr.f32.mxu0 0.0
      %2088 = vmatmul.mubr.f32.gmra.mrb[0].mxu0 %v1897
      %v2089 = vpop.f32.mrb[0].mxu0
      %v2090 = vadd.f32 0.0, %v2089
      %v2091 = vpop.f32.mrb[0].mxu0
      %2092 = vmatprep.mubr.f32.mxu0 0.0
      %2093 = vmatmul.mubr.f32.gmra.mrb[0].mxu0 %v1900
      %v2094 = vpop.f32.mrb[0].mxu0
      %v2095 = vadd.f32 0.0, %v2094
      %v2096 = vpop.f32.mrb[0].mxu0
      %2097 = vmatprep.mubr.f32.mxu0 0.0
      %2098 = vmatmul.mubr.f32.gmra.mrb[0].mxu0 %v1903
      %v2099 = vpop.f32.mrb[0].mxu0
      %v2100 = vadd.f32 0.0, %v2099
      %v2101 = vpop.f32.mrb[0].mxu0
      %2102 = vmatprep.mubr.f32.mxu0 0.0
      %2103 = vmatmul.mubr.f32.gmra.mrb[0].mxu0 %v1906
      %v2104 = vpop.f32.mrb[0].mxu0
      %v2105 = vadd.f32 0.0, %v2104
      %v2106 = vpop.f32.mrb[0].mxu0
      %2107 = vmatprep.mubr.f32.mxu0 0.0
      %2108 = vmatmul.mubr.f32.gmra.mrb[0].mxu0 %v1909
      %v2109 = vpop.f32.mrb[0].mxu0
      %v2110 = vadd.f32 0.0, %v2109
      %v2111 = vpop.f32.mrb[0].mxu0
      %2112 = vmatprep.mubr.f32.mxu0 0.0
      %2113 = vmatmul.mubr.f32.gmra.mrb[0].mxu0 %v1912
      %v2114 = vpop.f32.mrb[0].mxu0
      %v2115 = vadd.f32 0.0, %v2114
      %v2116 = vpop.f32.mrb[0].mxu0
      %2117 = vmatprep.mubr.f32.mxu0 0.0
      %2118 = vmatmul.mubr.f32.gmra.mrb[0].mxu0 %v1915
      %v2119 = vpop.f32.mrb[0].mxu0
      %v2120 = vadd.f32 0.0, %v2119
      %v2121 = vpop.f32.mrb[0].mxu0
      %2122 = vmatprep.mubr.f32.mxu0 0.0
      %2123 = vmatmul.mubr.f32.gmra.mrb[0].mxu0 %v1918
      %v2124 = vpop.f32.mrb[0].mxu0
      %v2125 = vadd.f32 0.0, %v2124
      %v2126 = vpop.f32.mrb[0].mxu0
      %2127 = vmatprep.mubr.f32.mxu0 0.0
      %2128 = vmatmul.mubr.f32.gmra.mrb[0].mxu0 %v1921
      %v2129 = vpop.f32.mrb[0].mxu0
      %v2130 = vadd.f32 0.0, %v2129
      %v2131 = vpop.f32.mrb[0].mxu0
      %2132 = vmatprep.mubr.f32.mxu0 0.0
      %2133 = vmatmul.mubr.f32.gmra.mrb[0].mxu0 %v1924
      %v2134 = vpop.f32.mrb[0].mxu0
      %v2135 = vadd.f32 0.0, %v2134
      %v2136 = vpop.f32.mrb[0].mxu0
      %2137 = vmatprep.mubr.f32.mxu0 0.0
      %2138 = vmatmul.mubr.f32.gmra.mrb[0].mxu0 %v1927
      %v2139 = vpop.f32.mrb[0].mxu0
      %v2140 = vadd.f32 0.0, %v2139
      %v2141 = vpop.f32.mrb[0].mxu0
      %2142 = vmatprep.mubr.f32.mxu0 0.0
      %2143 = vmatmul.mubr.f32.gmra.mrb[0].mxu0 %v1930
      %v2144 = vpop.f32.mrb[0].mxu0
      %v2145 = vadd.f32 0.0, %v2144
      %v2146 = vpop.f32.mrb[0].mxu0
      %2147 = vmatprep.mubr.f32.mxu0 0.0
      %2148 = vmatmul.mubr.f32.gmra.mrb[0].mxu0 %v1933
      %v2149 = vpop.f32.mrb[0].mxu0
      %v2150 = vadd.f32 0.0, %v2149
      %v2151 = vpop.f32.mrb[0].mxu0
      %2152 = vmatprep.mubr.f32.mxu0 0.0
      %2153 = vmatmul.mubr.f32.gmra.mrb[0].mxu0 %v1936
      %v2154 = vpop.f32.mrb[0].mxu0
      %v2155 = vadd.f32 0.0, %v2154
      %v2156 = vpop.f32.mrb[0].mxu0
      %2157 = vmatprep.mubr.f32.mxu0 0.0
      %2158 = vmatmul.mubr.f32.gmra.mrb[0].mxu0 %v1939
      %v2159 = vpop.f32.mrb[0].mxu0
      %v2160 = vadd.f32 0.0, %v2159
      %v2161 = vpop.f32.mrb[0].mxu0
      %2162 = vmatprep.mubr.f32.mxu0 0.0
      %2163 = vmatmul.mubr.f32.gmra.mrb[0].mxu0 %v1942
      %v2164 = vpop.f32.mrb[0].mxu0
      %v2165 = vadd.f32 0.0, %v2164
      %v2166 = vpop.f32.mrb[0].mxu0
      %2167 = vmatprep.mubr.f32.mxu0 0.0
      %2168 = vmatmul.mubr.f32.gmra.mrb[0].mxu0 %v1945
      %v2169 = vpop.f32.mrb[0].mxu0
      %v2170 = vadd.f32 0.0, %v2169
      %v2171 = vpop.f32.mrb[0].mxu0
      %2172 = vmatprep.mubr.f32.mxu0 0.0
      %2173 = vmatmul.mubr.f32.gmra.mrb[0].mxu0 %v1948
      %v2174 = vpop.f32.mrb[0].mxu0
      %v2175 = vadd.f32 0.0, %v2174
      %v2176 = vpop.f32.mrb[0].mxu0
      %2177 = vdwg.mxu0
      %v2178 = vadd.f32 %v1788, %v2020
      %v2179 = vadd.f32 %v1789, %v2025
      %v2180 = vadd.f32 %v1790, %v2030
      %v2181 = vadd.f32 %v1791, %v2035
      %v2182 = vadd.f32 %v1792, %v2040
      %v2183 = vadd.f32 %v1793, %v2045
      %v2184 = vadd.f32 %v1794, %v2050
      %v2185 = vadd.f32 %v1795, %v2055
      %v2186 = vadd.f32 %v1796, %v2060
      %v2187 = vadd.f32 %v1797, %v2065
      %v2188 = vadd.f32 %v1798, %v2070
      %v2189 = vadd.f32 %v1799, %v2075
      %v2190 = vadd.f32 %v1800, %v2080
      %v2191 = vadd.f32 %v1801, %v2085
      %v2192 = vadd.f32 %v1802, %v2090
      %v2193 = vadd.f32 %v1803, %v2095
      %v2194 = vadd.f32 %v1804, %v2100
      %v2195 = vadd.f32 %v1805, %v2105
      %v2196 = vadd.f32 %v1806, %v2110
      %v2197 = vadd.f32 %v1807, %v2115
      %v2198 = vadd.f32 %v1808, %v2120
      %v2199 = vadd.f32 %v1809, %v2125
      %v2200 = vadd.f32 %v1810, %v2130
      %v2201 = vadd.f32 %v1811, %v2135
      %v2202 = vadd.f32 %v1812, %v2140
      %v2203 = vadd.f32 %v1813, %v2145
      %v2204 = vadd.f32 %v1814, %v2150
      %v2205 = vadd.f32 %v1815, %v2155
      %v2206 = vadd.f32 %v1816, %v2160
      %v2207 = vadd.f32 %v1817, %v2165
      %v2208 = vadd.f32 %v1818, %v2170
      %v2209 = vadd.f32 %v1819, %v2175
      %v2210 = vld [vmem:[%s290 + $0x2] sm:$0xff]
      %v2211 = vld [vmem:[%s290 + $0xa] sm:$0xff]
      %v2212 = vld [vmem:[%s290 + $0x1a] sm:$0xff]
      %v2213 = vld [vmem:[%s290 + $0x22] sm:$0xff]
      %v2214 = vld [vmem:[%s290 + $0x32] sm:$0xff]
      %v2215 = vld [vmem:[%s290 + $0x3a] sm:$0xff]
      %v2216 = vld [vmem:[%s290 + $0x4a] sm:$0xff]
      %v2217 = vld [vmem:[%s290 + $0x52] sm:$0xff]
      %v2218 = vld [vmem:[%s290 + $0x62] sm:$0xff]
      %v2219 = vld [vmem:[%s290 + $0x6a] sm:$0xff]
      %v2220 = vld [vmem:[%s290 + $0x7a] sm:$0xff]
      %v2221 = vld [vmem:[%s290 + $0x82] sm:$0xff]
      %v2222 = vld [vmem:[%s290 + $0x92] sm:$0xff]
      %v2223 = vld [vmem:[%s290 + $0x9a] sm:$0xff]
      %v2224 = vld [vmem:[%s290 + $0xaa] sm:$0xff]
      %v2225 = vld [vmem:[%s290 + $0xb2] sm:$0xff]
      %v2226 = vld [vmem:[%s290 + $0xc2] sm:$0xff]
      %v2227 = vld [vmem:[%s290 + $0xca] sm:$0xff]
      %v2228 = vld [vmem:[%s290 + $0xda] sm:$0xff]
      %v2229 = vld [vmem:[%s290 + $0xe2] sm:$0xff]
      %v2230 = vld [vmem:[%s290 + $0xf2] sm:$0xff]
      %v2231 = vld [vmem:[%s290 + $0xfa] sm:$0xff]
      %v2232 = vld [vmem:[%s290 + $0x10a] sm:$0xff]
      %v2233 = vld [vmem:[%s290 + $0x112] sm:$0xff]
      %v2234 = vld [vmem:[%s290 + $0x122] sm:$0xff]
      %v2235 = vld [vmem:[%s290 + $0x12a] sm:$0xff]
      %v2236 = vld [vmem:[%s290 + $0x13a] sm:$0xff]
      %v2237 = vld [vmem:[%s290 + $0x142] sm:$0xff]
      %v2238 = vld [vmem:[%s290 + $0x152] sm:$0xff]
      %v2239 = vld [vmem:[%s290 + $0x15a] sm:$0xff]
      %v2240 = vld [vmem:[%s290 + $0x16a] sm:$0xff]
      %v2241 = vld [vmem:[%s290 + $0x172] sm:$0xff]
      %s2242 = scalar_lea.vmem %s1, 20
      %v2243 = vld [vmem:[%s2242] sm:$0xf]
      %v2245 = vsel %vm291, %v2210, 0
      %v2248 = vsel %vm291, %v2211, 0
      %v2251 = vsel %vm291, %v2212, 0
      %v2254 = vsel %vm291, %v2213, 0
      %v2257 = vsel %vm291, %v2214, 0
      %v2260 = vsel %vm291, %v2215, 0
      %v2263 = vsel %vm291, %v2216, 0
      %v2266 = vsel %vm291, %v2217, 0
      %v2269 = vsel %vm291, %v2218, 0
      %v2272 = vsel %vm291, %v2219, 0
      %v2275 = vsel %vm291, %v2220, 0
      %v2278 = vsel %vm291, %v2221, 0
      %v2281 = vsel %vm291, %v2222, 0
      %v2284 = vsel %vm291, %v2223, 0
      %v2287 = vsel %vm291, %v2224, 0
      %v2290 = vsel %vm291, %v2225, 0
      %v2293 = vsel %vm291, %v2226, 0
      %v2296 = vsel %vm291, %v2227, 0
      %v2299 = vsel %vm291, %v2228, 0
      %v2302 = vsel %vm291, %v2229, 0
      %v2305 = vsel %vm291, %v2230, 0
      %v2308 = vsel %vm291, %v2231, 0
      %v2311 = vsel %vm291, %v2232, 0
      %v2314 = vsel %vm291, %v2233, 0
      %v2317 = vsel %vm291, %v2234, 0
      %v2320 = vsel %vm291, %v2235, 0
      %v2323 = vsel %vm291, %v2236, 0
      %v2326 = vsel %vm291, %v2237, 0
      %v2329 = vsel %vm291, %v2238, 0
      %v2332 = vsel %vm291, %v2239, 0
      %v2335 = vsel %vm291, %v2240, 0
      %v2338 = vsel %vm291, %v2241, 0
      %v2341 = vsel %vm487, %v2243, 0
      %2343 = vmatprep.subr.mxu0 0.0
      %2344 = vmatpush1.msra.mxu0 %v2341
      %2345 = vmatprep.subr.mxu0 0.0
      %2346 = vmatpush1.msra.mxu0 0.0
      %2347 = vmatprep.subr.mxu0 0.0
      %2348 = vmatpush1.msra.mxu0 0.0
      %2349 = vmatprep.subr.mxu0 0.0
      %2350 = vmatpush1.msra.mxu0 0.0
      %2351 = vmatprep.subr.mxu0 0.0
      %2352 = vmatpush1.msra.mxu0 0.0
      %2353 = vmatprep.subr.mxu0 0.0
      %2354 = vmatpush1.msra.mxu0 0.0
      %2355 = vmatprep.subr.mxu0 0.0
      %2356 = vmatpush1.msra.mxu0 0.0
      %2357 = vmatprep.subr.mxu0 0.0
      %2358 = vmatpush1.msra.mxu0 0.0
      %2359 = vmatprep.subr.mxu0 0.0
      %2360 = vmatpush1.msra.mxu0 0.0
      %2361 = vmatprep.subr.mxu0 0.0
      %2362 = vmatpush1.msra.mxu0 0.0
      %2363 = vmatprep.subr.mxu0 0.0
      %2364 = vmatpush1.msra.mxu0 0.0
      %2365 = vmatprep.subr.mxu0 0.0
      %2366 = vmatpush1.msra.mxu0 0.0
      %2367 = vmatprep.subr.mxu0 0.0
      %2368 = vmatpush1.msra.mxu0 0.0
      %2369 = vmatprep.subr.mxu0 0.0
      %2370 = vmatpush1.msra.mxu0 0.0
      %2371 = vmatprep.subr.mxu0 0.0
      %2372 = vmatpush1.msra.mxu0 0.0
      %2373 = vmatprep.subr.mxu0 0.0
      %2374 = vmatpush1.msra.mxu0 0.0
      %2375 = vmatprep.subr.mxu0 0.0
      %2376 = vmatpush1.msra.mxu0 0.0
      %2377 = vmatprep.subr.mxu0 0.0
      %2378 = vmatpush1.msra.mxu0 0.0
      %2379 = vmatprep.subr.mxu0 0.0
      %2380 = vmatpush1.msra.mxu0 0.0
      %2381 = vmatprep.subr.mxu0 0.0
      %2382 = vmatpush1.msra.mxu0 0.0
      %2383 = vmatprep.subr.mxu0 0.0
      %2384 = vmatpush1.msra.mxu0 0.0
      %2385 = vmatprep.subr.mxu0 0.0
      %2386 = vmatpush1.msra.mxu0 0.0
      %2387 = vmatprep.subr.mxu0 0.0
      %2388 = vmatpush1.msra.mxu0 0.0
      %2389 = vmatprep.subr.mxu0 0.0
      %2390 = vmatpush1.msra.mxu0 0.0
      %2391 = vmatprep.subr.mxu0 0.0
      %2392 = vmatpush1.msra.mxu0 0.0
      %2393 = vmatprep.subr.mxu0 0.0
      %2394 = vmatpush1.msra.mxu0 0.0
      %2395 = vmatprep.subr.mxu0 0.0
      %2396 = vmatpush1.msra.mxu0 0.0
      %2397 = vmatprep.subr.mxu0 0.0
      %2398 = vmatpush1.msra.mxu0 0.0
      %2399 = vmatprep.subr.mxu0 0.0
      %2400 = vmatpush1.msra.mxu0 0.0
      %2401 = vmatprep.subr.mxu0 0.0
      %2402 = vmatpush1.msra.mxu0 0.0
      %2403 = vmatprep.subr.mxu0 0.0
      %2404 = vmatpush1.msra.mxu0 0.0
      %2405 = vmatprep.subr.mxu0 0.0
      %2406 = vmatpush1.msra.mxu0 0.0
      %2407 = vmatprep.mubr.f32.mxu0 0.0
      %2408 = vmatmul.mubr.f32.gmra.mrb[0].mxu0 %v2245
      %v2409 = vpop.f32.mrb[0].mxu0
      %v2410 = vadd.f32 0.0, %v2409
      %v2411 = vpop.f32.mrb[0].mxu0
      %2412 = vmatprep.mubr.f32.mxu0 0.0
      %2413 = vmatmul.mubr.f32.gmra.mrb[0].mxu0 %v2248
      %v2414 = vpop.f32.mrb[0].mxu0
      %v2415 = vadd.f32 0.0, %v2414
      %v2416 = vpop.f32.mrb[0].mxu0
      %2417 = vmatprep.mubr.f32.mxu0 0.0
      %2418 = vmatmul.mubr.f32.gmra.mrb[0].mxu0 %v2251
      %v2419 = vpop.f32.mrb[0].mxu0
      %v2420 = vadd.f32 0.0, %v2419
      %v2421 = vpop.f32.mrb[0].mxu0
      %2422 = vmatprep.mubr.f32.mxu0 0.0
      %2423 = vmatmul.mubr.f32.gmra.mrb[0].mxu0 %v2254
      %v2424 = vpop.f32.mrb[0].mxu0
      %v2425 = vadd.f32 0.0, %v2424
      %v2426 = vpop.f32.mrb[0].mxu0
      %2427 = vmatprep.mubr.f32.mxu0 0.0
      %2428 = vmatmul.mubr.f32.gmra.mrb[0].mxu0 %v2257
      %v2429 = vpop.f32.mrb[0].mxu0
      %v2430 = vadd.f32 0.0, %v2429
      %v2431 = vpop.f32.mrb[0].mxu0
      %2432 = vmatprep.mubr.f32.mxu0 0.0
      %2433 = vmatmul.mubr.f32.gmra.mrb[0].mxu0 %v2260
      %v2434 = vpop.f32.mrb[0].mxu0
      %v2435 = vadd.f32 0.0, %v2434
      %v2436 = vpop.f32.mrb[0].mxu0
      %2437 = vmatprep.mubr.f32.mxu0 0.0
      %2438 = vmatmul.mubr.f32.gmra.mrb[0].mxu0 %v2263
      %v2439 = vpop.f32.mrb[0].mxu0
      %v2440 = vadd.f32 0.0, %v2439
      %v2441 = vpop.f32.mrb[0].mxu0
      %2442 = vmatprep.mubr.f32.mxu0 0.0
      %2443 = vmatmul.mubr.f32.gmra.mrb[0].mxu0 %v2266
      %v2444 = vpop.f32.mrb[0].mxu0
      %v2445 = vadd.f32 0.0, %v2444
      %v2446 = vpop.f32.mrb[0].mxu0
      %2447 = vmatprep.mubr.f32.mxu0 0.0
      %2448 = vmatmul.mubr.f32.gmra.mrb[0].mxu0 %v2269
      %v2449 = vpop.f32.mrb[0].mxu0
      %v2450 = vadd.f32 0.0, %v2449
      %v2451 = vpop.f32.mrb[0].mxu0
      %2452 = vmatprep.mubr.f32.mxu0 0.0
      %2453 = vmatmul.mubr.f32.gmra.mrb[0].mxu0 %v2272
      %v2454 = vpop.f32.mrb[0].mxu0
      %v2455 = vadd.f32 0.0, %v2454
      %v2456 = vpop.f32.mrb[0].mxu0
      %2457 = vmatprep.mubr.f32.mxu0 0.0
      %2458 = vmatmul.mubr.f32.gmra.mrb[0].mxu0 %v2275
      %v2459 = vpop.f32.mrb[0].mxu0
      %v2460 = vadd.f32 0.0, %v2459
      %v2461 = vpop.f32.mrb[0].mxu0
      %2462 = vmatprep.mubr.f32.mxu0 0.0
      %2463 = vmatmul.mubr.f32.gmra.mrb[0].mxu0 %v2278
      %v2464 = vpop.f32.mrb[0].mxu0
      %v2465 = vadd.f32 0.0, %v2464
      %v2466 = vpop.f32.mrb[0].mxu0
      %2467 = vmatprep.mubr.f32.mxu0 0.0
      %2468 = vmatmul.mubr.f32.gmra.mrb[0].mxu0 %v2281
      %v2469 = vpop.f32.mrb[0].mxu0
      %v2470 = vadd.f32 0.0, %v2469
      %v2471 = vpop.f32.mrb[0].mxu0
      %2472 = vmatprep.mubr.f32.mxu0 0.0
      %2473 = vmatmul.mubr.f32.gmra.mrb[0].mxu0 %v2284
      %v2474 = vpop.f32.mrb[0].mxu0
      %v2475 = vadd.f32 0.0, %v2474
      %v2476 = vpop.f32.mrb[0].mxu0
      %2477 = vmatprep.mubr.f32.mxu0 0.0
      %2478 = vmatmul.mubr.f32.gmra.mrb[0].mxu0 %v2287
      %v2479 = vpop.f32.mrb[0].mxu0
      %v2480 = vadd.f32 0.0, %v2479
      %v2481 = vpop.f32.mrb[0].mxu0
      %2482 = vmatprep.mubr.f32.mxu0 0.0
      %2483 = vmatmul.mubr.f32.gmra.mrb[0].mxu0 %v2290
      %v2484 = vpop.f32.mrb[0].mxu0
      %v2485 = vadd.f32 0.0, %v2484
      %v2486 = vpop.f32.mrb[0].mxu0
      %2487 = vmatprep.mubr.f32.mxu0 0.0
      %2488 = vmatmul.mubr.f32.gmra.mrb[0].mxu0 %v2293
      %v2489 = vpop.f32.mrb[0].mxu0
      %v2490 = vadd.f32 0.0, %v2489
      %v2491 = vpop.f32.mrb[0].mxu0
      %2492 = vmatprep.mubr.f32.mxu0 0.0
      %2493 = vmatmul.mubr.f32.gmra.mrb[0].mxu0 %v2296
      %v2494 = vpop.f32.mrb[0].mxu0
      %v2495 = vadd.f32 0.0, %v2494
      %v2496 = vpop.f32.mrb[0].mxu0
      %2497 = vmatprep.mubr.f32.mxu0 0.0
      %2498 = vmatmul.mubr.f32.gmra.mrb[0].mxu0 %v2299
      %v2499 = vpop.f32.mrb[0].mxu0
      %v2500 = vadd.f32 0.0, %v2499
      %v2501 = vpop.f32.mrb[0].mxu0
      %2502 = vmatprep.mubr.f32.mxu0 0.0
      %2503 = vmatmul.mubr.f32.gmra.mrb[0].mxu0 %v2302
      %v2504 = vpop.f32.mrb[0].mxu0
      %v2505 = vadd.f32 0.0, %v2504
      %v2506 = vpop.f32.mrb[0].mxu0
      %2507 = vmatprep.mubr.f32.mxu0 0.0
      %2508 = vmatmul.mubr.f32.gmra.mrb[0].mxu0 %v2305
      %v2509 = vpop.f32.mrb[0].mxu0
      %v2510 = vadd.f32 0.0, %v2509
      %v2511 = vpop.f32.mrb[0].mxu0
      %2512 = vmatprep.mubr.f32.mxu0 0.0
      %2513 = vmatmul.mubr.f32.gmra.mrb[0].mxu0 %v2308
      %v2514 = vpop.f32.mrb[0].mxu0
      %v2515 = vadd.f32 0.0, %v2514
      %v2516 = vpop.f32.mrb[0].mxu0
      %2517 = vmatprep.mubr.f32.mxu0 0.0
      %2518 = vmatmul.mubr.f32.gmra.mrb[0].mxu0 %v2311
      %v2519 = vpop.f32.mrb[0].mxu0
      %v2520 = vadd.f32 0.0, %v2519
      %v2521 = vpop.f32.mrb[0].mxu0
      %2522 = vmatprep.mubr.f32.mxu0 0.0
      %2523 = vmatmul.mubr.f32.gmra.mrb[0].mxu0 %v2314
      %v2524 = vpop.f32.mrb[0].mxu0
      %v2525 = vadd.f32 0.0, %v2524
      %v2526 = vpop.f32.mrb[0].mxu0
      %2527 = vmatprep.mubr.f32.mxu0 0.0
      %2528 = vmatmul.mubr.f32.gmra.mrb[0].mxu0 %v2317
      %v2529 = vpop.f32.mrb[0].mxu0
      %v2530 = vadd.f32 0.0, %v2529
      %v2531 = vpop.f32.mrb[0].mxu0
      %2532 = vmatprep.mubr.f32.mxu0 0.0
      %2533 = vmatmul.mubr.f32.gmra.mrb[0].mxu0 %v2320
      %v2534 = vpop.f32.mrb[0].mxu0
      %v2535 = vadd.f32 0.0, %v2534
      %v2536 = vpop.f32.mrb[0].mxu0
      %2537 = vmatprep.mubr.f32.mxu0 0.0
      %2538 = vmatmul.mubr.f32.gmra.mrb[0].mxu0 %v2323
      %v2539 = vpop.f32.mrb[0].mxu0
      %v2540 = vadd.f32 0.0, %v2539
      %v2541 = vpop.f32.mrb[0].mxu0
      %2542 = vmatprep.mubr.f32.mxu0 0.0
      %2543 = vmatmul.mubr.f32.gmra.mrb[0].mxu0 %v2326
      %v2544 = vpop.f32.mrb[0].mxu0
      %v2545 = vadd.f32 0.0, %v2544
      %v2546 = vpop.f32.mrb[0].mxu0
      %2547 = vmatprep.mubr.f32.mxu0 0.0
      %2548 = vmatmul.mubr.f32.gmra.mrb[0].mxu0 %v2329
      %v2549 = vpop.f32.mrb[0].mxu0
      %v2550 = vadd.f32 0.0, %v2549
      %v2551 = vpop.f32.mrb[0].mxu0
      %2552 = vmatprep.mubr.f32.mxu0 0.0
      %2553 = vmatmul.mubr.f32.gmra.mrb[0].mxu0 %v2332
      %v2554 = vpop.f32.mrb[0].mxu0
      %v2555 = vadd.f32 0.0, %v2554
      %v2556 = vpop.f32.mrb[0].mxu0
      %2557 = vmatprep.mubr.f32.mxu0 0.0
      %2558 = vmatmul.mubr.f32.gmra.mrb[0].mxu0 %v2335
      %v2559 = vpop.f32.mrb[0].mxu0
      %v2560 = vadd.f32 0.0, %v2559
      %v2561 = vpop.f32.mrb[0].mxu0
      %2562 = vmatprep.mubr.f32.mxu0 0.0
      %2563 = vmatmul.mubr.f32.gmra.mrb[0].mxu0 %v2338
      %v2564 = vpop.f32.mrb[0].mxu0
      %v2565 = vadd.f32 0.0, %v2564
      %v2566 = vpop.f32.mrb[0].mxu0
      %2567 = vdwg.mxu0
      %v2568 = vadd.f32 %v2178, %v2410
      %v2569 = vadd.f32 %v2179, %v2415
      %v2570 = vadd.f32 %v2180, %v2420
      %v2571 = vadd.f32 %v2181, %v2425
      %v2572 = vadd.f32 %v2182, %v2430
      %v2573 = vadd.f32 %v2183, %v2435
      %v2574 = vadd.f32 %v2184, %v2440
      %v2575 = vadd.f32 %v2185, %v2445
      %v2576 = vadd.f32 %v2186, %v2450
      %v2577 = vadd.f32 %v2187, %v2455
      %v2578 = vadd.f32 %v2188, %v2460
      %v2579 = vadd.f32 %v2189, %v2465
      %v2580 = vadd.f32 %v2190, %v2470
      %v2581 = vadd.f32 %v2191, %v2475
      %v2582 = vadd.f32 %v2192, %v2480
      %v2583 = vadd.f32 %v2193, %v2485
      %v2584 = vadd.f32 %v2194, %v2490
      %v2585 = vadd.f32 %v2195, %v2495
      %v2586 = vadd.f32 %v2196, %v2500
      %v2587 = vadd.f32 %v2197, %v2505
      %v2588 = vadd.f32 %v2198, %v2510
      %v2589 = vadd.f32 %v2199, %v2515
      %v2590 = vadd.f32 %v2200, %v2520
      %v2591 = vadd.f32 %v2201, %v2525
      %v2592 = vadd.f32 %v2202, %v2530
      %v2593 = vadd.f32 %v2203, %v2535
      %v2594 = vadd.f32 %v2204, %v2540
      %v2595 = vadd.f32 %v2205, %v2545
      %v2596 = vadd.f32 %v2206, %v2550
      %v2597 = vadd.f32 %v2207, %v2555
      %v2598 = vadd.f32 %v2208, %v2560
      %v2599 = vadd.f32 %v2209, %v2565
      %s2600 = scalar_lea.vmem [#allocation2], 48
      %v2601 = vld [vmem:[%s2600] sm:$0xff]
      %v2602 = vld [vmem:[%s2600 + $0x8] sm:$0xff]
      %v2603 = vld [vmem:[%s2600 + $0x18] sm:$0xff]
      %v2604 = vld [vmem:[%s2600 + $0x20] sm:$0xff]
      %v2605 = vld [vmem:[%s2600 + $0x30] sm:$0xff]
      %v2606 = vld [vmem:[%s2600 + $0x38] sm:$0xff]
      %v2607 = vld [vmem:[%s2600 + $0x48] sm:$0xff]
      %v2608 = vld [vmem:[%s2600 + $0x50] sm:$0xff]
      %v2609 = vld [vmem:[%s2600 + $0x60] sm:$0xff]
      %v2610 = vld [vmem:[%s2600 + $0x68] sm:$0xff]
      %v2611 = vld [vmem:[%s2600 + $0x78] sm:$0xff]
      %v2612 = vld [vmem:[%s2600 + $0x80] sm:$0xff]
      %v2613 = vld [vmem:[%s2600 + $0x90] sm:$0xff]
      %v2614 = vld [vmem:[%s2600 + $0x98] sm:$0xff]
      %v2615 = vld [vmem:[%s2600 + $0xa8] sm:$0xff]
      %v2616 = vld [vmem:[%s2600 + $0xb0] sm:$0xff]
      %v2617 = vld [vmem:[%s2600 + $0xc0] sm:$0xff]
      %v2618 = vld [vmem:[%s2600 + $0xc8] sm:$0xff]
      %v2619 = vld [vmem:[%s2600 + $0xd8] sm:$0xff]
      %v2620 = vld [vmem:[%s2600 + $0xe0] sm:$0xff]
      %v2621 = vld [vmem:[%s2600 + $0xf0] sm:$0xff]
      %v2622 = vld [vmem:[%s2600 + $0xf8] sm:$0xff]
      %v2623 = vld [vmem:[%s2600 + $0x108] sm:$0xff]
      %v2624 = vld [vmem:[%s2600 + $0x110] sm:$0xff]
      %v2625 = vld [vmem:[%s2600 + $0x120] sm:$0xff]
      %v2626 = vld [vmem:[%s2600 + $0x128] sm:$0xff]
      %v2627 = vld [vmem:[%s2600 + $0x138] sm:$0xff]
      %v2628 = vld [vmem:[%s2600 + $0x140] sm:$0xff]
      %v2629 = vld [vmem:[%s2600 + $0x150] sm:$0xff]
      %v2630 = vld [vmem:[%s2600 + $0x158] sm:$0xff]
      %v2631 = vld [vmem:[%s2600 + $0x168] sm:$0xff]
      %v2632 = vld [vmem:[%s2600 + $0x170] sm:$0xff]
      %s2633 = scalar_lea.vmem %s1, 24
      %v2634 = vld [vmem:[%s2633] sm:$0xf]
      %v2636 = vsel %vm291, %v2601, 0
      %v2639 = vsel %vm291, %v2602, 0
      %v2642 = vsel %vm291, %v2603, 0
      %v2645 = vsel %vm291, %v2604, 0
      %v2648 = vsel %vm291, %v2605, 0
      %v2651 = vsel %vm291, %v2606, 0
      %v2654 = vsel %vm291, %v2607, 0
      %v2657 = vsel %vm291, %v2608, 0
      %v2660 = vsel %vm291, %v2609, 0
      %v2663 = vsel %vm291, %v2610, 0
      %v2666 = vsel %vm291, %v2611, 0
      %v2669 = vsel %vm291, %v2612, 0
      %v2672 = vsel %vm291, %v2613, 0
      %v2675 = vsel %vm291, %v2614, 0
      %v2678 = vsel %vm291, %v2615, 0
      %v2681 = vsel %vm291, %v2616, 0
      %v2684 = vsel %vm291, %v2617, 0
      %v2687 = vsel %vm291, %v2618, 0
      %v2690 = vsel %vm291, %v2619, 0
      %v2693 = vsel %vm291, %v2620, 0
      %v2696 = vsel %vm291, %v2621, 0
      %v2699 = vsel %vm291, %v2622, 0
      %v2702 = vsel %vm291, %v2623, 0
      %v2705 = vsel %vm291, %v2624, 0
      %v2708 = vsel %vm291, %v2625, 0
      %v2711 = vsel %vm291, %v2626, 0
      %v2714 = vsel %vm291, %v2627, 0
      %v2717 = vsel %vm291, %v2628, 0
      %v2720 = vsel %vm291, %v2629, 0
      %v2723 = vsel %vm291, %v2630, 0
      %v2726 = vsel %vm291, %v2631, 0
      %v2729 = vsel %vm291, %v2632, 0
      %v2732 = vsel %vm487, %v2634, 0
      %2734 = vmatprep.subr.mxu0 0.0
      %2735 = vmatpush1.msra.mxu0 %v2732
      %2736 = vmatprep.subr.mxu0 0.0
      %2737 = vmatpush1.msra.mxu0 0.0
      %2738 = vmatprep.subr.mxu0 0.0
      %2739 = vmatpush1.msra.mxu0 0.0
      %2740 = vmatprep.subr.mxu0 0.0
      %2741 = vmatpush1.msra.mxu0 0.0
      %2742 = vmatprep.subr.mxu0 0.0
      %2743 = vmatpush1.msra.mxu0 0.0
      %2744 = vmatprep.subr.mxu0 0.0
      %2745 = vmatpush1.msra.mxu0 0.0
      %2746 = vmatprep.subr.mxu0 0.0
      %2747 = vmatpush1.msra.mxu0 0.0
      %2748 = vmatprep.subr.mxu0 0.0
      %2749 = vmatpush1.msra.mxu0 0.0
      %2750 = vmatprep.subr.mxu0 0.0
      %2751 = vmatpush1.msra.mxu0 0.0
      %2752 = vmatprep.subr.mxu0 0.0
      %2753 = vmatpush1.msra.mxu0 0.0
      %2754 = vmatprep.subr.mxu0 0.0
      %2755 = vmatpush1.msra.mxu0 0.0
      %2756 = vmatprep.subr.mxu0 0.0
      %2757 = vmatpush1.msra.mxu0 0.0
      %2758 = vmatprep.subr.mxu0 0.0
      %2759 = vmatpush1.msra.mxu0 0.0
      %2760 = vmatprep.subr.mxu0 0.0
      %2761 = vmatpush1.msra.mxu0 0.0
      %2762 = vmatprep.subr.mxu0 0.0
      %2763 = vmatpush1.msra.mxu0 0.0
      %2764 = vmatprep.subr.mxu0 0.0
      %2765 = vmatpush1.msra.mxu0 0.0
      %2766 = vmatprep.subr.mxu0 0.0
      %2767 = vmatpush1.msra.mxu0 0.0
      %2768 = vmatprep.subr.mxu0 0.0
      %2769 = vmatpush1.msra.mxu0 0.0
      %2770 = vmatprep.subr.mxu0 0.0
      %2771 = vmatpush1.msra.mxu0 0.0
      %2772 = vmatprep.subr.mxu0 0.0
      %2773 = vmatpush1.msra.mxu0 0.0
      %2774 = vmatprep.subr.mxu0 0.0
      %2775 = vmatpush1.msra.mxu0 0.0
      %2776 = vmatprep.subr.mxu0 0.0
      %2777 = vmatpush1.msra.mxu0 0.0
      %2778 = vmatprep.subr.mxu0 0.0
      %2779 = vmatpush1.msra.mxu0 0.0
      %2780 = vmatprep.subr.mxu0 0.0
      %2781 = vmatpush1.msra.mxu0 0.0
      %2782 = vmatprep.subr.mxu0 0.0
      %2783 = vmatpush1.msra.mxu0 0.0
      %2784 = vmatprep.subr.mxu0 0.0
      %2785 = vmatpush1.msra.mxu0 0.0
      %2786 = vmatprep.subr.mxu0 0.0
      %2787 = vmatpush1.msra.mxu0 0.0
      %2788 = vmatprep.subr.mxu0 0.0
      %2789 = vmatpush1.msra.mxu0 0.0
      %2790 = vmatprep.subr.mxu0 0.0
      %2791 = vmatpush1.msra.mxu0 0.0
      %2792 = vmatprep.subr.mxu0 0.0
      %2793 = vmatpush1.msra.mxu0 0.0
      %2794 = vmatprep.subr.mxu0 0.0
      %2795 = vmatpush1.msra.mxu0 0.0
      %2796 = vmatprep.subr.mxu0 0.0
      %2797 = vmatpush1.msra.mxu0 0.0
      %2798 = vmatprep.mubr.f32.mxu0 0.0
      %2799 = vmatmul.mubr.f32.gmra.mrb[0].mxu0 %v2636
      %v2800 = vpop.f32.mrb[0].mxu0
      %v2801 = vadd.f32 0.0, %v2800
      %v2802 = vpop.f32.mrb[0].mxu0
      %2803 = vmatprep.mubr.f32.mxu0 0.0
      %2804 = vmatmul.mubr.f32.gmra.mrb[0].mxu0 %v2639
      %v2805 = vpop.f32.mrb[0].mxu0
      %v2806 = vadd.f32 0.0, %v2805
      %v2807 = vpop.f32.mrb[0].mxu0
      %2808 = vmatprep.mubr.f32.mxu0 0.0
      %2809 = vmatmul.mubr.f32.gmra.mrb[0].mxu0 %v2642
      %v2810 = vpop.f32.mrb[0].mxu0
      %v2811 = vadd.f32 0.0, %v2810
      %v2812 = vpop.f32.mrb[0].mxu0
      %2813 = vmatprep.mubr.f32.mxu0 0.0
      %2814 = vmatmul.mubr.f32.gmra.mrb[0].mxu0 %v2645
      %v2815 = vpop.f32.mrb[0].mxu0
      %v2816 = vadd.f32 0.0, %v2815
      %v2817 = vpop.f32.mrb[0].mxu0
      %2818 = vmatprep.mubr.f32.mxu0 0.0
      %2819 = vmatmul.mubr.f32.gmra.mrb[0].mxu0 %v2648
      %v2820 = vpop.f32.mrb[0].mxu0
      %v2821 = vadd.f32 0.0, %v2820
      %v2822 = vpop.f32.mrb[0].mxu0
      %2823 = vmatprep.mubr.f32.mxu0 0.0
      %2824 = vmatmul.mubr.f32.gmra.mrb[0].mxu0 %v2651
      %v2825 = vpop.f32.mrb[0].mxu0
      %v2826 = vadd.f32 0.0, %v2825
      %v2827 = vpop.f32.mrb[0].mxu0
      %2828 = vmatprep.mubr.f32.mxu0 0.0
      %2829 = vmatmul.mubr.f32.gmra.mrb[0].mxu0 %v2654
      %v2830 = vpop.f32.mrb[0].mxu0
      %v2831 = vadd.f32 0.0, %v2830
      %v2832 = vpop.f32.mrb[0].mxu0
      %2833 = vmatprep.mubr.f32.mxu0 0.0
      %2834 = vmatmul.mubr.f32.gmra.mrb[0].mxu0 %v2657
      %v2835 = vpop.f32.mrb[0].mxu0
      %v2836 = vadd.f32 0.0, %v2835
      %v2837 = vpop.f32.mrb[0].mxu0
      %2838 = vmatprep.mubr.f32.mxu0 0.0
      %2839 = vmatmul.mubr.f32.gmra.mrb[0].mxu0 %v2660
      %v2840 = vpop.f32.mrb[0].mxu0
      %v2841 = vadd.f32 0.0, %v2840
      %v2842 = vpop.f32.mrb[0].mxu0
      %2843 = vmatprep.mubr.f32.mxu0 0.0
      %2844 = vmatmul.mubr.f32.gmra.mrb[0].mxu0 %v2663
      %v2845 = vpop.f32.mrb[0].mxu0
      %v2846 = vadd.f32 0.0, %v2845
      %v2847 = vpop.f32.mrb[0].mxu0
      %2848 = vmatprep.mubr.f32.mxu0 0.0
      %2849 = vmatmul.mubr.f32.gmra.mrb[0].mxu0 %v2666
      %v2850 = vpop.f32.mrb[0].mxu0
      %v2851 = vadd.f32 0.0, %v2850
      %v2852 = vpop.f32.mrb[0].mxu0
      %2853 = vmatprep.mubr.f32.mxu0 0.0
      %2854 = vmatmul.mubr.f32.gmra.mrb[0].mxu0 %v2669
      %v2855 = vpop.f32.mrb[0].mxu0
      %v2856 = vadd.f32 0.0, %v2855
      %v2857 = vpop.f32.mrb[0].mxu0
      %2858 = vmatprep.mubr.f32.mxu0 0.0
      %2859 = vmatmul.mubr.f32.gmra.mrb[0].mxu0 %v2672
      %v2860 = vpop.f32.mrb[0].mxu0
      %v2861 = vadd.f32 0.0, %v2860
      %v2862 = vpop.f32.mrb[0].mxu0
      %2863 = vmatprep.mubr.f32.mxu0 0.0
      %2864 = vmatmul.mubr.f32.gmra.mrb[0].mxu0 %v2675
      %v2865 = vpop.f32.mrb[0].mxu0
      %v2866 = vadd.f32 0.0, %v2865
      %v2867 = vpop.f32.mrb[0].mxu0
      %2868 = vmatprep.mubr.f32.mxu0 0.0
      %2869 = vmatmul.mubr.f32.gmra.mrb[0].mxu0 %v2678
      %v2870 = vpop.f32.mrb[0].mxu0
      %v2871 = vadd.f32 0.0, %v2870
      %v2872 = vpop.f32.mrb[0].mxu0
      %2873 = vmatprep.mubr.f32.mxu0 0.0
      %2874 = vmatmul.mubr.f32.gmra.mrb[0].mxu0 %v2681
      %v2875 = vpop.f32.mrb[0].mxu0
      %v2876 = vadd.f32 0.0, %v2875
      %v2877 = vpop.f32.mrb[0].mxu0
      %2878 = vmatprep.mubr.f32.mxu0 0.0
      %2879 = vmatmul.mubr.f32.gmra.mrb[0].mxu0 %v2684
      %v2880 = vpop.f32.mrb[0].mxu0
      %v2881 = vadd.f32 0.0, %v2880
      %v2882 = vpop.f32.mrb[0].mxu0
      %2883 = vmatprep.mubr.f32.mxu0 0.0
      %2884 = vmatmul.mubr.f32.gmra.mrb[0].mxu0 %v2687
      %v2885 = vpop.f32.mrb[0].mxu0
      %v2886 = vadd.f32 0.0, %v2885
      %v2887 = vpop.f32.mrb[0].mxu0
      %2888 = vmatprep.mubr.f32.mxu0 0.0
      %2889 = vmatmul.mubr.f32.gmra.mrb[0].mxu0 %v2690
      %v2890 = vpop.f32.mrb[0].mxu0
      %v2891 = vadd.f32 0.0, %v2890
      %v2892 = vpop.f32.mrb[0].mxu0
      %2893 = vmatprep.mubr.f32.mxu0 0.0
      %2894 = vmatmul.mubr.f32.gmra.mrb[0].mxu0 %v2693
      %v2895 = vpop.f32.mrb[0].mxu0
      %v2896 = vadd.f32 0.0, %v2895
      %v2897 = vpop.f32.mrb[0].mxu0
      %2898 = vmatprep.mubr.f32.mxu0 0.0
      %2899 = vmatmul.mubr.f32.gmra.mrb[0].mxu0 %v2696
      %v2900 = vpop.f32.mrb[0].mxu0
      %v2901 = vadd.f32 0.0, %v2900
      %v2902 = vpop.f32.mrb[0].mxu0
      %2903 = vmatprep.mubr.f32.mxu0 0.0
      %2904 = vmatmul.mubr.f32.gmra.mrb[0].mxu0 %v2699
      %v2905 = vpop.f32.mrb[0].mxu0
      %v2906 = vadd.f32 0.0, %v2905
      %v2907 = vpop.f32.mrb[0].mxu0
      %2908 = vmatprep.mubr.f32.mxu0 0.0
      %2909 = vmatmul.mubr.f32.gmra.mrb[0].mxu0 %v2702
      %v2910 = vpop.f32.mrb[0].mxu0
      %v2911 = vadd.f32 0.0, %v2910
      %v2912 = vpop.f32.mrb[0].mxu0
      %2913 = vmatprep.mubr.f32.mxu0 0.0
      %2914 = vmatmul.mubr.f32.gmra.mrb[0].mxu0 %v2705
      %v2915 = vpop.f32.mrb[0].mxu0
      %v2916 = vadd.f32 0.0, %v2915
      %v2917 = vpop.f32.mrb[0].mxu0
      %2918 = vmatprep.mubr.f32.mxu0 0.0
      %2919 = vmatmul.mubr.f32.gmra.mrb[0].mxu0 %v2708
      %v2920 = vpop.f32.mrb[0].mxu0
      %v2921 = vadd.f32 0.0, %v2920
      %v2922 = vpop.f32.mrb[0].mxu0
      %2923 = vmatprep.mubr.f32.mxu0 0.0
      %2924 = vmatmul.mubr.f32.gmra.mrb[0].mxu0 %v2711
      %v2925 = vpop.f32.mrb[0].mxu0
      %v2926 = vadd.f32 0.0, %v2925
      %v2927 = vpop.f32.mrb[0].mxu0
      %2928 = vmatprep.mubr.f32.mxu0 0.0
      %2929 = vmatmul.mubr.f32.gmra.mrb[0].mxu0 %v2714
      %v2930 = vpop.f32.mrb[0].mxu0
      %v2931 = vadd.f32 0.0, %v2930
      %v2932 = vpop.f32.mrb[0].mxu0
      %2933 = vmatprep.mubr.f32.mxu0 0.0
      %2934 = vmatmul.mubr.f32.gmra.mrb[0].mxu0 %v2717
      %v2935 = vpop.f32.mrb[0].mxu0
      %v2936 = vadd.f32 0.0, %v2935
      %v2937 = vpop.f32.mrb[0].mxu0
      %2938 = vmatprep.mubr.f32.mxu0 0.0
      %2939 = vmatmul.mubr.f32.gmra.mrb[0].mxu0 %v2720
      %v2940 = vpop.f32.mrb[0].mxu0
      %v2941 = vadd.f32 0.0, %v2940
      %v2942 = vpop.f32.mrb[0].mxu0
      %2943 = vmatprep.mubr.f32.mxu0 0.0
      %2944 = vmatmul.mubr.f32.gmra.mrb[0].mxu0 %v2723
      %v2945 = vpop.f32.mrb[0].mxu0
      %v2946 = vadd.f32 0.0, %v2945
      %v2947 = vpop.f32.mrb[0].mxu0
      %2948 = vmatprep.mubr.f32.mxu0 0.0
      %2949 = vmatmul.mubr.f32.gmra.mrb[0].mxu0 %v2726
      %v2950 = vpop.f32.mrb[0].mxu0
      %v2951 = vadd.f32 0.0, %v2950
      %v2952 = vpop.f32.mrb[0].mxu0
      %2953 = vmatprep.mubr.f32.mxu0 0.0
      %2954 = vmatmul.mubr.f32.gmra.mrb[0].mxu0 %v2729
      %v2955 = vpop.f32.mrb[0].mxu0
      %v2956 = vadd.f32 0.0, %v2955
      %v2957 = vpop.f32.mrb[0].mxu0
      %2958 = vdwg.mxu0
      %v2959 = vadd.f32 %v2568, %v2801
      %v2960 = vadd.f32 %v2569, %v2806
      %v2961 = vadd.f32 %v2570, %v2811
      %v2962 = vadd.f32 %v2571, %v2816
      %v2963 = vadd.f32 %v2572, %v2821
      %v2964 = vadd.f32 %v2573, %v2826
      %v2965 = vadd.f32 %v2574, %v2831
      %v2966 = vadd.f32 %v2575, %v2836
      %v2967 = vadd.f32 %v2576, %v2841
      %v2968 = vadd.f32 %v2577, %v2846
      %v2969 = vadd.f32 %v2578, %v2851
      %v2970 = vadd.f32 %v2579, %v2856
      %v2971 = vadd.f32 %v2580, %v2861
      %v2972 = vadd.f32 %v2581, %v2866
      %v2973 = vadd.f32 %v2582, %v2871
      %v2974 = vadd.f32 %v2583, %v2876
      %v2975 = vadd.f32 %v2584, %v2881
      %v2976 = vadd.f32 %v2585, %v2886
      %v2977 = vadd.f32 %v2586, %v2891
      %v2978 = vadd.f32 %v2587, %v2896
      %v2979 = vadd.f32 %v2588, %v2901
      %v2980 = vadd.f32 %v2589, %v2906
      %v2981 = vadd.f32 %v2590, %v2911
      %v2982 = vadd.f32 %v2591, %v2916
      %v2983 = vadd.f32 %v2592, %v2921
      %v2984 = vadd.f32 %v2593, %v2926
      %v2985 = vadd.f32 %v2594, %v2931
      %v2986 = vadd.f32 %v2595, %v2936
      %v2987 = vadd.f32 %v2596, %v2941
      %v2988 = vadd.f32 %v2597, %v2946
      %v2989 = vadd.f32 %v2598, %v2951
      %v2990 = vadd.f32 %v2599, %v2956
      %v2991 = vld [vmem:[%s2600 + $0x1] sm:$0xff]
      %v2992 = vld [vmem:[%s2600 + $0x9] sm:$0xff]
      %v2993 = vld [vmem:[%s2600 + $0x19] sm:$0xff]
      %v2994 = vld [vmem:[%s2600 + $0x21] sm:$0xff]
      %v2995 = vld [vmem:[%s2600 + $0x31] sm:$0xff]
      %v2996 = vld [vmem:[%s2600 + $0x39] sm:$0xff]
      %v2997 = vld [vmem:[%s2600 + $0x49] sm:$0xff]
      %v2998 = vld [vmem:[%s2600 + $0x51] sm:$0xff]
      %v2999 = vld [vmem:[%s2600 + $0x61] sm:$0xff]
      %v3000 = vld [vmem:[%s2600 + $0x69] sm:$0xff]
      %v3001 = vld [vmem:[%s2600 + $0x79] sm:$0xff]
      %v3002 = vld [vmem:[%s2600 + $0x81] sm:$0xff]
      %v3003 = vld [vmem:[%s2600 + $0x91] sm:$0xff]
      %v3004 = vld [vmem:[%s2600 + $0x99] sm:$0xff]
      %v3005 = vld [vmem:[%s2600 + $0xa9] sm:$0xff]
      %v3006 = vld [vmem:[%s2600 + $0xb1] sm:$0xff]
      %v3007 = vld [vmem:[%s2600 + $0xc1] sm:$0xff]
      %v3008 = vld [vmem:[%s2600 + $0xc9] sm:$0xff]
      %v3009 = vld [vmem:[%s2600 + $0xd9] sm:$0xff]
      %v3010 = vld [vmem:[%s2600 + $0xe1] sm:$0xff]
      %v3011 = vld [vmem:[%s2600 + $0xf1] sm:$0xff]
      %v3012 = vld [vmem:[%s2600 + $0xf9] sm:$0xff]
      %v3013 = vld [vmem:[%s2600 + $0x109] sm:$0xff]
      %v3014 = vld [vmem:[%s2600 + $0x111] sm:$0xff]
      %v3015 = vld [vmem:[%s2600 + $0x121] sm:$0xff]
      %v3016 = vld [vmem:[%s2600 + $0x129] sm:$0xff]
      %v3017 = vld [vmem:[%s2600 + $0x139] sm:$0xff]
      %v3018 = vld [vmem:[%s2600 + $0x141] sm:$0xff]
      %v3019 = vld [vmem:[%s2600 + $0x151] sm:$0xff]
      %v3020 = vld [vmem:[%s2600 + $0x159] sm:$0xff]
      %v3021 = vld [vmem:[%s2600 + $0x169] sm:$0xff]
      %v3022 = vld [vmem:[%s2600 + $0x171] sm:$0xff]
      %s3023 = scalar_lea.vmem %s1, 28
      %v3024 = vld [vmem:[%s3023] sm:$0xf]
      %v3026 = vsel %vm291, %v2991, 0
      %v3029 = vsel %vm291, %v2992, 0
      %v3032 = vsel %vm291, %v2993, 0
      %v3035 = vsel %vm291, %v2994, 0
      %v3038 = vsel %vm291, %v2995, 0
      %v3041 = vsel %vm291, %v2996, 0
      %v3044 = vsel %vm291, %v2997, 0
      %v3047 = vsel %vm291, %v2998, 0
      %v3050 = vsel %vm291, %v2999, 0
      %v3053 = vsel %vm291, %v3000, 0
      %v3056 = vsel %vm291, %v3001, 0
      %v3059 = vsel %vm291, %v3002, 0
      %v3062 = vsel %vm291, %v3003, 0
      %v3065 = vsel %vm291, %v3004, 0
      %v3068 = vsel %vm291, %v3005, 0
      %v3071 = vsel %vm291, %v3006, 0
      %v3074 = vsel %vm291, %v3007, 0
      %v3077 = vsel %vm291, %v3008, 0
      %v3080 = vsel %vm291, %v3009, 0
      %v3083 = vsel %vm291, %v3010, 0
      %v3086 = vsel %vm291, %v3011, 0
      %v3089 = vsel %vm291, %v3012, 0
      %v3092 = vsel %vm291, %v3013, 0
      %v3095 = vsel %vm291, %v3014, 0
      %v3098 = vsel %vm291, %v3015, 0
      %v3101 = vsel %vm291, %v3016, 0
      %v3104 = vsel %vm291, %v3017, 0
      %v3107 = vsel %vm291, %v3018, 0
      %v3110 = vsel %vm291, %v3019, 0
      %v3113 = vsel %vm291, %v3020, 0
      %v3116 = vsel %vm291, %v3021, 0
      %v3119 = vsel %vm291, %v3022, 0
      %v3122 = vsel %vm487, %v3024, 0
      %3124 = vmatprep.subr.mxu0 0.0
      %3125 = vmatpush1.msra.mxu0 %v3122
      %3126 = vmatprep.subr.mxu0 0.0
      %3127 = vmatpush1.msra.mxu0 0.0
      %3128 = vmatprep.subr.mxu0 0.0
      %3129 = vmatpush1.msra.mxu0 0.0
      %3130 = vmatprep.subr.mxu0 0.0
      %3131 = vmatpush1.msra.mxu0 0.0
      %3132 = vmatprep.subr.mxu0 0.0
      %3133 = vmatpush1.msra.mxu0 0.0
      %3134 = vmatprep.subr.mxu0 0.0
      %3135 = vmatpush1.msra.mxu0 0.0
      %3136 = vmatprep.subr.mxu0 0.0
      %3137 = vmatpush1.msra.mxu0 0.0
      %3138 = vmatprep.subr.mxu0 0.0
      %3139 = vmatpush1.msra.mxu0 0.0
      %3140 = vmatprep.subr.mxu0 0.0
      %3141 = vmatpush1.msra.mxu0 0.0
      %3142 = vmatprep.subr.mxu0 0.0
      %3143 = vmatpush1.msra.mxu0 0.0
      %3144 = vmatprep.subr.mxu0 0.0
      %3145 = vmatpush1.msra.mxu0 0.0
      %3146 = vmatprep.subr.mxu0 0.0
      %3147 = vmatpush1.msra.mxu0 0.0
      %3148 = vmatprep.subr.mxu0 0.0
      %3149 = vmatpush1.msra.mxu0 0.0
      %3150 = vmatprep.subr.mxu0 0.0
      %3151 = vmatpush1.msra.mxu0 0.0
      %3152 = vmatprep.subr.mxu0 0.0
      %3153 = vmatpush1.msra.mxu0 0.0
      %3154 = vmatprep.subr.mxu0 0.0
      %3155 = vmatpush1.msra.mxu0 0.0
      %3156 = vmatprep.subr.mxu0 0.0
      %3157 = vmatpush1.msra.mxu0 0.0
      %3158 = vmatprep.subr.mxu0 0.0
      %3159 = vmatpush1.msra.mxu0 0.0
      %3160 = vmatprep.subr.mxu0 0.0
      %3161 = vmatpush1.msra.mxu0 0.0
      %3162 = vmatprep.subr.mxu0 0.0
      %3163 = vmatpush1.msra.mxu0 0.0
      %3164 = vmatprep.subr.mxu0 0.0
      %3165 = vmatpush1.msra.mxu0 0.0
      %3166 = vmatprep.subr.mxu0 0.0
      %3167 = vmatpush1.msra.mxu0 0.0
      %3168 = vmatprep.subr.mxu0 0.0
      %3169 = vmatpush1.msra.mxu0 0.0
      %3170 = vmatprep.subr.mxu0 0.0
      %3171 = vmatpush1.msra.mxu0 0.0
      %3172 = vmatprep.subr.mxu0 0.0
      %3173 = vmatpush1.msra.mxu0 0.0
      %3174 = vmatprep.subr.mxu0 0.0
      %3175 = vmatpush1.msra.mxu0 0.0
      %3176 = vmatprep.subr.mxu0 0.0
      %3177 = vmatpush1.msra.mxu0 0.0
      %3178 = vmatprep.subr.mxu0 0.0
      %3179 = vmatpush1.msra.mxu0 0.0
      %3180 = vmatprep.subr.mxu0 0.0
      %3181 = vmatpush1.msra.mxu0 0.0
      %3182 = vmatprep.subr.mxu0 0.0
      %3183 = vmatpush1.msra.mxu0 0.0
      %3184 = vmatprep.subr.mxu0 0.0
      %3185 = vmatpush1.msra.mxu0 0.0
      %3186 = vmatprep.subr.mxu0 0.0
      %3187 = vmatpush1.msra.mxu0 0.0
      %3188 = vmatprep.mubr.f32.mxu0 0.0
      %3189 = vmatmul.mubr.f32.gmra.mrb[0].mxu0 %v3026
      %v3190 = vpop.f32.mrb[0].mxu0
      %v3191 = vadd.f32 0.0, %v3190
      %v3192 = vpop.f32.mrb[0].mxu0
      %3193 = vmatprep.mubr.f32.mxu0 0.0
      %3194 = vmatmul.mubr.f32.gmra.mrb[0].mxu0 %v3029
      %v3195 = vpop.f32.mrb[0].mxu0
      %v3196 = vadd.f32 0.0, %v3195
      %v3197 = vpop.f32.mrb[0].mxu0
      %3198 = vmatprep.mubr.f32.mxu0 0.0
      %3199 = vmatmul.mubr.f32.gmra.mrb[0].mxu0 %v3032
      %v3200 = vpop.f32.mrb[0].mxu0
      %v3201 = vadd.f32 0.0, %v3200
      %v3202 = vpop.f32.mrb[0].mxu0
      %3203 = vmatprep.mubr.f32.mxu0 0.0
      %3204 = vmatmul.mubr.f32.gmra.mrb[0].mxu0 %v3035
      %v3205 = vpop.f32.mrb[0].mxu0
      %v3206 = vadd.f32 0.0, %v3205
      %v3207 = vpop.f32.mrb[0].mxu0
      %3208 = vmatprep.mubr.f32.mxu0 0.0
      %3209 = vmatmul.mubr.f32.gmra.mrb[0].mxu0 %v3038
      %v3210 = vpop.f32.mrb[0].mxu0
      %v3211 = vadd.f32 0.0, %v3210
      %v3212 = vpop.f32.mrb[0].mxu0
      %3213 = vmatprep.mubr.f32.mxu0 0.0
      %3214 = vmatmul.mubr.f32.gmra.mrb[0].mxu0 %v3041
      %v3215 = vpop.f32.mrb[0].mxu0
      %v3216 = vadd.f32 0.0, %v3215
      %v3217 = vpop.f32.mrb[0].mxu0
      %3218 = vmatprep.mubr.f32.mxu0 0.0
      %3219 = vmatmul.mubr.f32.gmra.mrb[0].mxu0 %v3044
      %v3220 = vpop.f32.mrb[0].mxu0
      %v3221 = vadd.f32 0.0, %v3220
      %v3222 = vpop.f32.mrb[0].mxu0
      %3223 = vmatprep.mubr.f32.mxu0 0.0
      %3224 = vmatmul.mubr.f32.gmra.mrb[0].mxu0 %v3047
      %v3225 = vpop.f32.mrb[0].mxu0
      %v3226 = vadd.f32 0.0, %v3225
      %v3227 = vpop.f32.mrb[0].mxu0
      %3228 = vmatprep.mubr.f32.mxu0 0.0
      %3229 = vmatmul.mubr.f32.gmra.mrb[0].mxu0 %v3050
      %v3230 = vpop.f32.mrb[0].mxu0
      %v3231 = vadd.f32 0.0, %v3230
      %v3232 = vpop.f32.mrb[0].mxu0
      %3233 = vmatprep.mubr.f32.mxu0 0.0
      %3234 = vmatmul.mubr.f32.gmra.mrb[0].mxu0 %v3053
      %v3235 = vpop.f32.mrb[0].mxu0
      %v3236 = vadd.f32 0.0, %v3235
      %v3237 = vpop.f32.mrb[0].mxu0
      %3238 = vmatprep.mubr.f32.mxu0 0.0
      %3239 = vmatmul.mubr.f32.gmra.mrb[0].mxu0 %v3056
      %v3240 = vpop.f32.mrb[0].mxu0
      %v3241 = vadd.f32 0.0, %v3240
      %v3242 = vpop.f32.mrb[0].mxu0
      %3243 = vmatprep.mubr.f32.mxu0 0.0
      %3244 = vmatmul.mubr.f32.gmra.mrb[0].mxu0 %v3059
      %v3245 = vpop.f32.mrb[0].mxu0
      %v3246 = vadd.f32 0.0, %v3245
      %v3247 = vpop.f32.mrb[0].mxu0
      %3248 = vmatprep.mubr.f32.mxu0 0.0
      %3249 = vmatmul.mubr.f32.gmra.mrb[0].mxu0 %v3062
      %v3250 = vpop.f32.mrb[0].mxu0
      %v3251 = vadd.f32 0.0, %v3250
      %v3252 = vpop.f32.mrb[0].mxu0
      %3253 = vmatprep.mubr.f32.mxu0 0.0
      %3254 = vmatmul.mubr.f32.gmra.mrb[0].mxu0 %v3065
      %v3255 = vpop.f32.mrb[0].mxu0
      %v3256 = vadd.f32 0.0, %v3255
      %v3257 = vpop.f32.mrb[0].mxu0
      %3258 = vmatprep.mubr.f32.mxu0 0.0
      %3259 = vmatmul.mubr.f32.gmra.mrb[0].mxu0 %v3068
      %v3260 = vpop.f32.mrb[0].mxu0
      %v3261 = vadd.f32 0.0, %v3260
      %v3262 = vpop.f32.mrb[0].mxu0
      %3263 = vmatprep.mubr.f32.mxu0 0.0
      %3264 = vmatmul.mubr.f32.gmra.mrb[0].mxu0 %v3071
      %v3265 = vpop.f32.mrb[0].mxu0
      %v3266 = vadd.f32 0.0, %v3265
      %v3267 = vpop.f32.mrb[0].mxu0
      %3268 = vmatprep.mubr.f32.mxu0 0.0
      %3269 = vmatmul.mubr.f32.gmra.mrb[0].mxu0 %v3074
      %v3270 = vpop.f32.mrb[0].mxu0
      %v3271 = vadd.f32 0.0, %v3270
      %v3272 = vpop.f32.mrb[0].mxu0
      %3273 = vmatprep.mubr.f32.mxu0 0.0
      %3274 = vmatmul.mubr.f32.gmra.mrb[0].mxu0 %v3077
      %v3275 = vpop.f32.mrb[0].mxu0
      %v3276 = vadd.f32 0.0, %v3275
      %v3277 = vpop.f32.mrb[0].mxu0
      %3278 = vmatprep.mubr.f32.mxu0 0.0
      %3279 = vmatmul.mubr.f32.gmra.mrb[0].mxu0 %v3080
      %v3280 = vpop.f32.mrb[0].mxu0
      %v3281 = vadd.f32 0.0, %v3280
      %v3282 = vpop.f32.mrb[0].mxu0
      %3283 = vmatprep.mubr.f32.mxu0 0.0
      %3284 = vmatmul.mubr.f32.gmra.mrb[0].mxu0 %v3083
      %v3285 = vpop.f32.mrb[0].mxu0
      %v3286 = vadd.f32 0.0, %v3285
      %v3287 = vpop.f32.mrb[0].mxu0
      %3288 = vmatprep.mubr.f32.mxu0 0.0
      %3289 = vmatmul.mubr.f32.gmra.mrb[0].mxu0 %v3086
      %v3290 = vpop.f32.mrb[0].mxu0
      %v3291 = vadd.f32 0.0, %v3290
      %v3292 = vpop.f32.mrb[0].mxu0
      %3293 = vmatprep.mubr.f32.mxu0 0.0
      %3294 = vmatmul.mubr.f32.gmra.mrb[0].mxu0 %v3089
      %v3295 = vpop.f32.mrb[0].mxu0
      %v3296 = vadd.f32 0.0, %v3295
      %v3297 = vpop.f32.mrb[0].mxu0
      %3298 = vmatprep.mubr.f32.mxu0 0.0
      %3299 = vmatmul.mubr.f32.gmra.mrb[0].mxu0 %v3092
      %v3300 = vpop.f32.mrb[0].mxu0
      %v3301 = vadd.f32 0.0, %v3300
      %v3302 = vpop.f32.mrb[0].mxu0
      %3303 = vmatprep.mubr.f32.mxu0 0.0
      %3304 = vmatmul.mubr.f32.gmra.mrb[0].mxu0 %v3095
      %v3305 = vpop.f32.mrb[0].mxu0
      %v3306 = vadd.f32 0.0, %v3305
      %v3307 = vpop.f32.mrb[0].mxu0
      %3308 = vmatprep.mubr.f32.mxu0 0.0
      %3309 = vmatmul.mubr.f32.gmra.mrb[0].mxu0 %v3098
      %v3310 = vpop.f32.mrb[0].mxu0
      %v3311 = vadd.f32 0.0, %v3310
      %v3312 = vpop.f32.mrb[0].mxu0
      %3313 = vmatprep.mubr.f32.mxu0 0.0
      %3314 = vmatmul.mubr.f32.gmra.mrb[0].mxu0 %v3101
      %v3315 = vpop.f32.mrb[0].mxu0
      %v3316 = vadd.f32 0.0, %v3315
      %v3317 = vpop.f32.mrb[0].mxu0
      %3318 = vmatprep.mubr.f32.mxu0 0.0
      %3319 = vmatmul.mubr.f32.gmra.mrb[0].mxu0 %v3104
      %v3320 = vpop.f32.mrb[0].mxu0
      %v3321 = vadd.f32 0.0, %v3320
      %v3322 = vpop.f32.mrb[0].mxu0
      %3323 = vmatprep.mubr.f32.mxu0 0.0
      %3324 = vmatmul.mubr.f32.gmra.mrb[0].mxu0 %v3107
      %v3325 = vpop.f32.mrb[0].mxu0
      %v3326 = vadd.f32 0.0, %v3325
      %v3327 = vpop.f32.mrb[0].mxu0
      %3328 = vmatprep.mubr.f32.mxu0 0.0
      %3329 = vmatmul.mubr.f32.gmra.mrb[0].mxu0 %v3110
      %v3330 = vpop.f32.mrb[0].mxu0
      %v3331 = vadd.f32 0.0, %v3330
      %v3332 = vpop.f32.mrb[0].mxu0
      %3333 = vmatprep.mubr.f32.mxu0 0.0
      %3334 = vmatmul.mubr.f32.gmra.mrb[0].mxu0 %v3113
      %v3335 = vpop.f32.mrb[0].mxu0
      %v3336 = vadd.f32 0.0, %v3335
      %v3337 = vpop.f32.mrb[0].mxu0
      %3338 = vmatprep.mubr.f32.mxu0 0.0
      %3339 = vmatmul.mubr.f32.gmra.mrb[0].mxu0 %v3116
      %v3340 = vpop.f32.mrb[0].mxu0
      %v3341 = vadd.f32 0.0, %v3340
      %v3342 = vpop.f32.mrb[0].mxu0
      %3343 = vmatprep.mubr.f32.mxu0 0.0
      %3344 = vmatmul.mubr.f32.gmra.mrb[0].mxu0 %v3119
      %v3345 = vpop.f32.mrb[0].mxu0
      %v3346 = vadd.f32 0.0, %v3345
      %v3347 = vpop.f32.mrb[0].mxu0
      %3348 = vdwg.mxu0
      %v3349 = vadd.f32 %v2959, %v3191
      %v3350 = vadd.f32 %v2960, %v3196
      %v3351 = vadd.f32 %v2961, %v3201
      %v3352 = vadd.f32 %v2962, %v3206
      %v3353 = vadd.f32 %v2963, %v3211
      %v3354 = vadd.f32 %v2964, %v3216
      %v3355 = vadd.f32 %v2965, %v3221
      %v3356 = vadd.f32 %v2966, %v3226
      %v3357 = vadd.f32 %v2967, %v3231
      %v3358 = vadd.f32 %v2968, %v3236
      %v3359 = vadd.f32 %v2969, %v3241
      %v3360 = vadd.f32 %v2970, %v3246
      %v3361 = vadd.f32 %v2971, %v3251
      %v3362 = vadd.f32 %v2972, %v3256
      %v3363 = vadd.f32 %v2973, %v3261
      %v3364 = vadd.f32 %v2974, %v3266
      %v3365 = vadd.f32 %v2975, %v3271
      %v3366 = vadd.f32 %v2976, %v3276
      %v3367 = vadd.f32 %v2977, %v3281
      %v3368 = vadd.f32 %v2978, %v3286
      %v3369 = vadd.f32 %v2979, %v3291
      %v3370 = vadd.f32 %v2980, %v3296
      %v3371 = vadd.f32 %v2981, %v3301
      %v3372 = vadd.f32 %v2982, %v3306
      %v3373 = vadd.f32 %v2983, %v3311
      %v3374 = vadd.f32 %v2984, %v3316
      %v3375 = vadd.f32 %v2985, %v3321
      %v3376 = vadd.f32 %v2986, %v3326
      %v3377 = vadd.f32 %v2987, %v3331
      %v3378 = vadd.f32 %v2988, %v3336
      %v3379 = vadd.f32 %v2989, %v3341
      %v3380 = vadd.f32 %v2990, %v3346
      %v3381 = vld [vmem:[%s2600 + $0x2] sm:$0xff]
      %v3382 = vld [vmem:[%s2600 + $0xa] sm:$0xff]
      %v3383 = vld [vmem:[%s2600 + $0x1a] sm:$0xff]
      %v3384 = vld [vmem:[%s2600 + $0x22] sm:$0xff]
      %v3385 = vld [vmem:[%s2600 + $0x32] sm:$0xff]
      %v3386 = vld [vmem:[%s2600 + $0x3a] sm:$0xff]
      %v3387 = vld [vmem:[%s2600 + $0x4a] sm:$0xff]
      %v3388 = vld [vmem:[%s2600 + $0x52] sm:$0xff]
      %v3389 = vld [vmem:[%s2600 + $0x62] sm:$0xff]
      %v3390 = vld [vmem:[%s2600 + $0x6a] sm:$0xff]
      %v3391 = vld [vmem:[%s2600 + $0x7a] sm:$0xff]
      %v3392 = vld [vmem:[%s2600 + $0x82] sm:$0xff]
      %v3393 = vld [vmem:[%s2600 + $0x92] sm:$0xff]
      %v3394 = vld [vmem:[%s2600 + $0x9a] sm:$0xff]
      %v3395 = vld [vmem:[%s2600 + $0xaa] sm:$0xff]
      %v3396 = vld [vmem:[%s2600 + $0xb2] sm:$0xff]
      %v3397 = vld [vmem:[%s2600 + $0xc2] sm:$0xff]
      %v3398 = vld [vmem:[%s2600 + $0xca] sm:$0xff]
      %v3399 = vld [vmem:[%s2600 + $0xda] sm:$0xff]
      %v3400 = vld [vmem:[%s2600 + $0xe2] sm:$0xff]
      %v3401 = vld [vmem:[%s2600 + $0xf2] sm:$0xff]
      %v3402 = vld [vmem:[%s2600 + $0xfa] sm:$0xff]
      %v3403 = vld [vmem:[%s2600 + $0x10a] sm:$0xff]
      %v3404 = vld [vmem:[%s2600 + $0x112] sm:$0xff]
      %v3405 = vld [vmem:[%s2600 + $0x122] sm:$0xff]
      %v3406 = vld [vmem:[%s2600 + $0x12a] sm:$0xff]
      %v3407 = vld [vmem:[%s2600 + $0x13a] sm:$0xff]
      %v3408 = vld [vmem:[%s2600 + $0x142] sm:$0xff]
      %v3409 = vld [vmem:[%s2600 + $0x152] sm:$0xff]
      %v3410 = vld [vmem:[%s2600 + $0x15a] sm:$0xff]
      %v3411 = vld [vmem:[%s2600 + $0x16a] sm:$0xff]
      %v3412 = vld [vmem:[%s2600 + $0x172] sm:$0xff]
      %s3413 = scalar_lea.vmem %s1, 32
      %v3414 = vld [vmem:[%s3413] sm:$0xf]
      %v3416 = vsel %vm291, %v3381, 0
      %v3419 = vsel %vm291, %v3382, 0
      %v3422 = vsel %vm291, %v3383, 0
      %v3425 = vsel %vm291, %v3384, 0
      %v3428 = vsel %vm291, %v3385, 0
      %v3431 = vsel %vm291, %v3386, 0
      %v3434 = vsel %vm291, %v3387, 0
      %v3437 = vsel %vm291, %v3388, 0
      %v3440 = vsel %vm291, %v3389, 0
      %v3443 = vsel %vm291, %v3390, 0
      %v3446 = vsel %vm291, %v3391, 0
      %v3449 = vsel %vm291, %v3392, 0
      %v3452 = vsel %vm291, %v3393, 0
      %v3455 = vsel %vm291, %v3394, 0
      %v3458 = vsel %vm291, %v3395, 0
      %v3461 = vsel %vm291, %v3396, 0
      %v3464 = vsel %vm291, %v3397, 0
      %v3467 = vsel %vm291, %v3398, 0
      %v3470 = vsel %vm291, %v3399, 0
      %v3473 = vsel %vm291, %v3400, 0
      %v3476 = vsel %vm291, %v3401, 0
      %v3479 = vsel %vm291, %v3402, 0
      %v3482 = vsel %vm291, %v3403, 0
      %v3485 = vsel %vm291, %v3404, 0
      %v3488 = vsel %vm291, %v3405, 0
      %v3491 = vsel %vm291, %v3406, 0
      %v3494 = vsel %vm291, %v3407, 0
      %v3497 = vsel %vm291, %v3408, 0
      %v3500 = vsel %vm291, %v3409, 0
      %v3503 = vsel %vm291, %v3410, 0
      %v3506 = vsel %vm291, %v3411, 0
      %v3509 = vsel %vm291, %v3412, 0
      %v3512 = vsel %vm487, %v3414, 0
      %3514 = vmatprep.subr.mxu0 0.0
      %3515 = vmatpush1.msra.mxu0 %v3512
      %3516 = vmatprep.subr.mxu0 0.0
      %3517 = vmatpush1.msra.mxu0 0.0
      %3518 = vmatprep.subr.mxu0 0.0
      %3519 = vmatpush1.msra.mxu0 0.0
      %3520 = vmatprep.subr.mxu0 0.0
      %3521 = vmatpush1.msra.mxu0 0.0
      %3522 = vmatprep.subr.mxu0 0.0
      %3523 = vmatpush1.msra.mxu0 0.0
      %3524 = vmatprep.subr.mxu0 0.0
      %3525 = vmatpush1.msra.mxu0 0.0
      %3526 = vmatprep.subr.mxu0 0.0
      %3527 = vmatpush1.msra.mxu0 0.0
      %3528 = vmatprep.subr.mxu0 0.0
      %3529 = vmatpush1.msra.mxu0 0.0
      %3530 = vmatprep.subr.mxu0 0.0
      %3531 = vmatpush1.msra.mxu0 0.0
      %3532 = vmatprep.subr.mxu0 0.0
      %3533 = vmatpush1.msra.mxu0 0.0
      %3534 = vmatprep.subr.mxu0 0.0
      %3535 = vmatpush1.msra.mxu0 0.0
      %3536 = vmatprep.subr.mxu0 0.0
      %3537 = vmatpush1.msra.mxu0 0.0
      %3538 = vmatprep.subr.mxu0 0.0
      %3539 = vmatpush1.msra.mxu0 0.0
      %3540 = vmatprep.subr.mxu0 0.0
      %3541 = vmatpush1.msra.mxu0 0.0
      %3542 = vmatprep.subr.mxu0 0.0
      %3543 = vmatpush1.msra.mxu0 0.0
      %3544 = vmatprep.subr.mxu0 0.0
      %3545 = vmatpush1.msra.mxu0 0.0
      %3546 = vmatprep.subr.mxu0 0.0
      %3547 = vmatpush1.msra.mxu0 0.0
      %3548 = vmatprep.subr.mxu0 0.0
      %3549 = vmatpush1.msra.mxu0 0.0
      %3550 = vmatprep.subr.mxu0 0.0
      %3551 = vmatpush1.msra.mxu0 0.0
      %3552 = vmatprep.subr.mxu0 0.0
      %3553 = vmatpush1.msra.mxu0 0.0
      %3554 = vmatprep.subr.mxu0 0.0
      %3555 = vmatpush1.msra.mxu0 0.0
      %3556 = vmatprep.subr.mxu0 0.0
      %3557 = vmatpush1.msra.mxu0 0.0
      %3558 = vmatprep.subr.mxu0 0.0
      %3559 = vmatpush1.msra.mxu0 0.0
      %3560 = vmatprep.subr.mxu0 0.0
      %3561 = vmatpush1.msra.mxu0 0.0
      %3562 = vmatprep.subr.mxu0 0.0
      %3563 = vmatpush1.msra.mxu0 0.0
      %3564 = vmatprep.subr.mxu0 0.0
      %3565 = vmatpush1.msra.mxu0 0.0
      %3566 = vmatprep.subr.mxu0 0.0
      %3567 = vmatpush1.msra.mxu0 0.0
      %3568 = vmatprep.subr.mxu0 0.0
      %3569 = vmatpush1.msra.mxu0 0.0
      %3570 = vmatprep.subr.mxu0 0.0
      %3571 = vmatpush1.msra.mxu0 0.0
      %3572 = vmatprep.subr.mxu0 0.0
      %3573 = vmatpush1.msra.mxu0 0.0
      %3574 = vmatprep.subr.mxu0 0.0
      %3575 = vmatpush1.msra.mxu0 0.0
      %3576 = vmatprep.subr.mxu0 0.0
      %3577 = vmatpush1.msra.mxu0 0.0
      %3578 = vmatprep.mubr.f32.mxu0 0.0
      %3579 = vmatmul.mubr.f32.gmra.mrb[0].mxu0 %v3416
      %v3580 = vpop.f32.mrb[0].mxu0
      %v3581 = vadd.f32 0.0, %v3580
      %v3582 = vpop.f32.mrb[0].mxu0
      %3583 = vmatprep.mubr.f32.mxu0 0.0
      %3584 = vmatmul.mubr.f32.gmra.mrb[0].mxu0 %v3419
      %v3585 = vpop.f32.mrb[0].mxu0
      %v3586 = vadd.f32 0.0, %v3585
      %v3587 = vpop.f32.mrb[0].mxu0
      %3588 = vmatprep.mubr.f32.mxu0 0.0
      %3589 = vmatmul.mubr.f32.gmra.mrb[0].mxu0 %v3422
      %v3590 = vpop.f32.mrb[0].mxu0
      %v3591 = vadd.f32 0.0, %v3590
      %v3592 = vpop.f32.mrb[0].mxu0
      %3593 = vmatprep.mubr.f32.mxu0 0.0
      %3594 = vmatmul.mubr.f32.gmra.mrb[0].mxu0 %v3425
      %v3595 = vpop.f32.mrb[0].mxu0
      %v3596 = vadd.f32 0.0, %v3595
      %v3597 = vpop.f32.mrb[0].mxu0
      %3598 = vmatprep.mubr.f32.mxu0 0.0
      %3599 = vmatmul.mubr.f32.gmra.mrb[0].mxu0 %v3428
      %v3600 = vpop.f32.mrb[0].mxu0
      %v3601 = vadd.f32 0.0, %v3600
      %v3602 = vpop.f32.mrb[0].mxu0
      %3603 = vmatprep.mubr.f32.mxu0 0.0
      %3604 = vmatmul.mubr.f32.gmra.mrb[0].mxu0 %v3431
      %v3605 = vpop.f32.mrb[0].mxu0
      %v3606 = vadd.f32 0.0, %v3605
      %v3607 = vpop.f32.mrb[0].mxu0
      %3608 = vmatprep.mubr.f32.mxu0 0.0
      %3609 = vmatmul.mubr.f32.gmra.mrb[0].mxu0 %v3434
      %v3610 = vpop.f32.mrb[0].mxu0
      %v3611 = vadd.f32 0.0, %v3610
      %v3612 = vpop.f32.mrb[0].mxu0
      %3613 = vmatprep.mubr.f32.mxu0 0.0
      %3614 = vmatmul.mubr.f32.gmra.mrb[0].mxu0 %v3437
      %v3615 = vpop.f32.mrb[0].mxu0
      %v3616 = vadd.f32 0.0, %v3615
      %v3617 = vpop.f32.mrb[0].mxu0
      %3618 = vmatprep.mubr.f32.mxu0 0.0
      %3619 = vmatmul.mubr.f32.gmra.mrb[0].mxu0 %v3440
      %v3620 = vpop.f32.mrb[0].mxu0
      %v3621 = vadd.f32 0.0, %v3620
      %v3622 = vpop.f32.mrb[0].mxu0
      %3623 = vmatprep.mubr.f32.mxu0 0.0
      %3624 = vmatmul.mubr.f32.gmra.mrb[0].mxu0 %v3443
      %v3625 = vpop.f32.mrb[0].mxu0
      %v3626 = vadd.f32 0.0, %v3625
      %v3627 = vpop.f32.mrb[0].mxu0
      %3628 = vmatprep.mubr.f32.mxu0 0.0
      %3629 = vmatmul.mubr.f32.gmra.mrb[0].mxu0 %v3446
      %v3630 = vpop.f32.mrb[0].mxu0
      %v3631 = vadd.f32 0.0, %v3630
      %v3632 = vpop.f32.mrb[0].mxu0
      %3633 = vmatprep.mubr.f32.mxu0 0.0
      %3634 = vmatmul.mubr.f32.gmra.mrb[0].mxu0 %v3449
      %v3635 = vpop.f32.mrb[0].mxu0
      %v3636 = vadd.f32 0.0, %v3635
      %v3637 = vpop.f32.mrb[0].mxu0
      %3638 = vmatprep.mubr.f32.mxu0 0.0
      %3639 = vmatmul.mubr.f32.gmra.mrb[0].mxu0 %v3452
      %v3640 = vpop.f32.mrb[0].mxu0
      %v3641 = vadd.f32 0.0, %v3640
      %v3642 = vpop.f32.mrb[0].mxu0
      %3643 = vmatprep.mubr.f32.mxu0 0.0
      %3644 = vmatmul.mubr.f32.gmra.mrb[0].mxu0 %v3455
      %v3645 = vpop.f32.mrb[0].mxu0
      %v3646 = vadd.f32 0.0, %v3645
      %v3647 = vpop.f32.mrb[0].mxu0
      %3648 = vmatprep.mubr.f32.mxu0 0.0
      %3649 = vmatmul.mubr.f32.gmra.mrb[0].mxu0 %v3458
      %v3650 = vpop.f32.mrb[0].mxu0
      %v3651 = vadd.f32 0.0, %v3650
      %v3652 = vpop.f32.mrb[0].mxu0
      %3653 = vmatprep.mubr.f32.mxu0 0.0
      %3654 = vmatmul.mubr.f32.gmra.mrb[0].mxu0 %v3461
      %v3655 = vpop.f32.mrb[0].mxu0
      %v3656 = vadd.f32 0.0, %v3655
      %v3657 = vpop.f32.mrb[0].mxu0
      %3658 = vmatprep.mubr.f32.mxu0 0.0
      %3659 = vmatmul.mubr.f32.gmra.mrb[0].mxu0 %v3464
      %v3660 = vpop.f32.mrb[0].mxu0
      %v3661 = vadd.f32 0.0, %v3660
      %v3662 = vpop.f32.mrb[0].mxu0
      %3663 = vmatprep.mubr.f32.mxu0 0.0
      %3664 = vmatmul.mubr.f32.gmra.mrb[0].mxu0 %v3467
      %v3665 = vpop.f32.mrb[0].mxu0
      %v3666 = vadd.f32 0.0, %v3665
      %v3667 = vpop.f32.mrb[0].mxu0
      %3668 = vmatprep.mubr.f32.mxu0 0.0
      %3669 = vmatmul.mubr.f32.gmra.mrb[0].mxu0 %v3470
      %v3670 = vpop.f32.mrb[0].mxu0
      %v3671 = vadd.f32 0.0, %v3670
      %v3672 = vpop.f32.mrb[0].mxu0
      %3673 = vmatprep.mubr.f32.mxu0 0.0
      %3674 = vmatmul.mubr.f32.gmra.mrb[0].mxu0 %v3473
      %v3675 = vpop.f32.mrb[0].mxu0
      %v3676 = vadd.f32 0.0, %v3675
      %v3677 = vpop.f32.mrb[0].mxu0
      %3678 = vmatprep.mubr.f32.mxu0 0.0
      %3679 = vmatmul.mubr.f32.gmra.mrb[0].mxu0 %v3476
      %v3680 = vpop.f32.mrb[0].mxu0
      %v3681 = vadd.f32 0.0, %v3680
      %v3682 = vpop.f32.mrb[0].mxu0
      %3683 = vmatprep.mubr.f32.mxu0 0.0
      %3684 = vmatmul.mubr.f32.gmra.mrb[0].mxu0 %v3479
      %v3685 = vpop.f32.mrb[0].mxu0
      %v3686 = vadd.f32 0.0, %v3685
      %v3687 = vpop.f32.mrb[0].mxu0
      %3688 = vmatprep.mubr.f32.mxu0 0.0
      %3689 = vmatmul.mubr.f32.gmra.mrb[0].mxu0 %v3482
      %v3690 = vpop.f32.mrb[0].mxu0
      %v3691 = vadd.f32 0.0, %v3690
      %v3692 = vpop.f32.mrb[0].mxu0
      %3693 = vmatprep.mubr.f32.mxu0 0.0
      %3694 = vmatmul.mubr.f32.gmra.mrb[0].mxu0 %v3485
      %v3695 = vpop.f32.mrb[0].mxu0
      %v3696 = vadd.f32 0.0, %v3695
      %v3697 = vpop.f32.mrb[0].mxu0
      %3698 = vmatprep.mubr.f32.mxu0 0.0
      %3699 = vmatmul.mubr.f32.gmra.mrb[0].mxu0 %v3488
      %v3700 = vpop.f32.mrb[0].mxu0
      %v3701 = vadd.f32 0.0, %v3700
      %v3702 = vpop.f32.mrb[0].mxu0
      %3703 = vmatprep.mubr.f32.mxu0 0.0
      %3704 = vmatmul.mubr.f32.gmra.mrb[0].mxu0 %v3491
      %v3705 = vpop.f32.mrb[0].mxu0
      %v3706 = vadd.f32 0.0, %v3705
      %v3707 = vpop.f32.mrb[0].mxu0
      %3708 = vmatprep.mubr.f32.mxu0 0.0
      %3709 = vmatmul.mubr.f32.gmra.mrb[0].mxu0 %v3494
      %v3710 = vpop.f32.mrb[0].mxu0
      %v3711 = vadd.f32 0.0, %v3710
      %v3712 = vpop.f32.mrb[0].mxu0
      %3713 = vmatprep.mubr.f32.mxu0 0.0
      %3714 = vmatmul.mubr.f32.gmra.mrb[0].mxu0 %v3497
      %v3715 = vpop.f32.mrb[0].mxu0
      %v3716 = vadd.f32 0.0, %v3715
      %v3717 = vpop.f32.mrb[0].mxu0
      %3718 = vmatprep.mubr.f32.mxu0 0.0
      %3719 = vmatmul.mubr.f32.gmra.mrb[0].mxu0 %v3500
      %v3720 = vpop.f32.mrb[0].mxu0
      %v3721 = vadd.f32 0.0, %v3720
      %v3722 = vpop.f32.mrb[0].mxu0
      %3723 = vmatprep.mubr.f32.mxu0 0.0
      %3724 = vmatmul.mubr.f32.gmra.mrb[0].mxu0 %v3503
      %v3725 = vpop.f32.mrb[0].mxu0
      %v3726 = vadd.f32 0.0, %v3725
      %v3727 = vpop.f32.mrb[0].mxu0
      %3728 = vmatprep.mubr.f32.mxu0 0.0
      %3729 = vmatmul.mubr.f32.gmra.mrb[0].mxu0 %v3506
      %v3730 = vpop.f32.mrb[0].mxu0
      %v3731 = vadd.f32 0.0, %v3730
      %v3732 = vpop.f32.mrb[0].mxu0
      %3733 = vmatprep.mubr.f32.mxu0 0.0
      %3734 = vmatmul.mubr.f32.gmra.mrb[0].mxu0 %v3509
      %v3735 = vpop.f32.mrb[0].mxu0
      %v3736 = vadd.f32 0.0, %v3735
      %v3737 = vpop.f32.mrb[0].mxu0
      %3738 = vdwg.mxu0
      %v3739 = vadd.f32 %v3349, %v3581
      %v3740 = vadd.f32 %v3350, %v3586
      %v3741 = vadd.f32 %v3351, %v3591
      %v3742 = vadd.f32 %v3352, %v3596
      %v3743 = vadd.f32 %v3353, %v3601
      %v3744 = vadd.f32 %v3354, %v3606
      %v3745 = vadd.f32 %v3355, %v3611
      %v3746 = vadd.f32 %v3356, %v3616
      %v3747 = vadd.f32 %v3357, %v3621
      %v3748 = vadd.f32 %v3358, %v3626
      %v3749 = vadd.f32 %v3359, %v3631
      %v3750 = vadd.f32 %v3360, %v3636
      %v3751 = vadd.f32 %v3361, %v3641
      %v3752 = vadd.f32 %v3362, %v3646
      %v3753 = vadd.f32 %v3363, %v3651
      %v3754 = vadd.f32 %v3364, %v3656
      %v3755 = vadd.f32 %v3365, %v3661
      %v3756 = vadd.f32 %v3366, %v3666
      %v3757 = vadd.f32 %v3367, %v3671
      %v3758 = vadd.f32 %v3368, %v3676
      %v3759 = vadd.f32 %v3369, %v3681
      %v3760 = vadd.f32 %v3370, %v3686
      %v3761 = vadd.f32 %v3371, %v3691
      %v3762 = vadd.f32 %v3372, %v3696
      %v3763 = vadd.f32 %v3373, %v3701
      %v3764 = vadd.f32 %v3374, %v3706
      %v3765 = vadd.f32 %v3375, %v3711
      %v3766 = vadd.f32 %v3376, %v3716
      %v3767 = vadd.f32 %v3377, %v3721
      %v3768 = vadd.f32 %v3378, %v3726
      %v3769 = vadd.f32 %v3379, %v3731
      %v3770 = vadd.f32 %v3380, %v3736
      %v3771 = vld [vmem:[%s2] sm:$0xf]
      %v3773 = vsel %vm291, %v258, 0
      %v3776 = vsel %vm291, %v259, 0
      %v3779 = vsel %vm291, %v260, 0
      %v3782 = vsel %vm291, %v261, 0
      %v3785 = vsel %vm291, %v262, 0
      %v3788 = vsel %vm291, %v263, 0
      %v3791 = vsel %vm291, %v264, 0
      %v3794 = vsel %vm291, %v265, 0
      %v3797 = vsel %vm291, %v266, 0
      %v3800 = vsel %vm291, %v267, 0
      %v3803 = vsel %vm291, %v268, 0
      %v3806 = vsel %vm291, %v269, 0
      %v3809 = vsel %vm291, %v270, 0
      %v3812 = vsel %vm291, %v271, 0
      %v3815 = vsel %vm291, %v272, 0
      %v3818 = vsel %vm291, %v273, 0
      %v3821 = vsel %vm291, %v274, 0
      %v3824 = vsel %vm291, %v275, 0
      %v3827 = vsel %vm291, %v276, 0
      %v3830 = vsel %vm291, %v277, 0
      %v3833 = vsel %vm291, %v278, 0
      %v3836 = vsel %vm291, %v279, 0
      %v3839 = vsel %vm291, %v280, 0
      %v3842 = vsel %vm291, %v281, 0
      %v3845 = vsel %vm291, %v282, 0
      %v3848 = vsel %vm291, %v283, 0
      %v3851 = vsel %vm291, %v284, 0
      %v3854 = vsel %vm291, %v285, 0
      %v3857 = vsel %vm291, %v286, 0
      %v3860 = vsel %vm291, %v287, 0
      %v3863 = vsel %vm291, %v288, 0
      %v3866 = vsel %vm291, %v289, 0
      %v3869 = vsel %vm487, %v3771, 0
      %3871 = vmatprep.subr.mxu0 0.0
      %3872 = vmatpush1.msra.mxu0 %v3869
      %3873 = vmatprep.subr.mxu0 0.0
      %3874 = vmatpush1.msra.mxu0 0.0
      %3875 = vmatprep.subr.mxu0 0.0
      %3876 = vmatpush1.msra.mxu0 0.0
      %3877 = vmatprep.subr.mxu0 0.0
      %3878 = vmatpush1.msra.mxu0 0.0
      %3879 = vmatprep.subr.mxu0 0.0
      %3880 = vmatpush1.msra.mxu0 0.0
      %3881 = vmatprep.subr.mxu0 0.0
      %3882 = vmatpush1.msra.mxu0 0.0
      %3883 = vmatprep.subr.mxu0 0.0
      %3884 = vmatpush1.msra.mxu0 0.0
      %3885 = vmatprep.subr.mxu0 0.0
      %3886 = vmatpush1.msra.mxu0 0.0
      %3887 = vmatprep.subr.mxu0 0.0
      %3888 = vmatpush1.msra.mxu0 0.0
      %3889 = vmatprep.subr.mxu0 0.0
      %3890 = vmatpush1.msra.mxu0 0.0
      %3891 = vmatprep.subr.mxu0 0.0
      %3892 = vmatpush1.msra.mxu0 0.0
      %3893 = vmatprep.subr.mxu0 0.0
      %3894 = vmatpush1.msra.mxu0 0.0
      %3895 = vmatprep.subr.mxu0 0.0
      %3896 = vmatpush1.msra.mxu0 0.0
      %3897 = vmatprep.subr.mxu0 0.0
      %3898 = vmatpush1.msra.mxu0 0.0
      %3899 = vmatprep.subr.mxu0 0.0
      %3900 = vmatpush1.msra.mxu0 0.0
      %3901 = vmatprep.subr.mxu0 0.0
      %3902 = vmatpush1.msra.mxu0 0.0
      %3903 = vmatprep.subr.mxu0 0.0
      %3904 = vmatpush1.msra.mxu0 0.0
      %3905 = vmatprep.subr.mxu0 0.0
      %3906 = vmatpush1.msra.mxu0 0.0
      %3907 = vmatprep.subr.mxu0 0.0
      %3908 = vmatpush1.msra.mxu0 0.0
      %3909 = vmatprep.subr.mxu0 0.0
      %3910 = vmatpush1.msra.mxu0 0.0
      %3911 = vmatprep.subr.mxu0 0.0
      %3912 = vmatpush1.msra.mxu0 0.0
      %3913 = vmatprep.subr.mxu0 0.0
      %3914 = vmatpush1.msra.mxu0 0.0
      %3915 = vmatprep.subr.mxu0 0.0
      %3916 = vmatpush1.msra.mxu0 0.0
      %3917 = vmatprep.subr.mxu0 0.0
      %3918 = vmatpush1.msra.mxu0 0.0
      %3919 = vmatprep.subr.mxu0 0.0
      %3920 = vmatpush1.msra.mxu0 0.0
      %3921 = vmatprep.subr.mxu0 0.0
      %3922 = vmatpush1.msra.mxu0 0.0
      %3923 = vmatprep.subr.mxu0 0.0
      %3924 = vmatpush1.msra.mxu0 0.0
      %3925 = vmatprep.subr.mxu0 0.0
      %3926 = vmatpush1.msra.mxu0 0.0
      %3927 = vmatprep.subr.mxu0 0.0
      %3928 = vmatpush1.msra.mxu0 0.0
      %3929 = vmatprep.subr.mxu0 0.0
      %3930 = vmatpush1.msra.mxu0 0.0
      %3931 = vmatprep.subr.mxu0 0.0
      %3932 = vmatpush1.msra.mxu0 0.0
      %3933 = vmatprep.subr.mxu0 0.0
      %3934 = vmatpush1.msra.mxu0 0.0
      %3935 = vmatprep.mubr.f32.mxu0 0.0
      %3936 = vmatmul.mubr.f32.gmra.mrb[0].mxu0 %v3773
      %v3937 = vpop.f32.mrb[0].mxu0
      %v3938 = vadd.f32 0.0, %v3937
      %v3939 = vpop.f32.mrb[0].mxu0
      %3940 = vmatprep.mubr.f32.mxu0 0.0
      %3941 = vmatmul.mubr.f32.gmra.mrb[0].mxu0 %v3776
      %v3942 = vpop.f32.mrb[0].mxu0
      %v3943 = vadd.f32 0.0, %v3942
      %v3944 = vpop.f32.mrb[0].mxu0
      %3945 = vmatprep.mubr.f32.mxu0 0.0
      %3946 = vmatmul.mubr.f32.gmra.mrb[0].mxu0 %v3779
      %v3947 = vpop.f32.mrb[0].mxu0
      %v3948 = vadd.f32 0.0, %v3947
      %v3949 = vpop.f32.mrb[0].mxu0
      %3950 = vmatprep.mubr.f32.mxu0 0.0
      %3951 = vmatmul.mubr.f32.gmra.mrb[0].mxu0 %v3782
      %v3952 = vpop.f32.mrb[0].mxu0
      %v3953 = vadd.f32 0.0, %v3952
      %v3954 = vpop.f32.mrb[0].mxu0
      %3955 = vmatprep.mubr.f32.mxu0 0.0
      %3956 = vmatmul.mubr.f32.gmra.mrb[0].mxu0 %v3785
      %v3957 = vpop.f32.mrb[0].mxu0
      %v3958 = vadd.f32 0.0, %v3957
      %v3959 = vpop.f32.mrb[0].mxu0
      %3960 = vmatprep.mubr.f32.mxu0 0.0
      %3961 = vmatmul.mubr.f32.gmra.mrb[0].mxu0 %v3788
      %v3962 = vpop.f32.mrb[0].mxu0
      %v3963 = vadd.f32 0.0, %v3962
      %v3964 = vpop.f32.mrb[0].mxu0
      %3965 = vmatprep.mubr.f32.mxu0 0.0
      %3966 = vmatmul.mubr.f32.gmra.mrb[0].mxu0 %v3791
      %v3967 = vpop.f32.mrb[0].mxu0
      %v3968 = vadd.f32 0.0, %v3967
      %v3969 = vpop.f32.mrb[0].mxu0
      %3970 = vmatprep.mubr.f32.mxu0 0.0
      %3971 = vmatmul.mubr.f32.gmra.mrb[0].mxu0 %v3794
      %v3972 = vpop.f32.mrb[0].mxu0
      %v3973 = vadd.f32 0.0, %v3972
      %v3974 = vpop.f32.mrb[0].mxu0
      %3975 = vmatprep.mubr.f32.mxu0 0.0
      %3976 = vmatmul.mubr.f32.gmra.mrb[0].mxu0 %v3797
      %v3977 = vpop.f32.mrb[0].mxu0
      %v3978 = vadd.f32 0.0, %v3977
      %v3979 = vpop.f32.mrb[0].mxu0
      %3980 = vmatprep.mubr.f32.mxu0 0.0
      %3981 = vmatmul.mubr.f32.gmra.mrb[0].mxu0 %v3800
      %v3982 = vpop.f32.mrb[0].mxu0
      %v3983 = vadd.f32 0.0, %v3982
      %v3984 = vpop.f32.mrb[0].mxu0
      %3985 = vmatprep.mubr.f32.mxu0 0.0
      %3986 = vmatmul.mubr.f32.gmra.mrb[0].mxu0 %v3803
      %v3987 = vpop.f32.mrb[0].mxu0
      %v3988 = vadd.f32 0.0, %v3987
      %v3989 = vpop.f32.mrb[0].mxu0
      %3990 = vmatprep.mubr.f32.mxu0 0.0
      %3991 = vmatmul.mubr.f32.gmra.mrb[0].mxu0 %v3806
      %v3992 = vpop.f32.mrb[0].mxu0
      %v3993 = vadd.f32 0.0, %v3992
      %v3994 = vpop.f32.mrb[0].mxu0
      %3995 = vmatprep.mubr.f32.mxu0 0.0
      %3996 = vmatmul.mubr.f32.gmra.mrb[0].mxu0 %v3809
      %v3997 = vpop.f32.mrb[0].mxu0
      %v3998 = vadd.f32 0.0, %v3997
      %v3999 = vpop.f32.mrb[0].mxu0
      %4000 = vmatprep.mubr.f32.mxu0 0.0
      %4001 = vmatmul.mubr.f32.gmra.mrb[0].mxu0 %v3812
      %v4002 = vpop.f32.mrb[0].mxu0
      %v4003 = vadd.f32 0.0, %v4002
      %v4004 = vpop.f32.mrb[0].mxu0
      %4005 = vmatprep.mubr.f32.mxu0 0.0
      %4006 = vmatmul.mubr.f32.gmra.mrb[0].mxu0 %v3815
      %v4007 = vpop.f32.mrb[0].mxu0
      %v4008 = vadd.f32 0.0, %v4007
      %v4009 = vpop.f32.mrb[0].mxu0
      %4010 = vmatprep.mubr.f32.mxu0 0.0
      %4011 = vmatmul.mubr.f32.gmra.mrb[0].mxu0 %v3818
      %v4012 = vpop.f32.mrb[0].mxu0
      %v4013 = vadd.f32 0.0, %v4012
      %v4014 = vpop.f32.mrb[0].mxu0
      %4015 = vmatprep.mubr.f32.mxu0 0.0
      %4016 = vmatmul.mubr.f32.gmra.mrb[0].mxu0 %v3821
      %v4017 = vpop.f32.mrb[0].mxu0
      %v4018 = vadd.f32 0.0, %v4017
      %v4019 = vpop.f32.mrb[0].mxu0
      %4020 = vmatprep.mubr.f32.mxu0 0.0
      %4021 = vmatmul.mubr.f32.gmra.mrb[0].mxu0 %v3824
      %v4022 = vpop.f32.mrb[0].mxu0
      %v4023 = vadd.f32 0.0, %v4022
      %v4024 = vpop.f32.mrb[0].mxu0
      %4025 = vmatprep.mubr.f32.mxu0 0.0
      %4026 = vmatmul.mubr.f32.gmra.mrb[0].mxu0 %v3827
      %v4027 = vpop.f32.mrb[0].mxu0
      %v4028 = vadd.f32 0.0, %v4027
      %v4029 = vpop.f32.mrb[0].mxu0
      %4030 = vmatprep.mubr.f32.mxu0 0.0
      %4031 = vmatmul.mubr.f32.gmra.mrb[0].mxu0 %v3830
      %v4032 = vpop.f32.mrb[0].mxu0
      %v4033 = vadd.f32 0.0, %v4032
      %v4034 = vpop.f32.mrb[0].mxu0
      %4035 = vmatprep.mubr.f32.mxu0 0.0
      %4036 = vmatmul.mubr.f32.gmra.mrb[0].mxu0 %v3833
      %v4037 = vpop.f32.mrb[0].mxu0
      %v4038 = vadd.f32 0.0, %v4037
      %v4039 = vpop.f32.mrb[0].mxu0
      %4040 = vmatprep.mubr.f32.mxu0 0.0
      %4041 = vmatmul.mubr.f32.gmra.mrb[0].mxu0 %v3836
      %v4042 = vpop.f32.mrb[0].mxu0
      %v4043 = vadd.f32 0.0, %v4042
      %v4044 = vpop.f32.mrb[0].mxu0
      %4045 = vmatprep.mubr.f32.mxu0 0.0
      %4046 = vmatmul.mubr.f32.gmra.mrb[0].mxu0 %v3839
      %v4047 = vpop.f32.mrb[0].mxu0
      %v4048 = vadd.f32 0.0, %v4047
      %v4049 = vpop.f32.mrb[0].mxu0
      %4050 = vmatprep.mubr.f32.mxu0 0.0
      %4051 = vmatmul.mubr.f32.gmra.mrb[0].mxu0 %v3842
      %v4052 = vpop.f32.mrb[0].mxu0
      %v4053 = vadd.f32 0.0, %v4052
      %v4054 = vpop.f32.mrb[0].mxu0
      %4055 = vmatprep.mubr.f32.mxu0 0.0
      %4056 = vmatmul.mubr.f32.gmra.mrb[0].mxu0 %v3845
      %v4057 = vpop.f32.mrb[0].mxu0
      %v4058 = vadd.f32 0.0, %v4057
      %v4059 = vpop.f32.mrb[0].mxu0
      %4060 = vmatprep.mubr.f32.mxu0 0.0
      %4061 = vmatmul.mubr.f32.gmra.mrb[0].mxu0 %v3848
      %v4062 = vpop.f32.mrb[0].mxu0
      %v4063 = vadd.f32 0.0, %v4062
      %v4064 = vpop.f32.mrb[0].mxu0
      %4065 = vmatprep.mubr.f32.mxu0 0.0
      %4066 = vmatmul.mubr.f32.gmra.mrb[0].mxu0 %v3851
      %v4067 = vpop.f32.mrb[0].mxu0
      %v4068 = vadd.f32 0.0, %v4067
      %v4069 = vpop.f32.mrb[0].mxu0
      %4070 = vmatprep.mubr.f32.mxu0 0.0
      %4071 = vmatmul.mubr.f32.gmra.mrb[0].mxu0 %v3854
      %v4072 = vpop.f32.mrb[0].mxu0
      %v4073 = vadd.f32 0.0, %v4072
      %v4074 = vpop.f32.mrb[0].mxu0
      %4075 = vmatprep.mubr.f32.mxu0 0.0
      %4076 = vmatmul.mubr.f32.gmra.mrb[0].mxu0 %v3857
      %v4077 = vpop.f32.mrb[0].mxu0
      %v4078 = vadd.f32 0.0, %v4077
      %v4079 = vpop.f32.mrb[0].mxu0
      %4080 = vmatprep.mubr.f32.mxu0 0.0
      %4081 = vmatmul.mubr.f32.gmra.mrb[0].mxu0 %v3860
      %v4082 = vpop.f32.mrb[0].mxu0
      %v4083 = vadd.f32 0.0, %v4082
      %v4084 = vpop.f32.mrb[0].mxu0
      %4085 = vmatprep.mubr.f32.mxu0 0.0
      %4086 = vmatmul.mubr.f32.gmra.mrb[0].mxu0 %v3863
      %v4087 = vpop.f32.mrb[0].mxu0
      %v4088 = vadd.f32 0.0, %v4087
      %v4089 = vpop.f32.mrb[0].mxu0
      %4090 = vmatprep.mubr.f32.mxu0 0.0
      %4091 = vmatmul.mubr.f32.gmra.mrb[0].mxu0 %v3866
      %v4092 = vpop.f32.mrb[0].mxu0
      %v4093 = vadd.f32 0.0, %v4092
      %v4094 = vpop.f32.mrb[0].mxu0
      %4095 = vdwg.mxu0
      %vm4096 = vcmask 64512
      %4097 = vst.msk [vmem:[%s195] sm:$0xff] %vm4096, %v3739
      %4098 = vst.msk [vmem:[%s195 + $0x8] sm:$0xff] %vm4096, %v3740
      %4099 = vst.msk [vmem:[%s195 + $0x10] sm:$0xff] %vm4096, %v3741
      %4100 = vst.msk [vmem:[%s195 + $0x18] sm:$0xff] %vm4096, %v3742
      %4101 = vst.msk [vmem:[%s195 + $0x20] sm:$0xff] %vm4096, %v3743
      %4102 = vst.msk [vmem:[%s195 + $0x28] sm:$0xff] %vm4096, %v3744
      %4103 = vst.msk [vmem:[%s195 + $0x30] sm:$0xff] %vm4096, %v3745
      %4104 = vst.msk [vmem:[%s195 + $0x38] sm:$0xff] %vm4096, %v3746
      %4105 = vst.msk [vmem:[%s195 + $0x40] sm:$0xff] %vm4096, %v3747
      %4106 = vst.msk [vmem:[%s195 + $0x48] sm:$0xff] %vm4096, %v3748
      %4107 = vst.msk [vmem:[%s195 + $0x50] sm:$0xff] %vm4096, %v3749
      %4108 = vst.msk [vmem:[%s195 + $0x58] sm:$0xff] %vm4096, %v3750
      %4109 = vst.msk [vmem:[%s195 + $0x60] sm:$0xff] %vm4096, %v3751
      %4110 = vst.msk [vmem:[%s195 + $0x68] sm:$0xff] %vm4096, %v3752
      %4111 = vst.msk [vmem:[%s195 + $0x70] sm:$0xff] %vm4096, %v3753
      %4112 = vst.msk [vmem:[%s195 + $0x78] sm:$0xff] %vm4096, %v3754
      %4113 = vst.msk [vmem:[%s195 + $0x80] sm:$0xff] %vm4096, %v3755
      %4114 = vst.msk [vmem:[%s195 + $0x88] sm:$0xff] %vm4096, %v3756
      %4115 = vst.msk [vmem:[%s195 + $0x90] sm:$0xff] %vm4096, %v3757
      %4116 = vst.msk [vmem:[%s195 + $0x98] sm:$0xff] %vm4096, %v3758
      %4117 = vst.msk [vmem:[%s195 + $0xa0] sm:$0xff] %vm4096, %v3759
      %4118 = vst.msk [vmem:[%s195 + $0xa8] sm:$0xff] %vm4096, %v3760
      %4119 = vst.msk [vmem:[%s195 + $0xb0] sm:$0xff] %vm4096, %v3761
      %4120 = vst.msk [vmem:[%s195 + $0xb8] sm:$0xff] %vm4096, %v3762
      %4121 = vst.msk [vmem:[%s195 + $0xc0] sm:$0xff] %vm4096, %v3763
      %4122 = vst.msk [vmem:[%s195 + $0xc8] sm:$0xff] %vm4096, %v3764
      %4123 = vst.msk [vmem:[%s195 + $0xd0] sm:$0xff] %vm4096, %v3765
      %4124 = vst.msk [vmem:[%s195 + $0xd8] sm:$0xff] %vm4096, %v3766
      %4125 = vst.msk [vmem:[%s195 + $0xe0] sm:$0xff] %vm4096, %v3767
      %4126 = vst.msk [vmem:[%s195 + $0xe8] sm:$0xff] %vm4096, %v3768
      %4127 = vst.msk [vmem:[%s195 + $0xf0] sm:$0xff] %vm4096, %v3769
      %4128 = vst.msk [vmem:[%s195 + $0xf8] sm:$0xff] %vm4096, %v3770
      %v4129 = vld [vmem:[%s4] sm:$0xf]
      %v4130 = vsel %vm4096, %v3739, 0.0
      %v4131 = vsel %vm4096, %v3740, 0.0
      %v4132 = vadd.f32 %v4130, %v4131
      %v4133 = vsel %vm4096, %v3741, 0.0
      %v4134 = vadd.f32 %v4132, %v4133
      %v4135 = vsel %vm4096, %v3742, 0.0
      %v4136 = vadd.f32 %v4134, %v4135
      %v4137 = vsel %vm4096, %v3743, 0.0
      %v4138 = vadd.f32 %v4136, %v4137
      %v4139 = vsel %vm4096, %v3744, 0.0
      %v4140 = vadd.f32 %v4138, %v4139
      %v4141 = vsel %vm4096, %v3745, 0.0
      %v4142 = vadd.f32 %v4140, %v4141
      %v4143 = vsel %vm4096, %v3746, 0.0
      %v4144 = vadd.f32 %v4142, %v4143
      %v4145 = vsel %vm4096, %v3747, 0.0
      %v4146 = vadd.f32 %v4144, %v4145
      %v4147 = vsel %vm4096, %v3748, 0.0
      %v4148 = vadd.f32 %v4146, %v4147
      %v4149 = vsel %vm4096, %v3749, 0.0
      %v4150 = vadd.f32 %v4148, %v4149
      %v4151 = vsel %vm4096, %v3750, 0.0
      %v4152 = vadd.f32 %v4150, %v4151
      %v4153 = vsel %vm4096, %v3751, 0.0
      %v4154 = vadd.f32 %v4152, %v4153
      %v4155 = vsel %vm4096, %v3752, 0.0
      %v4156 = vadd.f32 %v4154, %v4155
      %v4157 = vsel %vm4096, %v3753, 0.0
      %v4158 = vadd.f32 %v4156, %v4157
      %v4159 = vsel %vm4096, %v3754, 0.0
      %v4160 = vadd.f32 %v4158, %v4159
      %v4161 = vsel %vm4096, %v3755, 0.0
      %v4162 = vadd.f32 %v4160, %v4161
      %v4163 = vsel %vm4096, %v3756, 0.0
      %v4164 = vadd.f32 %v4162, %v4163
      %v4165 = vsel %vm4096, %v3757, 0.0
      %v4166 = vadd.f32 %v4164, %v4165
      %v4167 = vsel %vm4096, %v3758, 0.0
      %v4168 = vadd.f32 %v4166, %v4167
      %v4169 = vsel %vm4096, %v3759, 0.0
      %v4170 = vadd.f32 %v4168, %v4169
      %v4171 = vsel %vm4096, %v3760, 0.0
      %v4172 = vadd.f32 %v4170, %v4171
      %v4173 = vsel %vm4096, %v3761, 0.0
      %v4174 = vadd.f32 %v4172, %v4173
      %v4175 = vsel %vm4096, %v3762, 0.0
      %v4176 = vadd.f32 %v4174, %v4175
      %v4177 = vsel %vm4096, %v3763, 0.0
      %v4178 = vadd.f32 %v4176, %v4177
      %v4179 = vsel %vm4096, %v3764, 0.0
      %v4180 = vadd.f32 %v4178, %v4179
      %v4181 = vsel %vm4096, %v3765, 0.0
      %v4182 = vadd.f32 %v4180, %v4181
      %v4183 = vsel %vm4096, %v3766, 0.0
      %v4184 = vadd.f32 %v4182, %v4183
      %v4185 = vsel %vm4096, %v3767, 0.0
      %v4186 = vadd.f32 %v4184, %v4185
      %v4187 = vsel %vm4096, %v3768, 0.0
      %v4188 = vadd.f32 %v4186, %v4187
      %v4189 = vsel %vm4096, %v3769, 0.0
      %v4190 = vadd.f32 %v4188, %v4189
      %v4191 = vsel %vm4096, %v3770, 0.0
      %v4192 = vadd.f32 %v4190, %v4191
      %v4193 = vrot.slane %v4192, 4
      %v4194 = vadd.f32 %v4192, %v4193
      %v4195 = vrot.slane %v4194, 2
      %v4196 = vadd.f32 %v4194, %v4195
      %v4197 = vrot.slane %v4196, 1
      %v4198 = vadd.f32 %v4196, %v4197
      %v4199 = vmul.f32 %v3739, %v3739
      %v4200 = vmul.f32 %v3740, %v3740
      %v4201 = vmul.f32 %v3741, %v3741
      %v4202 = vmul.f32 %v3742, %v3742
      %v4203 = vmul.f32 %v3743, %v3743
      %v4204 = vmul.f32 %v3744, %v3744
      %v4205 = vmul.f32 %v3745, %v3745
      %v4206 = vmul.f32 %v3746, %v3746
      %v4207 = vmul.f32 %v3747, %v3747
      %v4208 = vmul.f32 %v3748, %v3748
      %v4209 = vmul.f32 %v3749, %v3749
      %v4210 = vmul.f32 %v3750, %v3750
      %v4211 = vmul.f32 %v3751, %v3751
      %v4212 = vmul.f32 %v3752, %v3752
      %v4213 = vmul.f32 %v3753, %v3753
      %v4214 = vmul.f32 %v3754, %v3754
      %v4215 = vmul.f32 %v3755, %v3755
      %v4216 = vmul.f32 %v3756, %v3756
      %v4217 = vmul.f32 %v3757, %v3757
      %v4218 = vmul.f32 %v3758, %v3758
      %v4219 = vmul.f32 %v3759, %v3759
      %v4220 = vmul.f32 %v3760, %v3760
      %v4221 = vmul.f32 %v3761, %v3761
      %v4222 = vmul.f32 %v3762, %v3762
      %v4223 = vmul.f32 %v3763, %v3763
      %v4224 = vmul.f32 %v3764, %v3764
      %v4225 = vmul.f32 %v3765, %v3765
      %v4226 = vmul.f32 %v3766, %v3766
      %v4227 = vmul.f32 %v3767, %v3767
      %v4228 = vmul.f32 %v3768, %v3768
      %v4229 = vmul.f32 %v3769, %v3769
      %v4230 = vmul.f32 %v3770, %v3770
      %v4231 = vsel %vm4096, %v4199, 0.0
      %v4232 = vsel %vm4096, %v4200, 0.0
      %v4233 = vadd.f32 %v4231, %v4232
      %v4234 = vsel %vm4096, %v4201, 0.0
      %v4235 = vadd.f32 %v4233, %v4234
      %v4236 = vsel %vm4096, %v4202, 0.0
      %v4237 = vadd.f32 %v4235, %v4236
      %v4238 = vsel %vm4096, %v4203, 0.0
      %v4239 = vadd.f32 %v4237, %v4238
      %v4240 = vsel %vm4096, %v4204, 0.0
      %v4241 = vadd.f32 %v4239, %v4240
      %v4242 = vsel %vm4096, %v4205, 0.0
      %v4243 = vadd.f32 %v4241, %v4242
      %v4244 = vsel %vm4096, %v4206, 0.0
      %v4245 = vadd.f32 %v4243, %v4244
      %v4246 = vsel %vm4096, %v4207, 0.0
      %v4247 = vadd.f32 %v4245, %v4246
      %v4248 = vsel %vm4096, %v4208, 0.0
      %v4249 = vadd.f32 %v4247, %v4248
      %v4250 = vsel %vm4096, %v4209, 0.0
      %v4251 = vadd.f32 %v4249, %v4250
      %v4252 = vsel %vm4096, %v4210, 0.0
      %v4253 = vadd.f32 %v4251, %v4252
      %v4254 = vsel %vm4096, %v4211, 0.0
      %v4255 = vadd.f32 %v4253, %v4254
      %v4256 = vsel %vm4096, %v4212, 0.0
      %v4257 = vadd.f32 %v4255, %v4256
      %v4258 = vsel %vm4096, %v4213, 0.0
      %v4259 = vadd.f32 %v4257, %v4258
      %v4260 = vsel %vm4096, %v4214, 0.0
      %v4261 = vadd.f32 %v4259, %v4260
      %v4262 = vsel %vm4096, %v4215, 0.0
      %v4263 = vadd.f32 %v4261, %v4262
      %v4264 = vsel %vm4096, %v4216, 0.0
      %v4265 = vadd.f32 %v4263, %v4264
      %v4266 = vsel %vm4096, %v4217, 0.0
      %v4267 = vadd.f32 %v4265, %v4266
      %v4268 = vsel %vm4096, %v4218, 0.0
      %v4269 = vadd.f32 %v4267, %v4268
      %v4270 = vsel %vm4096, %v4219, 0.0
      %v4271 = vadd.f32 %v4269, %v4270
      %v4272 = vsel %vm4096, %v4220, 0.0
      %v4273 = vadd.f32 %v4271, %v4272
      %v4274 = vsel %vm4096, %v4221, 0.0
      %v4275 = vadd.f32 %v4273, %v4274
      %v4276 = vsel %vm4096, %v4222, 0.0
      %v4277 = vadd.f32 %v4275, %v4276
      %v4278 = vsel %vm4096, %v4223, 0.0
      %v4279 = vadd.f32 %v4277, %v4278
      %v4280 = vsel %vm4096, %v4224, 0.0
      %v4281 = vadd.f32 %v4279, %v4280
      %v4282 = vsel %vm4096, %v4225, 0.0
      %v4283 = vadd.f32 %v4281, %v4282
      %v4284 = vsel %vm4096, %v4226, 0.0
      %v4285 = vadd.f32 %v4283, %v4284
      %v4286 = vsel %vm4096, %v4227, 0.0
      %v4287 = vadd.f32 %v4285, %v4286
      %v4288 = vsel %vm4096, %v4228, 0.0
      %v4289 = vadd.f32 %v4287, %v4288
      %v4290 = vsel %vm4096, %v4229, 0.0
      %v4291 = vadd.f32 %v4289, %v4290
      %v4292 = vsel %vm4096, %v4230, 0.0
      %v4293 = vadd.f32 %v4291, %v4292
      %v4294 = vrot.slane %v4293, 4
      %v4295 = vadd.f32 %v4293, %v4294
      %v4296 = vrot.slane %v4295, 2
      %v4297 = vadd.f32 %v4295, %v4296
      %v4298 = vrot.slane %v4297, 1
      %v4299 = vadd.f32 %v4297, %v4298
      %v4300 = vsel %vm4096, %v3938, 0.0
      %v4301 = vsel %vm4096, %v3943, 0.0
      %v4302 = vadd.f32 %v4300, %v4301
      %v4303 = vsel %vm4096, %v3948, 0.0
      %v4304 = vadd.f32 %v4302, %v4303
      %v4305 = vsel %vm4096, %v3953, 0.0
      %v4306 = vadd.f32 %v4304, %v4305
      %v4307 = vsel %vm4096, %v3958, 0.0
      %v4308 = vadd.f32 %v4306, %v4307
      %v4309 = vsel %vm4096, %v3963, 0.0
      %v4310 = vadd.f32 %v4308, %v4309
      %v4311 = vsel %vm4096, %v3968, 0.0
      %v4312 = vadd.f32 %v4310, %v4311
      %v4313 = vsel %vm4096, %v3973, 0.0
      %v4314 = vadd.f32 %v4312, %v4313
      %v4315 = vsel %vm4096, %v3978, 0.0
      %v4316 = vadd.f32 %v4314, %v4315
      %v4317 = vsel %vm4096, %v3983, 0.0
      %v4318 = vadd.f32 %v4316, %v4317
      %v4319 = vsel %vm4096, %v3988, 0.0
      %v4320 = vadd.f32 %v4318, %v4319
      %v4321 = vsel %vm4096, %v3993, 0.0
      %v4322 = vadd.f32 %v4320, %v4321
      %v4323 = vsel %vm4096, %v3998, 0.0
      %v4324 = vadd.f32 %v4322, %v4323
      %v4325 = vsel %vm4096, %v4003, 0.0
      %v4326 = vadd.f32 %v4324, %v4325
      %v4327 = vsel %vm4096, %v4008, 0.0
      %v4328 = vadd.f32 %v4326, %v4327
      %v4329 = vsel %vm4096, %v4013, 0.0
      %v4330 = vadd.f32 %v4328, %v4329
      %v4331 = vsel %vm4096, %v4018, 0.0
      %v4332 = vadd.f32 %v4330, %v4331
      %v4333 = vsel %vm4096, %v4023, 0.0
      %v4334 = vadd.f32 %v4332, %v4333
      %v4335 = vsel %vm4096, %v4028, 0.0
      %v4336 = vadd.f32 %v4334, %v4335
      %v4337 = vsel %vm4096, %v4033, 0.0
      %v4338 = vadd.f32 %v4336, %v4337
      %v4339 = vsel %vm4096, %v4038, 0.0
      %v4340 = vadd.f32 %v4338, %v4339
      %v4341 = vsel %vm4096, %v4043, 0.0
      %v4342 = vadd.f32 %v4340, %v4341
      %v4343 = vsel %vm4096, %v4048, 0.0
      %v4344 = vadd.f32 %v4342, %v4343
      %v4345 = vsel %vm4096, %v4053, 0.0
      %v4346 = vadd.f32 %v4344, %v4345
      %v4347 = vsel %vm4096, %v4058, 0.0
      %v4348 = vadd.f32 %v4346, %v4347
      %v4349 = vsel %vm4096, %v4063, 0.0
      %v4350 = vadd.f32 %v4348, %v4349
      %v4351 = vsel %vm4096, %v4068, 0.0
      %v4352 = vadd.f32 %v4350, %v4351
      %v4353 = vsel %vm4096, %v4073, 0.0
      %v4354 = vadd.f32 %v4352, %v4353
      %v4355 = vsel %vm4096, %v4078, 0.0
      %v4356 = vadd.f32 %v4354, %v4355
      %v4357 = vsel %vm4096, %v4083, 0.0
      %v4358 = vadd.f32 %v4356, %v4357
      %v4359 = vsel %vm4096, %v4088, 0.0
      %v4360 = vadd.f32 %v4358, %v4359
      %v4361 = vsel %vm4096, %v4093, 0.0
      %v4362 = vadd.f32 %v4360, %v4361
      %v4363 = vrot.slane %v4362, 4
      %v4364 = vadd.f32 %v4362, %v4363
      %v4365 = vrot.slane %v4364, 2
      %v4366 = vadd.f32 %v4364, %v4365
      %v4367 = vrot.slane %v4366, 1
      %v4368 = vadd.f32 %v4366, %v4367
      %v4369 = vmul.f32 %v3938, %v3938
      %v4370 = vmul.f32 %v3943, %v3943
      %v4371 = vmul.f32 %v3948, %v3948
      %v4372 = vmul.f32 %v3953, %v3953
      %v4373 = vmul.f32 %v3958, %v3958
      %v4374 = vmul.f32 %v3963, %v3963
      %v4375 = vmul.f32 %v3968, %v3968
      %v4376 = vmul.f32 %v3973, %v3973
      %v4377 = vmul.f32 %v3978, %v3978
      %v4378 = vmul.f32 %v3983, %v3983
      %v4379 = vmul.f32 %v3988, %v3988
      %v4380 = vmul.f32 %v3993, %v3993
      %v4381 = vmul.f32 %v3998, %v3998
      %v4382 = vmul.f32 %v4003, %v4003
      %v4383 = vmul.f32 %v4008, %v4008
      %v4384 = vmul.f32 %v4013, %v4013
      %v4385 = vmul.f32 %v4018, %v4018
      %v4386 = vmul.f32 %v4023, %v4023
      %v4387 = vmul.f32 %v4028, %v4028
      %v4388 = vmul.f32 %v4033, %v4033
      %v4389 = vmul.f32 %v4038, %v4038
      %v4390 = vmul.f32 %v4043, %v4043
      %v4391 = vmul.f32 %v4048, %v4048
      %v4392 = vmul.f32 %v4053, %v4053
      %v4393 = vmul.f32 %v4058, %v4058
      %v4394 = vmul.f32 %v4063, %v4063
      %v4395 = vmul.f32 %v4068, %v4068
      %v4396 = vmul.f32 %v4073, %v4073
      %v4397 = vmul.f32 %v4078, %v4078
      %v4398 = vmul.f32 %v4083, %v4083
      %v4399 = vmul.f32 %v4088, %v4088
      %v4400 = vmul.f32 %v4093, %v4093
      %v4401 = vsel %vm4096, %v4369, 0.0
      %v4402 = vsel %vm4096, %v4370, 0.0
      %v4403 = vadd.f32 %v4401, %v4402
      %v4404 = vsel %vm4096, %v4371, 0.0
      %v4405 = vadd.f32 %v4403, %v4404
      %v4406 = vsel %vm4096, %v4372, 0.0
      %v4407 = vadd.f32 %v4405, %v4406
      %v4408 = vsel %vm4096, %v4373, 0.0
      %v4409 = vadd.f32 %v4407, %v4408
      %v4410 = vsel %vm4096, %v4374, 0.0
      %v4411 = vadd.f32 %v4409, %v4410
      %v4412 = vsel %vm4096, %v4375, 0.0
      %v4413 = vadd.f32 %v4411, %v4412
      %v4414 = vsel %vm4096, %v4376, 0.0
      %v4415 = vadd.f32 %v4413, %v4414
      %v4416 = vsel %vm4096, %v4377, 0.0
      %v4417 = vadd.f32 %v4415, %v4416
      %v4418 = vsel %vm4096, %v4378, 0.0
      %v4419 = vadd.f32 %v4417, %v4418
      %v4420 = vsel %vm4096, %v4379, 0.0
      %v4421 = vadd.f32 %v4419, %v4420
      %v4422 = vsel %vm4096, %v4380, 0.0
      %v4423 = vadd.f32 %v4421, %v4422
      %v4424 = vsel %vm4096, %v4381, 0.0
      %v4425 = vadd.f32 %v4423, %v4424
      %v4426 = vsel %vm4096, %v4382, 0.0
      %v4427 = vadd.f32 %v4425, %v4426
      %v4428 = vsel %vm4096, %v4383, 0.0
      %v4429 = vadd.f32 %v4427, %v4428
      %v4430 = vsel %vm4096, %v4384, 0.0
      %v4431 = vadd.f32 %v4429, %v4430
      %v4432 = vsel %vm4096, %v4385, 0.0
      %v4433 = vadd.f32 %v4431, %v4432
      %v4434 = vsel %vm4096, %v4386, 0.0
      %v4435 = vadd.f32 %v4433, %v4434
      %v4436 = vsel %vm4096, %v4387, 0.0
      %v4437 = vadd.f32 %v4435, %v4436
      %v4438 = vsel %vm4096, %v4388, 0.0
      %v4439 = vadd.f32 %v4437, %v4438
      %v4440 = vsel %vm4096, %v4389, 0.0
      %v4441 = vadd.f32 %v4439, %v4440
      %v4442 = vsel %vm4096, %v4390, 0.0
      %v4443 = vadd.f32 %v4441, %v4442
      %v4444 = vsel %vm4096, %v4391, 0.0
      %v4445 = vadd.f32 %v4443, %v4444
      %v4446 = vsel %vm4096, %v4392, 0.0
      %v4447 = vadd.f32 %v4445, %v4446
      %v4448 = vsel %vm4096, %v4393, 0.0
      %v4449 = vadd.f32 %v4447, %v4448
      %v4450 = vsel %vm4096, %v4394, 0.0
      %v4451 = vadd.f32 %v4449, %v4450
      %v4452 = vsel %vm4096, %v4395, 0.0
      %v4453 = vadd.f32 %v4451, %v4452
      %v4454 = vsel %vm4096, %v4396, 0.0
      %v4455 = vadd.f32 %v4453, %v4454
      %v4456 = vsel %vm4096, %v4397, 0.0
      %v4457 = vadd.f32 %v4455, %v4456
      %v4458 = vsel %vm4096, %v4398, 0.0
      %v4459 = vadd.f32 %v4457, %v4458
      %v4460 = vsel %vm4096, %v4399, 0.0
      %v4461 = vadd.f32 %v4459, %v4460
      %v4462 = vsel %vm4096, %v4400, 0.0
      %v4463 = vadd.f32 %v4461, %v4462
      %v4464 = vrot.slane %v4463, 4
      %v4465 = vadd.f32 %v4463, %v4464
      %v4466 = vrot.slane %v4465, 2
      %v4467 = vadd.f32 %v4465, %v4466
      %v4468 = vrot.slane %v4467, 1
      %v4469 = vadd.f32 %v4467, %v4468
      %vm4470 = vcmask 1040384
      %v4471 = vsel %vm4470, %v4198, %v4299
      %vm4472 = vcmask 1041408
      %v4473 = vsel %vm4472, %v4471, %v4368
      %vm4474 = vcmask 1042432
      %v4475 = vsel %vm4474, %v4473, %v4469
      %v4476 = vadd.f32 %v4129, %v4475
      %vm4477 = vcmask 60416
      %4478 = vst.msk [vmem:[%s4] sm:$0xf] %vm4477, %v4476
      %p4479 = scmp.lt.s32.totalorder %s16, 1
      %s4480 = scalar_select %p4479, %s16, 1
      %s4481 = smul.addr %s4480, 32
      %s4482 = smul.addr %s4481, 8
      %s4483 = scalar_lea.vmem %s3, %s4482
      // Predicated region
      $region37: #{basic_block.3} parent=31 // pred_check
        %p4484 = pneg %p102
      $region38: #{basic_block.3} parent=31 // pred_check_branch
        %4486 = sbr.rel (%p4484) target = $region40
      $region39: #{basic_block.3} parent=31 // pred_region
        _
      $region40: #{basic_block.3} parent=31 // pred_fallthru
        _
      // Predicated region
      $region41: #{basic_block.3} parent=31 // pred_check
        %p4487 = pneg %p123
      $region42: #{basic_block.3} parent=31 // pred_check_branch
        %4489 = sbr.rel (%p4487) target = $region44
      $region43: #{basic_block.3} parent=31 // pred_region
        _
      $region44: #{basic_block.3} parent=31 // pred_fallthru
        _
      // Predicated region
      $region45: #{basic_block.3} parent=31 // pred_check
        %p4490 = pneg %p123
      $region46: #{basic_block.3} parent=31 // pred_check_branch
        %4492 = sbr.rel (%p4490) target = $region48
      $region47: #{basic_block.3} parent=31 // pred_region
        _
      $region48: #{basic_block.3} parent=31 // pred_fallthru
        _
    $region32: #{basic_block.3} parent=5 // pred_fallthru
      _
    %p4493 = scmp.le.s32.totalorder 2, %s11
    // Predicated region
    $region49: #{basic_block.3} parent=5 // pred_check
      %p4494 = pneg %p4493
    $region50: #{basic_block.3} parent=5 // pred_check_branch
      %4496 = sbr.rel (%p4494) target = $region52
    $region51: #{basic_block.3} parent=5 // pred_region
      %s4497 = ssub.s32 %s11, 2
      // Predicated region
      $region53: #{basic_block.3} parent=51 // pred_check
        %p4498 = pneg %p108
      $region54: #{basic_block.3} parent=51 // pred_check_branch
        %4500 = sbr.rel (%p4498) target = $region56
      $region55: #{basic_block.3} parent=51 // pred_region
        %p4501 = scmp.lt.s32.totalorder %s17, 1
        %s4502 = scalar_select %p4501, %s17, 1
        %s4503 = smul.addr %s4502, 32
        %s4504 = smul.addr %s4503, 8
        %s4505 = scalar_lea.vmem %s3, %s4504
      $region56: #{basic_block.3} parent=51 // pred_fallthru
        _
    $region52: #{basic_block.3} parent=5 // pred_fallthru
      _
  $region6: #{basic_block.3} parent=0 // loop_footer
    %s15 = sadd.s32 1, %s11
  $region7: #{basic_block.3} parent=0 // loop_footer_branch
    %10 = sbr.rel target = $region3
  $region8: #{basic_block.3} parent=0 // loop_exit
    _

</llo_original>
